<compile_context>
chip_gen: v7x
topology: tpu7x:2x2x1
jax: 0.10.0
libtpu: 0.0.40
codegen_flags: <defaults>
</compile_context>

<pallas_src>
import jax
import jax.numpy as jnp
from jax.experimental import pallas as pl
from jax.experimental.pallas import tpu as pltpu

# ----------------------------- configuration --------------------------------
VOCAB = 100
TEXT_HIDDEN = 64          # stub for text_encoder.config.hidden_size
SEQ = 8                   # text sequence length
NUM_GRAPHS = 8            # graph "sequence" length after pooling + unsqueeze(0)
NUM_NODES = 16
NODE_FEAT = 8
GRAPH_ENC_DIM = 256       # graph_projection expects in_features=256
EMBED_DIM = 32
SELF_HEADS = 4
CROSS_HEADS = 4
SELF_FF = 64
CROSS_FF = 64
NUM_CROSS_BLOCKS = 2
OUT_CHANNELS = 5
OUT_PAD = 128             # lane-dense padded width of the final logits store
LN_EPS = 1e-5

N_ATTN = 2 + 2 * NUM_CROSS_BLOCKS   # text_sa, graph_sa, then (text_ca, graph_ca) per block
N_FF = 2 + 2 * NUM_CROSS_BLOCKS     # same ordering for feed-forwards
N_LN = 2 + 2 * NUM_CROSS_BLOCKS     # paired (text|graph) layer-norms, same ordering

assert SELF_FF == CROSS_FF, "weight stacking assumes equal FF dims"
assert SEQ == NUM_GRAPHS, "paired layer-norm stacking assumes equal sequence lengths"
assert EMBED_DIM % SELF_HEADS == 0 and EMBED_DIM % CROSS_HEADS == 0


# ------------------------------ fused kernel ---------------------------------
def _fused_kernel(
    t_in_ref, g_in_ref,                       # [S,64], [G,256]
    tproj_w_ref, tproj_b_ref,                 # [64,E], [1,E]
    gproj_w_ref, gproj_b_ref,                 # [256,E], [1,E]
    attn_wqkv_ref, attn_bqkv_ref,             # [NA,E,3E], [NA,1,3E]
    attn_wo_ref, attn_bo_ref,                 # [NA,E,E],  [NA,1,E]
    ff1_w_ref, ff1_b_ref,                     # [NF,E,FF], [NF,1,FF]
    ff2_w_ref, ff2_b_ref,                     # [NF,FF,E], [NF,1,E]
    ln_g_ref, ln_b_ref,                       # [NL,2S,E], [NL,2S,E] (text rows then graph rows)
    out_g_ref, out_b_ref,                     # [1,2E], [1,2E]
    out_w_ref, out_b2_ref,                    # [2E,OUT_PAD], [1,OUT_PAD]
    o_ref,                                    # [1,OUT_PAD]
):
    e = EMBED_DIM
    s = SEQ

    def dense(x, w, bias):
        return jnp.dot(x, w, preferred_element_type=jnp.float32) + bias

    def layer_norm(z, gamma, beta):
        mu = jnp.mean(z, axis=-1, keepdims=True)
        var = jnp.mean(jnp.square(z - mu), axis=-1, keepdims=True)
        return (z - mu) * jax.lax.rsqrt(var + LN_EPS) * gamma + beta

    def add_ln_pair(xt, yt, xg, yg, idx):
        # Both modalities normalized in a single [2S, E] VPU pass.
        z = jnp.concatenate([xt + yt, xg + yg], axis=0)
        zn = layer_norm(z, ln_g_ref[idx], ln_b_ref[idx])
        return zn[:s], zn[s:]

    def mha(q_in, kv_in, idx, num_heads, is_self):
        wqkv = attn_wqkv_ref[idx]              # [E, 3E] fused QKV weight
        bqkv = attn_bqkv_ref[idx]              # [1, 3E]
        hd = e // num_heads
        if is_self:
            qkv = dense(q_in, wqkv, bqkv)                       # one matmul for Q,K,V
            q, k, v = qkv[:, :e], qkv[:, e:2 * e], qkv[:, 2 * e:]
        else:
            sq = q_in.shape[0]
            qkv = dense(jnp.concatenate([q_in, kv_in], axis=0), wqkv, bqkv)
            q = qkv[:sq, :e]
            k = qkv[sq:, e:2 * e]
            v = qkv[sq:, 2 * e:]
        # Head-batched attention: one dot_general for all heads' scores,
        # one for all heads' value mix (no per-head matmul loop).
        qh = jnp.stack([q[:, h * hd:(h + 1) * hd] for h in range(num_heads)], axis=0)
        kh = jnp.stack([k[:, h * hd:(h + 1) * hd] for h in range(num_heads)], axis=0)
        vh = jnp.stack([v[:, h * hd:(h + 1) * hd] for h in range(num_heads)], axis=0)
        sc = jax.lax.dot_general(
            qh, kh, (((2,), (2,)), ((0,), (0,))),
            preferred_element_type=jnp.float32) * (1.0 / (hd ** 0.5))   # (H,Sq,Skv)
        sc = sc - jnp.max(sc, axis=-1, keepdims=True)
        p = jnp.exp(sc)
        p = p * pl.reciprocal(jnp.sum(p, axis=-1, keepdims=True), approx=True)
        oh = jax.lax.dot_general(
            p, vh, (((2,), (1,)), ((0,), (0,))),
            preferred_element_type=jnp.float32)                         # (H,Sq,hd)
        attn = jnp.concatenate([oh[h] for h in range(num_heads)], axis=-1)
        return dense(attn, attn_wo_ref[idx], attn_bo_ref[idx])

    def ff(x, idx):
        h = jnp.maximum(dense(x, ff1_w_ref[idx], ff1_b_ref[idx]), 0.0)
        return dense(h, ff2_w_ref[idx], ff2_b_ref[idx])

    # ---- projections ----
    t = dense(t_in_ref[...], tproj_w_ref[...], tproj_b_ref[...])        # (S, E)
    g = dense(g_in_ref[...], gproj_w_ref[...], gproj_b_ref[...])        # (G, E)

    # ---- self attention + residual norm ----
    t_sa = mha(t, t, 0, SELF_HEADS, True)
    g_sa = mha(g, g, 1, SELF_HEADS, True)
    t_sa, g_sa = add_ln_pair(t_sa, t, g_sa, g, 0)

    # ---- feed-forward + residual norm ----
    t, g = add_ln_pair(t_sa, ff(t_sa, 0), g_sa, ff(g_sa, 1), 1)

    # ---- cross-modal attention blocks ----
    # TODO(synk): CrossModelAttentionBlock source not provided; implemented as a
    # standard bidirectional cross-attention (text<->graph) with post-norm
    # residuals and a ReLU feed-forward per modality.
    for blk in range(NUM_CROSS_BLOCKS):
        ai = 2 + 2 * blk
        t_ca = mha(t, g, ai, CROSS_HEADS, False)
        g_ca = mha(g, t, ai + 1, CROSS_HEADS, False)
        t2, g2 = add_ln_pair(t, t_ca, g, g_ca, ai)
        t, g = add_ln_pair(t2, ff(t2, ai), g2, ff(g2, ai + 1), ai + 1)

    # ---- mean pool, concat, layer norm, classifier head ----
    t_mean = jnp.mean(t, axis=0, keepdims=True)                         # (1, E)
    g_mean = jnp.mean(g, axis=0, keepdims=True)                         # (1, E)
    c = jnp.concatenate([t_mean, g_mean], axis=-1)                      # (1, 2E)
    cn = layer_norm(c, out_g_ref[...], out_b_ref[...])
    o_ref[...] = dense(cn, out_w_ref[...], out_b2_ref[...])             # (1, OUT_PAD)


# --------------------------- parameter initialisation ------------------------
class _KeyGen:
    def __init__(self, key):
        self._key = key
        self._i = 0

    def __call__(self):
        self._i += 1
        return jax.random.fold_in(self._key, self._i)


def init_params(key):
    kg = _KeyGen(key)
    e = EMBED_DIM

    def w(shape, scale=0.05):
        return jax.random.normal(kg(), shape, jnp.float32) * scale

    def b(shape, scale=0.01):
        return jax.random.normal(kg(), shape, jnp.float32) * scale

    # Paired layer-norm params are stored per-row (text rows then graph rows)
    # so the kernel normalizes both modalities in one [2S, E] pass.
    params = {
        # frozen encoder stubs
        'text_enc_emb': w((VOCAB, TEXT_HIDDEN)),
        'graph_enc_w': w((NODE_FEAT, GRAPH_ENC_DIM)),
        # projections
        'text_proj_w': w((TEXT_HIDDEN, e)), 'text_proj_b': b((1, e)),
        'graph_proj_w': w((GRAPH_ENC_DIM, e)), 'graph_proj_b': b((1, e)),
        # stacked attention weights: [text_sa, graph_sa, (text_ca, graph_ca) * blocks]
        'attn_wqkv': w((N_ATTN, e, 3 * e)), 'attn_bqkv': b((N_ATTN, 1, 3 * e)),
        'attn_wo': w((N_ATTN, e, e)), 'attn_bo': b((N_ATTN, 1, e)),
        # stacked feed-forward weights, same ordering
        'ff1_w': w((N_FF, e, SELF_FF)), 'ff1_b': b((N_FF, 1, SELF_FF)),
        'ff2_w': w((N_FF, SELF_FF, e)), 'ff2_b': b((N_FF, 1, e)),
        # paired layer-norms (gamma=1, beta=0 as in nn.LayerNorm init)
        'ln_gamma': jnp.ones((N_LN, SEQ + NUM_GRAPHS, e), jnp.float32),
        'ln_beta': jnp.zeros((N_LN, SEQ + NUM_GRAPHS, e), jnp.float32),
        # output head (weight/bias lane-padded to OUT_PAD for a dense store)
        'out_gamma': jnp.ones((1, 2 * e), jnp.float32),
        'out_beta': jnp.zeros((1, 2 * e), jnp.float32),
        'out_w': jnp.pad(w((2 * e, OUT_CHANNELS)), ((0, 0), (0, OUT_PAD - OUT_CHANNELS))),
        'out_b': jnp.pad(b((1, OUT_CHANNELS)), ((0, 0), (0, OUT_PAD - OUT_CHANNELS))),
    }
    return params


# ------------------------------- forward --------------------------------------
def forward(params, text_input_ids, text_attention_mask, graph_x, graph_edge_index,
            graph_batch):
    # ---- frozen pretrained encoders: deterministic stubs (plain-JAX glue) ----
    # TODO(synk): text_encoder / graph_encoder are external pretrained nn.Modules;
    # stubbed with an embedding lookup and a node-MLP + per-graph mean pool
    # (graph_edge_index message passing is not modelled).
    text_emb = jnp.take(params['text_enc_emb'], text_input_ids[0], axis=0)       # (S, 64)
    text_emb = text_emb * text_attention_mask[0][:, None].astype(jnp.float32)
    node_h = graph_x @ params['graph_enc_w']                                     # (N, 256)
    onehot = (graph_batch[None, :] ==
              jnp.arange(NUM_GRAPHS, dtype=graph_batch.dtype)[:, None]).astype(jnp.float32)
    counts = jnp.maximum(jnp.sum(onehot, axis=1, keepdims=True), 1.0)
    graph_emb = (onehot @ node_h) / counts                                       # (G, 256)

    args = (
        text_emb, graph_emb,
        params['text_proj_w'], params['text_proj_b'],
        params['graph_proj_w'], params['graph_proj_b'],
        params['attn_wqkv'], params['attn_bqkv'], params['attn_wo'], params['attn_bo'],
        params['ff1_w'], params['ff1_b'], params['ff2_w'], params['ff2_b'],
        params['ln_gamma'], params['ln_beta'],
        params['out_gamma'], params['out_beta'],
        params['out_w'], params['out_b'],
    )
    vmem_spec = pl.BlockSpec(memory_space=pltpu.MemorySpace.VMEM)
    out_pad = pl.pallas_call(
        _fused_kernel,
        out_shape=jax.ShapeDtypeStruct((1, OUT_PAD), jnp.float32),
        in_specs=[vmem_spec] * len(args),
        out_specs=vmem_spec,
        compiler_params=pltpu.CompilerParams(vmem_limit_bytes=32 * 1024 * 1024),
    )(*args)
    return out_pad[:, :OUT_CHANNELS]                                             # (1, 5)


# --------------------------------- main ---------------------------------------
if __name__ == "__main__":
    root = jax.random.PRNGKey(0)
    params = init_params(root)

    k1, k2, k3 = jax.random.split(root, 3)
    text_input_ids = jax.random.randint(k1, (1, SEQ), 0, VOCAB, dtype=jnp.int32)
    text_attention_mask = jnp.ones((1, SEQ), jnp.int32)
    graph_x = jax.random.normal(k2, (NUM_NODES, NODE_FEAT), jnp.float32)
    graph_edge_index = jax.random.randint(k3, (2, 2 * NUM_NODES), 0, NUM_NODES,
                                          dtype=jnp.int32)
    graph_batch = jnp.repeat(jnp.arange(NUM_GRAPHS, dtype=jnp.int32),
                             NUM_NODES // NUM_GRAPHS)

    fwd = jax.jit(forward)
    out = fwd(params, text_input_ids, text_attention_mask, graph_x,
              graph_edge_index, graph_batch)
    jax.block_until_ready(out)

    assert out.shape == (1, OUT_CHANNELS), out.shape
    assert bool(jnp.all(jnp.isfinite(out)))
    print("KERNEL_OK")
</pallas_src>

<mosaic_0001>
module attributes {stable_mosaic.version = 11 : i64} {
  func.func @_fused_kernel(%arg0: memref<8x64xf32, #tpu.memory_space<vmem>>, %arg1: memref<8x256xf32, #tpu.memory_space<vmem>>, %arg2: memref<64x32xf32, #tpu.memory_space<vmem>>, %arg3: memref<1x32xf32, #tpu.memory_space<vmem>>, %arg4: memref<256x32xf32, #tpu.memory_space<vmem>>, %arg5: memref<1x32xf32, #tpu.memory_space<vmem>>, %arg6: memref<6x32x96xf32, #tpu.memory_space<vmem>>, %arg7: memref<6x1x96xf32, #tpu.memory_space<vmem>>, %arg8: memref<6x32x32xf32, #tpu.memory_space<vmem>>, %arg9: memref<6x1x32xf32, #tpu.memory_space<vmem>>, %arg10: memref<6x32x64xf32, #tpu.memory_space<vmem>>, %arg11: memref<6x1x64xf32, #tpu.memory_space<vmem>>, %arg12: memref<6x64x32xf32, #tpu.memory_space<vmem>>, %arg13: memref<6x1x32xf32, #tpu.memory_space<vmem>>, %arg14: memref<6x16x32xf32, #tpu.memory_space<vmem>>, %arg15: memref<6x16x32xf32, #tpu.memory_space<vmem>>, %arg16: memref<1x64xf32, #tpu.memory_space<vmem>>, %arg17: memref<1x64xf32, #tpu.memory_space<vmem>>, %arg18: memref<64x128xf32, #tpu.memory_space<vmem>>, %arg19: memref<1x128xf32, #tpu.memory_space<vmem>>, %arg20: memref<1x128xf32, #tpu.memory_space<vmem>>) attributes {dimension_semantics = [], scalar_prefetch = 0 : i64, scratch_operands = 0 : i64, tpu.core_type = #tpu.core_type<tc>} {
    %c0 = arith.constant 0 : index
    %c0_0 = arith.constant 0 : index
    %0 = vector.load %arg0[%c0, %c0_0] : memref<8x64xf32, #tpu.memory_space<vmem>>, vector<8x64xf32>
    %c0_1 = arith.constant 0 : index
    %c0_2 = arith.constant 0 : index
    %1 = vector.load %arg2[%c0_1, %c0_2] : memref<64x32xf32, #tpu.memory_space<vmem>>, vector<64x32xf32>
    %c0_3 = arith.constant 0 : index
    %c0_4 = arith.constant 0 : index
    %2 = vector.load %arg3[%c0_3, %c0_4] : memref<1x32xf32, #tpu.memory_space<vmem>>, vector<1x32xf32>
    %cst = arith.constant dense<0.000000e+00> : vector<8x32xf32>
    %3 = tpu.matmul %0, %1, %cst {dimension_numbers = #tpu.dot_dimension_numbers<[1], [0], [0], [1], [0, 0, 1, 1], [], []>} : vector<8x64xf32>, vector<64x32xf32>, vector<8x32xf32> -> vector<8x32xf32>
    %4 = vector.broadcast %2 : vector<1x32xf32> to vector<8x32xf32>
    %5 = arith.addf %3, %4 : vector<8x32xf32>
    %c0_5 = arith.constant 0 : index
    %c0_6 = arith.constant 0 : index
    %6 = vector.load %arg1[%c0_5, %c0_6] : memref<8x256xf32, #tpu.memory_space<vmem>>, vector<8x256xf32>
    %c0_7 = arith.constant 0 : index
    %c0_8 = arith.constant 0 : index
    %7 = vector.load %arg4[%c0_7, %c0_8] : memref<256x32xf32, #tpu.memory_space<vmem>>, vector<256x32xf32>
    %c0_9 = arith.constant 0 : index
    %c0_10 = arith.constant 0 : index
    %8 = vector.load %arg5[%c0_9, %c0_10] : memref<1x32xf32, #tpu.memory_space<vmem>>, vector<1x32xf32>
    %cst_11 = arith.constant dense<0.000000e+00> : vector<8x32xf32>
    %9 = tpu.matmul %6, %7, %cst_11 {dimension_numbers = #tpu.dot_dimension_numbers<[1], [0], [0], [1], [0, 0, 1, 1], [], []>} : vector<8x256xf32>, vector<256x32xf32>, vector<8x32xf32> -> vector<8x32xf32>
    %10 = vector.broadcast %8 : vector<1x32xf32> to vector<8x32xf32>
    %11 = arith.addf %9, %10 : vector<8x32xf32>
    %c0_12 = arith.constant 0 : index
    %c0_13 = arith.constant 0 : index
    %c0_14 = arith.constant 0 : index
    %12 = vector.load %arg6[%c0_12, %c0_13, %c0_14] : memref<6x32x96xf32, #tpu.memory_space<vmem>>, vector<1x32x96xf32>
    %13 = vector.shape_cast %12 : vector<1x32x96xf32> to vector<32x96xf32>
    %c0_15 = arith.constant 0 : index
    %c0_16 = arith.constant 0 : index
    %c0_17 = arith.constant 0 : index
    %14 = vector.load %arg7[%c0_15, %c0_16, %c0_17] : memref<6x1x96xf32, #tpu.memory_space<vmem>>, vector<1x1x96xf32>
    %15 = vector.shape_cast %14 : vector<1x1x96xf32> to vector<1x96xf32>
    %cst_18 = arith.constant dense<0.000000e+00> : vector<8x96xf32>
    %16 = tpu.matmul %5, %13, %cst_18 {dimension_numbers = #tpu.dot_dimension_numbers<[1], [0], [0], [1], [0, 0, 1, 1], [], []>} : vector<8x32xf32>, vector<32x96xf32>, vector<8x96xf32> -> vector<8x96xf32>
    %17 = vector.broadcast %15 : vector<1x96xf32> to vector<8x96xf32>
    %18 = arith.addf %16, %17 : vector<8x96xf32>
    %19 = vector.extract_strided_slice %18 {offsets = [0, 0], sizes = [8, 32], strides = [1, 1]} : vector<8x96xf32> to vector<8x32xf32>
    %20 = vector.extract_strided_slice %18 {offsets = [0, 32], sizes = [8, 32], strides = [1, 1]} : vector<8x96xf32> to vector<8x32xf32>
    %21 = vector.extract_strided_slice %18 {offsets = [0, 64], sizes = [8, 32], strides = [1, 1]} : vector<8x96xf32> to vector<8x32xf32>
    %22 = vector.extract_strided_slice %19 {offsets = [0, 0], sizes = [8, 8], strides = [1, 1]} : vector<8x32xf32> to vector<8x8xf32>
    %23 = vector.extract_strided_slice %19 {offsets = [0, 8], sizes = [8, 8], strides = [1, 1]} : vector<8x32xf32> to vector<8x8xf32>
    %24 = vector.extract_strided_slice %19 {offsets = [0, 16], sizes = [8, 8], strides = [1, 1]} : vector<8x32xf32> to vector<8x8xf32>
    %25 = vector.extract_strided_slice %19 {offsets = [0, 24], sizes = [8, 8], strides = [1, 1]} : vector<8x32xf32> to vector<8x8xf32>
    %26 = vector.shape_cast %22 : vector<8x8xf32> to vector<1x8x8xf32>
    %27 = vector.shape_cast %23 : vector<8x8xf32> to vector<1x8x8xf32>
    %28 = vector.shape_cast %24 : vector<8x8xf32> to vector<1x8x8xf32>
    %29 = vector.shape_cast %25 : vector<8x8xf32> to vector<1x8x8xf32>
    %30 = tpu.concatenate %26, %27, %28, %29 in 0 : vector<1x8x8xf32>, vector<1x8x8xf32>, vector<1x8x8xf32>, vector<1x8x8xf32> -> vector<4x8x8xf32>
    %31 = vector.extract_strided_slice %20 {offsets = [0, 0], sizes = [8, 8], strides = [1, 1]} : vector<8x32xf32> to vector<8x8xf32>
    %32 = vector.extract_strided_slice %20 {offsets = [0, 8], sizes = [8, 8], strides = [1, 1]} : vector<8x32xf32> to vector<8x8xf32>
    %33 = vector.extract_strided_slice %20 {offsets = [0, 16], sizes = [8, 8], strides = [1, 1]} : vector<8x32xf32> to vector<8x8xf32>
    %34 = vector.extract_strided_slice %20 {offsets = [0, 24], sizes = [8, 8], strides = [1, 1]} : vector<8x32xf32> to vector<8x8xf32>
    %35 = vector.shape_cast %31 : vector<8x8xf32> to vector<1x8x8xf32>
    %36 = vector.shape_cast %32 : vector<8x8xf32> to vector<1x8x8xf32>
    %37 = vector.shape_cast %33 : vector<8x8xf32> to vector<1x8x8xf32>
    %38 = vector.shape_cast %34 : vector<8x8xf32> to vector<1x8x8xf32>
    %39 = tpu.concatenate %35, %36, %37, %38 in 0 : vector<1x8x8xf32>, vector<1x8x8xf32>, vector<1x8x8xf32>, vector<1x8x8xf32> -> vector<4x8x8xf32>
    %40 = vector.extract_strided_slice %21 {offsets = [0, 0], sizes = [8, 8], strides = [1, 1]} : vector<8x32xf32> to vector<8x8xf32>
    %41 = vector.extract_strided_slice %21 {offsets = [0, 8], sizes = [8, 8], strides = [1, 1]} : vector<8x32xf32> to vector<8x8xf32>
    %42 = vector.extract_strided_slice %21 {offsets = [0, 16], sizes = [8, 8], strides = [1, 1]} : vector<8x32xf32> to vector<8x8xf32>
    %43 = vector.extract_strided_slice %21 {offsets = [0, 24], sizes = [8, 8], strides = [1, 1]} : vector<8x32xf32> to vector<8x8xf32>
    %44 = vector.shape_cast %40 : vector<8x8xf32> to vector<1x8x8xf32>
    %45 = vector.shape_cast %41 : vector<8x8xf32> to vector<1x8x8xf32>
    %46 = vector.shape_cast %42 : vector<8x8xf32> to vector<1x8x8xf32>
    %47 = vector.shape_cast %43 : vector<8x8xf32> to vector<1x8x8xf32>
    %48 = tpu.concatenate %44, %45, %46, %47 in 0 : vector<1x8x8xf32>, vector<1x8x8xf32>, vector<1x8x8xf32>, vector<1x8x8xf32> -> vector<4x8x8xf32>
    %cst_19 = arith.constant dense<0.000000e+00> : vector<4x8x8xf32>
    %49 = tpu.matmul %30, %39, %cst_19 {dimension_numbers = #tpu.dot_dimension_numbers<[2], [2], [1], [1], [0, 0, 0, 1, 1, 1], [0], [0]>} : vector<4x8x8xf32>, vector<4x8x8xf32>, vector<4x8x8xf32> -> vector<4x8x8xf32>
    %cst_20 = arith.constant 0.353553385 : f32
    %50 = vector.broadcast %cst_20 : f32 to vector<4x8x8xf32>
    %51 = arith.mulf %49, %50 : vector<4x8x8xf32>
    %cst_21 = arith.constant dense<0xFF800000> : vector<4x8xf32>
    %52 = vector.multi_reduction <maximumf>, %51, %cst_21 [2] : vector<4x8x8xf32> to vector<4x8xf32>
    %53 = vector.shape_cast %52 : vector<4x8xf32> to vector<4x8x1xf32>
    %54 = vector.broadcast %53 : vector<4x8x1xf32> to vector<4x8x8xf32>
    %55 = arith.subf %51, %54 : vector<4x8x8xf32>
    %56 = math.exp %55 : vector<4x8x8xf32>
    %cst_22 = arith.constant dense<0.000000e+00> : vector<4x8xf32>
    %57 = vector.multi_reduction <add>, %56, %cst_22 [2] : vector<4x8x8xf32> to vector<4x8xf32>
    %58 = vector.shape_cast %57 : vector<4x8xf32> to vector<4x8x1xf32>
    %59 = tpu.reciprocal %58 {approx = true} : vector<4x8x1xf32> -> vector<4x8x1xf32>
    %60 = vector.broadcast %59 : vector<4x8x1xf32> to vector<4x8x8xf32>
    %61 = arith.mulf %56, %60 : vector<4x8x8xf32>
    %cst_23 = arith.constant dense<0.000000e+00> : vector<4x8x8xf32>
    %62 = tpu.matmul %61, %48, %cst_23 {dimension_numbers = #tpu.dot_dimension_numbers<[2], [1], [1], [2], [0, 0, 0, 1, 1, 2], [0], [0]>} : vector<4x8x8xf32>, vector<4x8x8xf32>, vector<4x8x8xf32> -> vector<4x8x8xf32>
    %63 = vector.extract_strided_slice %62 {offsets = [0, 0, 0], sizes = [1, 8, 8], strides = [1, 1, 1]} : vector<4x8x8xf32> to vector<1x8x8xf32>
    %64 = vector.shape_cast %63 : vector<1x8x8xf32> to vector<8x8xf32>
    %65 = vector.extract_strided_slice %62 {offsets = [1, 0, 0], sizes = [1, 8, 8], strides = [1, 1, 1]} : vector<4x8x8xf32> to vector<1x8x8xf32>
    %66 = vector.shape_cast %65 : vector<1x8x8xf32> to vector<8x8xf32>
    %67 = vector.extract_strided_slice %62 {offsets = [2, 0, 0], sizes = [1, 8, 8], strides = [1, 1, 1]} : vector<4x8x8xf32> to vector<1x8x8xf32>
    %68 = vector.shape_cast %67 : vector<1x8x8xf32> to vector<8x8xf32>
    %69 = vector.extract_strided_slice %62 {offsets = [3, 0, 0], sizes = [1, 8, 8], strides = [1, 1, 1]} : vector<4x8x8xf32> to vector<1x8x8xf32>
    %70 = vector.shape_cast %69 : vector<1x8x8xf32> to vector<8x8xf32>
    %71 = tpu.concatenate %64, %66, %68, %70 in 1 : vector<8x8xf32>, vector<8x8xf32>, vector<8x8xf32>, vector<8x8xf32> -> vector<8x32xf32>
    %c0_24 = arith.constant 0 : index
    %c0_25 = arith.constant 0 : index
    %c0_26 = arith.constant 0 : index
    %72 = vector.load %arg8[%c0_24, %c0_25, %c0_26] : memref<6x32x32xf32, #tpu.memory_space<vmem>>, vector<1x32x32xf32>
    %73 = vector.shape_cast %72 : vector<1x32x32xf32> to vector<32x32xf32>
    %c0_27 = arith.constant 0 : index
    %c0_28 = arith.constant 0 : index
    %c0_29 = arith.constant 0 : index
    %74 = vector.load %arg9[%c0_27, %c0_28, %c0_29] : memref<6x1x32xf32, #tpu.memory_space<vmem>>, vector<1x1x32xf32>
    %75 = vector.shape_cast %74 : vector<1x1x32xf32> to vector<1x32xf32>
    %cst_30 = arith.constant dense<0.000000e+00> : vector<8x32xf32>
    %76 = tpu.matmul %71, %73, %cst_30 {dimension_numbers = #tpu.dot_dimension_numbers<[1], [0], [0], [1], [0, 0, 1, 1], [], []>} : vector<8x32xf32>, vector<32x32xf32>, vector<8x32xf32> -> vector<8x32xf32>
    %77 = vector.broadcast %75 : vector<1x32xf32> to vector<8x32xf32>
    %78 = arith.addf %76, %77 : vector<8x32xf32>
    %c1 = arith.constant 1 : index
    %c0_31 = arith.constant 0 : index
    %c0_32 = arith.constant 0 : index
    %79 = vector.load %arg6[%c1, %c0_31, %c0_32] : memref<6x32x96xf32, #tpu.memory_space<vmem>>, vector<1x32x96xf32>
    %80 = vector.shape_cast %79 : vector<1x32x96xf32> to vector<32x96xf32>
    %c1_33 = arith.constant 1 : index
    %c0_34 = arith.constant 0 : index
    %c0_35 = arith.constant 0 : index
    %81 = vector.load %arg7[%c1_33, %c0_34, %c0_35] : memref<6x1x96xf32, #tpu.memory_space<vmem>>, vector<1x1x96xf32>
    %82 = vector.shape_cast %81 : vector<1x1x96xf32> to vector<1x96xf32>
    %cst_36 = arith.constant dense<0.000000e+00> : vector<8x96xf32>
    %83 = tpu.matmul %11, %80, %cst_36 {dimension_numbers = #tpu.dot_dimension_numbers<[1], [0], [0], [1], [0, 0, 1, 1], [], []>} : vector<8x32xf32>, vector<32x96xf32>, vector<8x96xf32> -> vector<8x96xf32>
    %84 = vector.broadcast %82 : vector<1x96xf32> to vector<8x96xf32>
    %85 = arith.addf %83, %84 : vector<8x96xf32>
    %86 = vector.extract_strided_slice %85 {offsets = [0, 0], sizes = [8, 32], strides = [1, 1]} : vector<8x96xf32> to vector<8x32xf32>
    %87 = vector.extract_strided_slice %85 {offsets = [0, 32], sizes = [8, 32], strides = [1, 1]} : vector<8x96xf32> to vector<8x32xf32>
    %88 = vector.extract_strided_slice %85 {offsets = [0, 64], sizes = [8, 32], strides = [1, 1]} : vector<8x96xf32> to vector<8x32xf32>
    %89 = vector.extract_strided_slice %86 {offsets = [0, 0], sizes = [8, 8], strides = [1, 1]} : vector<8x32xf32> to vector<8x8xf32>
    %90 = vector.extract_strided_slice %86 {offsets = [0, 8], sizes = [8, 8], strides = [1, 1]} : vector<8x32xf32> to vector<8x8xf32>
    %91 = vector.extract_strided_slice %86 {offsets = [0, 16], sizes = [8, 8], strides = [1, 1]} : vector<8x32xf32> to vector<8x8xf32>
    %92 = vector.extract_strided_slice %86 {offsets = [0, 24], sizes = [8, 8], strides = [1, 1]} : vector<8x32xf32> to vector<8x8xf32>
    %93 = vector.shape_cast %89 : vector<8x8xf32> to vector<1x8x8xf32>
    %94 = vector.shape_cast %90 : vector<8x8xf32> to vector<1x8x8xf32>
    %95 = vector.shape_cast %91 : vector<8x8xf32> to vector<1x8x8xf32>
    %96 = vector.shape_cast %92 : vector<8x8xf32> to vector<1x8x8xf32>
    %97 = tpu.concatenate %93, %94, %95, %96 in 0 : vector<1x8x8xf32>, vector<1x8x8xf32>, vector<1x8x8xf32>, vector<1x8x8xf32> -> vector<4x8x8xf32>
    %98 = vector.extract_strided_slice %87 {offsets = [0, 0], sizes = [8, 8], strides = [1, 1]} : vector<8x32xf32> to vector<8x8xf32>
    %99 = vector.extract_strided_slice %87 {offsets = [0, 8], sizes = [8, 8], strides = [1, 1]} : vector<8x32xf32> to vector<8x8xf32>
    %100 = vector.extract_strided_slice %87 {offsets = [0, 16], sizes = [8, 8], strides = [1, 1]} : vector<8x32xf32> to vector<8x8xf32>
    %101 = vector.extract_strided_slice %87 {offsets = [0, 24], sizes = [8, 8], strides = [1, 1]} : vector<8x32xf32> to vector<8x8xf32>
    %102 = vector.shape_cast %98 : vector<8x8xf32> to vector<1x8x8xf32>
    %103 = vector.shape_cast %99 : vector<8x8xf32> to vector<1x8x8xf32>
    %104 = vector.shape_cast %100 : vector<8x8xf32> to vector<1x8x8xf32>
    %105 = vector.shape_cast %101 : vector<8x8xf32> to vector<1x8x8xf32>
    %106 = tpu.concatenate %102, %103, %104, %105 in 0 : vector<1x8x8xf32>, vector<1x8x8xf32>, vector<1x8x8xf32>, vector<1x8x8xf32> -> vector<4x8x8xf32>
    %107 = vector.extract_strided_slice %88 {offsets = [0, 0], sizes = [8, 8], strides = [1, 1]} : vector<8x32xf32> to vector<8x8xf32>
    %108 = vector.extract_strided_slice %88 {offsets = [0, 8], sizes = [8, 8], strides = [1, 1]} : vector<8x32xf32> to vector<8x8xf32>
    %109 = vector.extract_strided_slice %88 {offsets = [0, 16], sizes = [8, 8], strides = [1, 1]} : vector<8x32xf32> to vector<8x8xf32>
    %110 = vector.extract_strided_slice %88 {offsets = [0, 24], sizes = [8, 8], strides = [1, 1]} : vector<8x32xf32> to vector<8x8xf32>
    %111 = vector.shape_cast %107 : vector<8x8xf32> to vector<1x8x8xf32>
    %112 = vector.shape_cast %108 : vector<8x8xf32> to vector<1x8x8xf32>
    %113 = vector.shape_cast %109 : vector<8x8xf32> to vector<1x8x8xf32>
    %114 = vector.shape_cast %110 : vector<8x8xf32> to vector<1x8x8xf32>
    %115 = tpu.concatenate %111, %112, %113, %114 in 0 : vector<1x8x8xf32>, vector<1x8x8xf32>, vector<1x8x8xf32>, vector<1x8x8xf32> -> vector<4x8x8xf32>
    %cst_37 = arith.constant dense<0.000000e+00> : vector<4x8x8xf32>
    %116 = tpu.matmul %97, %106, %cst_37 {dimension_numbers = #tpu.dot_dimension_numbers<[2], [2], [1], [1], [0, 0, 0, 1, 1, 1], [0], [0]>} : vector<4x8x8xf32>, vector<4x8x8xf32>, vector<4x8x8xf32> -> vector<4x8x8xf32>
    %cst_38 = arith.constant 0.353553385 : f32
    %117 = vector.broadcast %cst_38 : f32 to vector<4x8x8xf32>
    %118 = arith.mulf %116, %117 : vector<4x8x8xf32>
    %cst_39 = arith.constant dense<0xFF800000> : vector<4x8xf32>
    %119 = vector.multi_reduction <maximumf>, %118, %cst_39 [2] : vector<4x8x8xf32> to vector<4x8xf32>
    %120 = vector.shape_cast %119 : vector<4x8xf32> to vector<4x8x1xf32>
    %121 = vector.broadcast %120 : vector<4x8x1xf32> to vector<4x8x8xf32>
    %122 = arith.subf %118, %121 : vector<4x8x8xf32>
    %123 = math.exp %122 : vector<4x8x8xf32>
    %cst_40 = arith.constant dense<0.000000e+00> : vector<4x8xf32>
    %124 = vector.multi_reduction <add>, %123, %cst_40 [2] : vector<4x8x8xf32> to vector<4x8xf32>
    %125 = vector.shape_cast %124 : vector<4x8xf32> to vector<4x8x1xf32>
    %126 = tpu.reciprocal %125 {approx = true} : vector<4x8x1xf32> -> vector<4x8x1xf32>
    %127 = vector.broadcast %126 : vector<4x8x1xf32> to vector<4x8x8xf32>
    %128 = arith.mulf %123, %127 : vector<4x8x8xf32>
    %cst_41 = arith.constant dense<0.000000e+00> : vector<4x8x8xf32>
    %129 = tpu.matmul %128, %115, %cst_41 {dimension_numbers = #tpu.dot_dimension_numbers<[2], [1], [1], [2], [0, 0, 0, 1, 1, 2], [0], [0]>} : vector<4x8x8xf32>, vector<4x8x8xf32>, vector<4x8x8xf32> -> vector<4x8x8xf32>
    %130 = vector.extract_strided_slice %129 {offsets = [0, 0, 0], sizes = [1, 8, 8], strides = [1, 1, 1]} : vector<4x8x8xf32> to vector<1x8x8xf32>
    %131 = vector.shape_cast %130 : vector<1x8x8xf32> to vector<8x8xf32>
    %132 = vector.extract_strided_slice %129 {offsets = [1, 0, 0], sizes = [1, 8, 8], strides = [1, 1, 1]} : vector<4x8x8xf32> to vector<1x8x8xf32>
    %133 = vector.shape_cast %132 : vector<1x8x8xf32> to vector<8x8xf32>
    %134 = vector.extract_strided_slice %129 {offsets = [2, 0, 0], sizes = [1, 8, 8], strides = [1, 1, 1]} : vector<4x8x8xf32> to vector<1x8x8xf32>
    %135 = vector.shape_cast %134 : vector<1x8x8xf32> to vector<8x8xf32>
    %136 = vector.extract_strided_slice %129 {offsets = [3, 0, 0], sizes = [1, 8, 8], strides = [1, 1, 1]} : vector<4x8x8xf32> to vector<1x8x8xf32>
    %137 = vector.shape_cast %136 : vector<1x8x8xf32> to vector<8x8xf32>
    %138 = tpu.concatenate %131, %133, %135, %137 in 1 : vector<8x8xf32>, vector<8x8xf32>, vector<8x8xf32>, vector<8x8xf32> -> vector<8x32xf32>
    %c1_42 = arith.constant 1 : index
    %c0_43 = arith.constant 0 : index
    %c0_44 = arith.constant 0 : index
    %139 = vector.load %arg8[%c1_42, %c0_43, %c0_44] : memref<6x32x32xf32, #tpu.memory_space<vmem>>, vector<1x32x32xf32>
    %140 = vector.shape_cast %139 : vector<1x32x32xf32> to vector<32x32xf32>
    %c1_45 = arith.constant 1 : index
    %c0_46 = arith.constant 0 : index
    %c0_47 = arith.constant 0 : index
    %141 = vector.load %arg9[%c1_45, %c0_46, %c0_47] : memref<6x1x32xf32, #tpu.memory_space<vmem>>, vector<1x1x32xf32>
    %142 = vector.shape_cast %141 : vector<1x1x32xf32> to vector<1x32xf32>
    %cst_48 = arith.constant dense<0.000000e+00> : vector<8x32xf32>
    %143 = tpu.matmul %138, %140, %cst_48 {dimension_numbers = #tpu.dot_dimension_numbers<[1], [0], [0], [1], [0, 0, 1, 1], [], []>} : vector<8x32xf32>, vector<32x32xf32>, vector<8x32xf32> -> vector<8x32xf32>
    %144 = vector.broadcast %142 : vector<1x32xf32> to vector<8x32xf32>
    %145 = arith.addf %143, %144 : vector<8x32xf32>
    %146 = arith.addf %78, %5 : vector<8x32xf32>
    %147 = arith.addf %145, %11 : vector<8x32xf32>
    %148 = tpu.concatenate %146, %147 in 0 : vector<8x32xf32>, vector<8x32xf32> -> vector<16x32xf32>
    %c0_49 = arith.constant 0 : index
    %c0_50 = arith.constant 0 : index
    %c0_51 = arith.constant 0 : index
    %149 = vector.load %arg14[%c0_49, %c0_50, %c0_51] : memref<6x16x32xf32, #tpu.memory_space<vmem>>, vector<1x16x32xf32>
    %150 = vector.shape_cast %149 : vector<1x16x32xf32> to vector<16x32xf32>
    %c0_52 = arith.constant 0 : index
    %c0_53 = arith.constant 0 : index
    %c0_54 = arith.constant 0 : index
    %151 = vector.load %arg15[%c0_52, %c0_53, %c0_54] : memref<6x16x32xf32, #tpu.memory_space<vmem>>, vector<1x16x32xf32>
    %152 = vector.shape_cast %151 : vector<1x16x32xf32> to vector<16x32xf32>
    %cst_55 = arith.constant dense<0.000000e+00> : vector<16xf32>
    %153 = vector.multi_reduction <add>, %148, %cst_55 [1] : vector<16x32xf32> to vector<16xf32>
    %154 = vector.shape_cast %153 : vector<16xf32> to vector<16x1xf32>
    %cst_56 = arith.constant 3.200000e+01 : f32
    %155 = vector.broadcast %cst_56 : f32 to vector<16x1xf32>
    %156 = arith.divf %154, %155 : vector<16x1xf32>
    %157 = vector.broadcast %156 : vector<16x1xf32> to vector<16x32xf32>
    %158 = arith.subf %148, %157 : vector<16x32xf32>
    %159 = arith.mulf %158, %158 : vector<16x32xf32>
    %cst_57 = arith.constant dense<0.000000e+00> : vector<16xf32>
    %160 = vector.multi_reduction <add>, %159, %cst_57 [1] : vector<16x32xf32> to vector<16xf32>
    %161 = vector.shape_cast %160 : vector<16xf32> to vector<16x1xf32>
    %cst_58 = arith.constant 3.200000e+01 : f32
    %162 = vector.broadcast %cst_58 : f32 to vector<16x1xf32>
    %163 = arith.divf %161, %162 : vector<16x1xf32>
    %164 = vector.broadcast %156 : vector<16x1xf32> to vector<16x32xf32>
    %165 = arith.subf %148, %164 : vector<16x32xf32>
    %cst_59 = arith.constant 9.99999974E-6 : f32
    %166 = vector.broadcast %cst_59 : f32 to vector<16x1xf32>
    %167 = arith.addf %163, %166 : vector<16x1xf32>
    %168 = math.rsqrt %167 : vector<16x1xf32>
    %169 = vector.broadcast %168 : vector<16x1xf32> to vector<16x32xf32>
    %170 = arith.mulf %165, %169 : vector<16x32xf32>
    %171 = arith.mulf %170, %150 : vector<16x32xf32>
    %172 = arith.addf %171, %152 : vector<16x32xf32>
    %173 = vector.extract_strided_slice %172 {offsets = [0, 0], sizes = [8, 32], strides = [1, 1]} : vector<16x32xf32> to vector<8x32xf32>
    %174 = vector.extract_strided_slice %172 {offsets = [8, 0], sizes = [8, 32], strides = [1, 1]} : vector<16x32xf32> to vector<8x32xf32>
    %c0_60 = arith.constant 0 : index
    %c0_61 = arith.constant 0 : index
    %c0_62 = arith.constant 0 : index
    %175 = vector.load %arg10[%c0_60, %c0_61, %c0_62] : memref<6x32x64xf32, #tpu.memory_space<vmem>>, vector<1x32x64xf32>
    %176 = vector.shape_cast %175 : vector<1x32x64xf32> to vector<32x64xf32>
    %c0_63 = arith.constant 0 : index
    %c0_64 = arith.constant 0 : index
    %c0_65 = arith.constant 0 : index
    %177 = vector.load %arg11[%c0_63, %c0_64, %c0_65] : memref<6x1x64xf32, #tpu.memory_space<vmem>>, vector<1x1x64xf32>
    %178 = vector.shape_cast %177 : vector<1x1x64xf32> to vector<1x64xf32>
    %cst_66 = arith.constant dense<0.000000e+00> : vector<8x64xf32>
    %179 = tpu.matmul %173, %176, %cst_66 {dimension_numbers = #tpu.dot_dimension_numbers<[1], [0], [0], [1], [0, 0, 1, 1], [], []>} : vector<8x32xf32>, vector<32x64xf32>, vector<8x64xf32> -> vector<8x64xf32>
    %180 = vector.broadcast %178 : vector<1x64xf32> to vector<8x64xf32>
    %181 = arith.addf %179, %180 : vector<8x64xf32>
    %cst_67 = arith.constant 0.000000e+00 : f32
    %182 = vector.broadcast %cst_67 : f32 to vector<8x64xf32>
    %183 = arith.maximumf %181, %182 : vector<8x64xf32>
    %c0_68 = arith.constant 0 : index
    %c0_69 = arith.constant 0 : index
    %c0_70 = arith.constant 0 : index
    %184 = vector.load %arg12[%c0_68, %c0_69, %c0_70] : memref<6x64x32xf32, #tpu.memory_space<vmem>>, vector<1x64x32xf32>
    %185 = vector.shape_cast %184 : vector<1x64x32xf32> to vector<64x32xf32>
    %c0_71 = arith.constant 0 : index
    %c0_72 = arith.constant 0 : index
    %c0_73 = arith.constant 0 : index
    %186 = vector.load %arg13[%c0_71, %c0_72, %c0_73] : memref<6x1x32xf32, #tpu.memory_space<vmem>>, vector<1x1x32xf32>
    %187 = vector.shape_cast %186 : vector<1x1x32xf32> to vector<1x32xf32>
    %cst_74 = arith.constant dense<0.000000e+00> : vector<8x32xf32>
    %188 = tpu.matmul %183, %185, %cst_74 {dimension_numbers = #tpu.dot_dimension_numbers<[1], [0], [0], [1], [0, 0, 1, 1], [], []>} : vector<8x64xf32>, vector<64x32xf32>, vector<8x32xf32> -> vector<8x32xf32>
    %189 = vector.broadcast %187 : vector<1x32xf32> to vector<8x32xf32>
    %190 = arith.addf %188, %189 : vector<8x32xf32>
    %c1_75 = arith.constant 1 : index
    %c0_76 = arith.constant 0 : index
    %c0_77 = arith.constant 0 : index
    %191 = vector.load %arg10[%c1_75, %c0_76, %c0_77] : memref<6x32x64xf32, #tpu.memory_space<vmem>>, vector<1x32x64xf32>
    %192 = vector.shape_cast %191 : vector<1x32x64xf32> to vector<32x64xf32>
    %c1_78 = arith.constant 1 : index
    %c0_79 = arith.constant 0 : index
    %c0_80 = arith.constant 0 : index
    %193 = vector.load %arg11[%c1_78, %c0_79, %c0_80] : memref<6x1x64xf32, #tpu.memory_space<vmem>>, vector<1x1x64xf32>
    %194 = vector.shape_cast %193 : vector<1x1x64xf32> to vector<1x64xf32>
    %cst_81 = arith.constant dense<0.000000e+00> : vector<8x64xf32>
    %195 = tpu.matmul %174, %192, %cst_81 {dimension_numbers = #tpu.dot_dimension_numbers<[1], [0], [0], [1], [0, 0, 1, 1], [], []>} : vector<8x32xf32>, vector<32x64xf32>, vector<8x64xf32> -> vector<8x64xf32>
    %196 = vector.broadcast %194 : vector<1x64xf32> to vector<8x64xf32>
    %197 = arith.addf %195, %196 : vector<8x64xf32>
    %cst_82 = arith.constant 0.000000e+00 : f32
    %198 = vector.broadcast %cst_82 : f32 to vector<8x64xf32>
    %199 = arith.maximumf %197, %198 : vector<8x64xf32>
    %c1_83 = arith.constant 1 : index
    %c0_84 = arith.constant 0 : index
    %c0_85 = arith.constant 0 : index
    %200 = vector.load %arg12[%c1_83, %c0_84, %c0_85] : memref<6x64x32xf32, #tpu.memory_space<vmem>>, vector<1x64x32xf32>
    %201 = vector.shape_cast %200 : vector<1x64x32xf32> to vector<64x32xf32>
    %c1_86 = arith.constant 1 : index
    %c0_87 = arith.constant 0 : index
    %c0_88 = arith.constant 0 : index
    %202 = vector.load %arg13[%c1_86, %c0_87, %c0_88] : memref<6x1x32xf32, #tpu.memory_space<vmem>>, vector<1x1x32xf32>
    %203 = vector.shape_cast %202 : vector<1x1x32xf32> to vector<1x32xf32>
    %cst_89 = arith.constant dense<0.000000e+00> : vector<8x32xf32>
    %204 = tpu.matmul %199, %201, %cst_89 {dimension_numbers = #tpu.dot_dimension_numbers<[1], [0], [0], [1], [0, 0, 1, 1], [], []>} : vector<8x64xf32>, vector<64x32xf32>, vector<8x32xf32> -> vector<8x32xf32>
    %205 = vector.broadcast %203 : vector<1x32xf32> to vector<8x32xf32>
    %206 = arith.addf %204, %205 : vector<8x32xf32>
    %207 = arith.addf %173, %190 : vector<8x32xf32>
    %208 = arith.addf %174, %206 : vector<8x32xf32>
    %209 = tpu.concatenate %207, %208 in 0 : vector<8x32xf32>, vector<8x32xf32> -> vector<16x32xf32>
    %c1_90 = arith.constant 1 : index
    %c0_91 = arith.constant 0 : index
    %c0_92 = arith.constant 0 : index
    %210 = vector.load %arg14[%c1_90, %c0_91, %c0_92] : memref<6x16x32xf32, #tpu.memory_space<vmem>>, vector<1x16x32xf32>
    %211 = vector.shape_cast %210 : vector<1x16x32xf32> to vector<16x32xf32>
    %c1_93 = arith.constant 1 : index
    %c0_94 = arith.constant 0 : index
    %c0_95 = arith.constant 0 : index
    %212 = vector.load %arg15[%c1_93, %c0_94, %c0_95] : memref<6x16x32xf32, #tpu.memory_space<vmem>>, vector<1x16x32xf32>
    %213 = vector.shape_cast %212 : vector<1x16x32xf32> to vector<16x32xf32>
    %cst_96 = arith.constant dense<0.000000e+00> : vector<16xf32>
    %214 = vector.multi_reduction <add>, %209, %cst_96 [1] : vector<16x32xf32> to vector<16xf32>
    %215 = vector.shape_cast %214 : vector<16xf32> to vector<16x1xf32>
    %cst_97 = arith.constant 3.200000e+01 : f32
    %216 = vector.broadcast %cst_97 : f32 to vector<16x1xf32>
    %217 = arith.divf %215, %216 : vector<16x1xf32>
    %218 = vector.broadcast %217 : vector<16x1xf32> to vector<16x32xf32>
    %219 = arith.subf %209, %218 : vector<16x32xf32>
    %220 = arith.mulf %219, %219 : vector<16x32xf32>
    %cst_98 = arith.constant dense<0.000000e+00> : vector<16xf32>
    %221 = vector.multi_reduction <add>, %220, %cst_98 [1] : vector<16x32xf32> to vector<16xf32>
    %222 = vector.shape_cast %221 : vector<16xf32> to vector<16x1xf32>
    %cst_99 = arith.constant 3.200000e+01 : f32
    %223 = vector.broadcast %cst_99 : f32 to vector<16x1xf32>
    %224 = arith.divf %222, %223 : vector<16x1xf32>
    %225 = vector.broadcast %217 : vector<16x1xf32> to vector<16x32xf32>
    %226 = arith.subf %209, %225 : vector<16x32xf32>
    %cst_100 = arith.constant 9.99999974E-6 : f32
    %227 = vector.broadcast %cst_100 : f32 to vector<16x1xf32>
    %228 = arith.addf %224, %227 : vector<16x1xf32>
    %229 = math.rsqrt %228 : vector<16x1xf32>
    %230 = vector.broadcast %229 : vector<16x1xf32> to vector<16x32xf32>
    %231 = arith.mulf %226, %230 : vector<16x32xf32>
    %232 = arith.mulf %231, %211 : vector<16x32xf32>
    %233 = arith.addf %232, %213 : vector<16x32xf32>
    %234 = vector.extract_strided_slice %233 {offsets = [0, 0], sizes = [8, 32], strides = [1, 1]} : vector<16x32xf32> to vector<8x32xf32>
    %235 = vector.extract_strided_slice %233 {offsets = [8, 0], sizes = [8, 32], strides = [1, 1]} : vector<16x32xf32> to vector<8x32xf32>
    %c2 = arith.constant 2 : index
    %c0_101 = arith.constant 0 : index
    %c0_102 = arith.constant 0 : index
    %236 = vector.load %arg6[%c2, %c0_101, %c0_102] : memref<6x32x96xf32, #tpu.memory_space<vmem>>, vector<1x32x96xf32>
    %237 = vector.shape_cast %236 : vector<1x32x96xf32> to vector<32x96xf32>
    %c2_103 = arith.constant 2 : index
    %c0_104 = arith.constant 0 : index
    %c0_105 = arith.constant 0 : index
    %238 = vector.load %arg7[%c2_103, %c0_104, %c0_105] : memref<6x1x96xf32, #tpu.memory_space<vmem>>, vector<1x1x96xf32>
    %239 = vector.shape_cast %238 : vector<1x1x96xf32> to vector<1x96xf32>
    %240 = tpu.concatenate %234, %235 in 0 : vector<8x32xf32>, vector<8x32xf32> -> vector<16x32xf32>
    %cst_106 = arith.constant dense<0.000000e+00> : vector<16x96xf32>
    %241 = tpu.matmul %240, %237, %cst_106 {dimension_numbers = #tpu.dot_dimension_numbers<[1], [0], [0], [1], [0, 0, 1, 1], [], []>} : vector<16x32xf32>, vector<32x96xf32>, vector<16x96xf32> -> vector<16x96xf32>
    %242 = vector.broadcast %239 : vector<1x96xf32> to vector<16x96xf32>
    %243 = arith.addf %241, %242 : vector<16x96xf32>
    %244 = vector.extract_strided_slice %243 {offsets = [0, 0], sizes = [8, 32], strides = [1, 1]} : vector<16x96xf32> to vector<8x32xf32>
    %245 = vector.extract_strided_slice %243 {offsets = [8, 32], sizes = [8, 32], strides = [1, 1]} : vector<16x96xf32> to vector<8x32xf32>
    %246 = vector.extract_strided_slice %243 {offsets = [8, 64], sizes = [8, 32], strides = [1, 1]} : vector<16x96xf32> to vector<8x32xf32>
    %247 = vector.extract_strided_slice %244 {offsets = [0, 0], sizes = [8, 8], strides = [1, 1]} : vector<8x32xf32> to vector<8x8xf32>
    %248 = vector.extract_strided_slice %244 {offsets = [0, 8], sizes = [8, 8], strides = [1, 1]} : vector<8x32xf32> to vector<8x8xf32>
    %249 = vector.extract_strided_slice %244 {offsets = [0, 16], sizes = [8, 8], strides = [1, 1]} : vector<8x32xf32> to vector<8x8xf32>
    %250 = vector.extract_strided_slice %244 {offsets = [0, 24], sizes = [8, 8], strides = [1, 1]} : vector<8x32xf32> to vector<8x8xf32>
    %251 = vector.shape_cast %247 : vector<8x8xf32> to vector<1x8x8xf32>
    %252 = vector.shape_cast %248 : vector<8x8xf32> to vector<1x8x8xf32>
    %253 = vector.shape_cast %249 : vector<8x8xf32> to vector<1x8x8xf32>
    %254 = vector.shape_cast %250 : vector<8x8xf32> to vector<1x8x8xf32>
    %255 = tpu.concatenate %251, %252, %253, %254 in 0 : vector<1x8x8xf32>, vector<1x8x8xf32>, vector<1x8x8xf32>, vector<1x8x8xf32> -> vector<4x8x8xf32>
    %256 = vector.extract_strided_slice %245 {offsets = [0, 0], sizes = [8, 8], strides = [1, 1]} : vector<8x32xf32> to vector<8x8xf32>
    %257 = vector.extract_strided_slice %245 {offsets = [0, 8], sizes = [8, 8], strides = [1, 1]} : vector<8x32xf32> to vector<8x8xf32>
    %258 = vector.extract_strided_slice %245 {offsets = [0, 16], sizes = [8, 8], strides = [1, 1]} : vector<8x32xf32> to vector<8x8xf32>
    %259 = vector.extract_strided_slice %245 {offsets = [0, 24], sizes = [8, 8], strides = [1, 1]} : vector<8x32xf32> to vector<8x8xf32>
    %260 = vector.shape_cast %256 : vector<8x8xf32> to vector<1x8x8xf32>
    %261 = vector.shape_cast %257 : vector<8x8xf32> to vector<1x8x8xf32>
    %262 = vector.shape_cast %258 : vector<8x8xf32> to vector<1x8x8xf32>
    %263 = vector.shape_cast %259 : vector<8x8xf32> to vector<1x8x8xf32>
    %264 = tpu.concatenate %260, %261, %262, %263 in 0 : vector<1x8x8xf32>, vector<1x8x8xf32>, vector<1x8x8xf32>, vector<1x8x8xf32> -> vector<4x8x8xf32>
    %265 = vector.extract_strided_slice %246 {offsets = [0, 0], sizes = [8, 8], strides = [1, 1]} : vector<8x32xf32> to vector<8x8xf32>
    %266 = vector.extract_strided_slice %246 {offsets = [0, 8], sizes = [8, 8], strides = [1, 1]} : vector<8x32xf32> to vector<8x8xf32>
    %267 = vector.extract_strided_slice %246 {offsets = [0, 16], sizes = [8, 8], strides = [1, 1]} : vector<8x32xf32> to vector<8x8xf32>
    %268 = vector.extract_strided_slice %246 {offsets = [0, 24], sizes = [8, 8], strides = [1, 1]} : vector<8x32xf32> to vector<8x8xf32>
    %269 = vector.shape_cast %265 : vector<8x8xf32> to vector<1x8x8xf32>
    %270 = vector.shape_cast %266 : vector<8x8xf32> to vector<1x8x8xf32>
    %271 = vector.shape_cast %267 : vector<8x8xf32> to vector<1x8x8xf32>
    %272 = vector.shape_cast %268 : vector<8x8xf32> to vector<1x8x8xf32>
    %273 = tpu.concatenate %269, %270, %271, %272 in 0 : vector<1x8x8xf32>, vector<1x8x8xf32>, vector<1x8x8xf32>, vector<1x8x8xf32> -> vector<4x8x8xf32>
    %cst_107 = arith.constant dense<0.000000e+00> : vector<4x8x8xf32>
    %274 = tpu.matmul %255, %264, %cst_107 {dimension_numbers = #tpu.dot_dimension_numbers<[2], [2], [1], [1], [0, 0, 0, 1, 1, 1], [0], [0]>} : vector<4x8x8xf32>, vector<4x8x8xf32>, vector<4x8x8xf32> -> vector<4x8x8xf32>
    %cst_108 = arith.constant 0.353553385 : f32
    %275 = vector.broadcast %cst_108 : f32 to vector<4x8x8xf32>
    %276 = arith.mulf %274, %275 : vector<4x8x8xf32>
    %cst_109 = arith.constant dense<0xFF800000> : vector<4x8xf32>
    %277 = vector.multi_reduction <maximumf>, %276, %cst_109 [2] : vector<4x8x8xf32> to vector<4x8xf32>
    %278 = vector.shape_cast %277 : vector<4x8xf32> to vector<4x8x1xf32>
    %279 = vector.broadcast %278 : vector<4x8x1xf32> to vector<4x8x8xf32>
    %280 = arith.subf %276, %279 : vector<4x8x8xf32>
    %281 = math.exp %280 : vector<4x8x8xf32>
    %cst_110 = arith.constant dense<0.000000e+00> : vector<4x8xf32>
    %282 = vector.multi_reduction <add>, %281, %cst_110 [2] : vector<4x8x8xf32> to vector<4x8xf32>
    %283 = vector.shape_cast %282 : vector<4x8xf32> to vector<4x8x1xf32>
    %284 = tpu.reciprocal %283 {approx = true} : vector<4x8x1xf32> -> vector<4x8x1xf32>
    %285 = vector.broadcast %284 : vector<4x8x1xf32> to vector<4x8x8xf32>
    %286 = arith.mulf %281, %285 : vector<4x8x8xf32>
    %cst_111 = arith.constant dense<0.000000e+00> : vector<4x8x8xf32>
    %287 = tpu.matmul %286, %273, %cst_111 {dimension_numbers = #tpu.dot_dimension_numbers<[2], [1], [1], [2], [0, 0, 0, 1, 1, 2], [0], [0]>} : vector<4x8x8xf32>, vector<4x8x8xf32>, vector<4x8x8xf32> -> vector<4x8x8xf32>
    %288 = vector.extract_strided_slice %287 {offsets = [0, 0, 0], sizes = [1, 8, 8], strides = [1, 1, 1]} : vector<4x8x8xf32> to vector<1x8x8xf32>
    %289 = vector.shape_cast %288 : vector<1x8x8xf32> to vector<8x8xf32>
    %290 = vector.extract_strided_slice %287 {offsets = [1, 0, 0], sizes = [1, 8, 8], strides = [1, 1, 1]} : vector<4x8x8xf32> to vector<1x8x8xf32>
    %291 = vector.shape_cast %290 : vector<1x8x8xf32> to vector<8x8xf32>
    %292 = vector.extract_strided_slice %287 {offsets = [2, 0, 0], sizes = [1, 8, 8], strides = [1, 1, 1]} : vector<4x8x8xf32> to vector<1x8x8xf32>
    %293 = vector.shape_cast %292 : vector<1x8x8xf32> to vector<8x8xf32>
    %294 = vector.extract_strided_slice %287 {offsets = [3, 0, 0], sizes = [1, 8, 8], strides = [1, 1, 1]} : vector<4x8x8xf32> to vector<1x8x8xf32>
    %295 = vector.shape_cast %294 : vector<1x8x8xf32> to vector<8x8xf32>
    %296 = tpu.concatenate %289, %291, %293, %295 in 1 : vector<8x8xf32>, vector<8x8xf32>, vector<8x8xf32>, vector<8x8xf32> -> vector<8x32xf32>
    %c2_112 = arith.constant 2 : index
    %c0_113 = arith.constant 0 : index
    %c0_114 = arith.constant 0 : index
    %297 = vector.load %arg8[%c2_112, %c0_113, %c0_114] : memref<6x32x32xf32, #tpu.memory_space<vmem>>, vector<1x32x32xf32>
    %298 = vector.shape_cast %297 : vector<1x32x32xf32> to vector<32x32xf32>
    %c2_115 = arith.constant 2 : index
    %c0_116 = arith.constant 0 : index
    %c0_117 = arith.constant 0 : index
    %299 = vector.load %arg9[%c2_115, %c0_116, %c0_117] : memref<6x1x32xf32, #tpu.memory_space<vmem>>, vector<1x1x32xf32>
    %300 = vector.shape_cast %299 : vector<1x1x32xf32> to vector<1x32xf32>
    %cst_118 = arith.constant dense<0.000000e+00> : vector<8x32xf32>
    %301 = tpu.matmul %296, %298, %cst_118 {dimension_numbers = #tpu.dot_dimension_numbers<[1], [0], [0], [1], [0, 0, 1, 1], [], []>} : vector<8x32xf32>, vector<32x32xf32>, vector<8x32xf32> -> vector<8x32xf32>
    %302 = vector.broadcast %300 : vector<1x32xf32> to vector<8x32xf32>
    %303 = arith.addf %301, %302 : vector<8x32xf32>
    %c3 = arith.constant 3 : index
    %c0_119 = arith.constant 0 : index
    %c0_120 = arith.constant 0 : index
    %304 = vector.load %arg6[%c3, %c0_119, %c0_120] : memref<6x32x96xf32, #tpu.memory_space<vmem>>, vector<1x32x96xf32>
    %305 = vector.shape_cast %304 : vector<1x32x96xf32> to vector<32x96xf32>
    %c3_121 = arith.constant 3 : index
    %c0_122 = arith.constant 0 : index
    %c0_123 = arith.constant 0 : index
    %306 = vector.load %arg7[%c3_121, %c0_122, %c0_123] : memref<6x1x96xf32, #tpu.memory_space<vmem>>, vector<1x1x96xf32>
    %307 = vector.shape_cast %306 : vector<1x1x96xf32> to vector<1x96xf32>
    %308 = tpu.concatenate %235, %234 in 0 : vector<8x32xf32>, vector<8x32xf32> -> vector<16x32xf32>
    %cst_124 = arith.constant dense<0.000000e+00> : vector<16x96xf32>
    %309 = tpu.matmul %308, %305, %cst_124 {dimension_numbers = #tpu.dot_dimension_numbers<[1], [0], [0], [1], [0, 0, 1, 1], [], []>} : vector<16x32xf32>, vector<32x96xf32>, vector<16x96xf32> -> vector<16x96xf32>
    %310 = vector.broadcast %307 : vector<1x96xf32> to vector<16x96xf32>
    %311 = arith.addf %309, %310 : vector<16x96xf32>
    %312 = vector.extract_strided_slice %311 {offsets = [0, 0], sizes = [8, 32], strides = [1, 1]} : vector<16x96xf32> to vector<8x32xf32>
    %313 = vector.extract_strided_slice %311 {offsets = [8, 32], sizes = [8, 32], strides = [1, 1]} : vector<16x96xf32> to vector<8x32xf32>
    %314 = vector.extract_strided_slice %311 {offsets = [8, 64], sizes = [8, 32], strides = [1, 1]} : vector<16x96xf32> to vector<8x32xf32>
    %315 = vector.extract_strided_slice %312 {offsets = [0, 0], sizes = [8, 8], strides = [1, 1]} : vector<8x32xf32> to vector<8x8xf32>
    %316 = vector.extract_strided_slice %312 {offsets = [0, 8], sizes = [8, 8], strides = [1, 1]} : vector<8x32xf32> to vector<8x8xf32>
    %317 = vector.extract_strided_slice %312 {offsets = [0, 16], sizes = [8, 8], strides = [1, 1]} : vector<8x32xf32> to vector<8x8xf32>
    %318 = vector.extract_strided_slice %312 {offsets = [0, 24], sizes = [8, 8], strides = [1, 1]} : vector<8x32xf32> to vector<8x8xf32>
    %319 = vector.shape_cast %315 : vector<8x8xf32> to vector<1x8x8xf32>
    %320 = vector.shape_cast %316 : vector<8x8xf32> to vector<1x8x8xf32>
    %321 = vector.shape_cast %317 : vector<8x8xf32> to vector<1x8x8xf32>
    %322 = vector.shape_cast %318 : vector<8x8xf32> to vector<1x8x8xf32>
    %323 = tpu.concatenate %319, %320, %321, %322 in 0 : vector<1x8x8xf32>, vector<1x8x8xf32>, vector<1x8x8xf32>, vector<1x8x8xf32> -> vector<4x8x8xf32>
    %324 = vector.extract_strided_slice %313 {offsets = [0, 0], sizes = [8, 8], strides = [1, 1]} : vector<8x32xf32> to vector<8x8xf32>
    %325 = vector.extract_strided_slice %313 {offsets = [0, 8], sizes = [8, 8], strides = [1, 1]} : vector<8x32xf32> to vector<8x8xf32>
    %326 = vector.extract_strided_slice %313 {offsets = [0, 16], sizes = [8, 8], strides = [1, 1]} : vector<8x32xf32> to vector<8x8xf32>
    %327 = vector.extract_strided_slice %313 {offsets = [0, 24], sizes = [8, 8], strides = [1, 1]} : vector<8x32xf32> to vector<8x8xf32>
    %328 = vector.shape_cast %324 : vector<8x8xf32> to vector<1x8x8xf32>
    %329 = vector.shape_cast %325 : vector<8x8xf32> to vector<1x8x8xf32>
    %330 = vector.shape_cast %326 : vector<8x8xf32> to vector<1x8x8xf32>
    %331 = vector.shape_cast %327 : vector<8x8xf32> to vector<1x8x8xf32>
    %332 = tpu.concatenate %328, %329, %330, %331 in 0 : vector<1x8x8xf32>, vector<1x8x8xf32>, vector<1x8x8xf32>, vector<1x8x8xf32> -> vector<4x8x8xf32>
    %333 = vector.extract_strided_slice %314 {offsets = [0, 0], sizes = [8, 8], strides = [1, 1]} : vector<8x32xf32> to vector<8x8xf32>
    %334 = vector.extract_strided_slice %314 {offsets = [0, 8], sizes = [8, 8], strides = [1, 1]} : vector<8x32xf32> to vector<8x8xf32>
    %335 = vector.extract_strided_slice %314 {offsets = [0, 16], sizes = [8, 8], strides = [1, 1]} : vector<8x32xf32> to vector<8x8xf32>
    %336 = vector.extract_strided_slice %314 {offsets = [0, 24], sizes = [8, 8], strides = [1, 1]} : vector<8x32xf32> to vector<8x8xf32>
    %337 = vector.shape_cast %333 : vector<8x8xf32> to vector<1x8x8xf32>
    %338 = vector.shape_cast %334 : vector<8x8xf32> to vector<1x8x8xf32>
    %339 = vector.shape_cast %335 : vector<8x8xf32> to vector<1x8x8xf32>
    %340 = vector.shape_cast %336 : vector<8x8xf32> to vector<1x8x8xf32>
    %341 = tpu.concatenate %337, %338, %339, %340 in 0 : vector<1x8x8xf32>, vector<1x8x8xf32>, vector<1x8x8xf32>, vector<1x8x8xf32> -> vector<4x8x8xf32>
    %cst_125 = arith.constant dense<0.000000e+00> : vector<4x8x8xf32>
    %342 = tpu.matmul %323, %332, %cst_125 {dimension_numbers = #tpu.dot_dimension_numbers<[2], [2], [1], [1], [0, 0, 0, 1, 1, 1], [0], [0]>} : vector<4x8x8xf32>, vector<4x8x8xf32>, vector<4x8x8xf32> -> vector<4x8x8xf32>
    %cst_126 = arith.constant 0.353553385 : f32
    %343 = vector.broadcast %cst_126 : f32 to vector<4x8x8xf32>
    %344 = arith.mulf %342, %343 : vector<4x8x8xf32>
    %cst_127 = arith.constant dense<0xFF800000> : vector<4x8xf32>
    %345 = vector.multi_reduction <maximumf>, %344, %cst_127 [2] : vector<4x8x8xf32> to vector<4x8xf32>
    %346 = vector.shape_cast %345 : vector<4x8xf32> to vector<4x8x1xf32>
    %347 = vector.broadcast %346 : vector<4x8x1xf32> to vector<4x8x8xf32>
    %348 = arith.subf %344, %347 : vector<4x8x8xf32>
    %349 = math.exp %348 : vector<4x8x8xf32>
    %cst_128 = arith.constant dense<0.000000e+00> : vector<4x8xf32>
    %350 = vector.multi_reduction <add>, %349, %cst_128 [2] : vector<4x8x8xf32> to vector<4x8xf32>
    %351 = vector.shape_cast %350 : vector<4x8xf32> to vector<4x8x1xf32>
    %352 = tpu.reciprocal %351 {approx = true} : vector<4x8x1xf32> -> vector<4x8x1xf32>
    %353 = vector.broadcast %352 : vector<4x8x1xf32> to vector<4x8x8xf32>
    %354 = arith.mulf %349, %353 : vector<4x8x8xf32>
    %cst_129 = arith.constant dense<0.000000e+00> : vector<4x8x8xf32>
    %355 = tpu.matmul %354, %341, %cst_129 {dimension_numbers = #tpu.dot_dimension_numbers<[2], [1], [1], [2], [0, 0, 0, 1, 1, 2], [0], [0]>} : vector<4x8x8xf32>, vector<4x8x8xf32>, vector<4x8x8xf32> -> vector<4x8x8xf32>
    %356 = vector.extract_strided_slice %355 {offsets = [0, 0, 0], sizes = [1, 8, 8], strides = [1, 1, 1]} : vector<4x8x8xf32> to vector<1x8x8xf32>
    %357 = vector.shape_cast %356 : vector<1x8x8xf32> to vector<8x8xf32>
    %358 = vector.extract_strided_slice %355 {offsets = [1, 0, 0], sizes = [1, 8, 8], strides = [1, 1, 1]} : vector<4x8x8xf32> to vector<1x8x8xf32>
    %359 = vector.shape_cast %358 : vector<1x8x8xf32> to vector<8x8xf32>
    %360 = vector.extract_strided_slice %355 {offsets = [2, 0, 0], sizes = [1, 8, 8], strides = [1, 1, 1]} : vector<4x8x8xf32> to vector<1x8x8xf32>
    %361 = vector.shape_cast %360 : vector<1x8x8xf32> to vector<8x8xf32>
    %362 = vector.extract_strided_slice %355 {offsets = [3, 0, 0], sizes = [1, 8, 8], strides = [1, 1, 1]} : vector<4x8x8xf32> to vector<1x8x8xf32>
    %363 = vector.shape_cast %362 : vector<1x8x8xf32> to vector<8x8xf32>
    %364 = tpu.concatenate %357, %359, %361, %363 in 1 : vector<8x8xf32>, vector<8x8xf32>, vector<8x8xf32>, vector<8x8xf32> -> vector<8x32xf32>
    %c3_130 = arith.constant 3 : index
    %c0_131 = arith.constant 0 : index
    %c0_132 = arith.constant 0 : index
    %365 = vector.load %arg8[%c3_130, %c0_131, %c0_132] : memref<6x32x32xf32, #tpu.memory_space<vmem>>, vector<1x32x32xf32>
    %366 = vector.shape_cast %365 : vector<1x32x32xf32> to vector<32x32xf32>
    %c3_133 = arith.constant 3 : index
    %c0_134 = arith.constant 0 : index
    %c0_135 = arith.constant 0 : index
    %367 = vector.load %arg9[%c3_133, %c0_134, %c0_135] : memref<6x1x32xf32, #tpu.memory_space<vmem>>, vector<1x1x32xf32>
    %368 = vector.shape_cast %367 : vector<1x1x32xf32> to vector<1x32xf32>
    %cst_136 = arith.constant dense<0.000000e+00> : vector<8x32xf32>
    %369 = tpu.matmul %364, %366, %cst_136 {dimension_numbers = #tpu.dot_dimension_numbers<[1], [0], [0], [1], [0, 0, 1, 1], [], []>} : vector<8x32xf32>, vector<32x32xf32>, vector<8x32xf32> -> vector<8x32xf32>
    %370 = vector.broadcast %368 : vector<1x32xf32> to vector<8x32xf32>
    %371 = arith.addf %369, %370 : vector<8x32xf32>
    %372 = arith.addf %234, %303 : vector<8x32xf32>
    %373 = arith.addf %235, %371 : vector<8x32xf32>
    %374 = tpu.concatenate %372, %373 in 0 : vector<8x32xf32>, vector<8x32xf32> -> vector<16x32xf32>
    %c2_137 = arith.constant 2 : index
    %c0_138 = arith.constant 0 : index
    %c0_139 = arith.constant 0 : index
    %375 = vector.load %arg14[%c2_137, %c0_138, %c0_139] : memref<6x16x32xf32, #tpu.memory_space<vmem>>, vector<1x16x32xf32>
    %376 = vector.shape_cast %375 : vector<1x16x32xf32> to vector<16x32xf32>
    %c2_140 = arith.constant 2 : index
    %c0_141 = arith.constant 0 : index
    %c0_142 = arith.constant 0 : index
    %377 = vector.load %arg15[%c2_140, %c0_141, %c0_142] : memref<6x16x32xf32, #tpu.memory_space<vmem>>, vector<1x16x32xf32>
    %378 = vector.shape_cast %377 : vector<1x16x32xf32> to vector<16x32xf32>
    %cst_143 = arith.constant dense<0.000000e+00> : vector<16xf32>
    %379 = vector.multi_reduction <add>, %374, %cst_143 [1] : vector<16x32xf32> to vector<16xf32>
    %380 = vector.shape_cast %379 : vector<16xf32> to vector<16x1xf32>
    %cst_144 = arith.constant 3.200000e+01 : f32
    %381 = vector.broadcast %cst_144 : f32 to vector<16x1xf32>
    %382 = arith.divf %380, %381 : vector<16x1xf32>
    %383 = vector.broadcast %382 : vector<16x1xf32> to vector<16x32xf32>
    %384 = arith.subf %374, %383 : vector<16x32xf32>
    %385 = arith.mulf %384, %384 : vector<16x32xf32>
    %cst_145 = arith.constant dense<0.000000e+00> : vector<16xf32>
    %386 = vector.multi_reduction <add>, %385, %cst_145 [1] : vector<16x32xf32> to vector<16xf32>
    %387 = vector.shape_cast %386 : vector<16xf32> to vector<16x1xf32>
    %cst_146 = arith.constant 3.200000e+01 : f32
    %388 = vector.broadcast %cst_146 : f32 to vector<16x1xf32>
    %389 = arith.divf %387, %388 : vector<16x1xf32>
    %390 = vector.broadcast %382 : vector<16x1xf32> to vector<16x32xf32>
    %391 = arith.subf %374, %390 : vector<16x32xf32>
    %cst_147 = arith.constant 9.99999974E-6 : f32
    %392 = vector.broadcast %cst_147 : f32 to vector<16x1xf32>
    %393 = arith.addf %389, %392 : vector<16x1xf32>
    %394 = math.rsqrt %393 : vector<16x1xf32>
    %395 = vector.broadcast %394 : vector<16x1xf32> to vector<16x32xf32>
    %396 = arith.mulf %391, %395 : vector<16x32xf32>
    %397 = arith.mulf %396, %376 : vector<16x32xf32>
    %398 = arith.addf %397, %378 : vector<16x32xf32>
    %399 = vector.extract_strided_slice %398 {offsets = [0, 0], sizes = [8, 32], strides = [1, 1]} : vector<16x32xf32> to vector<8x32xf32>
    %400 = vector.extract_strided_slice %398 {offsets = [8, 0], sizes = [8, 32], strides = [1, 1]} : vector<16x32xf32> to vector<8x32xf32>
    %c2_148 = arith.constant 2 : index
    %c0_149 = arith.constant 0 : index
    %c0_150 = arith.constant 0 : index
    %401 = vector.load %arg10[%c2_148, %c0_149, %c0_150] : memref<6x32x64xf32, #tpu.memory_space<vmem>>, vector<1x32x64xf32>
    %402 = vector.shape_cast %401 : vector<1x32x64xf32> to vector<32x64xf32>
    %c2_151 = arith.constant 2 : index
    %c0_152 = arith.constant 0 : index
    %c0_153 = arith.constant 0 : index
    %403 = vector.load %arg11[%c2_151, %c0_152, %c0_153] : memref<6x1x64xf32, #tpu.memory_space<vmem>>, vector<1x1x64xf32>
    %404 = vector.shape_cast %403 : vector<1x1x64xf32> to vector<1x64xf32>
    %cst_154 = arith.constant dense<0.000000e+00> : vector<8x64xf32>
    %405 = tpu.matmul %399, %402, %cst_154 {dimension_numbers = #tpu.dot_dimension_numbers<[1], [0], [0], [1], [0, 0, 1, 1], [], []>} : vector<8x32xf32>, vector<32x64xf32>, vector<8x64xf32> -> vector<8x64xf32>
    %406 = vector.broadcast %404 : vector<1x64xf32> to vector<8x64xf32>
    %407 = arith.addf %405, %406 : vector<8x64xf32>
    %cst_155 = arith.constant 0.000000e+00 : f32
    %408 = vector.broadcast %cst_155 : f32 to vector<8x64xf32>
    %409 = arith.maximumf %407, %408 : vector<8x64xf32>
    %c2_156 = arith.constant 2 : index
    %c0_157 = arith.constant 0 : index
    %c0_158 = arith.constant 0 : index
    %410 = vector.load %arg12[%c2_156, %c0_157, %c0_158] : memref<6x64x32xf32, #tpu.memory_space<vmem>>, vector<1x64x32xf32>
    %411 = vector.shape_cast %410 : vector<1x64x32xf32> to vector<64x32xf32>
    %c2_159 = arith.constant 2 : index
    %c0_160 = arith.constant 0 : index
    %c0_161 = arith.constant 0 : index
    %412 = vector.load %arg13[%c2_159, %c0_160, %c0_161] : memref<6x1x32xf32, #tpu.memory_space<vmem>>, vector<1x1x32xf32>
    %413 = vector.shape_cast %412 : vector<1x1x32xf32> to vector<1x32xf32>
    %cst_162 = arith.constant dense<0.000000e+00> : vector<8x32xf32>
    %414 = tpu.matmul %409, %411, %cst_162 {dimension_numbers = #tpu.dot_dimension_numbers<[1], [0], [0], [1], [0, 0, 1, 1], [], []>} : vector<8x64xf32>, vector<64x32xf32>, vector<8x32xf32> -> vector<8x32xf32>
    %415 = vector.broadcast %413 : vector<1x32xf32> to vector<8x32xf32>
    %416 = arith.addf %414, %415 : vector<8x32xf32>
    %c3_163 = arith.constant 3 : index
    %c0_164 = arith.constant 0 : index
    %c0_165 = arith.constant 0 : index
    %417 = vector.load %arg10[%c3_163, %c0_164, %c0_165] : memref<6x32x64xf32, #tpu.memory_space<vmem>>, vector<1x32x64xf32>
    %418 = vector.shape_cast %417 : vector<1x32x64xf32> to vector<32x64xf32>
    %c3_166 = arith.constant 3 : index
    %c0_167 = arith.constant 0 : index
    %c0_168 = arith.constant 0 : index
    %419 = vector.load %arg11[%c3_166, %c0_167, %c0_168] : memref<6x1x64xf32, #tpu.memory_space<vmem>>, vector<1x1x64xf32>
    %420 = vector.shape_cast %419 : vector<1x1x64xf32> to vector<1x64xf32>
    %cst_169 = arith.constant dense<0.000000e+00> : vector<8x64xf32>
    %421 = tpu.matmul %400, %418, %cst_169 {dimension_numbers = #tpu.dot_dimension_numbers<[1], [0], [0], [1], [0, 0, 1, 1], [], []>} : vector<8x32xf32>, vector<32x64xf32>, vector<8x64xf32> -> vector<8x64xf32>
    %422 = vector.broadcast %420 : vector<1x64xf32> to vector<8x64xf32>
    %423 = arith.addf %421, %422 : vector<8x64xf32>
    %cst_170 = arith.constant 0.000000e+00 : f32
    %424 = vector.broadcast %cst_170 : f32 to vector<8x64xf32>
    %425 = arith.maximumf %423, %424 : vector<8x64xf32>
    %c3_171 = arith.constant 3 : index
    %c0_172 = arith.constant 0 : index
    %c0_173 = arith.constant 0 : index
    %426 = vector.load %arg12[%c3_171, %c0_172, %c0_173] : memref<6x64x32xf32, #tpu.memory_space<vmem>>, vector<1x64x32xf32>
    %427 = vector.shape_cast %426 : vector<1x64x32xf32> to vector<64x32xf32>
    %c3_174 = arith.constant 3 : index
    %c0_175 = arith.constant 0 : index
    %c0_176 = arith.constant 0 : index
    %428 = vector.load %arg13[%c3_174, %c0_175, %c0_176] : memref<6x1x32xf32, #tpu.memory_space<vmem>>, vector<1x1x32xf32>
    %429 = vector.shape_cast %428 : vector<1x1x32xf32> to vector<1x32xf32>
    %cst_177 = arith.constant dense<0.000000e+00> : vector<8x32xf32>
    %430 = tpu.matmul %425, %427, %cst_177 {dimension_numbers = #tpu.dot_dimension_numbers<[1], [0], [0], [1], [0, 0, 1, 1], [], []>} : vector<8x64xf32>, vector<64x32xf32>, vector<8x32xf32> -> vector<8x32xf32>
    %431 = vector.broadcast %429 : vector<1x32xf32> to vector<8x32xf32>
    %432 = arith.addf %430, %431 : vector<8x32xf32>
    %433 = arith.addf %399, %416 : vector<8x32xf32>
    %434 = arith.addf %400, %432 : vector<8x32xf32>
    %435 = tpu.concatenate %433, %434 in 0 : vector<8x32xf32>, vector<8x32xf32> -> vector<16x32xf32>
    %c3_178 = arith.constant 3 : index
    %c0_179 = arith.constant 0 : index
    %c0_180 = arith.constant 0 : index
    %436 = vector.load %arg14[%c3_178, %c0_179, %c0_180] : memref<6x16x32xf32, #tpu.memory_space<vmem>>, vector<1x16x32xf32>
    %437 = vector.shape_cast %436 : vector<1x16x32xf32> to vector<16x32xf32>
    %c3_181 = arith.constant 3 : index
    %c0_182 = arith.constant 0 : index
    %c0_183 = arith.constant 0 : index
    %438 = vector.load %arg15[%c3_181, %c0_182, %c0_183] : memref<6x16x32xf32, #tpu.memory_space<vmem>>, vector<1x16x32xf32>
    %439 = vector.shape_cast %438 : vector<1x16x32xf32> to vector<16x32xf32>
    %cst_184 = arith.constant dense<0.000000e+00> : vector<16xf32>
    %440 = vector.multi_reduction <add>, %435, %cst_184 [1] : vector<16x32xf32> to vector<16xf32>
    %441 = vector.shape_cast %440 : vector<16xf32> to vector<16x1xf32>
    %cst_185 = arith.constant 3.200000e+01 : f32
    %442 = vector.broadcast %cst_185 : f32 to vector<16x1xf32>
    %443 = arith.divf %441, %442 : vector<16x1xf32>
    %444 = vector.broadcast %443 : vector<16x1xf32> to vector<16x32xf32>
    %445 = arith.subf %435, %444 : vector<16x32xf32>
    %446 = arith.mulf %445, %445 : vector<16x32xf32>
    %cst_186 = arith.constant dense<0.000000e+00> : vector<16xf32>
    %447 = vector.multi_reduction <add>, %446, %cst_186 [1] : vector<16x32xf32> to vector<16xf32>
    %448 = vector.shape_cast %447 : vector<16xf32> to vector<16x1xf32>
    %cst_187 = arith.constant 3.200000e+01 : f32
    %449 = vector.broadcast %cst_187 : f32 to vector<16x1xf32>
    %450 = arith.divf %448, %449 : vector<16x1xf32>
    %451 = vector.broadcast %443 : vector<16x1xf32> to vector<16x32xf32>
    %452 = arith.subf %435, %451 : vector<16x32xf32>
    %cst_188 = arith.constant 9.99999974E-6 : f32
    %453 = vector.broadcast %cst_188 : f32 to vector<16x1xf32>
    %454 = arith.addf %450, %453 : vector<16x1xf32>
    %455 = math.rsqrt %454 : vector<16x1xf32>
    %456 = vector.broadcast %455 : vector<16x1xf32> to vector<16x32xf32>
    %457 = arith.mulf %452, %456 : vector<16x32xf32>
    %458 = arith.mulf %457, %437 : vector<16x32xf32>
    %459 = arith.addf %458, %439 : vector<16x32xf32>
    %460 = vector.extract_strided_slice %459 {offsets = [0, 0], sizes = [8, 32], strides = [1, 1]} : vector<16x32xf32> to vector<8x32xf32>
    %461 = vector.extract_strided_slice %459 {offsets = [8, 0], sizes = [8, 32], strides = [1, 1]} : vector<16x32xf32> to vector<8x32xf32>
    %c4 = arith.constant 4 : index
    %c0_189 = arith.constant 0 : index
    %c0_190 = arith.constant 0 : index
    %462 = vector.load %arg6[%c4, %c0_189, %c0_190] : memref<6x32x96xf32, #tpu.memory_space<vmem>>, vector<1x32x96xf32>
    %463 = vector.shape_cast %462 : vector<1x32x96xf32> to vector<32x96xf32>
    %c4_191 = arith.constant 4 : index
    %c0_192 = arith.constant 0 : index
    %c0_193 = arith.constant 0 : index
    %464 = vector.load %arg7[%c4_191, %c0_192, %c0_193] : memref<6x1x96xf32, #tpu.memory_space<vmem>>, vector<1x1x96xf32>
    %465 = vector.shape_cast %464 : vector<1x1x96xf32> to vector<1x96xf32>
    %466 = tpu.concatenate %460, %461 in 0 : vector<8x32xf32>, vector<8x32xf32> -> vector<16x32xf32>
    %cst_194 = arith.constant dense<0.000000e+00> : vector<16x96xf32>
    %467 = tpu.matmul %466, %463, %cst_194 {dimension_numbers = #tpu.dot_dimension_numbers<[1], [0], [0], [1], [0, 0, 1, 1], [], []>} : vector<16x32xf32>, vector<32x96xf32>, vector<16x96xf32> -> vector<16x96xf32>
    %468 = vector.broadcast %465 : vector<1x96xf32> to vector<16x96xf32>
    %469 = arith.addf %467, %468 : vector<16x96xf32>
    %470 = vector.extract_strided_slice %469 {offsets = [0, 0], sizes = [8, 32], strides = [1, 1]} : vector<16x96xf32> to vector<8x32xf32>
    %471 = vector.extract_strided_slice %469 {offsets = [8, 32], sizes = [8, 32], strides = [1, 1]} : vector<16x96xf32> to vector<8x32xf32>
    %472 = vector.extract_strided_slice %469 {offsets = [8, 64], sizes = [8, 32], strides = [1, 1]} : vector<16x96xf32> to vector<8x32xf32>
    %473 = vector.extract_strided_slice %470 {offsets = [0, 0], sizes = [8, 8], strides = [1, 1]} : vector<8x32xf32> to vector<8x8xf32>
    %474 = vector.extract_strided_slice %470 {offsets = [0, 8], sizes = [8, 8], strides = [1, 1]} : vector<8x32xf32> to vector<8x8xf32>
    %475 = vector.extract_strided_slice %470 {offsets = [0, 16], sizes = [8, 8], strides = [1, 1]} : vector<8x32xf32> to vector<8x8xf32>
    %476 = vector.extract_strided_slice %470 {offsets = [0, 24], sizes = [8, 8], strides = [1, 1]} : vector<8x32xf32> to vector<8x8xf32>
    %477 = vector.shape_cast %473 : vector<8x8xf32> to vector<1x8x8xf32>
    %478 = vector.shape_cast %474 : vector<8x8xf32> to vector<1x8x8xf32>
    %479 = vector.shape_cast %475 : vector<8x8xf32> to vector<1x8x8xf32>
    %480 = vector.shape_cast %476 : vector<8x8xf32> to vector<1x8x8xf32>
    %481 = tpu.concatenate %477, %478, %479, %480 in 0 : vector<1x8x8xf32>, vector<1x8x8xf32>, vector<1x8x8xf32>, vector<1x8x8xf32> -> vector<4x8x8xf32>
    %482 = vector.extract_strided_slice %471 {offsets = [0, 0], sizes = [8, 8], strides = [1, 1]} : vector<8x32xf32> to vector<8x8xf32>
    %483 = vector.extract_strided_slice %471 {offsets = [0, 8], sizes = [8, 8], strides = [1, 1]} : vector<8x32xf32> to vector<8x8xf32>
    %484 = vector.extract_strided_slice %471 {offsets = [0, 16], sizes = [8, 8], strides = [1, 1]} : vector<8x32xf32> to vector<8x8xf32>
    %485 = vector.extract_strided_slice %471 {offsets = [0, 24], sizes = [8, 8], strides = [1, 1]} : vector<8x32xf32> to vector<8x8xf32>
    %486 = vector.shape_cast %482 : vector<8x8xf32> to vector<1x8x8xf32>
    %487 = vector.shape_cast %483 : vector<8x8xf32> to vector<1x8x8xf32>
    %488 = vector.shape_cast %484 : vector<8x8xf32> to vector<1x8x8xf32>
    %489 = vector.shape_cast %485 : vector<8x8xf32> to vector<1x8x8xf32>
    %490 = tpu.concatenate %486, %487, %488, %489 in 0 : vector<1x8x8xf32>, vector<1x8x8xf32>, vector<1x8x8xf32>, vector<1x8x8xf32> -> vector<4x8x8xf32>
    %491 = vector.extract_strided_slice %472 {offsets = [0, 0], sizes = [8, 8], strides = [1, 1]} : vector<8x32xf32> to vector<8x8xf32>
    %492 = vector.extract_strided_slice %472 {offsets = [0, 8], sizes = [8, 8], strides = [1, 1]} : vector<8x32xf32> to vector<8x8xf32>
    %493 = vector.extract_strided_slice %472 {offsets = [0, 16], sizes = [8, 8], strides = [1, 1]} : vector<8x32xf32> to vector<8x8xf32>
    %494 = vector.extract_strided_slice %472 {offsets = [0, 24], sizes = [8, 8], strides = [1, 1]} : vector<8x32xf32> to vector<8x8xf32>
    %495 = vector.shape_cast %491 : vector<8x8xf32> to vector<1x8x8xf32>
    %496 = vector.shape_cast %492 : vector<8x8xf32> to vector<1x8x8xf32>
    %497 = vector.shape_cast %493 : vector<8x8xf32> to vector<1x8x8xf32>
    %498 = vector.shape_cast %494 : vector<8x8xf32> to vector<1x8x8xf32>
    %499 = tpu.concatenate %495, %496, %497, %498 in 0 : vector<1x8x8xf32>, vector<1x8x8xf32>, vector<1x8x8xf32>, vector<1x8x8xf32> -> vector<4x8x8xf32>
    %cst_195 = arith.constant dense<0.000000e+00> : vector<4x8x8xf32>
    %500 = tpu.matmul %481, %490, %cst_195 {dimension_numbers = #tpu.dot_dimension_numbers<[2], [2], [1], [1], [0, 0, 0, 1, 1, 1], [0], [0]>} : vector<4x8x8xf32>, vector<4x8x8xf32>, vector<4x8x8xf32> -> vector<4x8x8xf32>
    %cst_196 = arith.constant 0.353553385 : f32
    %501 = vector.broadcast %cst_196 : f32 to vector<4x8x8xf32>
    %502 = arith.mulf %500, %501 : vector<4x8x8xf32>
    %cst_197 = arith.constant dense<0xFF800000> : vector<4x8xf32>
    %503 = vector.multi_reduction <maximumf>, %502, %cst_197 [2] : vector<4x8x8xf32> to vector<4x8xf32>
    %504 = vector.shape_cast %503 : vector<4x8xf32> to vector<4x8x1xf32>
    %505 = vector.broadcast %504 : vector<4x8x1xf32> to vector<4x8x8xf32>
    %506 = arith.subf %502, %505 : vector<4x8x8xf32>
    %507 = math.exp %506 : vector<4x8x8xf32>
    %cst_198 = arith.constant dense<0.000000e+00> : vector<4x8xf32>
    %508 = vector.multi_reduction <add>, %507, %cst_198 [2] : vector<4x8x8xf32> to vector<4x8xf32>
    %509 = vector.shape_cast %508 : vector<4x8xf32> to vector<4x8x1xf32>
    %510 = tpu.reciprocal %509 {approx = true} : vector<4x8x1xf32> -> vector<4x8x1xf32>
    %511 = vector.broadcast %510 : vector<4x8x1xf32> to vector<4x8x8xf32>
    %512 = arith.mulf %507, %511 : vector<4x8x8xf32>
    %cst_199 = arith.constant dense<0.000000e+00> : vector<4x8x8xf32>
    %513 = tpu.matmul %512, %499, %cst_199 {dimension_numbers = #tpu.dot_dimension_numbers<[2], [1], [1], [2], [0, 0, 0, 1, 1, 2], [0], [0]>} : vector<4x8x8xf32>, vector<4x8x8xf32>, vector<4x8x8xf32> -> vector<4x8x8xf32>
    %514 = vector.extract_strided_slice %513 {offsets = [0, 0, 0], sizes = [1, 8, 8], strides = [1, 1, 1]} : vector<4x8x8xf32> to vector<1x8x8xf32>
    %515 = vector.shape_cast %514 : vector<1x8x8xf32> to vector<8x8xf32>
    %516 = vector.extract_strided_slice %513 {offsets = [1, 0, 0], sizes = [1, 8, 8], strides = [1, 1, 1]} : vector<4x8x8xf32> to vector<1x8x8xf32>
    %517 = vector.shape_cast %516 : vector<1x8x8xf32> to vector<8x8xf32>
    %518 = vector.extract_strided_slice %513 {offsets = [2, 0, 0], sizes = [1, 8, 8], strides = [1, 1, 1]} : vector<4x8x8xf32> to vector<1x8x8xf32>
    %519 = vector.shape_cast %518 : vector<1x8x8xf32> to vector<8x8xf32>
    %520 = vector.extract_strided_slice %513 {offsets = [3, 0, 0], sizes = [1, 8, 8], strides = [1, 1, 1]} : vector<4x8x8xf32> to vector<1x8x8xf32>
    %521 = vector.shape_cast %520 : vector<1x8x8xf32> to vector<8x8xf32>
    %522 = tpu.concatenate %515, %517, %519, %521 in 1 : vector<8x8xf32>, vector<8x8xf32>, vector<8x8xf32>, vector<8x8xf32> -> vector<8x32xf32>
    %c4_200 = arith.constant 4 : index
    %c0_201 = arith.constant 0 : index
    %c0_202 = arith.constant 0 : index
    %523 = vector.load %arg8[%c4_200, %c0_201, %c0_202] : memref<6x32x32xf32, #tpu.memory_space<vmem>>, vector<1x32x32xf32>
    %524 = vector.shape_cast %523 : vector<1x32x32xf32> to vector<32x32xf32>
    %c4_203 = arith.constant 4 : index
    %c0_204 = arith.constant 0 : index
    %c0_205 = arith.constant 0 : index
    %525 = vector.load %arg9[%c4_203, %c0_204, %c0_205] : memref<6x1x32xf32, #tpu.memory_space<vmem>>, vector<1x1x32xf32>
    %526 = vector.shape_cast %525 : vector<1x1x32xf32> to vector<1x32xf32>
    %cst_206 = arith.constant dense<0.000000e+00> : vector<8x32xf32>
    %527 = tpu.matmul %522, %524, %cst_206 {dimension_numbers = #tpu.dot_dimension_numbers<[1], [0], [0], [1], [0, 0, 1, 1], [], []>} : vector<8x32xf32>, vector<32x32xf32>, vector<8x32xf32> -> vector<8x32xf32>
    %528 = vector.broadcast %526 : vector<1x32xf32> to vector<8x32xf32>
    %529 = arith.addf %527, %528 : vector<8x32xf32>
    %c5 = arith.constant 5 : index
    %c0_207 = arith.constant 0 : index
    %c0_208 = arith.constant 0 : index
    %530 = vector.load %arg6[%c5, %c0_207, %c0_208] : memref<6x32x96xf32, #tpu.memory_space<vmem>>, vector<1x32x96xf32>
    %531 = vector.shape_cast %530 : vector<1x32x96xf32> to vector<32x96xf32>
    %c5_209 = arith.constant 5 : index
    %c0_210 = arith.constant 0 : index
    %c0_211 = arith.constant 0 : index
    %532 = vector.load %arg7[%c5_209, %c0_210, %c0_211] : memref<6x1x96xf32, #tpu.memory_space<vmem>>, vector<1x1x96xf32>
    %533 = vector.shape_cast %532 : vector<1x1x96xf32> to vector<1x96xf32>
    %534 = tpu.concatenate %461, %460 in 0 : vector<8x32xf32>, vector<8x32xf32> -> vector<16x32xf32>
    %cst_212 = arith.constant dense<0.000000e+00> : vector<16x96xf32>
    %535 = tpu.matmul %534, %531, %cst_212 {dimension_numbers = #tpu.dot_dimension_numbers<[1], [0], [0], [1], [0, 0, 1, 1], [], []>} : vector<16x32xf32>, vector<32x96xf32>, vector<16x96xf32> -> vector<16x96xf32>
    %536 = vector.broadcast %533 : vector<1x96xf32> to vector<16x96xf32>
    %537 = arith.addf %535, %536 : vector<16x96xf32>
    %538 = vector.extract_strided_slice %537 {offsets = [0, 0], sizes = [8, 32], strides = [1, 1]} : vector<16x96xf32> to vector<8x32xf32>
    %539 = vector.extract_strided_slice %537 {offsets = [8, 32], sizes = [8, 32], strides = [1, 1]} : vector<16x96xf32> to vector<8x32xf32>
    %540 = vector.extract_strided_slice %537 {offsets = [8, 64], sizes = [8, 32], strides = [1, 1]} : vector<16x96xf32> to vector<8x32xf32>
    %541 = vector.extract_strided_slice %538 {offsets = [0, 0], sizes = [8, 8], strides = [1, 1]} : vector<8x32xf32> to vector<8x8xf32>
    %542 = vector.extract_strided_slice %538 {offsets = [0, 8], sizes = [8, 8], strides = [1, 1]} : vector<8x32xf32> to vector<8x8xf32>
    %543 = vector.extract_strided_slice %538 {offsets = [0, 16], sizes = [8, 8], strides = [1, 1]} : vector<8x32xf32> to vector<8x8xf32>
    %544 = vector.extract_strided_slice %538 {offsets = [0, 24], sizes = [8, 8], strides = [1, 1]} : vector<8x32xf32> to vector<8x8xf32>
    %545 = vector.shape_cast %541 : vector<8x8xf32> to vector<1x8x8xf32>
    %546 = vector.shape_cast %542 : vector<8x8xf32> to vector<1x8x8xf32>
    %547 = vector.shape_cast %543 : vector<8x8xf32> to vector<1x8x8xf32>
    %548 = vector.shape_cast %544 : vector<8x8xf32> to vector<1x8x8xf32>
    %549 = tpu.concatenate %545, %546, %547, %548 in 0 : vector<1x8x8xf32>, vector<1x8x8xf32>, vector<1x8x8xf32>, vector<1x8x8xf32> -> vector<4x8x8xf32>
    %550 = vector.extract_strided_slice %539 {offsets = [0, 0], sizes = [8, 8], strides = [1, 1]} : vector<8x32xf32> to vector<8x8xf32>
    %551 = vector.extract_strided_slice %539 {offsets = [0, 8], sizes = [8, 8], strides = [1, 1]} : vector<8x32xf32> to vector<8x8xf32>
    %552 = vector.extract_strided_slice %539 {offsets = [0, 16], sizes = [8, 8], strides = [1, 1]} : vector<8x32xf32> to vector<8x8xf32>
    %553 = vector.extract_strided_slice %539 {offsets = [0, 24], sizes = [8, 8], strides = [1, 1]} : vector<8x32xf32> to vector<8x8xf32>
    %554 = vector.shape_cast %550 : vector<8x8xf32> to vector<1x8x8xf32>
    %555 = vector.shape_cast %551 : vector<8x8xf32> to vector<1x8x8xf32>
    %556 = vector.shape_cast %552 : vector<8x8xf32> to vector<1x8x8xf32>
    %557 = vector.shape_cast %553 : vector<8x8xf32> to vector<1x8x8xf32>
    %558 = tpu.concatenate %554, %555, %556, %557 in 0 : vector<1x8x8xf32>, vector<1x8x8xf32>, vector<1x8x8xf32>, vector<1x8x8xf32> -> vector<4x8x8xf32>
    %559 = vector.extract_strided_slice %540 {offsets = [0, 0], sizes = [8, 8], strides = [1, 1]} : vector<8x32xf32> to vector<8x8xf32>
    %560 = vector.extract_strided_slice %540 {offsets = [0, 8], sizes = [8, 8], strides = [1, 1]} : vector<8x32xf32> to vector<8x8xf32>
    %561 = vector.extract_strided_slice %540 {offsets = [0, 16], sizes = [8, 8], strides = [1, 1]} : vector<8x32xf32> to vector<8x8xf32>
    %562 = vector.extract_strided_slice %540 {offsets = [0, 24], sizes = [8, 8], strides = [1, 1]} : vector<8x32xf32> to vector<8x8xf32>
    %563 = vector.shape_cast %559 : vector<8x8xf32> to vector<1x8x8xf32>
    %564 = vector.shape_cast %560 : vector<8x8xf32> to vector<1x8x8xf32>
    %565 = vector.shape_cast %561 : vector<8x8xf32> to vector<1x8x8xf32>
    %566 = vector.shape_cast %562 : vector<8x8xf32> to vector<1x8x8xf32>
    %567 = tpu.concatenate %563, %564, %565, %566 in 0 : vector<1x8x8xf32>, vector<1x8x8xf32>, vector<1x8x8xf32>, vector<1x8x8xf32> -> vector<4x8x8xf32>
    %cst_213 = arith.constant dense<0.000000e+00> : vector<4x8x8xf32>
    %568 = tpu.matmul %549, %558, %cst_213 {dimension_numbers = #tpu.dot_dimension_numbers<[2], [2], [1], [1], [0, 0, 0, 1, 1, 1], [0], [0]>} : vector<4x8x8xf32>, vector<4x8x8xf32>, vector<4x8x8xf32> -> vector<4x8x8xf32>
    %cst_214 = arith.constant 0.353553385 : f32
    %569 = vector.broadcast %cst_214 : f32 to vector<4x8x8xf32>
    %570 = arith.mulf %568, %569 : vector<4x8x8xf32>
    %cst_215 = arith.constant dense<0xFF800000> : vector<4x8xf32>
    %571 = vector.multi_reduction <maximumf>, %570, %cst_215 [2] : vector<4x8x8xf32> to vector<4x8xf32>
    %572 = vector.shape_cast %571 : vector<4x8xf32> to vector<4x8x1xf32>
    %573 = vector.broadcast %572 : vector<4x8x1xf32> to vector<4x8x8xf32>
    %574 = arith.subf %570, %573 : vector<4x8x8xf32>
    %575 = math.exp %574 : vector<4x8x8xf32>
    %cst_216 = arith.constant dense<0.000000e+00> : vector<4x8xf32>
    %576 = vector.multi_reduction <add>, %575, %cst_216 [2] : vector<4x8x8xf32> to vector<4x8xf32>
    %577 = vector.shape_cast %576 : vector<4x8xf32> to vector<4x8x1xf32>
    %578 = tpu.reciprocal %577 {approx = true} : vector<4x8x1xf32> -> vector<4x8x1xf32>
    %579 = vector.broadcast %578 : vector<4x8x1xf32> to vector<4x8x8xf32>
    %580 = arith.mulf %575, %579 : vector<4x8x8xf32>
    %cst_217 = arith.constant dense<0.000000e+00> : vector<4x8x8xf32>
    %581 = tpu.matmul %580, %567, %cst_217 {dimension_numbers = #tpu.dot_dimension_numbers<[2], [1], [1], [2], [0, 0, 0, 1, 1, 2], [0], [0]>} : vector<4x8x8xf32>, vector<4x8x8xf32>, vector<4x8x8xf32> -> vector<4x8x8xf32>
    %582 = vector.extract_strided_slice %581 {offsets = [0, 0, 0], sizes = [1, 8, 8], strides = [1, 1, 1]} : vector<4x8x8xf32> to vector<1x8x8xf32>
    %583 = vector.shape_cast %582 : vector<1x8x8xf32> to vector<8x8xf32>
    %584 = vector.extract_strided_slice %581 {offsets = [1, 0, 0], sizes = [1, 8, 8], strides = [1, 1, 1]} : vector<4x8x8xf32> to vector<1x8x8xf32>
    %585 = vector.shape_cast %584 : vector<1x8x8xf32> to vector<8x8xf32>
    %586 = vector.extract_strided_slice %581 {offsets = [2, 0, 0], sizes = [1, 8, 8], strides = [1, 1, 1]} : vector<4x8x8xf32> to vector<1x8x8xf32>
    %587 = vector.shape_cast %586 : vector<1x8x8xf32> to vector<8x8xf32>
    %588 = vector.extract_strided_slice %581 {offsets = [3, 0, 0], sizes = [1, 8, 8], strides = [1, 1, 1]} : vector<4x8x8xf32> to vector<1x8x8xf32>
    %589 = vector.shape_cast %588 : vector<1x8x8xf32> to vector<8x8xf32>
    %590 = tpu.concatenate %583, %585, %587, %589 in 1 : vector<8x8xf32>, vector<8x8xf32>, vector<8x8xf32>, vector<8x8xf32> -> vector<8x32xf32>
    %c5_218 = arith.constant 5 : index
    %c0_219 = arith.constant 0 : index
    %c0_220 = arith.constant 0 : index
    %591 = vector.load %arg8[%c5_218, %c0_219, %c0_220] : memref<6x32x32xf32, #tpu.memory_space<vmem>>, vector<1x32x32xf32>
    %592 = vector.shape_cast %591 : vector<1x32x32xf32> to vector<32x32xf32>
    %c5_221 = arith.constant 5 : index
    %c0_222 = arith.constant 0 : index
    %c0_223 = arith.constant 0 : index
    %593 = vector.load %arg9[%c5_221, %c0_222, %c0_223] : memref<6x1x32xf32, #tpu.memory_space<vmem>>, vector<1x1x32xf32>
    %594 = vector.shape_cast %593 : vector<1x1x32xf32> to vector<1x32xf32>
    %cst_224 = arith.constant dense<0.000000e+00> : vector<8x32xf32>
    %595 = tpu.matmul %590, %592, %cst_224 {dimension_numbers = #tpu.dot_dimension_numbers<[1], [0], [0], [1], [0, 0, 1, 1], [], []>} : vector<8x32xf32>, vector<32x32xf32>, vector<8x32xf32> -> vector<8x32xf32>
    %596 = vector.broadcast %594 : vector<1x32xf32> to vector<8x32xf32>
    %597 = arith.addf %595, %596 : vector<8x32xf32>
    %598 = arith.addf %460, %529 : vector<8x32xf32>
    %599 = arith.addf %461, %597 : vector<8x32xf32>
    %600 = tpu.concatenate %598, %599 in 0 : vector<8x32xf32>, vector<8x32xf32> -> vector<16x32xf32>
    %c4_225 = arith.constant 4 : index
    %c0_226 = arith.constant 0 : index
    %c0_227 = arith.constant 0 : index
    %601 = vector.load %arg14[%c4_225, %c0_226, %c0_227] : memref<6x16x32xf32, #tpu.memory_space<vmem>>, vector<1x16x32xf32>
    %602 = vector.shape_cast %601 : vector<1x16x32xf32> to vector<16x32xf32>
    %c4_228 = arith.constant 4 : index
    %c0_229 = arith.constant 0 : index
    %c0_230 = arith.constant 0 : index
    %603 = vector.load %arg15[%c4_228, %c0_229, %c0_230] : memref<6x16x32xf32, #tpu.memory_space<vmem>>, vector<1x16x32xf32>
    %604 = vector.shape_cast %603 : vector<1x16x32xf32> to vector<16x32xf32>
    %cst_231 = arith.constant dense<0.000000e+00> : vector<16xf32>
    %605 = vector.multi_reduction <add>, %600, %cst_231 [1] : vector<16x32xf32> to vector<16xf32>
    %606 = vector.shape_cast %605 : vector<16xf32> to vector<16x1xf32>
    %cst_232 = arith.constant 3.200000e+01 : f32
    %607 = vector.broadcast %cst_232 : f32 to vector<16x1xf32>
    %608 = arith.divf %606, %607 : vector<16x1xf32>
    %609 = vector.broadcast %608 : vector<16x1xf32> to vector<16x32xf32>
    %610 = arith.subf %600, %609 : vector<16x32xf32>
    %611 = arith.mulf %610, %610 : vector<16x32xf32>
    %cst_233 = arith.constant dense<0.000000e+00> : vector<16xf32>
    %612 = vector.multi_reduction <add>, %611, %cst_233 [1] : vector<16x32xf32> to vector<16xf32>
    %613 = vector.shape_cast %612 : vector<16xf32> to vector<16x1xf32>
    %cst_234 = arith.constant 3.200000e+01 : f32
    %614 = vector.broadcast %cst_234 : f32 to vector<16x1xf32>
    %615 = arith.divf %613, %614 : vector<16x1xf32>
    %616 = vector.broadcast %608 : vector<16x1xf32> to vector<16x32xf32>
    %617 = arith.subf %600, %616 : vector<16x32xf32>
    %cst_235 = arith.constant 9.99999974E-6 : f32
    %618 = vector.broadcast %cst_235 : f32 to vector<16x1xf32>
    %619 = arith.addf %615, %618 : vector<16x1xf32>
    %620 = math.rsqrt %619 : vector<16x1xf32>
    %621 = vector.broadcast %620 : vector<16x1xf32> to vector<16x32xf32>
    %622 = arith.mulf %617, %621 : vector<16x32xf32>
    %623 = arith.mulf %622, %602 : vector<16x32xf32>
    %624 = arith.addf %623, %604 : vector<16x32xf32>
    %625 = vector.extract_strided_slice %624 {offsets = [0, 0], sizes = [8, 32], strides = [1, 1]} : vector<16x32xf32> to vector<8x32xf32>
    %626 = vector.extract_strided_slice %624 {offsets = [8, 0], sizes = [8, 32], strides = [1, 1]} : vector<16x32xf32> to vector<8x32xf32>
    %c4_236 = arith.constant 4 : index
    %c0_237 = arith.constant 0 : index
    %c0_238 = arith.constant 0 : index
    %627 = vector.load %arg10[%c4_236, %c0_237, %c0_238] : memref<6x32x64xf32, #tpu.memory_space<vmem>>, vector<1x32x64xf32>
    %628 = vector.shape_cast %627 : vector<1x32x64xf32> to vector<32x64xf32>
    %c4_239 = arith.constant 4 : index
    %c0_240 = arith.constant 0 : index
    %c0_241 = arith.constant 0 : index
    %629 = vector.load %arg11[%c4_239, %c0_240, %c0_241] : memref<6x1x64xf32, #tpu.memory_space<vmem>>, vector<1x1x64xf32>
    %630 = vector.shape_cast %629 : vector<1x1x64xf32> to vector<1x64xf32>
    %cst_242 = arith.constant dense<0.000000e+00> : vector<8x64xf32>
    %631 = tpu.matmul %625, %628, %cst_242 {dimension_numbers = #tpu.dot_dimension_numbers<[1], [0], [0], [1], [0, 0, 1, 1], [], []>} : vector<8x32xf32>, vector<32x64xf32>, vector<8x64xf32> -> vector<8x64xf32>
    %632 = vector.broadcast %630 : vector<1x64xf32> to vector<8x64xf32>
    %633 = arith.addf %631, %632 : vector<8x64xf32>
    %cst_243 = arith.constant 0.000000e+00 : f32
    %634 = vector.broadcast %cst_243 : f32 to vector<8x64xf32>
    %635 = arith.maximumf %633, %634 : vector<8x64xf32>
    %c4_244 = arith.constant 4 : index
    %c0_245 = arith.constant 0 : index
    %c0_246 = arith.constant 0 : index
    %636 = vector.load %arg12[%c4_244, %c0_245, %c0_246] : memref<6x64x32xf32, #tpu.memory_space<vmem>>, vector<1x64x32xf32>
    %637 = vector.shape_cast %636 : vector<1x64x32xf32> to vector<64x32xf32>
    %c4_247 = arith.constant 4 : index
    %c0_248 = arith.constant 0 : index
    %c0_249 = arith.constant 0 : index
    %638 = vector.load %arg13[%c4_247, %c0_248, %c0_249] : memref<6x1x32xf32, #tpu.memory_space<vmem>>, vector<1x1x32xf32>
    %639 = vector.shape_cast %638 : vector<1x1x32xf32> to vector<1x32xf32>
    %cst_250 = arith.constant dense<0.000000e+00> : vector<8x32xf32>
    %640 = tpu.matmul %635, %637, %cst_250 {dimension_numbers = #tpu.dot_dimension_numbers<[1], [0], [0], [1], [0, 0, 1, 1], [], []>} : vector<8x64xf32>, vector<64x32xf32>, vector<8x32xf32> -> vector<8x32xf32>
    %641 = vector.broadcast %639 : vector<1x32xf32> to vector<8x32xf32>
    %642 = arith.addf %640, %641 : vector<8x32xf32>
    %c5_251 = arith.constant 5 : index
    %c0_252 = arith.constant 0 : index
    %c0_253 = arith.constant 0 : index
    %643 = vector.load %arg10[%c5_251, %c0_252, %c0_253] : memref<6x32x64xf32, #tpu.memory_space<vmem>>, vector<1x32x64xf32>
    %644 = vector.shape_cast %643 : vector<1x32x64xf32> to vector<32x64xf32>
    %c5_254 = arith.constant 5 : index
    %c0_255 = arith.constant 0 : index
    %c0_256 = arith.constant 0 : index
    %645 = vector.load %arg11[%c5_254, %c0_255, %c0_256] : memref<6x1x64xf32, #tpu.memory_space<vmem>>, vector<1x1x64xf32>
    %646 = vector.shape_cast %645 : vector<1x1x64xf32> to vector<1x64xf32>
    %cst_257 = arith.constant dense<0.000000e+00> : vector<8x64xf32>
    %647 = tpu.matmul %626, %644, %cst_257 {dimension_numbers = #tpu.dot_dimension_numbers<[1], [0], [0], [1], [0, 0, 1, 1], [], []>} : vector<8x32xf32>, vector<32x64xf32>, vector<8x64xf32> -> vector<8x64xf32>
    %648 = vector.broadcast %646 : vector<1x64xf32> to vector<8x64xf32>
    %649 = arith.addf %647, %648 : vector<8x64xf32>
    %cst_258 = arith.constant 0.000000e+00 : f32
    %650 = vector.broadcast %cst_258 : f32 to vector<8x64xf32>
    %651 = arith.maximumf %649, %650 : vector<8x64xf32>
    %c5_259 = arith.constant 5 : index
    %c0_260 = arith.constant 0 : index
    %c0_261 = arith.constant 0 : index
    %652 = vector.load %arg12[%c5_259, %c0_260, %c0_261] : memref<6x64x32xf32, #tpu.memory_space<vmem>>, vector<1x64x32xf32>
    %653 = vector.shape_cast %652 : vector<1x64x32xf32> to vector<64x32xf32>
    %c5_262 = arith.constant 5 : index
    %c0_263 = arith.constant 0 : index
    %c0_264 = arith.constant 0 : index
    %654 = vector.load %arg13[%c5_262, %c0_263, %c0_264] : memref<6x1x32xf32, #tpu.memory_space<vmem>>, vector<1x1x32xf32>
    %655 = vector.shape_cast %654 : vector<1x1x32xf32> to vector<1x32xf32>
    %cst_265 = arith.constant dense<0.000000e+00> : vector<8x32xf32>
    %656 = tpu.matmul %651, %653, %cst_265 {dimension_numbers = #tpu.dot_dimension_numbers<[1], [0], [0], [1], [0, 0, 1, 1], [], []>} : vector<8x64xf32>, vector<64x32xf32>, vector<8x32xf32> -> vector<8x32xf32>
    %657 = vector.broadcast %655 : vector<1x32xf32> to vector<8x32xf32>
    %658 = arith.addf %656, %657 : vector<8x32xf32>
    %659 = arith.addf %625, %642 : vector<8x32xf32>
    %660 = arith.addf %626, %658 : vector<8x32xf32>
    %661 = tpu.concatenate %659, %660 in 0 : vector<8x32xf32>, vector<8x32xf32> -> vector<16x32xf32>
    %c5_266 = arith.constant 5 : index
    %c0_267 = arith.constant 0 : index
    %c0_268 = arith.constant 0 : index
    %662 = vector.load %arg14[%c5_266, %c0_267, %c0_268] : memref<6x16x32xf32, #tpu.memory_space<vmem>>, vector<1x16x32xf32>
    %663 = vector.shape_cast %662 : vector<1x16x32xf32> to vector<16x32xf32>
    %c5_269 = arith.constant 5 : index
    %c0_270 = arith.constant 0 : index
    %c0_271 = arith.constant 0 : index
    %664 = vector.load %arg15[%c5_269, %c0_270, %c0_271] : memref<6x16x32xf32, #tpu.memory_space<vmem>>, vector<1x16x32xf32>
    %665 = vector.shape_cast %664 : vector<1x16x32xf32> to vector<16x32xf32>
    %cst_272 = arith.constant dense<0.000000e+00> : vector<16xf32>
    %666 = vector.multi_reduction <add>, %661, %cst_272 [1] : vector<16x32xf32> to vector<16xf32>
    %667 = vector.shape_cast %666 : vector<16xf32> to vector<16x1xf32>
    %cst_273 = arith.constant 3.200000e+01 : f32
    %668 = vector.broadcast %cst_273 : f32 to vector<16x1xf32>
    %669 = arith.divf %667, %668 : vector<16x1xf32>
    %670 = vector.broadcast %669 : vector<16x1xf32> to vector<16x32xf32>
    %671 = arith.subf %661, %670 : vector<16x32xf32>
    %672 = arith.mulf %671, %671 : vector<16x32xf32>
    %cst_274 = arith.constant dense<0.000000e+00> : vector<16xf32>
    %673 = vector.multi_reduction <add>, %672, %cst_274 [1] : vector<16x32xf32> to vector<16xf32>
    %674 = vector.shape_cast %673 : vector<16xf32> to vector<16x1xf32>
    %cst_275 = arith.constant 3.200000e+01 : f32
    %675 = vector.broadcast %cst_275 : f32 to vector<16x1xf32>
    %676 = arith.divf %674, %675 : vector<16x1xf32>
    %677 = vector.broadcast %669 : vector<16x1xf32> to vector<16x32xf32>
    %678 = arith.subf %661, %677 : vector<16x32xf32>
    %cst_276 = arith.constant 9.99999974E-6 : f32
    %679 = vector.broadcast %cst_276 : f32 to vector<16x1xf32>
    %680 = arith.addf %676, %679 : vector<16x1xf32>
    %681 = math.rsqrt %680 : vector<16x1xf32>
    %682 = vector.broadcast %681 : vector<16x1xf32> to vector<16x32xf32>
    %683 = arith.mulf %678, %682 : vector<16x32xf32>
    %684 = arith.mulf %683, %663 : vector<16x32xf32>
    %685 = arith.addf %684, %665 : vector<16x32xf32>
    %686 = vector.extract_strided_slice %685 {offsets = [0, 0], sizes = [8, 32], strides = [1, 1]} : vector<16x32xf32> to vector<8x32xf32>
    %687 = vector.extract_strided_slice %685 {offsets = [8, 0], sizes = [8, 32], strides = [1, 1]} : vector<16x32xf32> to vector<8x32xf32>
    %cst_277 = arith.constant dense<0.000000e+00> : vector<32xf32>
    %688 = vector.multi_reduction <add>, %686, %cst_277 [0] : vector<8x32xf32> to vector<32xf32>
    %689 = vector.shape_cast %688 : vector<32xf32> to vector<1x32xf32>
    %cst_278 = arith.constant 8.000000e+00 : f32
    %690 = vector.broadcast %cst_278 : f32 to vector<1x32xf32>
    %691 = arith.divf %689, %690 : vector<1x32xf32>
    %cst_279 = arith.constant dense<0.000000e+00> : vector<32xf32>
    %692 = vector.multi_reduction <add>, %687, %cst_279 [0] : vector<8x32xf32> to vector<32xf32>
    %693 = vector.shape_cast %692 : vector<32xf32> to vector<1x32xf32>
    %cst_280 = arith.constant 8.000000e+00 : f32
    %694 = vector.broadcast %cst_280 : f32 to vector<1x32xf32>
    %695 = arith.divf %693, %694 : vector<1x32xf32>
    %696 = tpu.concatenate %691, %695 in 1 : vector<1x32xf32>, vector<1x32xf32> -> vector<1x64xf32>
    %c0_281 = arith.constant 0 : index
    %c0_282 = arith.constant 0 : index
    %697 = vector.load %arg16[%c0_281, %c0_282] : memref<1x64xf32, #tpu.memory_space<vmem>>, vector<1x64xf32>
    %c0_283 = arith.constant 0 : index
    %c0_284 = arith.constant 0 : index
    %698 = vector.load %arg17[%c0_283, %c0_284] : memref<1x64xf32, #tpu.memory_space<vmem>>, vector<1x64xf32>
    %cst_285 = arith.constant dense<0.000000e+00> : vector<1xf32>
    %699 = vector.multi_reduction <add>, %696, %cst_285 [1] : vector<1x64xf32> to vector<1xf32>
    %700 = vector.shape_cast %699 : vector<1xf32> to vector<1x1xf32>
    %cst_286 = arith.constant 6.400000e+01 : f32
    %701 = vector.broadcast %cst_286 : f32 to vector<1x1xf32>
    %702 = arith.divf %700, %701 : vector<1x1xf32>
    %703 = vector.broadcast %702 : vector<1x1xf32> to vector<1x64xf32>
    %704 = arith.subf %696, %703 : vector<1x64xf32>
    %705 = arith.mulf %704, %704 : vector<1x64xf32>
    %cst_287 = arith.constant dense<0.000000e+00> : vector<1xf32>
    %706 = vector.multi_reduction <add>, %705, %cst_287 [1] : vector<1x64xf32> to vector<1xf32>
    %707 = vector.shape_cast %706 : vector<1xf32> to vector<1x1xf32>
    %cst_288 = arith.constant 6.400000e+01 : f32
    %708 = vector.broadcast %cst_288 : f32 to vector<1x1xf32>
    %709 = arith.divf %707, %708 : vector<1x1xf32>
    %710 = vector.broadcast %702 : vector<1x1xf32> to vector<1x64xf32>
    %711 = arith.subf %696, %710 : vector<1x64xf32>
    %cst_289 = arith.constant 9.99999974E-6 : f32
    %712 = vector.broadcast %cst_289 : f32 to vector<1x1xf32>
    %713 = arith.addf %709, %712 : vector<1x1xf32>
    %714 = math.rsqrt %713 : vector<1x1xf32>
    %715 = vector.broadcast %714 : vector<1x1xf32> to vector<1x64xf32>
    %716 = arith.mulf %711, %715 : vector<1x64xf32>
    %717 = arith.mulf %716, %697 : vector<1x64xf32>
    %718 = arith.addf %717, %698 : vector<1x64xf32>
    %c0_290 = arith.constant 0 : index
    %c0_291 = arith.constant 0 : index
    %719 = vector.load %arg18[%c0_290, %c0_291] : memref<64x128xf32, #tpu.memory_space<vmem>>, vector<64x128xf32>
    %c0_292 = arith.constant 0 : index
    %c0_293 = arith.constant 0 : index
    %720 = vector.load %arg19[%c0_292, %c0_293] : memref<1x128xf32, #tpu.memory_space<vmem>>, vector<1x128xf32>
    %cst_294 = arith.constant dense<0.000000e+00> : vector<1x128xf32>
    %721 = tpu.matmul %718, %719, %cst_294 {dimension_numbers = #tpu.dot_dimension_numbers<[1], [0], [0], [1], [0, 0, 1, 1], [], []>} : vector<1x64xf32>, vector<64x128xf32>, vector<1x128xf32> -> vector<1x128xf32>
    %722 = arith.addf %721, %720 : vector<1x128xf32>
    %c0_295 = arith.constant 0 : index
    %c0_296 = arith.constant 0 : index
    %723 = vector.load %arg20[%c0_295, %c0_296] : memref<1x128xf32, #tpu.memory_space<vmem>>, vector<1x128xf32>
    tpu.vector_store %arg20[%c0_295, %c0_296], %722 {strides = array<i32>} : memref<1x128xf32, #tpu.memory_space<vmem>>, vector<1x128xf32>,
    return
  }
}

</mosaic_0001>

<llo_original>
// kernel: forward.1
$region0: #{forward.1}
  #allocation0 [shape = 'u32[]', space=smem, size = 0x4, offset = 0x4, fixed_abs, tag = 'smem constant byte address 0x4 - core index']
  #allocation1 [shape = 'u32[144,128]{1,0:T(1,128)}', space=vmem, size = 0x12000, scoped, tag = 'internal scratch']
  %s0 = inlined_call_operand.vmem [shape: f32[8,64], index: 0, kind: input, shape index: {}]
  %s1 = inlined_call_operand.vmem [shape: f32[8,256], index: 1, kind: input, shape index: {}]
  %s2 = inlined_call_operand.vmem [shape: f32[64,32], index: 2, kind: input, shape index: {}]
  %s3 = inlined_call_operand.vmem [shape: f32[1,32], index: 3, kind: input, shape index: {}]
  %s4 = inlined_call_operand.vmem [shape: f32[256,32], index: 4, kind: input, shape index: {}]
  %s5 = inlined_call_operand.vmem [shape: f32[1,32], index: 5, kind: input, shape index: {}]
  %s6 = inlined_call_operand.vmem [shape: f32[6,32,96], index: 6, kind: input, shape index: {}]
  %s7 = inlined_call_operand.vmem [shape: f32[6,1,96], index: 7, kind: input, shape index: {}]
  %s8 = inlined_call_operand.vmem [shape: f32[6,32,32], index: 8, kind: input, shape index: {}]
  %s9 = inlined_call_operand.vmem [shape: f32[6,1,32], index: 9, kind: input, shape index: {}]
  %s10 = inlined_call_operand.vmem [shape: f32[6,32,64], index: 10, kind: input, shape index: {}]
  %s11 = inlined_call_operand.vmem [shape: f32[6,1,64], index: 11, kind: input, shape index: {}]
  %s12 = inlined_call_operand.vmem [shape: f32[6,64,32], index: 12, kind: input, shape index: {}]
  %s13 = inlined_call_operand.vmem [shape: f32[6,1,32], index: 13, kind: input, shape index: {}]
  %s14 = inlined_call_operand.vmem [shape: f32[6,16,32], index: 14, kind: input, shape index: {}]
  %s15 = inlined_call_operand.vmem [shape: f32[6,16,32], index: 15, kind: input, shape index: {}]
  %s16 = inlined_call_operand.vmem [shape: f32[1,64], index: 16, kind: input, shape index: {}]
  %s17 = inlined_call_operand.vmem [shape: f32[1,64], index: 17, kind: input, shape index: {}]
  %s18 = inlined_call_operand.vmem [shape: f32[64,128], index: 18, kind: input, shape index: {}]
  %s19 = inlined_call_operand.vmem [shape: f32[1,128], index: 19, kind: input, shape index: {}]
  %s20 = inlined_call_operand.hbm [shape: f32[1,128], index: 20, kind: output, shape index: {}]
  %s21 = sld [smem:[#allocation0]]
  $region90: #{forward.1} parent=0
    _
  %s23 = ssub.s32 1, %s21
  %s24 = scalar_select 0, %s23, %s21
  $region1: #{forward.1} parent=0
    #allocation2 [shape = 'u8[512]{0}', space=vmem, size = 0x400, scoped, tag = 'output window, operand 0, single buffered']
    #allocation3 [shape = 's32[1]{0}', space=sflag, size = 0x4, scoped, tag = 'scoped memory for forward.1']
    %25 = vsyncpa [#allocation3], 0
    // Predicated region
    $region2: #{forward.1} parent=1 // pred_check
      _
    $region3: #{forward.1} parent=1 // pred_check_branch
      %27 = sbr.rel (0) target = $region5
    $region4: #{forward.1} parent=1 // pred_region
      _
    $region5: #{forward.1} parent=1 // pred_fallthru
      _
    // Predicated region
    $region6: #{forward.1} parent=1 // pred_check
      _
    $region7: #{forward.1} parent=1 // pred_check_branch
      %29 = sbr.rel (0) target = $region9
    $region8: #{forward.1} parent=1 // pred_region
      _
    $region9: #{forward.1} parent=1 // pred_fallthru
      _
    // Predicated region
    $region10: #{forward.1} parent=1 // pred_check
      _
    $region11: #{forward.1} parent=1 // pred_check_branch
      %31 = sbr.rel (0) target = $region13
    $region12: #{forward.1} parent=1 // pred_region
      _
    $region13: #{forward.1} parent=1 // pred_fallthru
      _
    // Predicated region
    $region14: #{forward.1} parent=1 // pred_check
      _
    $region15: #{forward.1} parent=1 // pred_check_branch
      %33 = sbr.rel (0) target = $region17
    $region16: #{forward.1} parent=1 // pred_region
      _
    $region17: #{forward.1} parent=1 // pred_fallthru
      _
    // Predicated region
    $region18: #{forward.1} parent=1 // pred_check
      _
    $region19: #{forward.1} parent=1 // pred_check_branch
      %35 = sbr.rel (0) target = $region21
    $region20: #{forward.1} parent=1 // pred_region
      _
    $region21: #{forward.1} parent=1 // pred_fallthru
      _
    // Predicated region
    $region22: #{forward.1} parent=1 // pred_check
      _
    $region23: #{forward.1} parent=1 // pred_check_branch
      %37 = sbr.rel (0) target = $region25
    $region24: #{forward.1} parent=1 // pred_region
      _
    $region25: #{forward.1} parent=1 // pred_fallthru
      _
    // Predicated region
    $region26: #{forward.1} parent=1 // pred_check
      _
    $region27: #{forward.1} parent=1 // pred_check_branch
      %39 = sbr.rel (0) target = $region29
    $region28: #{forward.1} parent=1 // pred_region
      _
    $region29: #{forward.1} parent=1 // pred_fallthru
      _
    // Predicated region
    $region30: #{forward.1} parent=1 // pred_check
      _
    $region31: #{forward.1} parent=1 // pred_check_branch
      %41 = sbr.rel (0) target = $region33
    $region32: #{forward.1} parent=1 // pred_region
      _
    $region33: #{forward.1} parent=1 // pred_fallthru
      _
    // Predicated region
    $region34: #{forward.1} parent=1 // pred_check
      _
    $region35: #{forward.1} parent=1 // pred_check_branch
      %43 = sbr.rel (0) target = $region37
    $region36: #{forward.1} parent=1 // pred_region
      _
    $region37: #{forward.1} parent=1 // pred_fallthru
      _
    // Predicated region
    $region38: #{forward.1} parent=1 // pred_check
      _
    $region39: #{forward.1} parent=1 // pred_check_branch
      %45 = sbr.rel (0) target = $region41
    $region40: #{forward.1} parent=1 // pred_region
      _
    $region41: #{forward.1} parent=1 // pred_fallthru
      _
    // Predicated region
    $region42: #{forward.1} parent=1 // pred_check
      _
    $region43: #{forward.1} parent=1 // pred_check_branch
      %47 = sbr.rel (0) target = $region45
    $region44: #{forward.1} parent=1 // pred_region
      _
    $region45: #{forward.1} parent=1 // pred_fallthru
      _
    // Predicated region
    $region46: #{forward.1} parent=1 // pred_check
      _
    $region47: #{forward.1} parent=1 // pred_check_branch
      %49 = sbr.rel (0) target = $region49
    $region48: #{forward.1} parent=1 // pred_region
      _
    $region49: #{forward.1} parent=1 // pred_fallthru
      _
    // Predicated region
    $region50: #{forward.1} parent=1 // pred_check
      _
    $region51: #{forward.1} parent=1 // pred_check_branch
      %51 = sbr.rel (0) target = $region53
    $region52: #{forward.1} parent=1 // pred_region
      _
    $region53: #{forward.1} parent=1 // pred_fallthru
      _
    // Predicated region
    $region54: #{forward.1} parent=1 // pred_check
      _
    $region55: #{forward.1} parent=1 // pred_check_branch
      %53 = sbr.rel (0) target = $region57
    $region56: #{forward.1} parent=1 // pred_region
      _
    $region57: #{forward.1} parent=1 // pred_fallthru
      _
    // Predicated region
    $region58: #{forward.1} parent=1 // pred_check
      _
    $region59: #{forward.1} parent=1 // pred_check_branch
      %55 = sbr.rel (0) target = $region61
    $region60: #{forward.1} parent=1 // pred_region
      _
    $region61: #{forward.1} parent=1 // pred_fallthru
      _
    // Predicated region
    $region62: #{forward.1} parent=1 // pred_check
      _
    $region63: #{forward.1} parent=1 // pred_check_branch
      %57 = sbr.rel (0) target = $region65
    $region64: #{forward.1} parent=1 // pred_region
      _
    $region65: #{forward.1} parent=1 // pred_fallthru
      _
    // Predicated region
    $region66: #{forward.1} parent=1 // pred_check
      _
    $region67: #{forward.1} parent=1 // pred_check_branch
      %59 = sbr.rel (0) target = $region69
    $region68: #{forward.1} parent=1 // pred_region
      _
    $region69: #{forward.1} parent=1 // pred_fallthru
      _
    // Predicated region
    $region70: #{forward.1} parent=1 // pred_check
      _
    $region71: #{forward.1} parent=1 // pred_check_branch
      %61 = sbr.rel (0) target = $region73
    $region72: #{forward.1} parent=1 // pred_region
      _
    $region73: #{forward.1} parent=1 // pred_fallthru
      _
    // Predicated region
    $region74: #{forward.1} parent=1 // pred_check
      _
    $region75: #{forward.1} parent=1 // pred_check_branch
      %63 = sbr.rel (0) target = $region77
    $region76: #{forward.1} parent=1 // pred_region
      _
    $region77: #{forward.1} parent=1 // pred_fallthru
      _
    // Predicated region
    $region78: #{forward.1} parent=1 // pred_check
      _
    $region79: #{forward.1} parent=1 // pred_check_branch
      %65 = sbr.rel (0) target = $region81
    $region80: #{forward.1} parent=1 // pred_region
      _
    $region81: #{forward.1} parent=1 // pred_fallthru
      _
    %v66 = vld [vmem:[%s0] sm:$0xff]
    %v67 = vld [vmem:[%s2] sm:$0xff]
    %v68 = vld [vmem:[%s2 + $0x8] sm:$0xff]
    %v69 = vld [vmem:[%s2 + $0x10] sm:$0xff]
    %v70 = vld [vmem:[%s2 + $0x18] sm:$0xff]
    %v71 = vld [vmem:[%s2 + $0x20] sm:$0xff]
    %v72 = vld [vmem:[%s2 + $0x28] sm:$0xff]
    %v73 = vld [vmem:[%s2 + $0x30] sm:$0xff]
    %v74 = vld [vmem:[%s2 + $0x38] sm:$0xff]
    %v75 = vld [vmem:[%s3] sm:$0x1]
    %v77 = vlaneseq
    %v78 = vshrl.u32 %v77, 7
    %v79 = vsub.s32 0, %v78
    %v80 = vrot.slane %v75, %v79
    %vm82 = vcmask 523264
    %v84 = vsel %vm82, %v66, 0
    %86 = vmatprep.subr.mxu0 0.0
    %87 = vmatpush1.msra.mxu0 %v67
    %88 = vmatprep.subr.mxu0 0.0
    %89 = vmatpush1.msra.mxu0 %v68
    %90 = vmatprep.subr.mxu0 0.0
    %91 = vmatpush1.msra.mxu0 %v69
    %92 = vmatprep.subr.mxu0 0.0
    %93 = vmatpush1.msra.mxu0 %v70
    %94 = vmatprep.subr.mxu0 0.0
    %95 = vmatpush1.msra.mxu0 %v71
    %96 = vmatprep.subr.mxu0 0.0
    %97 = vmatpush1.msra.mxu0 %v72
    %98 = vmatprep.subr.mxu0 0.0
    %99 = vmatpush1.msra.mxu0 %v73
    %100 = vmatprep.subr.mxu0 0.0
    %101 = vmatpush1.msra.mxu0 %v74
    %102 = vmatprep.subr.mxu0 0.0
    %103 = vmatpush1.msra.mxu0 0.0
    %104 = vmatprep.subr.mxu0 0.0
    %105 = vmatpush1.msra.mxu0 0.0
    %106 = vmatprep.subr.mxu0 0.0
    %107 = vmatpush1.msra.mxu0 0.0
    %108 = vmatprep.subr.mxu0 0.0
    %109 = vmatpush1.msra.mxu0 0.0
    %110 = vmatprep.subr.mxu0 0.0
    %111 = vmatpush1.msra.mxu0 0.0
    %112 = vmatprep.subr.mxu0 0.0
    %113 = vmatpush1.msra.mxu0 0.0
    %114 = vmatprep.subr.mxu0 0.0
    %115 = vmatpush1.msra.mxu0 0.0
    %116 = vmatprep.subr.mxu0 0.0
    %117 = vmatpush1.msra.mxu0 0.0
    %118 = vmatprep.subr.mxu0 0.0
    %119 = vmatpush1.msra.mxu0 0.0
    %120 = vmatprep.subr.mxu0 0.0
    %121 = vmatpush1.msra.mxu0 0.0
    %122 = vmatprep.subr.mxu0 0.0
    %123 = vmatpush1.msra.mxu0 0.0
    %124 = vmatprep.subr.mxu0 0.0
    %125 = vmatpush1.msra.mxu0 0.0
    %126 = vmatprep.subr.mxu0 0.0
    %127 = vmatpush1.msra.mxu0 0.0
    %128 = vmatprep.subr.mxu0 0.0
    %129 = vmatpush1.msra.mxu0 0.0
    %130 = vmatprep.subr.mxu0 0.0
    %131 = vmatpush1.msra.mxu0 0.0
    %132 = vmatprep.subr.mxu0 0.0
    %133 = vmatpush1.msra.mxu0 0.0
    %134 = vmatprep.subr.mxu0 0.0
    %135 = vmatpush1.msra.mxu0 0.0
    %136 = vmatprep.subr.mxu0 0.0
    %137 = vmatpush1.msra.mxu0 0.0
    %138 = vmatprep.subr.mxu0 0.0
    %139 = vmatpush1.msra.mxu0 0.0
    %140 = vmatprep.subr.mxu0 0.0
    %141 = vmatpush1.msra.mxu0 0.0
    %142 = vmatprep.subr.mxu0 0.0
    %143 = vmatpush1.msra.mxu0 0.0
    %144 = vmatprep.subr.mxu0 0.0
    %145 = vmatpush1.msra.mxu0 0.0
    %146 = vmatprep.subr.mxu0 0.0
    %147 = vmatpush1.msra.mxu0 0.0
    %148 = vmatprep.subr.mxu0 0.0
    %149 = vmatpush1.msra.mxu0 0.0
    %150 = vmatprep.mubr.f32.mxu0 0.0
    %151 = vmatmul.mubr.f32.gmra.mrb[0].mxu0 %v84
    %v152 = vpop.f32.mrb[0].mxu0
    %v153 = vadd.f32 %v80, %v152
    %v154 = vpop.f32.mrb[0].mxu0
    %155 = vdwg.mxu0
    %v156 = vld [vmem:[%s1] sm:$0xff]
    %v157 = vld [vmem:[%s1 + $0x8] sm:$0xff]
    %v158 = vld [vmem:[%s4] sm:$0xff]
    %v159 = vld [vmem:[%s4 + $0x8] sm:$0xff]
    %v160 = vld [vmem:[%s4 + $0x10] sm:$0xff]
    %v161 = vld [vmem:[%s4 + $0x18] sm:$0xff]
    %v162 = vld [vmem:[%s4 + $0x20] sm:$0xff]
    %v163 = vld [vmem:[%s4 + $0x28] sm:$0xff]
    %v164 = vld [vmem:[%s4 + $0x30] sm:$0xff]
    %v165 = vld [vmem:[%s4 + $0x38] sm:$0xff]
    %v166 = vld [vmem:[%s4 + $0x40] sm:$0xff]
    %v167 = vld [vmem:[%s4 + $0x48] sm:$0xff]
    %v168 = vld [vmem:[%s4 + $0x50] sm:$0xff]
    %v169 = vld [vmem:[%s4 + $0x58] sm:$0xff]
    %v170 = vld [vmem:[%s4 + $0x60] sm:$0xff]
    %v171 = vld [vmem:[%s4 + $0x68] sm:$0xff]
    %v172 = vld [vmem:[%s4 + $0x70] sm:$0xff]
    %v173 = vld [vmem:[%s4 + $0x78] sm:$0xff]
    %v174 = vld [vmem:[%s4 + $0x80] sm:$0xff]
    %v175 = vld [vmem:[%s4 + $0x88] sm:$0xff]
    %v176 = vld [vmem:[%s4 + $0x90] sm:$0xff]
    %v177 = vld [vmem:[%s4 + $0x98] sm:$0xff]
    %v178 = vld [vmem:[%s4 + $0xa0] sm:$0xff]
    %v179 = vld [vmem:[%s4 + $0xa8] sm:$0xff]
    %v180 = vld [vmem:[%s4 + $0xb0] sm:$0xff]
    %v181 = vld [vmem:[%s4 + $0xb8] sm:$0xff]
    %v182 = vld [vmem:[%s4 + $0xc0] sm:$0xff]
    %v183 = vld [vmem:[%s4 + $0xc8] sm:$0xff]
    %v184 = vld [vmem:[%s4 + $0xd0] sm:$0xff]
    %v185 = vld [vmem:[%s4 + $0xd8] sm:$0xff]
    %v186 = vld [vmem:[%s4 + $0xe0] sm:$0xff]
    %v187 = vld [vmem:[%s4 + $0xe8] sm:$0xff]
    %v188 = vld [vmem:[%s4 + $0xf0] sm:$0xff]
    %v189 = vld [vmem:[%s4 + $0xf8] sm:$0xff]
    %v190 = vld [vmem:[%s5] sm:$0x1]
    %v192 = vlaneseq
    %v193 = vshrl.u32 %v192, 7
    %v194 = vsub.s32 0, %v193
    %v195 = vrot.slane %v190, %v194
    %197 = vmatprep.subr.mxu0 0.0
    %198 = vmatpush1.msra.mxu0 %v158
    %199 = vmatprep.subr.mxu0 0.0
    %200 = vmatpush1.msra.mxu0 %v159
    %201 = vmatprep.subr.mxu0 0.0
    %202 = vmatpush1.msra.mxu0 %v160
    %203 = vmatprep.subr.mxu0 0.0
    %204 = vmatpush1.msra.mxu0 %v161
    %205 = vmatprep.subr.mxu0 0.0
    %206 = vmatpush1.msra.mxu0 %v162
    %207 = vmatprep.subr.mxu0 0.0
    %208 = vmatpush1.msra.mxu0 %v163
    %209 = vmatprep.subr.mxu0 0.0
    %210 = vmatpush1.msra.mxu0 %v164
    %211 = vmatprep.subr.mxu0 0.0
    %212 = vmatpush1.msra.mxu0 %v165
    %213 = vmatprep.subr.mxu0 0.0
    %214 = vmatpush1.msra.mxu0 %v166
    %215 = vmatprep.subr.mxu0 0.0
    %216 = vmatpush1.msra.mxu0 %v167
    %217 = vmatprep.subr.mxu0 0.0
    %218 = vmatpush1.msra.mxu0 %v168
    %219 = vmatprep.subr.mxu0 0.0
    %220 = vmatpush1.msra.mxu0 %v169
    %221 = vmatprep.subr.mxu0 0.0
    %222 = vmatpush1.msra.mxu0 %v170
    %223 = vmatprep.subr.mxu0 0.0
    %224 = vmatpush1.msra.mxu0 %v171
    %225 = vmatprep.subr.mxu0 0.0
    %226 = vmatpush1.msra.mxu0 %v172
    %227 = vmatprep.subr.mxu0 0.0
    %228 = vmatpush1.msra.mxu0 %v173
    %229 = vmatprep.subr.mxu0 0.0
    %230 = vmatpush1.msra.mxu0 %v174
    %231 = vmatprep.subr.mxu0 0.0
    %232 = vmatpush1.msra.mxu0 %v175
    %233 = vmatprep.subr.mxu0 0.0
    %234 = vmatpush1.msra.mxu0 %v176
    %235 = vmatprep.subr.mxu0 0.0
    %236 = vmatpush1.msra.mxu0 %v177
    %237 = vmatprep.subr.mxu0 0.0
    %238 = vmatpush1.msra.mxu0 %v178
    %239 = vmatprep.subr.mxu0 0.0
    %240 = vmatpush1.msra.mxu0 %v179
    %241 = vmatprep.subr.mxu0 0.0
    %242 = vmatpush1.msra.mxu0 %v180
    %243 = vmatprep.subr.mxu0 0.0
    %244 = vmatpush1.msra.mxu0 %v181
    %245 = vmatprep.subr.mxu0 0.0
    %246 = vmatpush1.msra.mxu0 %v182
    %247 = vmatprep.subr.mxu0 0.0
    %248 = vmatpush1.msra.mxu0 %v183
    %249 = vmatprep.subr.mxu0 0.0
    %250 = vmatpush1.msra.mxu0 %v184
    %251 = vmatprep.subr.mxu0 0.0
    %252 = vmatpush1.msra.mxu0 %v185
    %253 = vmatprep.subr.mxu0 0.0
    %254 = vmatpush1.msra.mxu0 %v186
    %255 = vmatprep.subr.mxu0 0.0
    %256 = vmatpush1.msra.mxu0 %v187
    %257 = vmatprep.subr.mxu0 0.0
    %258 = vmatpush1.msra.mxu0 %v188
    %259 = vmatprep.subr.mxu0 0.0
    %260 = vmatpush1.msra.mxu0 %v189
    %261 = vmatprep.mubr.f32.mxu0 %v157
    %262 = vmatmul.mubr.f32.gmra.mrb[0].mxu0 %v156
    %v263 = vpop.f32.mrb[0].mxu0
    %v264 = vadd.f32 %v195, %v263
    %v265 = vpop.f32.mrb[0].mxu0
    %266 = vdwg.mxu0
    %v267 = vld [vmem:[%s6] sm:$0xff]
    %v268 = vld [vmem:[%s6 + $0x8] sm:$0xff]
    %v269 = vld [vmem:[%s6 + $0x10] sm:$0xff]
    %v270 = vld [vmem:[%s6 + $0x18] sm:$0xff]
    %v271 = vld [vmem:[%s7] sm:$0x1]
    %v273 = vlaneseq
    %v274 = vshrl.u32 %v273, 7
    %v275 = vsub.s32 0, %v274
    %v276 = vrot.slane %v271, %v275
    %vm278 = vcmask 261120
    %v280 = vsel %vm278, %v153, 0
    %282 = vmatprep.subr.mxu0 0.0
    %283 = vmatpush1.msra.mxu0 %v267
    %284 = vmatprep.subr.mxu0 0.0
    %285 = vmatpush1.msra.mxu0 %v268
    %286 = vmatprep.subr.mxu0 0.0
    %287 = vmatpush1.msra.mxu0 %v269
    %288 = vmatprep.subr.mxu0 0.0
    %289 = vmatpush1.msra.mxu0 %v270
    %290 = vmatprep.subr.mxu0 0.0
    %291 = vmatpush1.msra.mxu0 0.0
    %292 = vmatprep.subr.mxu0 0.0
    %293 = vmatpush1.msra.mxu0 0.0
    %294 = vmatprep.subr.mxu0 0.0
    %295 = vmatpush1.msra.mxu0 0.0
    %296 = vmatprep.subr.mxu0 0.0
    %297 = vmatpush1.msra.mxu0 0.0
    %298 = vmatprep.subr.mxu0 0.0
    %299 = vmatpush1.msra.mxu0 0.0
    %300 = vmatprep.subr.mxu0 0.0
    %301 = vmatpush1.msra.mxu0 0.0
    %302 = vmatprep.subr.mxu0 0.0
    %303 = vmatpush1.msra.mxu0 0.0
    %304 = vmatprep.subr.mxu0 0.0
    %305 = vmatpush1.msra.mxu0 0.0
    %306 = vmatprep.subr.mxu0 0.0
    %307 = vmatpush1.msra.mxu0 0.0
    %308 = vmatprep.subr.mxu0 0.0
    %309 = vmatpush1.msra.mxu0 0.0
    %310 = vmatprep.subr.mxu0 0.0
    %311 = vmatpush1.msra.mxu0 0.0
    %312 = vmatprep.subr.mxu0 0.0
    %313 = vmatpush1.msra.mxu0 0.0
    %314 = vmatprep.subr.mxu0 0.0
    %315 = vmatpush1.msra.mxu0 0.0
    %316 = vmatprep.subr.mxu0 0.0
    %317 = vmatpush1.msra.mxu0 0.0
    %318 = vmatprep.subr.mxu0 0.0
    %319 = vmatpush1.msra.mxu0 0.0
    %320 = vmatprep.subr.mxu0 0.0
    %321 = vmatpush1.msra.mxu0 0.0
    %322 = vmatprep.subr.mxu0 0.0
    %323 = vmatpush1.msra.mxu0 0.0
    %324 = vmatprep.subr.mxu0 0.0
    %325 = vmatpush1.msra.mxu0 0.0
    %326 = vmatprep.subr.mxu0 0.0
    %327 = vmatpush1.msra.mxu0 0.0
    %328 = vmatprep.subr.mxu0 0.0
    %329 = vmatpush1.msra.mxu0 0.0
    %330 = vmatprep.subr.mxu0 0.0
    %331 = vmatpush1.msra.mxu0 0.0
    %332 = vmatprep.subr.mxu0 0.0
    %333 = vmatpush1.msra.mxu0 0.0
    %334 = vmatprep.subr.mxu0 0.0
    %335 = vmatpush1.msra.mxu0 0.0
    %336 = vmatprep.subr.mxu0 0.0
    %337 = vmatpush1.msra.mxu0 0.0
    %338 = vmatprep.subr.mxu0 0.0
    %339 = vmatpush1.msra.mxu0 0.0
    %340 = vmatprep.subr.mxu0 0.0
    %341 = vmatpush1.msra.mxu0 0.0
    %342 = vmatprep.subr.mxu0 0.0
    %343 = vmatpush1.msra.mxu0 0.0
    %344 = vmatprep.subr.mxu0 0.0
    %345 = vmatpush1.msra.mxu0 0.0
    %346 = vmatprep.mubr.f32.mxu0 0.0
    %347 = vmatmul.mubr.f32.gmra.mrb[0].mxu0 %v280
    %v348 = vpop.f32.mrb[0].mxu0
    %v349 = vadd.f32 %v276, %v348
    %v350 = vpop.f32.mrb[0].mxu0
    %351 = vdwg.mxu0
    %353 = vrot.lane.b32.xlu0 %v349, 120
    %v354 = vpop.permute.xlu0 %353
    %355 = vrot.lane.b32.xlu0 %v349, 112
    %v356 = vpop.permute.xlu0 %355
    %357 = vrot.lane.b32.xlu0 %v349, 104
    %v358 = vpop.permute.xlu0 %357
    %359 = vrot.lane.b32.xlu0 %v349, 96
    %v360 = vpop.permute.xlu0 %359
    %vm361 = vcmask 64512
    %v362 = vsel %vm361, %v349, 0
    %v364 = vsel %vm361, %v360, 0
    %366 = vmatprep.subr.mxu0 0.0
    %367 = vmatpush1.xpose.msra.mxu0 %v364
    %368 = vmatprep.subr.mxu0 0.0
    %369 = vmatpush1.xpose.msra.mxu0 0.0
    %370 = vmatprep.subr.mxu0 0.0
    %371 = vmatpush1.xpose.msra.mxu0 0.0
    %372 = vmatprep.subr.mxu0 0.0
    %373 = vmatpush1.xpose.msra.mxu0 0.0
    %374 = vmatprep.subr.mxu0 0.0
    %375 = vmatpush1.xpose.msra.mxu0 0.0
    %376 = vmatprep.subr.mxu0 0.0
    %377 = vmatpush1.xpose.msra.mxu0 0.0
    %378 = vmatprep.subr.mxu0 0.0
    %379 = vmatpush1.xpose.msra.mxu0 0.0
    %380 = vmatprep.subr.mxu0 0.0
    %381 = vmatpush1.xpose.msra.mxu0 0.0
    %382 = vmatprep.subr.mxu0 0.0
    %383 = vmatpush1.xpose.msra.mxu0 0.0
    %384 = vmatprep.subr.mxu0 0.0
    %385 = vmatpush1.xpose.msra.mxu0 0.0
    %386 = vmatprep.subr.mxu0 0.0
    %387 = vmatpush1.xpose.msra.mxu0 0.0
    %388 = vmatprep.subr.mxu0 0.0
    %389 = vmatpush1.xpose.msra.mxu0 0.0
    %390 = vmatprep.subr.mxu0 0.0
    %391 = vmatpush1.xpose.msra.mxu0 0.0
    %392 = vmatprep.subr.mxu0 0.0
    %393 = vmatpush1.xpose.msra.mxu0 0.0
    %394 = vmatprep.subr.mxu0 0.0
    %395 = vmatpush1.xpose.msra.mxu0 0.0
    %396 = vmatprep.subr.mxu0 0.0
    %397 = vmatpush1.xpose.msra.mxu0 0.0
    %398 = vmatprep.subr.mxu0 0.0
    %399 = vmatpush1.xpose.msra.mxu0 0.0
    %400 = vmatprep.subr.mxu0 0.0
    %401 = vmatpush1.xpose.msra.mxu0 0.0
    %402 = vmatprep.subr.mxu0 0.0
    %403 = vmatpush1.xpose.msra.mxu0 0.0
    %404 = vmatprep.subr.mxu0 0.0
    %405 = vmatpush1.xpose.msra.mxu0 0.0
    %406 = vmatprep.subr.mxu0 0.0
    %407 = vmatpush1.xpose.msra.mxu0 0.0
    %408 = vmatprep.subr.mxu0 0.0
    %409 = vmatpush1.xpose.msra.mxu0 0.0
    %410 = vmatprep.subr.mxu0 0.0
    %411 = vmatpush1.xpose.msra.mxu0 0.0
    %412 = vmatprep.subr.mxu0 0.0
    %413 = vmatpush1.xpose.msra.mxu0 0.0
    %414 = vmatprep.subr.mxu0 0.0
    %415 = vmatpush1.xpose.msra.mxu0 0.0
    %416 = vmatprep.subr.mxu0 0.0
    %417 = vmatpush1.xpose.msra.mxu0 0.0
    %418 = vmatprep.subr.mxu0 0.0
    %419 = vmatpush1.xpose.msra.mxu0 0.0
    %420 = vmatprep.subr.mxu0 0.0
    %421 = vmatpush1.xpose.msra.mxu0 0.0
    %422 = vmatprep.subr.mxu0 0.0
    %423 = vmatpush1.xpose.msra.mxu0 0.0
    %424 = vmatprep.subr.mxu0 0.0
    %425 = vmatpush1.xpose.msra.mxu0 0.0
    %426 = vmatprep.subr.mxu0 0.0
    %427 = vmatpush1.xpose.msra.mxu0 0.0
    %428 = vmatprep.subr.mxu0 0.0
    %429 = vmatpush1.xpose.msra.mxu0 0.0
    %430 = vmatprep.mubr.f32.mxu0 0.0
    %431 = vmatmul.mubr.f32.gmra.mrb[0].mxu0 %v362
    %v432 = vpop.f32.mrb[0].mxu0
    %v433 = vadd.f32 0.0, %v432
    %v434 = vpop.f32.mrb[0].mxu0
    %435 = vdwg.mxu0
    %436 = vrot.lane.b32.xlu0 %v354, 96
    %v437 = vpop.permute.xlu0 %436
    %v438 = vsel %vm361, %v354, 0
    %v440 = vsel %vm361, %v437, 0
    %442 = vmatprep.subr.mxu0 0.0
    %443 = vmatpush1.xpose.msra.mxu0 %v440
    %444 = vmatprep.subr.mxu0 0.0
    %445 = vmatpush1.xpose.msra.mxu0 0.0
    %446 = vmatprep.subr.mxu0 0.0
    %447 = vmatpush1.xpose.msra.mxu0 0.0
    %448 = vmatprep.subr.mxu0 0.0
    %449 = vmatpush1.xpose.msra.mxu0 0.0
    %450 = vmatprep.subr.mxu0 0.0
    %451 = vmatpush1.xpose.msra.mxu0 0.0
    %452 = vmatprep.subr.mxu0 0.0
    %453 = vmatpush1.xpose.msra.mxu0 0.0
    %454 = vmatprep.subr.mxu0 0.0
    %455 = vmatpush1.xpose.msra.mxu0 0.0
    %456 = vmatprep.subr.mxu0 0.0
    %457 = vmatpush1.xpose.msra.mxu0 0.0
    %458 = vmatprep.subr.mxu0 0.0
    %459 = vmatpush1.xpose.msra.mxu0 0.0
    %460 = vmatprep.subr.mxu0 0.0
    %461 = vmatpush1.xpose.msra.mxu0 0.0
    %462 = vmatprep.subr.mxu0 0.0
    %463 = vmatpush1.xpose.msra.mxu0 0.0
    %464 = vmatprep.subr.mxu0 0.0
    %465 = vmatpush1.xpose.msra.mxu0 0.0
    %466 = vmatprep.subr.mxu0 0.0
    %467 = vmatpush1.xpose.msra.mxu0 0.0
    %468 = vmatprep.subr.mxu0 0.0
    %469 = vmatpush1.xpose.msra.mxu0 0.0
    %470 = vmatprep.subr.mxu0 0.0
    %471 = vmatpush1.xpose.msra.mxu0 0.0
    %472 = vmatprep.subr.mxu0 0.0
    %473 = vmatpush1.xpose.msra.mxu0 0.0
    %474 = vmatprep.subr.mxu0 0.0
    %475 = vmatpush1.xpose.msra.mxu0 0.0
    %476 = vmatprep.subr.mxu0 0.0
    %477 = vmatpush1.xpose.msra.mxu0 0.0
    %478 = vmatprep.subr.mxu0 0.0
    %479 = vmatpush1.xpose.msra.mxu0 0.0
    %480 = vmatprep.subr.mxu0 0.0
    %481 = vmatpush1.xpose.msra.mxu0 0.0
    %482 = vmatprep.subr.mxu0 0.0
    %483 = vmatpush1.xpose.msra.mxu0 0.0
    %484 = vmatprep.subr.mxu0 0.0
    %485 = vmatpush1.xpose.msra.mxu0 0.0
    %486 = vmatprep.subr.mxu0 0.0
    %487 = vmatpush1.xpose.msra.mxu0 0.0
    %488 = vmatprep.subr.mxu0 0.0
    %489 = vmatpush1.xpose.msra.mxu0 0.0
    %490 = vmatprep.subr.mxu0 0.0
    %491 = vmatpush1.xpose.msra.mxu0 0.0
    %492 = vmatprep.subr.mxu0 0.0
    %493 = vmatpush1.xpose.msra.mxu0 0.0
    %494 = vmatprep.subr.mxu0 0.0
    %495 = vmatpush1.xpose.msra.mxu0 0.0
    %496 = vmatprep.subr.mxu0 0.0
    %497 = vmatpush1.xpose.msra.mxu0 0.0
    %498 = vmatprep.subr.mxu0 0.0
    %499 = vmatpush1.xpose.msra.mxu0 0.0
    %500 = vmatprep.subr.mxu0 0.0
    %501 = vmatpush1.xpose.msra.mxu0 0.0
    %502 = vmatprep.subr.mxu0 0.0
    %503 = vmatpush1.xpose.msra.mxu0 0.0
    %504 = vmatprep.subr.mxu0 0.0
    %505 = vmatpush1.xpose.msra.mxu0 0.0
    %506 = vmatprep.mubr.f32.mxu0 0.0
    %507 = vmatmul.mubr.f32.gmra.mrb[0].mxu0 %v438
    %v508 = vpop.f32.mrb[0].mxu0
    %v509 = vadd.f32 0.0, %v508
    %v510 = vpop.f32.mrb[0].mxu0
    %511 = vdwg.mxu0
    %512 = vrot.lane.b32.xlu0 %v356, 96
    %v513 = vpop.permute.xlu0 %512
    %v514 = vsel %vm361, %v356, 0
    %v516 = vsel %vm361, %v513, 0
    %518 = vmatprep.subr.mxu0 0.0
    %519 = vmatpush1.xpose.msra.mxu0 %v516
    %520 = vmatprep.subr.mxu0 0.0
    %521 = vmatpush1.xpose.msra.mxu0 0.0
    %522 = vmatprep.subr.mxu0 0.0
    %523 = vmatpush1.xpose.msra.mxu0 0.0
    %524 = vmatprep.subr.mxu0 0.0
    %525 = vmatpush1.xpose.msra.mxu0 0.0
    %526 = vmatprep.subr.mxu0 0.0
    %527 = vmatpush1.xpose.msra.mxu0 0.0
    %528 = vmatprep.subr.mxu0 0.0
    %529 = vmatpush1.xpose.msra.mxu0 0.0
    %530 = vmatprep.subr.mxu0 0.0
    %531 = vmatpush1.xpose.msra.mxu0 0.0
    %532 = vmatprep.subr.mxu0 0.0
    %533 = vmatpush1.xpose.msra.mxu0 0.0
    %534 = vmatprep.subr.mxu0 0.0
    %535 = vmatpush1.xpose.msra.mxu0 0.0
    %536 = vmatprep.subr.mxu0 0.0
    %537 = vmatpush1.xpose.msra.mxu0 0.0
    %538 = vmatprep.subr.mxu0 0.0
    %539 = vmatpush1.xpose.msra.mxu0 0.0
    %540 = vmatprep.subr.mxu0 0.0
    %541 = vmatpush1.xpose.msra.mxu0 0.0
    %542 = vmatprep.subr.mxu0 0.0
    %543 = vmatpush1.xpose.msra.mxu0 0.0
    %544 = vmatprep.subr.mxu0 0.0
    %545 = vmatpush1.xpose.msra.mxu0 0.0
    %546 = vmatprep.subr.mxu0 0.0
    %547 = vmatpush1.xpose.msra.mxu0 0.0
    %548 = vmatprep.subr.mxu0 0.0
    %549 = vmatpush1.xpose.msra.mxu0 0.0
    %550 = vmatprep.subr.mxu0 0.0
    %551 = vmatpush1.xpose.msra.mxu0 0.0
    %552 = vmatprep.subr.mxu0 0.0
    %553 = vmatpush1.xpose.msra.mxu0 0.0
    %554 = vmatprep.subr.mxu0 0.0
    %555 = vmatpush1.xpose.msra.mxu0 0.0
    %556 = vmatprep.subr.mxu0 0.0
    %557 = vmatpush1.xpose.msra.mxu0 0.0
    %558 = vmatprep.subr.mxu0 0.0
    %559 = vmatpush1.xpose.msra.mxu0 0.0
    %560 = vmatprep.subr.mxu0 0.0
    %561 = vmatpush1.xpose.msra.mxu0 0.0
    %562 = vmatprep.subr.mxu0 0.0
    %563 = vmatpush1.xpose.msra.mxu0 0.0
    %564 = vmatprep.subr.mxu0 0.0
    %565 = vmatpush1.xpose.msra.mxu0 0.0
    %566 = vmatprep.subr.mxu0 0.0
    %567 = vmatpush1.xpose.msra.mxu0 0.0
    %568 = vmatprep.subr.mxu0 0.0
    %569 = vmatpush1.xpose.msra.mxu0 0.0
    %570 = vmatprep.subr.mxu0 0.0
    %571 = vmatpush1.xpose.msra.mxu0 0.0
    %572 = vmatprep.subr.mxu0 0.0
    %573 = vmatpush1.xpose.msra.mxu0 0.0
    %574 = vmatprep.subr.mxu0 0.0
    %575 = vmatpush1.xpose.msra.mxu0 0.0
    %576 = vmatprep.subr.mxu0 0.0
    %577 = vmatpush1.xpose.msra.mxu0 0.0
    %578 = vmatprep.subr.mxu0 0.0
    %579 = vmatpush1.xpose.msra.mxu0 0.0
    %580 = vmatprep.subr.mxu0 0.0
    %581 = vmatpush1.xpose.msra.mxu0 0.0
    %582 = vmatprep.mubr.f32.mxu0 0.0
    %583 = vmatmul.mubr.f32.gmra.mrb[0].mxu0 %v514
    %v584 = vpop.f32.mrb[0].mxu0
    %v585 = vadd.f32 0.0, %v584
    %v586 = vpop.f32.mrb[0].mxu0
    %587 = vdwg.mxu0
    %588 = vrot.lane.b32.xlu0 %v358, 96
    %v589 = vpop.permute.xlu0 %588
    %v590 = vsel %vm361, %v358, 0
    %v592 = vsel %vm361, %v589, 0
    %594 = vmatprep.subr.mxu0 0.0
    %595 = vmatpush1.xpose.msra.mxu0 %v592
    %596 = vmatprep.subr.mxu0 0.0
    %597 = vmatpush1.xpose.msra.mxu0 0.0
    %598 = vmatprep.subr.mxu0 0.0
    %599 = vmatpush1.xpose.msra.mxu0 0.0
    %600 = vmatprep.subr.mxu0 0.0
    %601 = vmatpush1.xpose.msra.mxu0 0.0
    %602 = vmatprep.subr.mxu0 0.0
    %603 = vmatpush1.xpose.msra.mxu0 0.0
    %604 = vmatprep.subr.mxu0 0.0
    %605 = vmatpush1.xpose.msra.mxu0 0.0
    %606 = vmatprep.subr.mxu0 0.0
    %607 = vmatpush1.xpose.msra.mxu0 0.0
    %608 = vmatprep.subr.mxu0 0.0
    %609 = vmatpush1.xpose.msra.mxu0 0.0
    %610 = vmatprep.subr.mxu0 0.0
    %611 = vmatpush1.xpose.msra.mxu0 0.0
    %612 = vmatprep.subr.mxu0 0.0
    %613 = vmatpush1.xpose.msra.mxu0 0.0
    %614 = vmatprep.subr.mxu0 0.0
    %615 = vmatpush1.xpose.msra.mxu0 0.0
    %616 = vmatprep.subr.mxu0 0.0
    %617 = vmatpush1.xpose.msra.mxu0 0.0
    %618 = vmatprep.subr.mxu0 0.0
    %619 = vmatpush1.xpose.msra.mxu0 0.0
    %620 = vmatprep.subr.mxu0 0.0
    %621 = vmatpush1.xpose.msra.mxu0 0.0
    %622 = vmatprep.subr.mxu0 0.0
    %623 = vmatpush1.xpose.msra.mxu0 0.0
    %624 = vmatprep.subr.mxu0 0.0
    %625 = vmatpush1.xpose.msra.mxu0 0.0
    %626 = vmatprep.subr.mxu0 0.0
    %627 = vmatpush1.xpose.msra.mxu0 0.0
    %628 = vmatprep.subr.mxu0 0.0
    %629 = vmatpush1.xpose.msra.mxu0 0.0
    %630 = vmatprep.subr.mxu0 0.0
    %631 = vmatpush1.xpose.msra.mxu0 0.0
    %632 = vmatprep.subr.mxu0 0.0
    %633 = vmatpush1.xpose.msra.mxu0 0.0
    %634 = vmatprep.subr.mxu0 0.0
    %635 = vmatpush1.xpose.msra.mxu0 0.0
    %636 = vmatprep.subr.mxu0 0.0
    %637 = vmatpush1.xpose.msra.mxu0 0.0
    %638 = vmatprep.subr.mxu0 0.0
    %639 = vmatpush1.xpose.msra.mxu0 0.0
    %640 = vmatprep.subr.mxu0 0.0
    %641 = vmatpush1.xpose.msra.mxu0 0.0
    %642 = vmatprep.subr.mxu0 0.0
    %643 = vmatpush1.xpose.msra.mxu0 0.0
    %644 = vmatprep.subr.mxu0 0.0
    %645 = vmatpush1.xpose.msra.mxu0 0.0
    %646 = vmatprep.subr.mxu0 0.0
    %647 = vmatpush1.xpose.msra.mxu0 0.0
    %648 = vmatprep.subr.mxu0 0.0
    %649 = vmatpush1.xpose.msra.mxu0 0.0
    %650 = vmatprep.subr.mxu0 0.0
    %651 = vmatpush1.xpose.msra.mxu0 0.0
    %652 = vmatprep.subr.mxu0 0.0
    %653 = vmatpush1.xpose.msra.mxu0 0.0
    %654 = vmatprep.subr.mxu0 0.0
    %655 = vmatpush1.xpose.msra.mxu0 0.0
    %656 = vmatprep.subr.mxu0 0.0
    %657 = vmatpush1.xpose.msra.mxu0 0.0
    %658 = vmatprep.mubr.f32.mxu0 0.0
    %659 = vmatmul.mubr.f32.gmra.mrb[0].mxu0 %v590
    %v660 = vpop.f32.mrb[0].mxu0
    %v661 = vadd.f32 0.0, %v660
    %v662 = vpop.f32.mrb[0].mxu0
    %663 = vdwg.mxu0
    %v664 = vmul.f32 %v433, 0.35355338
    %v665 = vmul.f32 %v509, 0.35355338
    %v666 = vmul.f32 %v585, 0.35355338
    %v667 = vmul.f32 %v661, 0.35355338
    %v668 = vsel %vm361, %v664, -inf
    %669 = vmax.xlane.f32.xlu0 %v668
    %v670 = vpop.xlane.xlu0 %669
    %v671 = vsel %vm361, %v665, -inf
    %672 = vmax.xlane.f32.xlu0 %v671
    %v673 = vpop.xlane.xlu0 %672
    %v674 = vsel %vm361, %v666, -inf
    %675 = vmax.xlane.f32.xlu0 %v674
    %v676 = vpop.xlane.xlu0 %675
    %v677 = vsel %vm361, %v667, -inf
    %678 = vmax.xlane.f32.xlu0 %v677
    %v679 = vpop.xlane.xlu0 %678
    %v680 = vsub.f32 %v664, %v670
    %v681 = vsub.f32 %v665, %v673
    %v682 = vsub.f32 %v666, %v676
    %v683 = vsub.f32 %v667, %v679
    %v684 = vmul.f32 %v680, 1.442695
    %v685 = vpow.pop %v684
    %v686 = vmul.f32 %v681, 1.442695
    %v687 = vpow.pop %v686
    %v688 = vmul.f32 %v682, 1.442695
    %v689 = vpow.pop %v688
    %v690 = vmul.f32 %v683, 1.442695
    %v691 = vpow.pop %v690
    %v692 = vsel %vm361, %v685, 0.0
    %693 = vadd.xlane.f32.xlu0 %v692
    %v694 = vpop.xlane.xlu0 %693
    %v695 = vsel %vm361, %v687, 0.0
    %696 = vadd.xlane.f32.xlu0 %v695
    %v697 = vpop.xlane.xlu0 %696
    %v698 = vsel %vm361, %v689, 0.0
    %699 = vadd.xlane.f32.xlu0 %v698
    %v700 = vpop.xlane.xlu0 %699
    %v701 = vsel %vm361, %v691, 0.0
    %702 = vadd.xlane.f32.xlu0 %v701
    %v703 = vpop.xlane.xlu0 %702
    %v704 = vrcp.pop %v694
    %v705 = vrcp.pop %v697
    %v706 = vrcp.pop %v700
    %v707 = vrcp.pop %v703
    %v708 = vmul.f32 %v685, %v704
    %v709 = vmul.f32 %v687, %v705
    %v710 = vmul.f32 %v689, %v706
    %v711 = vmul.f32 %v691, %v707
    %712 = vrot.lane.b32.xlu0 %v349, 64
    %v713 = vpop.permute.xlu0 %712
    %v716 = vsel %vm361, %v708, 0
    %718 = vmatprep.subr.mxu0 0.0
    %719 = vmatpush1.msra.mxu0 %v713
    %720 = vmatprep.subr.mxu0 0.0
    %721 = vmatpush1.msra.mxu0 0.0
    %722 = vmatprep.subr.mxu0 0.0
    %723 = vmatpush1.msra.mxu0 0.0
    %724 = vmatprep.subr.mxu0 0.0
    %725 = vmatpush1.msra.mxu0 0.0
    %726 = vmatprep.subr.mxu0 0.0
    %727 = vmatpush1.msra.mxu0 0.0
    %728 = vmatprep.subr.mxu0 0.0
    %729 = vmatpush1.msra.mxu0 0.0
    %730 = vmatprep.subr.mxu0 0.0
    %731 = vmatpush1.msra.mxu0 0.0
    %732 = vmatprep.subr.mxu0 0.0
    %733 = vmatpush1.msra.mxu0 0.0
    %734 = vmatprep.subr.mxu0 0.0
    %735 = vmatpush1.msra.mxu0 0.0
    %736 = vmatprep.subr.mxu0 0.0
    %737 = vmatpush1.msra.mxu0 0.0
    %738 = vmatprep.subr.mxu0 0.0
    %739 = vmatpush1.msra.mxu0 0.0
    %740 = vmatprep.subr.mxu0 0.0
    %741 = vmatpush1.msra.mxu0 0.0
    %742 = vmatprep.subr.mxu0 0.0
    %743 = vmatpush1.msra.mxu0 0.0
    %744 = vmatprep.subr.mxu0 0.0
    %745 = vmatpush1.msra.mxu0 0.0
    %746 = vmatprep.subr.mxu0 0.0
    %747 = vmatpush1.msra.mxu0 0.0
    %748 = vmatprep.subr.mxu0 0.0
    %749 = vmatpush1.msra.mxu0 0.0
    %750 = vmatprep.subr.mxu0 0.0
    %751 = vmatpush1.msra.mxu0 0.0
    %752 = vmatprep.subr.mxu0 0.0
    %753 = vmatpush1.msra.mxu0 0.0
    %754 = vmatprep.subr.mxu0 0.0
    %755 = vmatpush1.msra.mxu0 0.0
    %756 = vmatprep.subr.mxu0 0.0
    %757 = vmatpush1.msra.mxu0 0.0
    %758 = vmatprep.subr.mxu0 0.0
    %759 = vmatpush1.msra.mxu0 0.0
    %760 = vmatprep.subr.mxu0 0.0
    %761 = vmatpush1.msra.mxu0 0.0
    %762 = vmatprep.subr.mxu0 0.0
    %763 = vmatpush1.msra.mxu0 0.0
    %764 = vmatprep.subr.mxu0 0.0
    %765 = vmatpush1.msra.mxu0 0.0
    %766 = vmatprep.subr.mxu0 0.0
    %767 = vmatpush1.msra.mxu0 0.0
    %768 = vmatprep.subr.mxu0 0.0
    %769 = vmatpush1.msra.mxu0 0.0
    %770 = vmatprep.subr.mxu0 0.0
    %771 = vmatpush1.msra.mxu0 0.0
    %772 = vmatprep.subr.mxu0 0.0
    %773 = vmatpush1.msra.mxu0 0.0
    %774 = vmatprep.subr.mxu0 0.0
    %775 = vmatpush1.msra.mxu0 0.0
    %776 = vmatprep.subr.mxu0 0.0
    %777 = vmatpush1.msra.mxu0 0.0
    %778 = vmatprep.subr.mxu0 0.0
    %779 = vmatpush1.msra.mxu0 0.0
    %780 = vmatprep.subr.mxu0 0.0
    %781 = vmatpush1.msra.mxu0 0.0
    %782 = vmatprep.mubr.f32.mxu0 0.0
    %783 = vmatmul.mubr.f32.gmra.mrb[0].mxu0 %v716
    %v784 = vpop.f32.mrb[0].mxu0
    %v785 = vadd.f32 0.0, %v784
    %v786 = vpop.f32.mrb[0].mxu0
    %787 = vdwg.mxu0
    %788 = vrot.lane.b32.xlu0 %v354, 64
    %v789 = vpop.permute.xlu0 %788
    %v792 = vsel %vm361, %v709, 0
    %794 = vmatprep.subr.mxu0 0.0
    %795 = vmatpush1.msra.mxu0 %v789
    %796 = vmatprep.subr.mxu0 0.0
    %797 = vmatpush1.msra.mxu0 0.0
    %798 = vmatprep.subr.mxu0 0.0
    %799 = vmatpush1.msra.mxu0 0.0
    %800 = vmatprep.subr.mxu0 0.0
    %801 = vmatpush1.msra.mxu0 0.0
    %802 = vmatprep.subr.mxu0 0.0
    %803 = vmatpush1.msra.mxu0 0.0
    %804 = vmatprep.subr.mxu0 0.0
    %805 = vmatpush1.msra.mxu0 0.0
    %806 = vmatprep.subr.mxu0 0.0
    %807 = vmatpush1.msra.mxu0 0.0
    %808 = vmatprep.subr.mxu0 0.0
    %809 = vmatpush1.msra.mxu0 0.0
    %810 = vmatprep.subr.mxu0 0.0
    %811 = vmatpush1.msra.mxu0 0.0
    %812 = vmatprep.subr.mxu0 0.0
    %813 = vmatpush1.msra.mxu0 0.0
    %814 = vmatprep.subr.mxu0 0.0
    %815 = vmatpush1.msra.mxu0 0.0
    %816 = vmatprep.subr.mxu0 0.0
    %817 = vmatpush1.msra.mxu0 0.0
    %818 = vmatprep.subr.mxu0 0.0
    %819 = vmatpush1.msra.mxu0 0.0
    %820 = vmatprep.subr.mxu0 0.0
    %821 = vmatpush1.msra.mxu0 0.0
    %822 = vmatprep.subr.mxu0 0.0
    %823 = vmatpush1.msra.mxu0 0.0
    %824 = vmatprep.subr.mxu0 0.0
    %825 = vmatpush1.msra.mxu0 0.0
    %826 = vmatprep.subr.mxu0 0.0
    %827 = vmatpush1.msra.mxu0 0.0
    %828 = vmatprep.subr.mxu0 0.0
    %829 = vmatpush1.msra.mxu0 0.0
    %830 = vmatprep.subr.mxu0 0.0
    %831 = vmatpush1.msra.mxu0 0.0
    %832 = vmatprep.subr.mxu0 0.0
    %833 = vmatpush1.msra.mxu0 0.0
    %834 = vmatprep.subr.mxu0 0.0
    %835 = vmatpush1.msra.mxu0 0.0
    %836 = vmatprep.subr.mxu0 0.0
    %837 = vmatpush1.msra.mxu0 0.0
    %838 = vmatprep.subr.mxu0 0.0
    %839 = vmatpush1.msra.mxu0 0.0
    %840 = vmatprep.subr.mxu0 0.0
    %841 = vmatpush1.msra.mxu0 0.0
    %842 = vmatprep.subr.mxu0 0.0
    %843 = vmatpush1.msra.mxu0 0.0
    %844 = vmatprep.subr.mxu0 0.0
    %845 = vmatpush1.msra.mxu0 0.0
    %846 = vmatprep.subr.mxu0 0.0
    %847 = vmatpush1.msra.mxu0 0.0
    %848 = vmatprep.subr.mxu0 0.0
    %849 = vmatpush1.msra.mxu0 0.0
    %850 = vmatprep.subr.mxu0 0.0
    %851 = vmatpush1.msra.mxu0 0.0
    %852 = vmatprep.subr.mxu0 0.0
    %853 = vmatpush1.msra.mxu0 0.0
    %854 = vmatprep.subr.mxu0 0.0
    %855 = vmatpush1.msra.mxu0 0.0
    %856 = vmatprep.subr.mxu0 0.0
    %857 = vmatpush1.msra.mxu0 0.0
    %858 = vmatprep.mubr.f32.mxu0 0.0
    %859 = vmatmul.mubr.f32.gmra.mrb[0].mxu0 %v792
    %v860 = vpop.f32.mrb[0].mxu0
    %v861 = vadd.f32 0.0, %v860
    %v862 = vpop.f32.mrb[0].mxu0
    %863 = vdwg.mxu0
    %864 = vrot.lane.b32.xlu0 %v356, 64
    %v865 = vpop.permute.xlu0 %864
    %v868 = vsel %vm361, %v710, 0
    %870 = vmatprep.subr.mxu0 0.0
    %871 = vmatpush1.msra.mxu0 %v865
    %872 = vmatprep.subr.mxu0 0.0
    %873 = vmatpush1.msra.mxu0 0.0
    %874 = vmatprep.subr.mxu0 0.0
    %875 = vmatpush1.msra.mxu0 0.0
    %876 = vmatprep.subr.mxu0 0.0
    %877 = vmatpush1.msra.mxu0 0.0
    %878 = vmatprep.subr.mxu0 0.0
    %879 = vmatpush1.msra.mxu0 0.0
    %880 = vmatprep.subr.mxu0 0.0
    %881 = vmatpush1.msra.mxu0 0.0
    %882 = vmatprep.subr.mxu0 0.0
    %883 = vmatpush1.msra.mxu0 0.0
    %884 = vmatprep.subr.mxu0 0.0
    %885 = vmatpush1.msra.mxu0 0.0
    %886 = vmatprep.subr.mxu0 0.0
    %887 = vmatpush1.msra.mxu0 0.0
    %888 = vmatprep.subr.mxu0 0.0
    %889 = vmatpush1.msra.mxu0 0.0
    %890 = vmatprep.subr.mxu0 0.0
    %891 = vmatpush1.msra.mxu0 0.0
    %892 = vmatprep.subr.mxu0 0.0
    %893 = vmatpush1.msra.mxu0 0.0
    %894 = vmatprep.subr.mxu0 0.0
    %895 = vmatpush1.msra.mxu0 0.0
    %896 = vmatprep.subr.mxu0 0.0
    %897 = vmatpush1.msra.mxu0 0.0
    %898 = vmatprep.subr.mxu0 0.0
    %899 = vmatpush1.msra.mxu0 0.0
    %900 = vmatprep.subr.mxu0 0.0
    %901 = vmatpush1.msra.mxu0 0.0
    %902 = vmatprep.subr.mxu0 0.0
    %903 = vmatpush1.msra.mxu0 0.0
    %904 = vmatprep.subr.mxu0 0.0
    %905 = vmatpush1.msra.mxu0 0.0
    %906 = vmatprep.subr.mxu0 0.0
    %907 = vmatpush1.msra.mxu0 0.0
    %908 = vmatprep.subr.mxu0 0.0
    %909 = vmatpush1.msra.mxu0 0.0
    %910 = vmatprep.subr.mxu0 0.0
    %911 = vmatpush1.msra.mxu0 0.0
    %912 = vmatprep.subr.mxu0 0.0
    %913 = vmatpush1.msra.mxu0 0.0
    %914 = vmatprep.subr.mxu0 0.0
    %915 = vmatpush1.msra.mxu0 0.0
    %916 = vmatprep.subr.mxu0 0.0
    %917 = vmatpush1.msra.mxu0 0.0
    %918 = vmatprep.subr.mxu0 0.0
    %919 = vmatpush1.msra.mxu0 0.0
    %920 = vmatprep.subr.mxu0 0.0
    %921 = vmatpush1.msra.mxu0 0.0
    %922 = vmatprep.subr.mxu0 0.0
    %923 = vmatpush1.msra.mxu0 0.0
    %924 = vmatprep.subr.mxu0 0.0
    %925 = vmatpush1.msra.mxu0 0.0
    %926 = vmatprep.subr.mxu0 0.0
    %927 = vmatpush1.msra.mxu0 0.0
    %928 = vmatprep.subr.mxu0 0.0
    %929 = vmatpush1.msra.mxu0 0.0
    %930 = vmatprep.subr.mxu0 0.0
    %931 = vmatpush1.msra.mxu0 0.0
    %932 = vmatprep.subr.mxu0 0.0
    %933 = vmatpush1.msra.mxu0 0.0
    %934 = vmatprep.mubr.f32.mxu0 0.0
    %935 = vmatmul.mubr.f32.gmra.mrb[0].mxu0 %v868
    %v936 = vpop.f32.mrb[0].mxu0
    %v937 = vadd.f32 0.0, %v936
    %v938 = vpop.f32.mrb[0].mxu0
    %939 = vdwg.mxu0
    %940 = vrot.lane.b32.xlu0 %v358, 64
    %v941 = vpop.permute.xlu0 %940
    %v944 = vsel %vm361, %v711, 0
    %946 = vmatprep.subr.mxu0 0.0
    %947 = vmatpush1.msra.mxu0 %v941
    %948 = vmatprep.subr.mxu0 0.0
    %949 = vmatpush1.msra.mxu0 0.0
    %950 = vmatprep.subr.mxu0 0.0
    %951 = vmatpush1.msra.mxu0 0.0
    %952 = vmatprep.subr.mxu0 0.0
    %953 = vmatpush1.msra.mxu0 0.0
    %954 = vmatprep.subr.mxu0 0.0
    %955 = vmatpush1.msra.mxu0 0.0
    %956 = vmatprep.subr.mxu0 0.0
    %957 = vmatpush1.msra.mxu0 0.0
    %958 = vmatprep.subr.mxu0 0.0
    %959 = vmatpush1.msra.mxu0 0.0
    %960 = vmatprep.subr.mxu0 0.0
    %961 = vmatpush1.msra.mxu0 0.0
    %962 = vmatprep.subr.mxu0 0.0
    %963 = vmatpush1.msra.mxu0 0.0
    %964 = vmatprep.subr.mxu0 0.0
    %965 = vmatpush1.msra.mxu0 0.0
    %966 = vmatprep.subr.mxu0 0.0
    %967 = vmatpush1.msra.mxu0 0.0
    %968 = vmatprep.subr.mxu0 0.0
    %969 = vmatpush1.msra.mxu0 0.0
    %970 = vmatprep.subr.mxu0 0.0
    %971 = vmatpush1.msra.mxu0 0.0
    %972 = vmatprep.subr.mxu0 0.0
    %973 = vmatpush1.msra.mxu0 0.0
    %974 = vmatprep.subr.mxu0 0.0
    %975 = vmatpush1.msra.mxu0 0.0
    %976 = vmatprep.subr.mxu0 0.0
    %977 = vmatpush1.msra.mxu0 0.0
    %978 = vmatprep.subr.mxu0 0.0
    %979 = vmatpush1.msra.mxu0 0.0
    %980 = vmatprep.subr.mxu0 0.0
    %981 = vmatpush1.msra.mxu0 0.0
    %982 = vmatprep.subr.mxu0 0.0
    %983 = vmatpush1.msra.mxu0 0.0
    %984 = vmatprep.subr.mxu0 0.0
    %985 = vmatpush1.msra.mxu0 0.0
    %986 = vmatprep.subr.mxu0 0.0
    %987 = vmatpush1.msra.mxu0 0.0
    %988 = vmatprep.subr.mxu0 0.0
    %989 = vmatpush1.msra.mxu0 0.0
    %990 = vmatprep.subr.mxu0 0.0
    %991 = vmatpush1.msra.mxu0 0.0
    %992 = vmatprep.subr.mxu0 0.0
    %993 = vmatpush1.msra.mxu0 0.0
    %994 = vmatprep.subr.mxu0 0.0
    %995 = vmatpush1.msra.mxu0 0.0
    %996 = vmatprep.subr.mxu0 0.0
    %997 = vmatpush1.msra.mxu0 0.0
    %998 = vmatprep.subr.mxu0 0.0
    %999 = vmatpush1.msra.mxu0 0.0
    %1000 = vmatprep.subr.mxu0 0.0
    %1001 = vmatpush1.msra.mxu0 0.0
    %1002 = vmatprep.subr.mxu0 0.0
    %1003 = vmatpush1.msra.mxu0 0.0
    %1004 = vmatprep.subr.mxu0 0.0
    %1005 = vmatpush1.msra.mxu0 0.0
    %1006 = vmatprep.subr.mxu0 0.0
    %1007 = vmatpush1.msra.mxu0 0.0
    %1008 = vmatprep.subr.mxu0 0.0
    %1009 = vmatpush1.msra.mxu0 0.0
    %1010 = vmatprep.mubr.f32.mxu0 0.0
    %1011 = vmatmul.mubr.f32.gmra.mrb[0].mxu0 %v944
    %v1012 = vpop.f32.mrb[0].mxu0
    %v1013 = vadd.f32 0.0, %v1012
    %v1014 = vpop.f32.mrb[0].mxu0
    %1015 = vdwg.mxu0
    %1017 = vrot.lane.b32.xlu0 %v861, 8
    %v1018 = vpop.permute.xlu0 %1017
    %1021 = vrot.lane.b32.xlu0 %v937, 16
    %v1022 = vpop.permute.xlu0 %1021
    %1025 = vrot.lane.b32.xlu0 %v1013, 24
    %v1026 = vpop.permute.xlu0 %1025
    %v1028 = vsel %vm361, %v785, %v1018
    %vm1029 = vcmask 130048
    %v1030 = vsel %vm1029, %v1028, %v1022
    %vm1031 = vcmask 195584
    %v1032 = vsel %vm1031, %v1030, %v1026
    %v1033 = vld [vmem:[%s8] sm:$0xff]
    %v1034 = vld [vmem:[%s8 + $0x8] sm:$0xff]
    %v1035 = vld [vmem:[%s8 + $0x10] sm:$0xff]
    %v1036 = vld [vmem:[%s8 + $0x18] sm:$0xff]
    %v1037 = vld [vmem:[%s9] sm:$0x1]
    %v1039 = vlaneseq
    %v1040 = vshrl.u32 %v1039, 7
    %v1041 = vsub.s32 0, %v1040
    %v1042 = vrot.slane %v1037, %v1041
    %v1045 = vsel %vm278, %v1032, 0
    %1047 = vmatprep.subr.mxu0 0.0
    %1048 = vmatpush1.msra.mxu0 %v1033
    %1049 = vmatprep.subr.mxu0 0.0
    %1050 = vmatpush1.msra.mxu0 %v1034
    %1051 = vmatprep.subr.mxu0 0.0
    %1052 = vmatpush1.msra.mxu0 %v1035
    %1053 = vmatprep.subr.mxu0 0.0
    %1054 = vmatpush1.msra.mxu0 %v1036
    %1055 = vmatprep.subr.mxu0 0.0
    %1056 = vmatpush1.msra.mxu0 0.0
    %1057 = vmatprep.subr.mxu0 0.0
    %1058 = vmatpush1.msra.mxu0 0.0
    %1059 = vmatprep.subr.mxu0 0.0
    %1060 = vmatpush1.msra.mxu0 0.0
    %1061 = vmatprep.subr.mxu0 0.0
    %1062 = vmatpush1.msra.mxu0 0.0
    %1063 = vmatprep.subr.mxu0 0.0
    %1064 = vmatpush1.msra.mxu0 0.0
    %1065 = vmatprep.subr.mxu0 0.0
    %1066 = vmatpush1.msra.mxu0 0.0
    %1067 = vmatprep.subr.mxu0 0.0
    %1068 = vmatpush1.msra.mxu0 0.0
    %1069 = vmatprep.subr.mxu0 0.0
    %1070 = vmatpush1.msra.mxu0 0.0
    %1071 = vmatprep.subr.mxu0 0.0
    %1072 = vmatpush1.msra.mxu0 0.0
    %1073 = vmatprep.subr.mxu0 0.0
    %1074 = vmatpush1.msra.mxu0 0.0
    %1075 = vmatprep.subr.mxu0 0.0
    %1076 = vmatpush1.msra.mxu0 0.0
    %1077 = vmatprep.subr.mxu0 0.0
    %1078 = vmatpush1.msra.mxu0 0.0
    %1079 = vmatprep.subr.mxu0 0.0
    %1080 = vmatpush1.msra.mxu0 0.0
    %1081 = vmatprep.subr.mxu0 0.0
    %1082 = vmatpush1.msra.mxu0 0.0
    %1083 = vmatprep.subr.mxu0 0.0
    %1084 = vmatpush1.msra.mxu0 0.0
    %1085 = vmatprep.subr.mxu0 0.0
    %1086 = vmatpush1.msra.mxu0 0.0
    %1087 = vmatprep.subr.mxu0 0.0
    %1088 = vmatpush1.msra.mxu0 0.0
    %1089 = vmatprep.subr.mxu0 0.0
    %1090 = vmatpush1.msra.mxu0 0.0
    %1091 = vmatprep.subr.mxu0 0.0
    %1092 = vmatpush1.msra.mxu0 0.0
    %1093 = vmatprep.subr.mxu0 0.0
    %1094 = vmatpush1.msra.mxu0 0.0
    %1095 = vmatprep.subr.mxu0 0.0
    %1096 = vmatpush1.msra.mxu0 0.0
    %1097 = vmatprep.subr.mxu0 0.0
    %1098 = vmatpush1.msra.mxu0 0.0
    %1099 = vmatprep.subr.mxu0 0.0
    %1100 = vmatpush1.msra.mxu0 0.0
    %1101 = vmatprep.subr.mxu0 0.0
    %1102 = vmatpush1.msra.mxu0 0.0
    %1103 = vmatprep.subr.mxu0 0.0
    %1104 = vmatpush1.msra.mxu0 0.0
    %1105 = vmatprep.subr.mxu0 0.0
    %1106 = vmatpush1.msra.mxu0 0.0
    %1107 = vmatprep.subr.mxu0 0.0
    %1108 = vmatpush1.msra.mxu0 0.0
    %1109 = vmatprep.subr.mxu0 0.0
    %1110 = vmatpush1.msra.mxu0 0.0
    %1111 = vmatprep.mubr.f32.mxu0 0.0
    %1112 = vmatmul.mubr.f32.gmra.mrb[0].mxu0 %v1045
    %v1113 = vpop.f32.mrb[0].mxu0
    %v1114 = vadd.f32 %v1042, %v1113
    %v1115 = vpop.f32.mrb[0].mxu0
    %1116 = vdwg.mxu0
    %s1117 = scalar_lea.vmem %s6, 32
    %v1118 = vld [vmem:[%s1117] sm:$0xff]
    %v1119 = vld [vmem:[%s1117 + $0x8] sm:$0xff]
    %v1120 = vld [vmem:[%s1117 + $0x10] sm:$0xff]
    %v1121 = vld [vmem:[%s1117 + $0x18] sm:$0xff]
    %s1122 = scalar_lea.vmem %s7, 1
    %v1123 = vld [vmem:[%s1122] sm:$0x1]
    %v1125 = vlaneseq
    %v1126 = vshrl.u32 %v1125, 7
    %v1127 = vsub.s32 0, %v1126
    %v1128 = vrot.slane %v1123, %v1127
    %v1131 = vsel %vm278, %v264, 0
    %1133 = vmatprep.subr.mxu0 0.0
    %1134 = vmatpush1.msra.mxu0 %v1118
    %1135 = vmatprep.subr.mxu0 0.0
    %1136 = vmatpush1.msra.mxu0 %v1119
    %1137 = vmatprep.subr.mxu0 0.0
    %1138 = vmatpush1.msra.mxu0 %v1120
    %1139 = vmatprep.subr.mxu0 0.0
    %1140 = vmatpush1.msra.mxu0 %v1121
    %1141 = vmatprep.subr.mxu0 0.0
    %1142 = vmatpush1.msra.mxu0 0.0
    %1143 = vmatprep.subr.mxu0 0.0
    %1144 = vmatpush1.msra.mxu0 0.0
    %1145 = vmatprep.subr.mxu0 0.0
    %1146 = vmatpush1.msra.mxu0 0.0
    %1147 = vmatprep.subr.mxu0 0.0
    %1148 = vmatpush1.msra.mxu0 0.0
    %1149 = vmatprep.subr.mxu0 0.0
    %1150 = vmatpush1.msra.mxu0 0.0
    %1151 = vmatprep.subr.mxu0 0.0
    %1152 = vmatpush1.msra.mxu0 0.0
    %1153 = vmatprep.subr.mxu0 0.0
    %1154 = vmatpush1.msra.mxu0 0.0
    %1155 = vmatprep.subr.mxu0 0.0
    %1156 = vmatpush1.msra.mxu0 0.0
    %1157 = vmatprep.subr.mxu0 0.0
    %1158 = vmatpush1.msra.mxu0 0.0
    %1159 = vmatprep.subr.mxu0 0.0
    %1160 = vmatpush1.msra.mxu0 0.0
    %1161 = vmatprep.subr.mxu0 0.0
    %1162 = vmatpush1.msra.mxu0 0.0
    %1163 = vmatprep.subr.mxu0 0.0
    %1164 = vmatpush1.msra.mxu0 0.0
    %1165 = vmatprep.subr.mxu0 0.0
    %1166 = vmatpush1.msra.mxu0 0.0
    %1167 = vmatprep.subr.mxu0 0.0
    %1168 = vmatpush1.msra.mxu0 0.0
    %1169 = vmatprep.subr.mxu0 0.0
    %1170 = vmatpush1.msra.mxu0 0.0
    %1171 = vmatprep.subr.mxu0 0.0
    %1172 = vmatpush1.msra.mxu0 0.0
    %1173 = vmatprep.subr.mxu0 0.0
    %1174 = vmatpush1.msra.mxu0 0.0
    %1175 = vmatprep.subr.mxu0 0.0
    %1176 = vmatpush1.msra.mxu0 0.0
    %1177 = vmatprep.subr.mxu0 0.0
    %1178 = vmatpush1.msra.mxu0 0.0
    %1179 = vmatprep.subr.mxu0 0.0
    %1180 = vmatpush1.msra.mxu0 0.0
    %1181 = vmatprep.subr.mxu0 0.0
    %1182 = vmatpush1.msra.mxu0 0.0
    %1183 = vmatprep.subr.mxu0 0.0
    %1184 = vmatpush1.msra.mxu0 0.0
    %1185 = vmatprep.subr.mxu0 0.0
    %1186 = vmatpush1.msra.mxu0 0.0
    %1187 = vmatprep.subr.mxu0 0.0
    %1188 = vmatpush1.msra.mxu0 0.0
    %1189 = vmatprep.subr.mxu0 0.0
    %1190 = vmatpush1.msra.mxu0 0.0
    %1191 = vmatprep.subr.mxu0 0.0
    %1192 = vmatpush1.msra.mxu0 0.0
    %1193 = vmatprep.subr.mxu0 0.0
    %1194 = vmatpush1.msra.mxu0 0.0
    %1195 = vmatprep.subr.mxu0 0.0
    %1196 = vmatpush1.msra.mxu0 0.0
    %1197 = vmatprep.mubr.f32.mxu0 0.0
    %1198 = vmatmul.mubr.f32.gmra.mrb[0].mxu0 %v1131
    %v1199 = vpop.f32.mrb[0].mxu0
    %v1200 = vadd.f32 %v1128, %v1199
    %v1201 = vpop.f32.mrb[0].mxu0
    %1202 = vdwg.mxu0
    %1204 = vrot.lane.b32.xlu0 %v1200, 120
    %v1205 = vpop.permute.xlu0 %1204
    %1206 = vrot.lane.b32.xlu0 %v1200, 112
    %v1207 = vpop.permute.xlu0 %1206
    %1208 = vrot.lane.b32.xlu0 %v1200, 104
    %v1209 = vpop.permute.xlu0 %1208
    %1210 = vrot.lane.b32.xlu0 %v1200, 96
    %v1211 = vpop.permute.xlu0 %1210
    %v1212 = vsel %vm361, %v1200, 0
    %v1214 = vsel %vm361, %v1211, 0
    %1216 = vmatprep.subr.mxu0 0.0
    %1217 = vmatpush1.xpose.msra.mxu0 %v1214
    %1218 = vmatprep.subr.mxu0 0.0
    %1219 = vmatpush1.xpose.msra.mxu0 0.0
    %1220 = vmatprep.subr.mxu0 0.0
    %1221 = vmatpush1.xpose.msra.mxu0 0.0
    %1222 = vmatprep.subr.mxu0 0.0
    %1223 = vmatpush1.xpose.msra.mxu0 0.0
    %1224 = vmatprep.subr.mxu0 0.0
    %1225 = vmatpush1.xpose.msra.mxu0 0.0
    %1226 = vmatprep.subr.mxu0 0.0
    %1227 = vmatpush1.xpose.msra.mxu0 0.0
    %1228 = vmatprep.subr.mxu0 0.0
    %1229 = vmatpush1.xpose.msra.mxu0 0.0
    %1230 = vmatprep.subr.mxu0 0.0
    %1231 = vmatpush1.xpose.msra.mxu0 0.0
    %1232 = vmatprep.subr.mxu0 0.0
    %1233 = vmatpush1.xpose.msra.mxu0 0.0
    %1234 = vmatprep.subr.mxu0 0.0
    %1235 = vmatpush1.xpose.msra.mxu0 0.0
    %1236 = vmatprep.subr.mxu0 0.0
    %1237 = vmatpush1.xpose.msra.mxu0 0.0
    %1238 = vmatprep.subr.mxu0 0.0
    %1239 = vmatpush1.xpose.msra.mxu0 0.0
    %1240 = vmatprep.subr.mxu0 0.0
    %1241 = vmatpush1.xpose.msra.mxu0 0.0
    %1242 = vmatprep.subr.mxu0 0.0
    %1243 = vmatpush1.xpose.msra.mxu0 0.0
    %1244 = vmatprep.subr.mxu0 0.0
    %1245 = vmatpush1.xpose.msra.mxu0 0.0
    %1246 = vmatprep.subr.mxu0 0.0
    %1247 = vmatpush1.xpose.msra.mxu0 0.0
    %1248 = vmatprep.subr.mxu0 0.0
    %1249 = vmatpush1.xpose.msra.mxu0 0.0
    %1250 = vmatprep.subr.mxu0 0.0
    %1251 = vmatpush1.xpose.msra.mxu0 0.0
    %1252 = vmatprep.subr.mxu0 0.0
    %1253 = vmatpush1.xpose.msra.mxu0 0.0
    %1254 = vmatprep.subr.mxu0 0.0
    %1255 = vmatpush1.xpose.msra.mxu0 0.0
    %1256 = vmatprep.subr.mxu0 0.0
    %1257 = vmatpush1.xpose.msra.mxu0 0.0
    %1258 = vmatprep.subr.mxu0 0.0
    %1259 = vmatpush1.xpose.msra.mxu0 0.0
    %1260 = vmatprep.subr.mxu0 0.0
    %1261 = vmatpush1.xpose.msra.mxu0 0.0
    %1262 = vmatprep.subr.mxu0 0.0
    %1263 = vmatpush1.xpose.msra.mxu0 0.0
    %1264 = vmatprep.subr.mxu0 0.0
    %1265 = vmatpush1.xpose.msra.mxu0 0.0
    %1266 = vmatprep.subr.mxu0 0.0
    %1267 = vmatpush1.xpose.msra.mxu0 0.0
    %1268 = vmatprep.subr.mxu0 0.0
    %1269 = vmatpush1.xpose.msra.mxu0 0.0
    %1270 = vmatprep.subr.mxu0 0.0
    %1271 = vmatpush1.xpose.msra.mxu0 0.0
    %1272 = vmatprep.subr.mxu0 0.0
    %1273 = vmatpush1.xpose.msra.mxu0 0.0
    %1274 = vmatprep.subr.mxu0 0.0
    %1275 = vmatpush1.xpose.msra.mxu0 0.0
    %1276 = vmatprep.subr.mxu0 0.0
    %1277 = vmatpush1.xpose.msra.mxu0 0.0
    %1278 = vmatprep.subr.mxu0 0.0
    %1279 = vmatpush1.xpose.msra.mxu0 0.0
    %1280 = vmatprep.mubr.f32.mxu0 0.0
    %1281 = vmatmul.mubr.f32.gmra.mrb[0].mxu0 %v1212
    %v1282 = vpop.f32.mrb[0].mxu0
    %v1283 = vadd.f32 0.0, %v1282
    %v1284 = vpop.f32.mrb[0].mxu0
    %1285 = vdwg.mxu0
    %1286 = vrot.lane.b32.xlu0 %v1205, 96
    %v1287 = vpop.permute.xlu0 %1286
    %v1288 = vsel %vm361, %v1205, 0
    %v1290 = vsel %vm361, %v1287, 0
    %1292 = vmatprep.subr.mxu0 0.0
    %1293 = vmatpush1.xpose.msra.mxu0 %v1290
    %1294 = vmatprep.subr.mxu0 0.0
    %1295 = vmatpush1.xpose.msra.mxu0 0.0
    %1296 = vmatprep.subr.mxu0 0.0
    %1297 = vmatpush1.xpose.msra.mxu0 0.0
    %1298 = vmatprep.subr.mxu0 0.0
    %1299 = vmatpush1.xpose.msra.mxu0 0.0
    %1300 = vmatprep.subr.mxu0 0.0
    %1301 = vmatpush1.xpose.msra.mxu0 0.0
    %1302 = vmatprep.subr.mxu0 0.0
    %1303 = vmatpush1.xpose.msra.mxu0 0.0
    %1304 = vmatprep.subr.mxu0 0.0
    %1305 = vmatpush1.xpose.msra.mxu0 0.0
    %1306 = vmatprep.subr.mxu0 0.0
    %1307 = vmatpush1.xpose.msra.mxu0 0.0
    %1308 = vmatprep.subr.mxu0 0.0
    %1309 = vmatpush1.xpose.msra.mxu0 0.0
    %1310 = vmatprep.subr.mxu0 0.0
    %1311 = vmatpush1.xpose.msra.mxu0 0.0
    %1312 = vmatprep.subr.mxu0 0.0
    %1313 = vmatpush1.xpose.msra.mxu0 0.0
    %1314 = vmatprep.subr.mxu0 0.0
    %1315 = vmatpush1.xpose.msra.mxu0 0.0
    %1316 = vmatprep.subr.mxu0 0.0
    %1317 = vmatpush1.xpose.msra.mxu0 0.0
    %1318 = vmatprep.subr.mxu0 0.0
    %1319 = vmatpush1.xpose.msra.mxu0 0.0
    %1320 = vmatprep.subr.mxu0 0.0
    %1321 = vmatpush1.xpose.msra.mxu0 0.0
    %1322 = vmatprep.subr.mxu0 0.0
    %1323 = vmatpush1.xpose.msra.mxu0 0.0
    %1324 = vmatprep.subr.mxu0 0.0
    %1325 = vmatpush1.xpose.msra.mxu0 0.0
    %1326 = vmatprep.subr.mxu0 0.0
    %1327 = vmatpush1.xpose.msra.mxu0 0.0
    %1328 = vmatprep.subr.mxu0 0.0
    %1329 = vmatpush1.xpose.msra.mxu0 0.0
    %1330 = vmatprep.subr.mxu0 0.0
    %1331 = vmatpush1.xpose.msra.mxu0 0.0
    %1332 = vmatprep.subr.mxu0 0.0
    %1333 = vmatpush1.xpose.msra.mxu0 0.0
    %1334 = vmatprep.subr.mxu0 0.0
    %1335 = vmatpush1.xpose.msra.mxu0 0.0
    %1336 = vmatprep.subr.mxu0 0.0
    %1337 = vmatpush1.xpose.msra.mxu0 0.0
    %1338 = vmatprep.subr.mxu0 0.0
    %1339 = vmatpush1.xpose.msra.mxu0 0.0
    %1340 = vmatprep.subr.mxu0 0.0
    %1341 = vmatpush1.xpose.msra.mxu0 0.0
    %1342 = vmatprep.subr.mxu0 0.0
    %1343 = vmatpush1.xpose.msra.mxu0 0.0
    %1344 = vmatprep.subr.mxu0 0.0
    %1345 = vmatpush1.xpose.msra.mxu0 0.0
    %1346 = vmatprep.subr.mxu0 0.0
    %1347 = vmatpush1.xpose.msra.mxu0 0.0
    %1348 = vmatprep.subr.mxu0 0.0
    %1349 = vmatpush1.xpose.msra.mxu0 0.0
    %1350 = vmatprep.subr.mxu0 0.0
    %1351 = vmatpush1.xpose.msra.mxu0 0.0
    %1352 = vmatprep.subr.mxu0 0.0
    %1353 = vmatpush1.xpose.msra.mxu0 0.0
    %1354 = vmatprep.subr.mxu0 0.0
    %1355 = vmatpush1.xpose.msra.mxu0 0.0
    %1356 = vmatprep.mubr.f32.mxu0 0.0
    %1357 = vmatmul.mubr.f32.gmra.mrb[0].mxu0 %v1288
    %v1358 = vpop.f32.mrb[0].mxu0
    %v1359 = vadd.f32 0.0, %v1358
    %v1360 = vpop.f32.mrb[0].mxu0
    %1361 = vdwg.mxu0
    %1362 = vrot.lane.b32.xlu0 %v1207, 96
    %v1363 = vpop.permute.xlu0 %1362
    %v1364 = vsel %vm361, %v1207, 0
    %v1366 = vsel %vm361, %v1363, 0
    %1368 = vmatprep.subr.mxu0 0.0
    %1369 = vmatpush1.xpose.msra.mxu0 %v1366
    %1370 = vmatprep.subr.mxu0 0.0
    %1371 = vmatpush1.xpose.msra.mxu0 0.0
    %1372 = vmatprep.subr.mxu0 0.0
    %1373 = vmatpush1.xpose.msra.mxu0 0.0
    %1374 = vmatprep.subr.mxu0 0.0
    %1375 = vmatpush1.xpose.msra.mxu0 0.0
    %1376 = vmatprep.subr.mxu0 0.0
    %1377 = vmatpush1.xpose.msra.mxu0 0.0
    %1378 = vmatprep.subr.mxu0 0.0
    %1379 = vmatpush1.xpose.msra.mxu0 0.0
    %1380 = vmatprep.subr.mxu0 0.0
    %1381 = vmatpush1.xpose.msra.mxu0 0.0
    %1382 = vmatprep.subr.mxu0 0.0
    %1383 = vmatpush1.xpose.msra.mxu0 0.0
    %1384 = vmatprep.subr.mxu0 0.0
    %1385 = vmatpush1.xpose.msra.mxu0 0.0
    %1386 = vmatprep.subr.mxu0 0.0
    %1387 = vmatpush1.xpose.msra.mxu0 0.0
    %1388 = vmatprep.subr.mxu0 0.0
    %1389 = vmatpush1.xpose.msra.mxu0 0.0
    %1390 = vmatprep.subr.mxu0 0.0
    %1391 = vmatpush1.xpose.msra.mxu0 0.0
    %1392 = vmatprep.subr.mxu0 0.0
    %1393 = vmatpush1.xpose.msra.mxu0 0.0
    %1394 = vmatprep.subr.mxu0 0.0
    %1395 = vmatpush1.xpose.msra.mxu0 0.0
    %1396 = vmatprep.subr.mxu0 0.0
    %1397 = vmatpush1.xpose.msra.mxu0 0.0
    %1398 = vmatprep.subr.mxu0 0.0
    %1399 = vmatpush1.xpose.msra.mxu0 0.0
    %1400 = vmatprep.subr.mxu0 0.0
    %1401 = vmatpush1.xpose.msra.mxu0 0.0
    %1402 = vmatprep.subr.mxu0 0.0
    %1403 = vmatpush1.xpose.msra.mxu0 0.0
    %1404 = vmatprep.subr.mxu0 0.0
    %1405 = vmatpush1.xpose.msra.mxu0 0.0
    %1406 = vmatprep.subr.mxu0 0.0
    %1407 = vmatpush1.xpose.msra.mxu0 0.0
    %1408 = vmatprep.subr.mxu0 0.0
    %1409 = vmatpush1.xpose.msra.mxu0 0.0
    %1410 = vmatprep.subr.mxu0 0.0
    %1411 = vmatpush1.xpose.msra.mxu0 0.0
    %1412 = vmatprep.subr.mxu0 0.0
    %1413 = vmatpush1.xpose.msra.mxu0 0.0
    %1414 = vmatprep.subr.mxu0 0.0
    %1415 = vmatpush1.xpose.msra.mxu0 0.0
    %1416 = vmatprep.subr.mxu0 0.0
    %1417 = vmatpush1.xpose.msra.mxu0 0.0
    %1418 = vmatprep.subr.mxu0 0.0
    %1419 = vmatpush1.xpose.msra.mxu0 0.0
    %1420 = vmatprep.subr.mxu0 0.0
    %1421 = vmatpush1.xpose.msra.mxu0 0.0
    %1422 = vmatprep.subr.mxu0 0.0
    %1423 = vmatpush1.xpose.msra.mxu0 0.0
    %1424 = vmatprep.subr.mxu0 0.0
    %1425 = vmatpush1.xpose.msra.mxu0 0.0
    %1426 = vmatprep.subr.mxu0 0.0
    %1427 = vmatpush1.xpose.msra.mxu0 0.0
    %1428 = vmatprep.subr.mxu0 0.0
    %1429 = vmatpush1.xpose.msra.mxu0 0.0
    %1430 = vmatprep.subr.mxu0 0.0
    %1431 = vmatpush1.xpose.msra.mxu0 0.0
    %1432 = vmatprep.mubr.f32.mxu0 0.0
    %1433 = vmatmul.mubr.f32.gmra.mrb[0].mxu0 %v1364
    %v1434 = vpop.f32.mrb[0].mxu0
    %v1435 = vadd.f32 0.0, %v1434
    %v1436 = vpop.f32.mrb[0].mxu0
    %1437 = vdwg.mxu0
    %1438 = vrot.lane.b32.xlu0 %v1209, 96
    %v1439 = vpop.permute.xlu0 %1438
    %v1440 = vsel %vm361, %v1209, 0
    %v1442 = vsel %vm361, %v1439, 0
    %1444 = vmatprep.subr.mxu0 0.0
    %1445 = vmatpush1.xpose.msra.mxu0 %v1442
    %1446 = vmatprep.subr.mxu0 0.0
    %1447 = vmatpush1.xpose.msra.mxu0 0.0
    %1448 = vmatprep.subr.mxu0 0.0
    %1449 = vmatpush1.xpose.msra.mxu0 0.0
    %1450 = vmatprep.subr.mxu0 0.0
    %1451 = vmatpush1.xpose.msra.mxu0 0.0
    %1452 = vmatprep.subr.mxu0 0.0
    %1453 = vmatpush1.xpose.msra.mxu0 0.0
    %1454 = vmatprep.subr.mxu0 0.0
    %1455 = vmatpush1.xpose.msra.mxu0 0.0
    %1456 = vmatprep.subr.mxu0 0.0
    %1457 = vmatpush1.xpose.msra.mxu0 0.0
    %1458 = vmatprep.subr.mxu0 0.0
    %1459 = vmatpush1.xpose.msra.mxu0 0.0
    %1460 = vmatprep.subr.mxu0 0.0
    %1461 = vmatpush1.xpose.msra.mxu0 0.0
    %1462 = vmatprep.subr.mxu0 0.0
    %1463 = vmatpush1.xpose.msra.mxu0 0.0
    %1464 = vmatprep.subr.mxu0 0.0
    %1465 = vmatpush1.xpose.msra.mxu0 0.0
    %1466 = vmatprep.subr.mxu0 0.0
    %1467 = vmatpush1.xpose.msra.mxu0 0.0
    %1468 = vmatprep.subr.mxu0 0.0
    %1469 = vmatpush1.xpose.msra.mxu0 0.0
    %1470 = vmatprep.subr.mxu0 0.0
    %1471 = vmatpush1.xpose.msra.mxu0 0.0
    %1472 = vmatprep.subr.mxu0 0.0
    %1473 = vmatpush1.xpose.msra.mxu0 0.0
    %1474 = vmatprep.subr.mxu0 0.0
    %1475 = vmatpush1.xpose.msra.mxu0 0.0
    %1476 = vmatprep.subr.mxu0 0.0
    %1477 = vmatpush1.xpose.msra.mxu0 0.0
    %1478 = vmatprep.subr.mxu0 0.0
    %1479 = vmatpush1.xpose.msra.mxu0 0.0
    %1480 = vmatprep.subr.mxu0 0.0
    %1481 = vmatpush1.xpose.msra.mxu0 0.0
    %1482 = vmatprep.subr.mxu0 0.0
    %1483 = vmatpush1.xpose.msra.mxu0 0.0
    %1484 = vmatprep.subr.mxu0 0.0
    %1485 = vmatpush1.xpose.msra.mxu0 0.0
    %1486 = vmatprep.subr.mxu0 0.0
    %1487 = vmatpush1.xpose.msra.mxu0 0.0
    %1488 = vmatprep.subr.mxu0 0.0
    %1489 = vmatpush1.xpose.msra.mxu0 0.0
    %1490 = vmatprep.subr.mxu0 0.0
    %1491 = vmatpush1.xpose.msra.mxu0 0.0
    %1492 = vmatprep.subr.mxu0 0.0
    %1493 = vmatpush1.xpose.msra.mxu0 0.0
    %1494 = vmatprep.subr.mxu0 0.0
    %1495 = vmatpush1.xpose.msra.mxu0 0.0
    %1496 = vmatprep.subr.mxu0 0.0
    %1497 = vmatpush1.xpose.msra.mxu0 0.0
    %1498 = vmatprep.subr.mxu0 0.0
    %1499 = vmatpush1.xpose.msra.mxu0 0.0
    %1500 = vmatprep.subr.mxu0 0.0
    %1501 = vmatpush1.xpose.msra.mxu0 0.0
    %1502 = vmatprep.subr.mxu0 0.0
    %1503 = vmatpush1.xpose.msra.mxu0 0.0
    %1504 = vmatprep.subr.mxu0 0.0
    %1505 = vmatpush1.xpose.msra.mxu0 0.0
    %1506 = vmatprep.subr.mxu0 0.0
    %1507 = vmatpush1.xpose.msra.mxu0 0.0
    %1508 = vmatprep.mubr.f32.mxu0 0.0
    %1509 = vmatmul.mubr.f32.gmra.mrb[0].mxu0 %v1440
    %v1510 = vpop.f32.mrb[0].mxu0
    %v1511 = vadd.f32 0.0, %v1510
    %v1512 = vpop.f32.mrb[0].mxu0
    %1513 = vdwg.mxu0
    %v1514 = vmul.f32 %v1283, 0.35355338
    %v1515 = vmul.f32 %v1359, 0.35355338
    %v1516 = vmul.f32 %v1435, 0.35355338
    %v1517 = vmul.f32 %v1511, 0.35355338
    %v1518 = vsel %vm361, %v1514, -inf
    %1519 = vmax.xlane.f32.xlu0 %v1518
    %v1520 = vpop.xlane.xlu0 %1519
    %v1521 = vsel %vm361, %v1515, -inf
    %1522 = vmax.xlane.f32.xlu0 %v1521
    %v1523 = vpop.xlane.xlu0 %1522
    %v1524 = vsel %vm361, %v1516, -inf
    %1525 = vmax.xlane.f32.xlu0 %v1524
    %v1526 = vpop.xlane.xlu0 %1525
    %v1527 = vsel %vm361, %v1517, -inf
    %1528 = vmax.xlane.f32.xlu0 %v1527
    %v1529 = vpop.xlane.xlu0 %1528
    %v1530 = vsub.f32 %v1514, %v1520
    %v1531 = vsub.f32 %v1515, %v1523
    %v1532 = vsub.f32 %v1516, %v1526
    %v1533 = vsub.f32 %v1517, %v1529
    %v1534 = vmul.f32 %v1530, 1.442695
    %v1535 = vpow.pop %v1534
    %v1536 = vmul.f32 %v1531, 1.442695
    %v1537 = vpow.pop %v1536
    %v1538 = vmul.f32 %v1532, 1.442695
    %v1539 = vpow.pop %v1538
    %v1540 = vmul.f32 %v1533, 1.442695
    %v1541 = vpow.pop %v1540
    %v1542 = vsel %vm361, %v1535, 0.0
    %1543 = vadd.xlane.f32.xlu0 %v1542
    %v1544 = vpop.xlane.xlu0 %1543
    %v1545 = vsel %vm361, %v1537, 0.0
    %1546 = vadd.xlane.f32.xlu0 %v1545
    %v1547 = vpop.xlane.xlu0 %1546
    %v1548 = vsel %vm361, %v1539, 0.0
    %1549 = vadd.xlane.f32.xlu0 %v1548
    %v1550 = vpop.xlane.xlu0 %1549
    %v1551 = vsel %vm361, %v1541, 0.0
    %1552 = vadd.xlane.f32.xlu0 %v1551
    %v1553 = vpop.xlane.xlu0 %1552
    %v1554 = vrcp.pop %v1544
    %v1555 = vrcp.pop %v1547
    %v1556 = vrcp.pop %v1550
    %v1557 = vrcp.pop %v1553
    %v1558 = vmul.f32 %v1535, %v1554
    %v1559 = vmul.f32 %v1537, %v1555
    %v1560 = vmul.f32 %v1539, %v1556
    %v1561 = vmul.f32 %v1541, %v1557
    %1562 = vrot.lane.b32.xlu0 %v1200, 64
    %v1563 = vpop.permute.xlu0 %1562
    %v1566 = vsel %vm361, %v1558, 0
    %1568 = vmatprep.subr.mxu0 0.0
    %1569 = vmatpush1.msra.mxu0 %v1563
    %1570 = vmatprep.subr.mxu0 0.0
    %1571 = vmatpush1.msra.mxu0 0.0
    %1572 = vmatprep.subr.mxu0 0.0
    %1573 = vmatpush1.msra.mxu0 0.0
    %1574 = vmatprep.subr.mxu0 0.0
    %1575 = vmatpush1.msra.mxu0 0.0
    %1576 = vmatprep.subr.mxu0 0.0
    %1577 = vmatpush1.msra.mxu0 0.0
    %1578 = vmatprep.subr.mxu0 0.0
    %1579 = vmatpush1.msra.mxu0 0.0
    %1580 = vmatprep.subr.mxu0 0.0
    %1581 = vmatpush1.msra.mxu0 0.0
    %1582 = vmatprep.subr.mxu0 0.0
    %1583 = vmatpush1.msra.mxu0 0.0
    %1584 = vmatprep.subr.mxu0 0.0
    %1585 = vmatpush1.msra.mxu0 0.0
    %1586 = vmatprep.subr.mxu0 0.0
    %1587 = vmatpush1.msra.mxu0 0.0
    %1588 = vmatprep.subr.mxu0 0.0
    %1589 = vmatpush1.msra.mxu0 0.0
    %1590 = vmatprep.subr.mxu0 0.0
    %1591 = vmatpush1.msra.mxu0 0.0
    %1592 = vmatprep.subr.mxu0 0.0
    %1593 = vmatpush1.msra.mxu0 0.0
    %1594 = vmatprep.subr.mxu0 0.0
    %1595 = vmatpush1.msra.mxu0 0.0
    %1596 = vmatprep.subr.mxu0 0.0
    %1597 = vmatpush1.msra.mxu0 0.0
    %1598 = vmatprep.subr.mxu0 0.0
    %1599 = vmatpush1.msra.mxu0 0.0
    %1600 = vmatprep.subr.mxu0 0.0
    %1601 = vmatpush1.msra.mxu0 0.0
    %1602 = vmatprep.subr.mxu0 0.0
    %1603 = vmatpush1.msra.mxu0 0.0
    %1604 = vmatprep.subr.mxu0 0.0
    %1605 = vmatpush1.msra.mxu0 0.0
    %1606 = vmatprep.subr.mxu0 0.0
    %1607 = vmatpush1.msra.mxu0 0.0
    %1608 = vmatprep.subr.mxu0 0.0
    %1609 = vmatpush1.msra.mxu0 0.0
    %1610 = vmatprep.subr.mxu0 0.0
    %1611 = vmatpush1.msra.mxu0 0.0
    %1612 = vmatprep.subr.mxu0 0.0
    %1613 = vmatpush1.msra.mxu0 0.0
    %1614 = vmatprep.subr.mxu0 0.0
    %1615 = vmatpush1.msra.mxu0 0.0
    %1616 = vmatprep.subr.mxu0 0.0
    %1617 = vmatpush1.msra.mxu0 0.0
    %1618 = vmatprep.subr.mxu0 0.0
    %1619 = vmatpush1.msra.mxu0 0.0
    %1620 = vmatprep.subr.mxu0 0.0
    %1621 = vmatpush1.msra.mxu0 0.0
    %1622 = vmatprep.subr.mxu0 0.0
    %1623 = vmatpush1.msra.mxu0 0.0
    %1624 = vmatprep.subr.mxu0 0.0
    %1625 = vmatpush1.msra.mxu0 0.0
    %1626 = vmatprep.subr.mxu0 0.0
    %1627 = vmatpush1.msra.mxu0 0.0
    %1628 = vmatprep.subr.mxu0 0.0
    %1629 = vmatpush1.msra.mxu0 0.0
    %1630 = vmatprep.subr.mxu0 0.0
    %1631 = vmatpush1.msra.mxu0 0.0
    %1632 = vmatprep.mubr.f32.mxu0 0.0
    %1633 = vmatmul.mubr.f32.gmra.mrb[0].mxu0 %v1566
    %v1634 = vpop.f32.mrb[0].mxu0
    %v1635 = vadd.f32 0.0, %v1634
    %v1636 = vpop.f32.mrb[0].mxu0
    %1637 = vdwg.mxu0
    %1638 = vrot.lane.b32.xlu0 %v1205, 64
    %v1639 = vpop.permute.xlu0 %1638
    %v1642 = vsel %vm361, %v1559, 0
    %1644 = vmatprep.subr.mxu0 0.0
    %1645 = vmatpush1.msra.mxu0 %v1639
    %1646 = vmatprep.subr.mxu0 0.0
    %1647 = vmatpush1.msra.mxu0 0.0
    %1648 = vmatprep.subr.mxu0 0.0
    %1649 = vmatpush1.msra.mxu0 0.0
    %1650 = vmatprep.subr.mxu0 0.0
    %1651 = vmatpush1.msra.mxu0 0.0
    %1652 = vmatprep.subr.mxu0 0.0
    %1653 = vmatpush1.msra.mxu0 0.0
    %1654 = vmatprep.subr.mxu0 0.0
    %1655 = vmatpush1.msra.mxu0 0.0
    %1656 = vmatprep.subr.mxu0 0.0
    %1657 = vmatpush1.msra.mxu0 0.0
    %1658 = vmatprep.subr.mxu0 0.0
    %1659 = vmatpush1.msra.mxu0 0.0
    %1660 = vmatprep.subr.mxu0 0.0
    %1661 = vmatpush1.msra.mxu0 0.0
    %1662 = vmatprep.subr.mxu0 0.0
    %1663 = vmatpush1.msra.mxu0 0.0
    %1664 = vmatprep.subr.mxu0 0.0
    %1665 = vmatpush1.msra.mxu0 0.0
    %1666 = vmatprep.subr.mxu0 0.0
    %1667 = vmatpush1.msra.mxu0 0.0
    %1668 = vmatprep.subr.mxu0 0.0
    %1669 = vmatpush1.msra.mxu0 0.0
    %1670 = vmatprep.subr.mxu0 0.0
    %1671 = vmatpush1.msra.mxu0 0.0
    %1672 = vmatprep.subr.mxu0 0.0
    %1673 = vmatpush1.msra.mxu0 0.0
    %1674 = vmatprep.subr.mxu0 0.0
    %1675 = vmatpush1.msra.mxu0 0.0
    %1676 = vmatprep.subr.mxu0 0.0
    %1677 = vmatpush1.msra.mxu0 0.0
    %1678 = vmatprep.subr.mxu0 0.0
    %1679 = vmatpush1.msra.mxu0 0.0
    %1680 = vmatprep.subr.mxu0 0.0
    %1681 = vmatpush1.msra.mxu0 0.0
    %1682 = vmatprep.subr.mxu0 0.0
    %1683 = vmatpush1.msra.mxu0 0.0
    %1684 = vmatprep.subr.mxu0 0.0
    %1685 = vmatpush1.msra.mxu0 0.0
    %1686 = vmatprep.subr.mxu0 0.0
    %1687 = vmatpush1.msra.mxu0 0.0
    %1688 = vmatprep.subr.mxu0 0.0
    %1689 = vmatpush1.msra.mxu0 0.0
    %1690 = vmatprep.subr.mxu0 0.0
    %1691 = vmatpush1.msra.mxu0 0.0
    %1692 = vmatprep.subr.mxu0 0.0
    %1693 = vmatpush1.msra.mxu0 0.0
    %1694 = vmatprep.subr.mxu0 0.0
    %1695 = vmatpush1.msra.mxu0 0.0
    %1696 = vmatprep.subr.mxu0 0.0
    %1697 = vmatpush1.msra.mxu0 0.0
    %1698 = vmatprep.subr.mxu0 0.0
    %1699 = vmatpush1.msra.mxu0 0.0
    %1700 = vmatprep.subr.mxu0 0.0
    %1701 = vmatpush1.msra.mxu0 0.0
    %1702 = vmatprep.subr.mxu0 0.0
    %1703 = vmatpush1.msra.mxu0 0.0
    %1704 = vmatprep.subr.mxu0 0.0
    %1705 = vmatpush1.msra.mxu0 0.0
    %1706 = vmatprep.subr.mxu0 0.0
    %1707 = vmatpush1.msra.mxu0 0.0
    %1708 = vmatprep.mubr.f32.mxu0 0.0
    %1709 = vmatmul.mubr.f32.gmra.mrb[0].mxu0 %v1642
    %v1710 = vpop.f32.mrb[0].mxu0
    %v1711 = vadd.f32 0.0, %v1710
    %v1712 = vpop.f32.mrb[0].mxu0
    %1713 = vdwg.mxu0
    %1714 = vrot.lane.b32.xlu0 %v1207, 64
    %v1715 = vpop.permute.xlu0 %1714
    %v1718 = vsel %vm361, %v1560, 0
    %1720 = vmatprep.subr.mxu0 0.0
    %1721 = vmatpush1.msra.mxu0 %v1715
    %1722 = vmatprep.subr.mxu0 0.0
    %1723 = vmatpush1.msra.mxu0 0.0
    %1724 = vmatprep.subr.mxu0 0.0
    %1725 = vmatpush1.msra.mxu0 0.0
    %1726 = vmatprep.subr.mxu0 0.0
    %1727 = vmatpush1.msra.mxu0 0.0
    %1728 = vmatprep.subr.mxu0 0.0
    %1729 = vmatpush1.msra.mxu0 0.0
    %1730 = vmatprep.subr.mxu0 0.0
    %1731 = vmatpush1.msra.mxu0 0.0
    %1732 = vmatprep.subr.mxu0 0.0
    %1733 = vmatpush1.msra.mxu0 0.0
    %1734 = vmatprep.subr.mxu0 0.0
    %1735 = vmatpush1.msra.mxu0 0.0
    %1736 = vmatprep.subr.mxu0 0.0
    %1737 = vmatpush1.msra.mxu0 0.0
    %1738 = vmatprep.subr.mxu0 0.0
    %1739 = vmatpush1.msra.mxu0 0.0
    %1740 = vmatprep.subr.mxu0 0.0
    %1741 = vmatpush1.msra.mxu0 0.0
    %1742 = vmatprep.subr.mxu0 0.0
    %1743 = vmatpush1.msra.mxu0 0.0
    %1744 = vmatprep.subr.mxu0 0.0
    %1745 = vmatpush1.msra.mxu0 0.0
    %1746 = vmatprep.subr.mxu0 0.0
    %1747 = vmatpush1.msra.mxu0 0.0
    %1748 = vmatprep.subr.mxu0 0.0
    %1749 = vmatpush1.msra.mxu0 0.0
    %1750 = vmatprep.subr.mxu0 0.0
    %1751 = vmatpush1.msra.mxu0 0.0
    %1752 = vmatprep.subr.mxu0 0.0
    %1753 = vmatpush1.msra.mxu0 0.0
    %1754 = vmatprep.subr.mxu0 0.0
    %1755 = vmatpush1.msra.mxu0 0.0
    %1756 = vmatprep.subr.mxu0 0.0
    %1757 = vmatpush1.msra.mxu0 0.0
    %1758 = vmatprep.subr.mxu0 0.0
    %1759 = vmatpush1.msra.mxu0 0.0
    %1760 = vmatprep.subr.mxu0 0.0
    %1761 = vmatpush1.msra.mxu0 0.0
    %1762 = vmatprep.subr.mxu0 0.0
    %1763 = vmatpush1.msra.mxu0 0.0
    %1764 = vmatprep.subr.mxu0 0.0
    %1765 = vmatpush1.msra.mxu0 0.0
    %1766 = vmatprep.subr.mxu0 0.0
    %1767 = vmatpush1.msra.mxu0 0.0
    %1768 = vmatprep.subr.mxu0 0.0
    %1769 = vmatpush1.msra.mxu0 0.0
    %1770 = vmatprep.subr.mxu0 0.0
    %1771 = vmatpush1.msra.mxu0 0.0
    %1772 = vmatprep.subr.mxu0 0.0
    %1773 = vmatpush1.msra.mxu0 0.0
    %1774 = vmatprep.subr.mxu0 0.0
    %1775 = vmatpush1.msra.mxu0 0.0
    %1776 = vmatprep.subr.mxu0 0.0
    %1777 = vmatpush1.msra.mxu0 0.0
    %1778 = vmatprep.subr.mxu0 0.0
    %1779 = vmatpush1.msra.mxu0 0.0
    %1780 = vmatprep.subr.mxu0 0.0
    %1781 = vmatpush1.msra.mxu0 0.0
    %1782 = vmatprep.subr.mxu0 0.0
    %1783 = vmatpush1.msra.mxu0 0.0
    %1784 = vmatprep.mubr.f32.mxu0 0.0
    %1785 = vmatmul.mubr.f32.gmra.mrb[0].mxu0 %v1718
    %v1786 = vpop.f32.mrb[0].mxu0
    %v1787 = vadd.f32 0.0, %v1786
    %v1788 = vpop.f32.mrb[0].mxu0
    %1789 = vdwg.mxu0
    %1790 = vrot.lane.b32.xlu0 %v1209, 64
    %v1791 = vpop.permute.xlu0 %1790
    %v1794 = vsel %vm361, %v1561, 0
    %1796 = vmatprep.subr.mxu0 0.0
    %1797 = vmatpush1.msra.mxu0 %v1791
    %1798 = vmatprep.subr.mxu0 0.0
    %1799 = vmatpush1.msra.mxu0 0.0
    %1800 = vmatprep.subr.mxu0 0.0
    %1801 = vmatpush1.msra.mxu0 0.0
    %1802 = vmatprep.subr.mxu0 0.0
    %1803 = vmatpush1.msra.mxu0 0.0
    %1804 = vmatprep.subr.mxu0 0.0
    %1805 = vmatpush1.msra.mxu0 0.0
    %1806 = vmatprep.subr.mxu0 0.0
    %1807 = vmatpush1.msra.mxu0 0.0
    %1808 = vmatprep.subr.mxu0 0.0
    %1809 = vmatpush1.msra.mxu0 0.0
    %1810 = vmatprep.subr.mxu0 0.0
    %1811 = vmatpush1.msra.mxu0 0.0
    %1812 = vmatprep.subr.mxu0 0.0
    %1813 = vmatpush1.msra.mxu0 0.0
    %1814 = vmatprep.subr.mxu0 0.0
    %1815 = vmatpush1.msra.mxu0 0.0
    %1816 = vmatprep.subr.mxu0 0.0
    %1817 = vmatpush1.msra.mxu0 0.0
    %1818 = vmatprep.subr.mxu0 0.0
    %1819 = vmatpush1.msra.mxu0 0.0
    %1820 = vmatprep.subr.mxu0 0.0
    %1821 = vmatpush1.msra.mxu0 0.0
    %1822 = vmatprep.subr.mxu0 0.0
    %1823 = vmatpush1.msra.mxu0 0.0
    %1824 = vmatprep.subr.mxu0 0.0
    %1825 = vmatpush1.msra.mxu0 0.0
    %1826 = vmatprep.subr.mxu0 0.0
    %1827 = vmatpush1.msra.mxu0 0.0
    %1828 = vmatprep.subr.mxu0 0.0
    %1829 = vmatpush1.msra.mxu0 0.0
    %1830 = vmatprep.subr.mxu0 0.0
    %1831 = vmatpush1.msra.mxu0 0.0
    %1832 = vmatprep.subr.mxu0 0.0
    %1833 = vmatpush1.msra.mxu0 0.0
    %1834 = vmatprep.subr.mxu0 0.0
    %1835 = vmatpush1.msra.mxu0 0.0
    %1836 = vmatprep.subr.mxu0 0.0
    %1837 = vmatpush1.msra.mxu0 0.0
    %1838 = vmatprep.subr.mxu0 0.0
    %1839 = vmatpush1.msra.mxu0 0.0
    %1840 = vmatprep.subr.mxu0 0.0
    %1841 = vmatpush1.msra.mxu0 0.0
    %1842 = vmatprep.subr.mxu0 0.0
    %1843 = vmatpush1.msra.mxu0 0.0
    %1844 = vmatprep.subr.mxu0 0.0
    %1845 = vmatpush1.msra.mxu0 0.0
    %1846 = vmatprep.subr.mxu0 0.0
    %1847 = vmatpush1.msra.mxu0 0.0
    %1848 = vmatprep.subr.mxu0 0.0
    %1849 = vmatpush1.msra.mxu0 0.0
    %1850 = vmatprep.subr.mxu0 0.0
    %1851 = vmatpush1.msra.mxu0 0.0
    %1852 = vmatprep.subr.mxu0 0.0
    %1853 = vmatpush1.msra.mxu0 0.0
    %1854 = vmatprep.subr.mxu0 0.0
    %1855 = vmatpush1.msra.mxu0 0.0
    %1856 = vmatprep.subr.mxu0 0.0
    %1857 = vmatpush1.msra.mxu0 0.0
    %1858 = vmatprep.subr.mxu0 0.0
    %1859 = vmatpush1.msra.mxu0 0.0
    %1860 = vmatprep.mubr.f32.mxu0 0.0
    %1861 = vmatmul.mubr.f32.gmra.mrb[0].mxu0 %v1794
    %v1862 = vpop.f32.mrb[0].mxu0
    %v1863 = vadd.f32 0.0, %v1862
    %v1864 = vpop.f32.mrb[0].mxu0
    %1865 = vdwg.mxu0
    %1867 = vrot.lane.b32.xlu0 %v1711, 8
    %v1868 = vpop.permute.xlu0 %1867
    %1871 = vrot.lane.b32.xlu0 %v1787, 16
    %v1872 = vpop.permute.xlu0 %1871
    %1875 = vrot.lane.b32.xlu0 %v1863, 24
    %v1876 = vpop.permute.xlu0 %1875
    %v1878 = vsel %vm361, %v1635, %v1868
    %v1879 = vsel %vm1029, %v1878, %v1872
    %v1880 = vsel %vm1031, %v1879, %v1876
    %s1881 = scalar_lea.vmem %s8, 32
    %v1882 = vld [vmem:[%s1881] sm:$0xff]
    %v1883 = vld [vmem:[%s1881 + $0x8] sm:$0xff]
    %v1884 = vld [vmem:[%s1881 + $0x10] sm:$0xff]
    %v1885 = vld [vmem:[%s1881 + $0x18] sm:$0xff]
    %s1886 = scalar_lea.vmem %s9, 1
    %v1887 = vld [vmem:[%s1886] sm:$0x1]
    %v1889 = vlaneseq
    %v1890 = vshrl.u32 %v1889, 7
    %v1891 = vsub.s32 0, %v1890
    %v1892 = vrot.slane %v1887, %v1891
    %v1895 = vsel %vm278, %v1880, 0
    %1897 = vmatprep.subr.mxu0 0.0
    %1898 = vmatpush1.msra.mxu0 %v1882
    %1899 = vmatprep.subr.mxu0 0.0
    %1900 = vmatpush1.msra.mxu0 %v1883
    %1901 = vmatprep.subr.mxu0 0.0
    %1902 = vmatpush1.msra.mxu0 %v1884
    %1903 = vmatprep.subr.mxu0 0.0
    %1904 = vmatpush1.msra.mxu0 %v1885
    %1905 = vmatprep.subr.mxu0 0.0
    %1906 = vmatpush1.msra.mxu0 0.0
    %1907 = vmatprep.subr.mxu0 0.0
    %1908 = vmatpush1.msra.mxu0 0.0
    %1909 = vmatprep.subr.mxu0 0.0
    %1910 = vmatpush1.msra.mxu0 0.0
    %1911 = vmatprep.subr.mxu0 0.0
    %1912 = vmatpush1.msra.mxu0 0.0
    %1913 = vmatprep.subr.mxu0 0.0
    %1914 = vmatpush1.msra.mxu0 0.0
    %1915 = vmatprep.subr.mxu0 0.0
    %1916 = vmatpush1.msra.mxu0 0.0
    %1917 = vmatprep.subr.mxu0 0.0
    %1918 = vmatpush1.msra.mxu0 0.0
    %1919 = vmatprep.subr.mxu0 0.0
    %1920 = vmatpush1.msra.mxu0 0.0
    %1921 = vmatprep.subr.mxu0 0.0
    %1922 = vmatpush1.msra.mxu0 0.0
    %1923 = vmatprep.subr.mxu0 0.0
    %1924 = vmatpush1.msra.mxu0 0.0
    %1925 = vmatprep.subr.mxu0 0.0
    %1926 = vmatpush1.msra.mxu0 0.0
    %1927 = vmatprep.subr.mxu0 0.0
    %1928 = vmatpush1.msra.mxu0 0.0
    %1929 = vmatprep.subr.mxu0 0.0
    %1930 = vmatpush1.msra.mxu0 0.0
    %1931 = vmatprep.subr.mxu0 0.0
    %1932 = vmatpush1.msra.mxu0 0.0
    %1933 = vmatprep.subr.mxu0 0.0
    %1934 = vmatpush1.msra.mxu0 0.0
    %1935 = vmatprep.subr.mxu0 0.0
    %1936 = vmatpush1.msra.mxu0 0.0
    %1937 = vmatprep.subr.mxu0 0.0
    %1938 = vmatpush1.msra.mxu0 0.0
    %1939 = vmatprep.subr.mxu0 0.0
    %1940 = vmatpush1.msra.mxu0 0.0
    %1941 = vmatprep.subr.mxu0 0.0
    %1942 = vmatpush1.msra.mxu0 0.0
    %1943 = vmatprep.subr.mxu0 0.0
    %1944 = vmatpush1.msra.mxu0 0.0
    %1945 = vmatprep.subr.mxu0 0.0
    %1946 = vmatpush1.msra.mxu0 0.0
    %1947 = vmatprep.subr.mxu0 0.0
    %1948 = vmatpush1.msra.mxu0 0.0
    %1949 = vmatprep.subr.mxu0 0.0
    %1950 = vmatpush1.msra.mxu0 0.0
    %1951 = vmatprep.subr.mxu0 0.0
    %1952 = vmatpush1.msra.mxu0 0.0
    %1953 = vmatprep.subr.mxu0 0.0
    %1954 = vmatpush1.msra.mxu0 0.0
    %1955 = vmatprep.subr.mxu0 0.0
    %1956 = vmatpush1.msra.mxu0 0.0
    %1957 = vmatprep.subr.mxu0 0.0
    %1958 = vmatpush1.msra.mxu0 0.0
    %1959 = vmatprep.subr.mxu0 0.0
    %1960 = vmatpush1.msra.mxu0 0.0
    %1961 = vmatprep.mubr.f32.mxu0 0.0
    %1962 = vmatmul.mubr.f32.gmra.mrb[0].mxu0 %v1895
    %v1963 = vpop.f32.mrb[0].mxu0
    %v1964 = vadd.f32 %v1892, %v1963
    %v1965 = vpop.f32.mrb[0].mxu0
    %1966 = vdwg.mxu0
    %v1967 = vadd.f32 %v1114, %v153
    %v1968 = vadd.f32 %v1964, %v264
    %v1969 = vld [vmem:[%s14] sm:$0xff]
    %v1970 = vld [vmem:[%s14 + $0x8] sm:$0xff]
    %v1971 = vld [vmem:[%s15] sm:$0xff]
    %v1972 = vld [vmem:[%s15 + $0x8] sm:$0xff]
    %v1973 = vsel %vm278, %v1967, 0.0
    %1974 = vadd.xlane.f32.xlu0 %v1973
    %v1975 = vpop.xlane.xlu0 %1974
    %v1976 = vsel %vm278, %v1968, 0.0
    %1977 = vadd.xlane.f32.xlu0 %v1976
    %v1978 = vpop.xlane.xlu0 %1977
    %v1979 = vrcp.pop 32.0
    %v1980 = vmul.f32 %v1975, %v1979
    %v1981 = vmul.f32 %v1978, %v1979
    %v1982 = vsub.f32 %v1967, %v1980
    %v1983 = vsub.f32 %v1968, %v1981
    %v1984 = vmul.f32 %v1982, %v1982
    %v1985 = vmul.f32 %v1983, %v1983
    %v1986 = vsel %vm278, %v1984, 0.0
    %1987 = vadd.xlane.f32.xlu0 %v1986
    %v1988 = vpop.xlane.xlu0 %1987
    %v1989 = vsel %vm278, %v1985, 0.0
    %1990 = vadd.xlane.f32.xlu0 %v1989
    %v1991 = vpop.xlane.xlu0 %1990
    %v1992 = vmul.f32 %v1988, %v1979
    %v1993 = vmul.f32 %v1991, %v1979
    %v1994 = vadd.f32 %v1992, 1e-05
    %v1995 = vadd.f32 %v1993, 1e-05
    %v1996 = vrsqrt.pop %v1994
    %v1997 = vrsqrt.pop %v1995
    %v1998 = vmul.f32 %v1982, %v1996
    %v1999 = vmul.f32 %v1983, %v1997
    %v2000 = vmul.f32 %v1998, %v1969
    %v2001 = vmul.f32 %v1999, %v1970
    %v2002 = vadd.f32 %v2000, %v1971
    %v2003 = vadd.f32 %v2001, %v1972
    %v2004 = vld [vmem:[%s10] sm:$0xff]
    %v2005 = vld [vmem:[%s10 + $0x8] sm:$0xff]
    %v2006 = vld [vmem:[%s10 + $0x10] sm:$0xff]
    %v2007 = vld [vmem:[%s10 + $0x18] sm:$0xff]
    %v2008 = vld [vmem:[%s11] sm:$0x1]
    %v2010 = vlaneseq
    %v2011 = vshrl.u32 %v2010, 7
    %v2012 = vsub.s32 0, %v2011
    %v2013 = vrot.slane %v2008, %v2012
    %v2016 = vsel %vm278, %v2002, 0
    %2018 = vmatprep.subr.mxu0 0.0
    %2019 = vmatpush1.msra.mxu0 %v2004
    %2020 = vmatprep.subr.mxu0 0.0
    %2021 = vmatpush1.msra.mxu0 %v2005
    %2022 = vmatprep.subr.mxu0 0.0
    %2023 = vmatpush1.msra.mxu0 %v2006
    %2024 = vmatprep.subr.mxu0 0.0
    %2025 = vmatpush1.msra.mxu0 %v2007
    %2026 = vmatprep.subr.mxu0 0.0
    %2027 = vmatpush1.msra.mxu0 0.0
    %2028 = vmatprep.subr.mxu0 0.0
    %2029 = vmatpush1.msra.mxu0 0.0
    %2030 = vmatprep.subr.mxu0 0.0
    %2031 = vmatpush1.msra.mxu0 0.0
    %2032 = vmatprep.subr.mxu0 0.0
    %2033 = vmatpush1.msra.mxu0 0.0
    %2034 = vmatprep.subr.mxu0 0.0
    %2035 = vmatpush1.msra.mxu0 0.0
    %2036 = vmatprep.subr.mxu0 0.0
    %2037 = vmatpush1.msra.mxu0 0.0
    %2038 = vmatprep.subr.mxu0 0.0
    %2039 = vmatpush1.msra.mxu0 0.0
    %2040 = vmatprep.subr.mxu0 0.0
    %2041 = vmatpush1.msra.mxu0 0.0
    %2042 = vmatprep.subr.mxu0 0.0
    %2043 = vmatpush1.msra.mxu0 0.0
    %2044 = vmatprep.subr.mxu0 0.0
    %2045 = vmatpush1.msra.mxu0 0.0
    %2046 = vmatprep.subr.mxu0 0.0
    %2047 = vmatpush1.msra.mxu0 0.0
    %2048 = vmatprep.subr.mxu0 0.0
    %2049 = vmatpush1.msra.mxu0 0.0
    %2050 = vmatprep.subr.mxu0 0.0
    %2051 = vmatpush1.msra.mxu0 0.0
    %2052 = vmatprep.subr.mxu0 0.0
    %2053 = vmatpush1.msra.mxu0 0.0
    %2054 = vmatprep.subr.mxu0 0.0
    %2055 = vmatpush1.msra.mxu0 0.0
    %2056 = vmatprep.subr.mxu0 0.0
    %2057 = vmatpush1.msra.mxu0 0.0
    %2058 = vmatprep.subr.mxu0 0.0
    %2059 = vmatpush1.msra.mxu0 0.0
    %2060 = vmatprep.subr.mxu0 0.0
    %2061 = vmatpush1.msra.mxu0 0.0
    %2062 = vmatprep.subr.mxu0 0.0
    %2063 = vmatpush1.msra.mxu0 0.0
    %2064 = vmatprep.subr.mxu0 0.0
    %2065 = vmatpush1.msra.mxu0 0.0
    %2066 = vmatprep.subr.mxu0 0.0
    %2067 = vmatpush1.msra.mxu0 0.0
    %2068 = vmatprep.subr.mxu0 0.0
    %2069 = vmatpush1.msra.mxu0 0.0
    %2070 = vmatprep.subr.mxu0 0.0
    %2071 = vmatpush1.msra.mxu0 0.0
    %2072 = vmatprep.subr.mxu0 0.0
    %2073 = vmatpush1.msra.mxu0 0.0
    %2074 = vmatprep.subr.mxu0 0.0
    %2075 = vmatpush1.msra.mxu0 0.0
    %2076 = vmatprep.subr.mxu0 0.0
    %2077 = vmatpush1.msra.mxu0 0.0
    %2078 = vmatprep.subr.mxu0 0.0
    %2079 = vmatpush1.msra.mxu0 0.0
    %2080 = vmatprep.subr.mxu0 0.0
    %2081 = vmatpush1.msra.mxu0 0.0
    %2082 = vmatprep.mubr.f32.mxu0 0.0
    %2083 = vmatmul.mubr.f32.gmra.mrb[0].mxu0 %v2016
    %v2084 = vpop.f32.mrb[0].mxu0
    %v2085 = vadd.f32 %v2013, %v2084
    %v2086 = vpop.f32.mrb[0].mxu0
    %2087 = vdwg.mxu0
    %v2088 = vmax.f32 %v2085, 0.0
    %v2089 = vld [vmem:[%s12] sm:$0xff]
    %v2090 = vld [vmem:[%s12 + $0x8] sm:$0xff]
    %v2091 = vld [vmem:[%s12 + $0x10] sm:$0xff]
    %v2092 = vld [vmem:[%s12 + $0x18] sm:$0xff]
    %v2093 = vld [vmem:[%s12 + $0x20] sm:$0xff]
    %v2094 = vld [vmem:[%s12 + $0x28] sm:$0xff]
    %v2095 = vld [vmem:[%s12 + $0x30] sm:$0xff]
    %v2096 = vld [vmem:[%s12 + $0x38] sm:$0xff]
    %v2097 = vld [vmem:[%s13] sm:$0x1]
    %v2099 = vlaneseq
    %v2100 = vshrl.u32 %v2099, 7
    %v2101 = vsub.s32 0, %v2100
    %v2102 = vrot.slane %v2097, %v2101
    %v2105 = vsel %vm82, %v2088, 0
    %2107 = vmatprep.subr.mxu0 0.0
    %2108 = vmatpush1.msra.mxu0 %v2089
    %2109 = vmatprep.subr.mxu0 0.0
    %2110 = vmatpush1.msra.mxu0 %v2090
    %2111 = vmatprep.subr.mxu0 0.0
    %2112 = vmatpush1.msra.mxu0 %v2091
    %2113 = vmatprep.subr.mxu0 0.0
    %2114 = vmatpush1.msra.mxu0 %v2092
    %2115 = vmatprep.subr.mxu0 0.0
    %2116 = vmatpush1.msra.mxu0 %v2093
    %2117 = vmatprep.subr.mxu0 0.0
    %2118 = vmatpush1.msra.mxu0 %v2094
    %2119 = vmatprep.subr.mxu0 0.0
    %2120 = vmatpush1.msra.mxu0 %v2095
    %2121 = vmatprep.subr.mxu0 0.0
    %2122 = vmatpush1.msra.mxu0 %v2096
    %2123 = vmatprep.subr.mxu0 0.0
    %2124 = vmatpush1.msra.mxu0 0.0
    %2125 = vmatprep.subr.mxu0 0.0
    %2126 = vmatpush1.msra.mxu0 0.0
    %2127 = vmatprep.subr.mxu0 0.0
    %2128 = vmatpush1.msra.mxu0 0.0
    %2129 = vmatprep.subr.mxu0 0.0
    %2130 = vmatpush1.msra.mxu0 0.0
    %2131 = vmatprep.subr.mxu0 0.0
    %2132 = vmatpush1.msra.mxu0 0.0
    %2133 = vmatprep.subr.mxu0 0.0
    %2134 = vmatpush1.msra.mxu0 0.0
    %2135 = vmatprep.subr.mxu0 0.0
    %2136 = vmatpush1.msra.mxu0 0.0
    %2137 = vmatprep.subr.mxu0 0.0
    %2138 = vmatpush1.msra.mxu0 0.0
    %2139 = vmatprep.subr.mxu0 0.0
    %2140 = vmatpush1.msra.mxu0 0.0
    %2141 = vmatprep.subr.mxu0 0.0
    %2142 = vmatpush1.msra.mxu0 0.0
    %2143 = vmatprep.subr.mxu0 0.0
    %2144 = vmatpush1.msra.mxu0 0.0
    %2145 = vmatprep.subr.mxu0 0.0
    %2146 = vmatpush1.msra.mxu0 0.0
    %2147 = vmatprep.subr.mxu0 0.0
    %2148 = vmatpush1.msra.mxu0 0.0
    %2149 = vmatprep.subr.mxu0 0.0
    %2150 = vmatpush1.msra.mxu0 0.0
    %2151 = vmatprep.subr.mxu0 0.0
    %2152 = vmatpush1.msra.mxu0 0.0
    %2153 = vmatprep.subr.mxu0 0.0
    %2154 = vmatpush1.msra.mxu0 0.0
    %2155 = vmatprep.subr.mxu0 0.0
    %2156 = vmatpush1.msra.mxu0 0.0
    %2157 = vmatprep.subr.mxu0 0.0
    %2158 = vmatpush1.msra.mxu0 0.0
    %2159 = vmatprep.subr.mxu0 0.0
    %2160 = vmatpush1.msra.mxu0 0.0
    %2161 = vmatprep.subr.mxu0 0.0
    %2162 = vmatpush1.msra.mxu0 0.0
    %2163 = vmatprep.subr.mxu0 0.0
    %2164 = vmatpush1.msra.mxu0 0.0
    %2165 = vmatprep.subr.mxu0 0.0
    %2166 = vmatpush1.msra.mxu0 0.0
    %2167 = vmatprep.subr.mxu0 0.0
    %2168 = vmatpush1.msra.mxu0 0.0
    %2169 = vmatprep.subr.mxu0 0.0
    %2170 = vmatpush1.msra.mxu0 0.0
    %2171 = vmatprep.mubr.f32.mxu0 0.0
    %2172 = vmatmul.mubr.f32.gmra.mrb[0].mxu0 %v2105
    %v2173 = vpop.f32.mrb[0].mxu0
    %v2174 = vadd.f32 %v2102, %v2173
    %v2175 = vpop.f32.mrb[0].mxu0
    %2176 = vdwg.mxu0
    %s2177 = scalar_lea.vmem %s10, 32
    %v2178 = vld [vmem:[%s2177] sm:$0xff]
    %v2179 = vld [vmem:[%s2177 + $0x8] sm:$0xff]
    %v2180 = vld [vmem:[%s2177 + $0x10] sm:$0xff]
    %v2181 = vld [vmem:[%s2177 + $0x18] sm:$0xff]
    %s2182 = scalar_lea.vmem %s11, 1
    %v2183 = vld [vmem:[%s2182] sm:$0x1]
    %v2185 = vlaneseq
    %v2186 = vshrl.u32 %v2185, 7
    %v2187 = vsub.s32 0, %v2186
    %v2188 = vrot.slane %v2183, %v2187
    %v2191 = vsel %vm278, %v2003, 0
    %2193 = vmatprep.subr.mxu0 0.0
    %2194 = vmatpush1.msra.mxu0 %v2178
    %2195 = vmatprep.subr.mxu0 0.0
    %2196 = vmatpush1.msra.mxu0 %v2179
    %2197 = vmatprep.subr.mxu0 0.0
    %2198 = vmatpush1.msra.mxu0 %v2180
    %2199 = vmatprep.subr.mxu0 0.0
    %2200 = vmatpush1.msra.mxu0 %v2181
    %2201 = vmatprep.subr.mxu0 0.0
    %2202 = vmatpush1.msra.mxu0 0.0
    %2203 = vmatprep.subr.mxu0 0.0
    %2204 = vmatpush1.msra.mxu0 0.0
    %2205 = vmatprep.subr.mxu0 0.0
    %2206 = vmatpush1.msra.mxu0 0.0
    %2207 = vmatprep.subr.mxu0 0.0
    %2208 = vmatpush1.msra.mxu0 0.0
    %2209 = vmatprep.subr.mxu0 0.0
    %2210 = vmatpush1.msra.mxu0 0.0
    %2211 = vmatprep.subr.mxu0 0.0
    %2212 = vmatpush1.msra.mxu0 0.0
    %2213 = vmatprep.subr.mxu0 0.0
    %2214 = vmatpush1.msra.mxu0 0.0
    %2215 = vmatprep.subr.mxu0 0.0
    %2216 = vmatpush1.msra.mxu0 0.0
    %2217 = vmatprep.subr.mxu0 0.0
    %2218 = vmatpush1.msra.mxu0 0.0
    %2219 = vmatprep.subr.mxu0 0.0
    %2220 = vmatpush1.msra.mxu0 0.0
    %2221 = vmatprep.subr.mxu0 0.0
    %2222 = vmatpush1.msra.mxu0 0.0
    %2223 = vmatprep.subr.mxu0 0.0
    %2224 = vmatpush1.msra.mxu0 0.0
    %2225 = vmatprep.subr.mxu0 0.0
    %2226 = vmatpush1.msra.mxu0 0.0
    %2227 = vmatprep.subr.mxu0 0.0
    %2228 = vmatpush1.msra.mxu0 0.0
    %2229 = vmatprep.subr.mxu0 0.0
    %2230 = vmatpush1.msra.mxu0 0.0
    %2231 = vmatprep.subr.mxu0 0.0
    %2232 = vmatpush1.msra.mxu0 0.0
    %2233 = vmatprep.subr.mxu0 0.0
    %2234 = vmatpush1.msra.mxu0 0.0
    %2235 = vmatprep.subr.mxu0 0.0
    %2236 = vmatpush1.msra.mxu0 0.0
    %2237 = vmatprep.subr.mxu0 0.0
    %2238 = vmatpush1.msra.mxu0 0.0
    %2239 = vmatprep.subr.mxu0 0.0
    %2240 = vmatpush1.msra.mxu0 0.0
    %2241 = vmatprep.subr.mxu0 0.0
    %2242 = vmatpush1.msra.mxu0 0.0
    %2243 = vmatprep.subr.mxu0 0.0
    %2244 = vmatpush1.msra.mxu0 0.0
    %2245 = vmatprep.subr.mxu0 0.0
    %2246 = vmatpush1.msra.mxu0 0.0
    %2247 = vmatprep.subr.mxu0 0.0
    %2248 = vmatpush1.msra.mxu0 0.0
    %2249 = vmatprep.subr.mxu0 0.0
    %2250 = vmatpush1.msra.mxu0 0.0
    %2251 = vmatprep.subr.mxu0 0.0
    %2252 = vmatpush1.msra.mxu0 0.0
    %2253 = vmatprep.subr.mxu0 0.0
    %2254 = vmatpush1.msra.mxu0 0.0
    %2255 = vmatprep.subr.mxu0 0.0
    %2256 = vmatpush1.msra.mxu0 0.0
    %2257 = vmatprep.mubr.f32.mxu0 0.0
    %2258 = vmatmul.mubr.f32.gmra.mrb[0].mxu0 %v2191
    %v2259 = vpop.f32.mrb[0].mxu0
    %v2260 = vadd.f32 %v2188, %v2259
    %v2261 = vpop.f32.mrb[0].mxu0
    %2262 = vdwg.mxu0
    %v2263 = vmax.f32 %v2260, 0.0
    %s2264 = scalar_lea.vmem %s12, 64
    %v2265 = vld [vmem:[%s2264] sm:$0xff]
    %v2266 = vld [vmem:[%s2264 + $0x8] sm:$0xff]
    %v2267 = vld [vmem:[%s2264 + $0x10] sm:$0xff]
    %v2268 = vld [vmem:[%s2264 + $0x18] sm:$0xff]
    %v2269 = vld [vmem:[%s2264 + $0x20] sm:$0xff]
    %v2270 = vld [vmem:[%s2264 + $0x28] sm:$0xff]
    %v2271 = vld [vmem:[%s2264 + $0x30] sm:$0xff]
    %v2272 = vld [vmem:[%s2264 + $0x38] sm:$0xff]
    %s2273 = scalar_lea.vmem %s13, 1
    %v2274 = vld [vmem:[%s2273] sm:$0x1]
    %v2276 = vlaneseq
    %v2277 = vshrl.u32 %v2276, 7
    %v2278 = vsub.s32 0, %v2277
    %v2279 = vrot.slane %v2274, %v2278
    %v2282 = vsel %vm82, %v2263, 0
    %2284 = vmatprep.subr.mxu0 0.0
    %2285 = vmatpush1.msra.mxu0 %v2265
    %2286 = vmatprep.subr.mxu0 0.0
    %2287 = vmatpush1.msra.mxu0 %v2266
    %2288 = vmatprep.subr.mxu0 0.0
    %2289 = vmatpush1.msra.mxu0 %v2267
    %2290 = vmatprep.subr.mxu0 0.0
    %2291 = vmatpush1.msra.mxu0 %v2268
    %2292 = vmatprep.subr.mxu0 0.0
    %2293 = vmatpush1.msra.mxu0 %v2269
    %2294 = vmatprep.subr.mxu0 0.0
    %2295 = vmatpush1.msra.mxu0 %v2270
    %2296 = vmatprep.subr.mxu0 0.0
    %2297 = vmatpush1.msra.mxu0 %v2271
    %2298 = vmatprep.subr.mxu0 0.0
    %2299 = vmatpush1.msra.mxu0 %v2272
    %2300 = vmatprep.subr.mxu0 0.0
    %2301 = vmatpush1.msra.mxu0 0.0
    %2302 = vmatprep.subr.mxu0 0.0
    %2303 = vmatpush1.msra.mxu0 0.0
    %2304 = vmatprep.subr.mxu0 0.0
    %2305 = vmatpush1.msra.mxu0 0.0
    %2306 = vmatprep.subr.mxu0 0.0
    %2307 = vmatpush1.msra.mxu0 0.0
    %2308 = vmatprep.subr.mxu0 0.0
    %2309 = vmatpush1.msra.mxu0 0.0
    %2310 = vmatprep.subr.mxu0 0.0
    %2311 = vmatpush1.msra.mxu0 0.0
    %2312 = vmatprep.subr.mxu0 0.0
    %2313 = vmatpush1.msra.mxu0 0.0
    %2314 = vmatprep.subr.mxu0 0.0
    %2315 = vmatpush1.msra.mxu0 0.0
    %2316 = vmatprep.subr.mxu0 0.0
    %2317 = vmatpush1.msra.mxu0 0.0
    %2318 = vmatprep.subr.mxu0 0.0
    %2319 = vmatpush1.msra.mxu0 0.0
    %2320 = vmatprep.subr.mxu0 0.0
    %2321 = vmatpush1.msra.mxu0 0.0
    %2322 = vmatprep.subr.mxu0 0.0
    %2323 = vmatpush1.msra.mxu0 0.0
    %2324 = vmatprep.subr.mxu0 0.0
    %2325 = vmatpush1.msra.mxu0 0.0
    %2326 = vmatprep.subr.mxu0 0.0
    %2327 = vmatpush1.msra.mxu0 0.0
    %2328 = vmatprep.subr.mxu0 0.0
    %2329 = vmatpush1.msra.mxu0 0.0
    %2330 = vmatprep.subr.mxu0 0.0
    %2331 = vmatpush1.msra.mxu0 0.0
    %2332 = vmatprep.subr.mxu0 0.0
    %2333 = vmatpush1.msra.mxu0 0.0
    %2334 = vmatprep.subr.mxu0 0.0
    %2335 = vmatpush1.msra.mxu0 0.0
    %2336 = vmatprep.subr.mxu0 0.0
    %2337 = vmatpush1.msra.mxu0 0.0
    %2338 = vmatprep.subr.mxu0 0.0
    %2339 = vmatpush1.msra.mxu0 0.0
    %2340 = vmatprep.subr.mxu0 0.0
    %2341 = vmatpush1.msra.mxu0 0.0
    %2342 = vmatprep.subr.mxu0 0.0
    %2343 = vmatpush1.msra.mxu0 0.0
    %2344 = vmatprep.subr.mxu0 0.0
    %2345 = vmatpush1.msra.mxu0 0.0
    %2346 = vmatprep.subr.mxu0 0.0
    %2347 = vmatpush1.msra.mxu0 0.0
    %2348 = vmatprep.mubr.f32.mxu0 0.0
    %2349 = vmatmul.mubr.f32.gmra.mrb[0].mxu0 %v2282
    %v2350 = vpop.f32.mrb[0].mxu0
    %v2351 = vadd.f32 %v2279, %v2350
    %v2352 = vpop.f32.mrb[0].mxu0
    %2353 = vdwg.mxu0
    %v2354 = vadd.f32 %v2002, %v2174
    %v2355 = vadd.f32 %v2003, %v2351
    %s2356 = scalar_lea.vmem %s14, 16
    %v2357 = vld [vmem:[%s2356] sm:$0xff]
    %v2358 = vld [vmem:[%s2356 + $0x8] sm:$0xff]
    %s2359 = scalar_lea.vmem %s15, 16
    %v2360 = vld [vmem:[%s2359] sm:$0xff]
    %v2361 = vld [vmem:[%s2359 + $0x8] sm:$0xff]
    %v2362 = vsel %vm278, %v2354, 0.0
    %2363 = vadd.xlane.f32.xlu0 %v2362
    %v2364 = vpop.xlane.xlu0 %2363
    %v2365 = vsel %vm278, %v2355, 0.0
    %2366 = vadd.xlane.f32.xlu0 %v2365
    %v2367 = vpop.xlane.xlu0 %2366
    %v2368 = vmul.f32 %v2364, %v1979
    %v2369 = vmul.f32 %v2367, %v1979
    %v2370 = vsub.f32 %v2354, %v2368
    %v2371 = vsub.f32 %v2355, %v2369
    %v2372 = vmul.f32 %v2370, %v2370
    %v2373 = vmul.f32 %v2371, %v2371
    %v2374 = vsel %vm278, %v2372, 0.0
    %2375 = vadd.xlane.f32.xlu0 %v2374
    %v2376 = vpop.xlane.xlu0 %2375
    %v2377 = vsel %vm278, %v2373, 0.0
    %2378 = vadd.xlane.f32.xlu0 %v2377
    %v2379 = vpop.xlane.xlu0 %2378
    %v2380 = vmul.f32 %v2376, %v1979
    %v2381 = vmul.f32 %v2379, %v1979
    %v2382 = vadd.f32 %v2380, 1e-05
    %v2383 = vadd.f32 %v2381, 1e-05
    %v2384 = vrsqrt.pop %v2382
    %v2385 = vrsqrt.pop %v2383
    %v2386 = vmul.f32 %v2370, %v2384
    %v2387 = vmul.f32 %v2371, %v2385
    %v2388 = vmul.f32 %v2386, %v2357
    %v2389 = vmul.f32 %v2387, %v2358
    %v2390 = vadd.f32 %v2388, %v2360
    %v2391 = vadd.f32 %v2389, %v2361
    %s2392 = scalar_lea.vmem %s6, 64
    %v2393 = vld [vmem:[%s2392] sm:$0xff]
    %v2394 = vld [vmem:[%s2392 + $0x8] sm:$0xff]
    %v2395 = vld [vmem:[%s2392 + $0x10] sm:$0xff]
    %v2396 = vld [vmem:[%s2392 + $0x18] sm:$0xff]
    %s2397 = scalar_lea.vmem %s7, 2
    %v2398 = vld [vmem:[%s2397] sm:$0x1]
    %v2400 = vlaneseq
    %v2401 = vshrl.u32 %v2400, 7
    %v2402 = vsub.s32 0, %v2401
    %v2403 = vrot.slane %v2398, %v2402
    %v2406 = vsel %vm278, %v2390, 0
    %v2409 = vsel %vm278, %v2391, 0
    %2411 = vmatprep.subr.mxu0 0.0
    %2412 = vmatpush1.msra.mxu0 %v2393
    %2413 = vmatprep.subr.mxu0 0.0
    %2414 = vmatpush1.msra.mxu0 %v2394
    %2415 = vmatprep.subr.mxu0 0.0
    %2416 = vmatpush1.msra.mxu0 %v2395
    %2417 = vmatprep.subr.mxu0 0.0
    %2418 = vmatpush1.msra.mxu0 %v2396
    %2419 = vmatprep.subr.mxu0 0.0
    %2420 = vmatpush1.msra.mxu0 0.0
    %2421 = vmatprep.subr.mxu0 0.0
    %2422 = vmatpush1.msra.mxu0 0.0
    %2423 = vmatprep.subr.mxu0 0.0
    %2424 = vmatpush1.msra.mxu0 0.0
    %2425 = vmatprep.subr.mxu0 0.0
    %2426 = vmatpush1.msra.mxu0 0.0
    %2427 = vmatprep.subr.mxu0 0.0
    %2428 = vmatpush1.msra.mxu0 0.0
    %2429 = vmatprep.subr.mxu0 0.0
    %2430 = vmatpush1.msra.mxu0 0.0
    %2431 = vmatprep.subr.mxu0 0.0
    %2432 = vmatpush1.msra.mxu0 0.0
    %2433 = vmatprep.subr.mxu0 0.0
    %2434 = vmatpush1.msra.mxu0 0.0
    %2435 = vmatprep.subr.mxu0 0.0
    %2436 = vmatpush1.msra.mxu0 0.0
    %2437 = vmatprep.subr.mxu0 0.0
    %2438 = vmatpush1.msra.mxu0 0.0
    %2439 = vmatprep.subr.mxu0 0.0
    %2440 = vmatpush1.msra.mxu0 0.0
    %2441 = vmatprep.subr.mxu0 0.0
    %2442 = vmatpush1.msra.mxu0 0.0
    %2443 = vmatprep.subr.mxu0 0.0
    %2444 = vmatpush1.msra.mxu0 0.0
    %2445 = vmatprep.subr.mxu0 0.0
    %2446 = vmatpush1.msra.mxu0 0.0
    %2447 = vmatprep.subr.mxu0 0.0
    %2448 = vmatpush1.msra.mxu0 0.0
    %2449 = vmatprep.subr.mxu0 0.0
    %2450 = vmatpush1.msra.mxu0 0.0
    %2451 = vmatprep.subr.mxu0 0.0
    %2452 = vmatpush1.msra.mxu0 0.0
    %2453 = vmatprep.subr.mxu0 0.0
    %2454 = vmatpush1.msra.mxu0 0.0
    %2455 = vmatprep.subr.mxu0 0.0
    %2456 = vmatpush1.msra.mxu0 0.0
    %2457 = vmatprep.subr.mxu0 0.0
    %2458 = vmatpush1.msra.mxu0 0.0
    %2459 = vmatprep.subr.mxu0 0.0
    %2460 = vmatpush1.msra.mxu0 0.0
    %2461 = vmatprep.subr.mxu0 0.0
    %2462 = vmatpush1.msra.mxu0 0.0
    %2463 = vmatprep.subr.mxu0 0.0
    %2464 = vmatpush1.msra.mxu0 0.0
    %2465 = vmatprep.subr.mxu0 0.0
    %2466 = vmatpush1.msra.mxu0 0.0
    %2467 = vmatprep.subr.mxu0 0.0
    %2468 = vmatpush1.msra.mxu0 0.0
    %2469 = vmatprep.subr.mxu0 0.0
    %2470 = vmatpush1.msra.mxu0 0.0
    %2471 = vmatprep.subr.mxu0 0.0
    %2472 = vmatpush1.msra.mxu0 0.0
    %2473 = vmatprep.subr.mxu0 0.0
    %2474 = vmatpush1.msra.mxu0 0.0
    %2475 = vmatprep.mubr.f32.mxu0 0.0
    %2476 = vmatmul.mubr.f32.gmra.mrb[0].mxu0 %v2406
    %v2477 = vpop.f32.mrb[0].mxu0
    %v2478 = vadd.f32 %v2403, %v2477
    %v2479 = vpop.f32.mrb[0].mxu0
    %2480 = vmatprep.mubr.f32.mxu0 0.0
    %2481 = vmatmul.mubr.f32.gmra.mrb[0].mxu0 %v2409
    %v2482 = vpop.f32.mrb[0].mxu0
    %v2483 = vadd.f32 %v2403, %v2482
    %v2484 = vpop.f32.mrb[0].mxu0
    %2485 = vdwg.mxu0
    %2487 = vrot.lane.b32.xlu0 %v2478, 120
    %v2488 = vpop.permute.xlu0 %2487
    %2489 = vrot.lane.b32.xlu0 %v2478, 112
    %v2490 = vpop.permute.xlu0 %2489
    %2491 = vrot.lane.b32.xlu0 %v2478, 104
    %v2492 = vpop.permute.xlu0 %2491
    %2494 = vrot.lane.b32.xlu0 %v2483, 120
    %v2495 = vpop.permute.xlu0 %2494
    %2496 = vrot.lane.b32.xlu0 %v2483, 112
    %v2497 = vpop.permute.xlu0 %2496
    %2498 = vrot.lane.b32.xlu0 %v2483, 104
    %v2499 = vpop.permute.xlu0 %2498
    %2500 = vrot.lane.b32.xlu0 %v2483, 96
    %v2501 = vpop.permute.xlu0 %2500
    %v2502 = vsel %vm361, %v2478, 0
    %v2504 = vsel %vm361, %v2501, 0
    %2506 = vmatprep.subr.mxu0 0.0
    %2507 = vmatpush1.xpose.msra.mxu0 %v2504
    %2508 = vmatprep.subr.mxu0 0.0
    %2509 = vmatpush1.xpose.msra.mxu0 0.0
    %2510 = vmatprep.subr.mxu0 0.0
    %2511 = vmatpush1.xpose.msra.mxu0 0.0
    %2512 = vmatprep.subr.mxu0 0.0
    %2513 = vmatpush1.xpose.msra.mxu0 0.0
    %2514 = vmatprep.subr.mxu0 0.0
    %2515 = vmatpush1.xpose.msra.mxu0 0.0
    %2516 = vmatprep.subr.mxu0 0.0
    %2517 = vmatpush1.xpose.msra.mxu0 0.0
    %2518 = vmatprep.subr.mxu0 0.0
    %2519 = vmatpush1.xpose.msra.mxu0 0.0
    %2520 = vmatprep.subr.mxu0 0.0
    %2521 = vmatpush1.xpose.msra.mxu0 0.0
    %2522 = vmatprep.subr.mxu0 0.0
    %2523 = vmatpush1.xpose.msra.mxu0 0.0
    %2524 = vmatprep.subr.mxu0 0.0
    %2525 = vmatpush1.xpose.msra.mxu0 0.0
    %2526 = vmatprep.subr.mxu0 0.0
    %2527 = vmatpush1.xpose.msra.mxu0 0.0
    %2528 = vmatprep.subr.mxu0 0.0
    %2529 = vmatpush1.xpose.msra.mxu0 0.0
    %2530 = vmatprep.subr.mxu0 0.0
    %2531 = vmatpush1.xpose.msra.mxu0 0.0
    %2532 = vmatprep.subr.mxu0 0.0
    %2533 = vmatpush1.xpose.msra.mxu0 0.0
    %2534 = vmatprep.subr.mxu0 0.0
    %2535 = vmatpush1.xpose.msra.mxu0 0.0
    %2536 = vmatprep.subr.mxu0 0.0
    %2537 = vmatpush1.xpose.msra.mxu0 0.0
    %2538 = vmatprep.subr.mxu0 0.0
    %2539 = vmatpush1.xpose.msra.mxu0 0.0
    %2540 = vmatprep.subr.mxu0 0.0
    %2541 = vmatpush1.xpose.msra.mxu0 0.0
    %2542 = vmatprep.subr.mxu0 0.0
    %2543 = vmatpush1.xpose.msra.mxu0 0.0
    %2544 = vmatprep.subr.mxu0 0.0
    %2545 = vmatpush1.xpose.msra.mxu0 0.0
    %2546 = vmatprep.subr.mxu0 0.0
    %2547 = vmatpush1.xpose.msra.mxu0 0.0
    %2548 = vmatprep.subr.mxu0 0.0
    %2549 = vmatpush1.xpose.msra.mxu0 0.0
    %2550 = vmatprep.subr.mxu0 0.0
    %2551 = vmatpush1.xpose.msra.mxu0 0.0
    %2552 = vmatprep.subr.mxu0 0.0
    %2553 = vmatpush1.xpose.msra.mxu0 0.0
    %2554 = vmatprep.subr.mxu0 0.0
    %2555 = vmatpush1.xpose.msra.mxu0 0.0
    %2556 = vmatprep.subr.mxu0 0.0
    %2557 = vmatpush1.xpose.msra.mxu0 0.0
    %2558 = vmatprep.subr.mxu0 0.0
    %2559 = vmatpush1.xpose.msra.mxu0 0.0
    %2560 = vmatprep.subr.mxu0 0.0
    %2561 = vmatpush1.xpose.msra.mxu0 0.0
    %2562 = vmatprep.subr.mxu0 0.0
    %2563 = vmatpush1.xpose.msra.mxu0 0.0
    %2564 = vmatprep.subr.mxu0 0.0
    %2565 = vmatpush1.xpose.msra.mxu0 0.0
    %2566 = vmatprep.subr.mxu0 0.0
    %2567 = vmatpush1.xpose.msra.mxu0 0.0
    %2568 = vmatprep.subr.mxu0 0.0
    %2569 = vmatpush1.xpose.msra.mxu0 0.0
    %2570 = vmatprep.mubr.f32.mxu0 0.0
    %2571 = vmatmul.mubr.f32.gmra.mrb[0].mxu0 %v2502
    %v2572 = vpop.f32.mrb[0].mxu0
    %v2573 = vadd.f32 0.0, %v2572
    %v2574 = vpop.f32.mrb[0].mxu0
    %2575 = vdwg.mxu0
    %2576 = vrot.lane.b32.xlu0 %v2495, 96
    %v2577 = vpop.permute.xlu0 %2576
    %v2578 = vsel %vm361, %v2488, 0
    %v2580 = vsel %vm361, %v2577, 0
    %2582 = vmatprep.subr.mxu0 0.0
    %2583 = vmatpush1.xpose.msra.mxu0 %v2580
    %2584 = vmatprep.subr.mxu0 0.0
    %2585 = vmatpush1.xpose.msra.mxu0 0.0
    %2586 = vmatprep.subr.mxu0 0.0
    %2587 = vmatpush1.xpose.msra.mxu0 0.0
    %2588 = vmatprep.subr.mxu0 0.0
    %2589 = vmatpush1.xpose.msra.mxu0 0.0
    %2590 = vmatprep.subr.mxu0 0.0
    %2591 = vmatpush1.xpose.msra.mxu0 0.0
    %2592 = vmatprep.subr.mxu0 0.0
    %2593 = vmatpush1.xpose.msra.mxu0 0.0
    %2594 = vmatprep.subr.mxu0 0.0
    %2595 = vmatpush1.xpose.msra.mxu0 0.0
    %2596 = vmatprep.subr.mxu0 0.0
    %2597 = vmatpush1.xpose.msra.mxu0 0.0
    %2598 = vmatprep.subr.mxu0 0.0
    %2599 = vmatpush1.xpose.msra.mxu0 0.0
    %2600 = vmatprep.subr.mxu0 0.0
    %2601 = vmatpush1.xpose.msra.mxu0 0.0
    %2602 = vmatprep.subr.mxu0 0.0
    %2603 = vmatpush1.xpose.msra.mxu0 0.0
    %2604 = vmatprep.subr.mxu0 0.0
    %2605 = vmatpush1.xpose.msra.mxu0 0.0
    %2606 = vmatprep.subr.mxu0 0.0
    %2607 = vmatpush1.xpose.msra.mxu0 0.0
    %2608 = vmatprep.subr.mxu0 0.0
    %2609 = vmatpush1.xpose.msra.mxu0 0.0
    %2610 = vmatprep.subr.mxu0 0.0
    %2611 = vmatpush1.xpose.msra.mxu0 0.0
    %2612 = vmatprep.subr.mxu0 0.0
    %2613 = vmatpush1.xpose.msra.mxu0 0.0
    %2614 = vmatprep.subr.mxu0 0.0
    %2615 = vmatpush1.xpose.msra.mxu0 0.0
    %2616 = vmatprep.subr.mxu0 0.0
    %2617 = vmatpush1.xpose.msra.mxu0 0.0
    %2618 = vmatprep.subr.mxu0 0.0
    %2619 = vmatpush1.xpose.msra.mxu0 0.0
    %2620 = vmatprep.subr.mxu0 0.0
    %2621 = vmatpush1.xpose.msra.mxu0 0.0
    %2622 = vmatprep.subr.mxu0 0.0
    %2623 = vmatpush1.xpose.msra.mxu0 0.0
    %2624 = vmatprep.subr.mxu0 0.0
    %2625 = vmatpush1.xpose.msra.mxu0 0.0
    %2626 = vmatprep.subr.mxu0 0.0
    %2627 = vmatpush1.xpose.msra.mxu0 0.0
    %2628 = vmatprep.subr.mxu0 0.0
    %2629 = vmatpush1.xpose.msra.mxu0 0.0
    %2630 = vmatprep.subr.mxu0 0.0
    %2631 = vmatpush1.xpose.msra.mxu0 0.0
    %2632 = vmatprep.subr.mxu0 0.0
    %2633 = vmatpush1.xpose.msra.mxu0 0.0
    %2634 = vmatprep.subr.mxu0 0.0
    %2635 = vmatpush1.xpose.msra.mxu0 0.0
    %2636 = vmatprep.subr.mxu0 0.0
    %2637 = vmatpush1.xpose.msra.mxu0 0.0
    %2638 = vmatprep.subr.mxu0 0.0
    %2639 = vmatpush1.xpose.msra.mxu0 0.0
    %2640 = vmatprep.subr.mxu0 0.0
    %2641 = vmatpush1.xpose.msra.mxu0 0.0
    %2642 = vmatprep.subr.mxu0 0.0
    %2643 = vmatpush1.xpose.msra.mxu0 0.0
    %2644 = vmatprep.subr.mxu0 0.0
    %2645 = vmatpush1.xpose.msra.mxu0 0.0
    %2646 = vmatprep.mubr.f32.mxu0 0.0
    %2647 = vmatmul.mubr.f32.gmra.mrb[0].mxu0 %v2578
    %v2648 = vpop.f32.mrb[0].mxu0
    %v2649 = vadd.f32 0.0, %v2648
    %v2650 = vpop.f32.mrb[0].mxu0
    %2651 = vdwg.mxu0
    %2652 = vrot.lane.b32.xlu0 %v2497, 96
    %v2653 = vpop.permute.xlu0 %2652
    %v2654 = vsel %vm361, %v2490, 0
    %v2656 = vsel %vm361, %v2653, 0
    %2658 = vmatprep.subr.mxu0 0.0
    %2659 = vmatpush1.xpose.msra.mxu0 %v2656
    %2660 = vmatprep.subr.mxu0 0.0
    %2661 = vmatpush1.xpose.msra.mxu0 0.0
    %2662 = vmatprep.subr.mxu0 0.0
    %2663 = vmatpush1.xpose.msra.mxu0 0.0
    %2664 = vmatprep.subr.mxu0 0.0
    %2665 = vmatpush1.xpose.msra.mxu0 0.0
    %2666 = vmatprep.subr.mxu0 0.0
    %2667 = vmatpush1.xpose.msra.mxu0 0.0
    %2668 = vmatprep.subr.mxu0 0.0
    %2669 = vmatpush1.xpose.msra.mxu0 0.0
    %2670 = vmatprep.subr.mxu0 0.0
    %2671 = vmatpush1.xpose.msra.mxu0 0.0
    %2672 = vmatprep.subr.mxu0 0.0
    %2673 = vmatpush1.xpose.msra.mxu0 0.0
    %2674 = vmatprep.subr.mxu0 0.0
    %2675 = vmatpush1.xpose.msra.mxu0 0.0
    %2676 = vmatprep.subr.mxu0 0.0
    %2677 = vmatpush1.xpose.msra.mxu0 0.0
    %2678 = vmatprep.subr.mxu0 0.0
    %2679 = vmatpush1.xpose.msra.mxu0 0.0
    %2680 = vmatprep.subr.mxu0 0.0
    %2681 = vmatpush1.xpose.msra.mxu0 0.0
    %2682 = vmatprep.subr.mxu0 0.0
    %2683 = vmatpush1.xpose.msra.mxu0 0.0
    %2684 = vmatprep.subr.mxu0 0.0
    %2685 = vmatpush1.xpose.msra.mxu0 0.0
    %2686 = vmatprep.subr.mxu0 0.0
    %2687 = vmatpush1.xpose.msra.mxu0 0.0
    %2688 = vmatprep.subr.mxu0 0.0
    %2689 = vmatpush1.xpose.msra.mxu0 0.0
    %2690 = vmatprep.subr.mxu0 0.0
    %2691 = vmatpush1.xpose.msra.mxu0 0.0
    %2692 = vmatprep.subr.mxu0 0.0
    %2693 = vmatpush1.xpose.msra.mxu0 0.0
    %2694 = vmatprep.subr.mxu0 0.0
    %2695 = vmatpush1.xpose.msra.mxu0 0.0
    %2696 = vmatprep.subr.mxu0 0.0
    %2697 = vmatpush1.xpose.msra.mxu0 0.0
    %2698 = vmatprep.subr.mxu0 0.0
    %2699 = vmatpush1.xpose.msra.mxu0 0.0
    %2700 = vmatprep.subr.mxu0 0.0
    %2701 = vmatpush1.xpose.msra.mxu0 0.0
    %2702 = vmatprep.subr.mxu0 0.0
    %2703 = vmatpush1.xpose.msra.mxu0 0.0
    %2704 = vmatprep.subr.mxu0 0.0
    %2705 = vmatpush1.xpose.msra.mxu0 0.0
    %2706 = vmatprep.subr.mxu0 0.0
    %2707 = vmatpush1.xpose.msra.mxu0 0.0
    %2708 = vmatprep.subr.mxu0 0.0
    %2709 = vmatpush1.xpose.msra.mxu0 0.0
    %2710 = vmatprep.subr.mxu0 0.0
    %2711 = vmatpush1.xpose.msra.mxu0 0.0
    %2712 = vmatprep.subr.mxu0 0.0
    %2713 = vmatpush1.xpose.msra.mxu0 0.0
    %2714 = vmatprep.subr.mxu0 0.0
    %2715 = vmatpush1.xpose.msra.mxu0 0.0
    %2716 = vmatprep.subr.mxu0 0.0
    %2717 = vmatpush1.xpose.msra.mxu0 0.0
    %2718 = vmatprep.subr.mxu0 0.0
    %2719 = vmatpush1.xpose.msra.mxu0 0.0
    %2720 = vmatprep.subr.mxu0 0.0
    %2721 = vmatpush1.xpose.msra.mxu0 0.0
    %2722 = vmatprep.mubr.f32.mxu0 0.0
    %2723 = vmatmul.mubr.f32.gmra.mrb[0].mxu0 %v2654
    %v2724 = vpop.f32.mrb[0].mxu0
    %v2725 = vadd.f32 0.0, %v2724
    %v2726 = vpop.f32.mrb[0].mxu0
    %2727 = vdwg.mxu0
    %2728 = vrot.lane.b32.xlu0 %v2499, 96
    %v2729 = vpop.permute.xlu0 %2728
    %v2730 = vsel %vm361, %v2492, 0
    %v2732 = vsel %vm361, %v2729, 0
    %2734 = vmatprep.subr.mxu0 0.0
    %2735 = vmatpush1.xpose.msra.mxu0 %v2732
    %2736 = vmatprep.subr.mxu0 0.0
    %2737 = vmatpush1.xpose.msra.mxu0 0.0
    %2738 = vmatprep.subr.mxu0 0.0
    %2739 = vmatpush1.xpose.msra.mxu0 0.0
    %2740 = vmatprep.subr.mxu0 0.0
    %2741 = vmatpush1.xpose.msra.mxu0 0.0
    %2742 = vmatprep.subr.mxu0 0.0
    %2743 = vmatpush1.xpose.msra.mxu0 0.0
    %2744 = vmatprep.subr.mxu0 0.0
    %2745 = vmatpush1.xpose.msra.mxu0 0.0
    %2746 = vmatprep.subr.mxu0 0.0
    %2747 = vmatpush1.xpose.msra.mxu0 0.0
    %2748 = vmatprep.subr.mxu0 0.0
    %2749 = vmatpush1.xpose.msra.mxu0 0.0
    %2750 = vmatprep.subr.mxu0 0.0
    %2751 = vmatpush1.xpose.msra.mxu0 0.0
    %2752 = vmatprep.subr.mxu0 0.0
    %2753 = vmatpush1.xpose.msra.mxu0 0.0
    %2754 = vmatprep.subr.mxu0 0.0
    %2755 = vmatpush1.xpose.msra.mxu0 0.0
    %2756 = vmatprep.subr.mxu0 0.0
    %2757 = vmatpush1.xpose.msra.mxu0 0.0
    %2758 = vmatprep.subr.mxu0 0.0
    %2759 = vmatpush1.xpose.msra.mxu0 0.0
    %2760 = vmatprep.subr.mxu0 0.0
    %2761 = vmatpush1.xpose.msra.mxu0 0.0
    %2762 = vmatprep.subr.mxu0 0.0
    %2763 = vmatpush1.xpose.msra.mxu0 0.0
    %2764 = vmatprep.subr.mxu0 0.0
    %2765 = vmatpush1.xpose.msra.mxu0 0.0
    %2766 = vmatprep.subr.mxu0 0.0
    %2767 = vmatpush1.xpose.msra.mxu0 0.0
    %2768 = vmatprep.subr.mxu0 0.0
    %2769 = vmatpush1.xpose.msra.mxu0 0.0
    %2770 = vmatprep.subr.mxu0 0.0
    %2771 = vmatpush1.xpose.msra.mxu0 0.0
    %2772 = vmatprep.subr.mxu0 0.0
    %2773 = vmatpush1.xpose.msra.mxu0 0.0
    %2774 = vmatprep.subr.mxu0 0.0
    %2775 = vmatpush1.xpose.msra.mxu0 0.0
    %2776 = vmatprep.subr.mxu0 0.0
    %2777 = vmatpush1.xpose.msra.mxu0 0.0
    %2778 = vmatprep.subr.mxu0 0.0
    %2779 = vmatpush1.xpose.msra.mxu0 0.0
    %2780 = vmatprep.subr.mxu0 0.0
    %2781 = vmatpush1.xpose.msra.mxu0 0.0
    %2782 = vmatprep.subr.mxu0 0.0
    %2783 = vmatpush1.xpose.msra.mxu0 0.0
    %2784 = vmatprep.subr.mxu0 0.0
    %2785 = vmatpush1.xpose.msra.mxu0 0.0
    %2786 = vmatprep.subr.mxu0 0.0
    %2787 = vmatpush1.xpose.msra.mxu0 0.0
    %2788 = vmatprep.subr.mxu0 0.0
    %2789 = vmatpush1.xpose.msra.mxu0 0.0
    %2790 = vmatprep.subr.mxu0 0.0
    %2791 = vmatpush1.xpose.msra.mxu0 0.0
    %2792 = vmatprep.subr.mxu0 0.0
    %2793 = vmatpush1.xpose.msra.mxu0 0.0
    %2794 = vmatprep.subr.mxu0 0.0
    %2795 = vmatpush1.xpose.msra.mxu0 0.0
    %2796 = vmatprep.subr.mxu0 0.0
    %2797 = vmatpush1.xpose.msra.mxu0 0.0
    %2798 = vmatprep.mubr.f32.mxu0 0.0
    %2799 = vmatmul.mubr.f32.gmra.mrb[0].mxu0 %v2730
    %v2800 = vpop.f32.mrb[0].mxu0
    %v2801 = vadd.f32 0.0, %v2800
    %v2802 = vpop.f32.mrb[0].mxu0
    %2803 = vdwg.mxu0
    %v2804 = vmul.f32 %v2573, 0.35355338
    %v2805 = vmul.f32 %v2649, 0.35355338
    %v2806 = vmul.f32 %v2725, 0.35355338
    %v2807 = vmul.f32 %v2801, 0.35355338
    %v2808 = vsel %vm361, %v2804, -inf
    %2809 = vmax.xlane.f32.xlu0 %v2808
    %v2810 = vpop.xlane.xlu0 %2809
    %v2811 = vsel %vm361, %v2805, -inf
    %2812 = vmax.xlane.f32.xlu0 %v2811
    %v2813 = vpop.xlane.xlu0 %2812
    %v2814 = vsel %vm361, %v2806, -inf
    %2815 = vmax.xlane.f32.xlu0 %v2814
    %v2816 = vpop.xlane.xlu0 %2815
    %v2817 = vsel %vm361, %v2807, -inf
    %2818 = vmax.xlane.f32.xlu0 %v2817
    %v2819 = vpop.xlane.xlu0 %2818
    %v2820 = vsub.f32 %v2804, %v2810
    %v2821 = vsub.f32 %v2805, %v2813
    %v2822 = vsub.f32 %v2806, %v2816
    %v2823 = vsub.f32 %v2807, %v2819
    %v2824 = vmul.f32 %v2820, 1.442695
    %v2825 = vpow.pop %v2824
    %v2826 = vmul.f32 %v2821, 1.442695
    %v2827 = vpow.pop %v2826
    %v2828 = vmul.f32 %v2822, 1.442695
    %v2829 = vpow.pop %v2828
    %v2830 = vmul.f32 %v2823, 1.442695
    %v2831 = vpow.pop %v2830
    %v2832 = vsel %vm361, %v2825, 0.0
    %2833 = vadd.xlane.f32.xlu0 %v2832
    %v2834 = vpop.xlane.xlu0 %2833
    %v2835 = vsel %vm361, %v2827, 0.0
    %2836 = vadd.xlane.f32.xlu0 %v2835
    %v2837 = vpop.xlane.xlu0 %2836
    %v2838 = vsel %vm361, %v2829, 0.0
    %2839 = vadd.xlane.f32.xlu0 %v2838
    %v2840 = vpop.xlane.xlu0 %2839
    %v2841 = vsel %vm361, %v2831, 0.0
    %2842 = vadd.xlane.f32.xlu0 %v2841
    %v2843 = vpop.xlane.xlu0 %2842
    %v2844 = vrcp.pop %v2834
    %v2845 = vrcp.pop %v2837
    %v2846 = vrcp.pop %v2840
    %v2847 = vrcp.pop %v2843
    %v2848 = vmul.f32 %v2825, %v2844
    %v2849 = vmul.f32 %v2827, %v2845
    %v2850 = vmul.f32 %v2829, %v2846
    %v2851 = vmul.f32 %v2831, %v2847
    %2852 = vrot.lane.b32.xlu0 %v2483, 64
    %v2853 = vpop.permute.xlu0 %2852
    %v2856 = vsel %vm361, %v2848, 0
    %2858 = vmatprep.subr.mxu0 0.0
    %2859 = vmatpush1.msra.mxu0 %v2853
    %2860 = vmatprep.subr.mxu0 0.0
    %2861 = vmatpush1.msra.mxu0 0.0
    %2862 = vmatprep.subr.mxu0 0.0
    %2863 = vmatpush1.msra.mxu0 0.0
    %2864 = vmatprep.subr.mxu0 0.0
    %2865 = vmatpush1.msra.mxu0 0.0
    %2866 = vmatprep.subr.mxu0 0.0
    %2867 = vmatpush1.msra.mxu0 0.0
    %2868 = vmatprep.subr.mxu0 0.0
    %2869 = vmatpush1.msra.mxu0 0.0
    %2870 = vmatprep.subr.mxu0 0.0
    %2871 = vmatpush1.msra.mxu0 0.0
    %2872 = vmatprep.subr.mxu0 0.0
    %2873 = vmatpush1.msra.mxu0 0.0
    %2874 = vmatprep.subr.mxu0 0.0
    %2875 = vmatpush1.msra.mxu0 0.0
    %2876 = vmatprep.subr.mxu0 0.0
    %2877 = vmatpush1.msra.mxu0 0.0
    %2878 = vmatprep.subr.mxu0 0.0
    %2879 = vmatpush1.msra.mxu0 0.0
    %2880 = vmatprep.subr.mxu0 0.0
    %2881 = vmatpush1.msra.mxu0 0.0
    %2882 = vmatprep.subr.mxu0 0.0
    %2883 = vmatpush1.msra.mxu0 0.0
    %2884 = vmatprep.subr.mxu0 0.0
    %2885 = vmatpush1.msra.mxu0 0.0
    %2886 = vmatprep.subr.mxu0 0.0
    %2887 = vmatpush1.msra.mxu0 0.0
    %2888 = vmatprep.subr.mxu0 0.0
    %2889 = vmatpush1.msra.mxu0 0.0
    %2890 = vmatprep.subr.mxu0 0.0
    %2891 = vmatpush1.msra.mxu0 0.0
    %2892 = vmatprep.subr.mxu0 0.0
    %2893 = vmatpush1.msra.mxu0 0.0
    %2894 = vmatprep.subr.mxu0 0.0
    %2895 = vmatpush1.msra.mxu0 0.0
    %2896 = vmatprep.subr.mxu0 0.0
    %2897 = vmatpush1.msra.mxu0 0.0
    %2898 = vmatprep.subr.mxu0 0.0
    %2899 = vmatpush1.msra.mxu0 0.0
    %2900 = vmatprep.subr.mxu0 0.0
    %2901 = vmatpush1.msra.mxu0 0.0
    %2902 = vmatprep.subr.mxu0 0.0
    %2903 = vmatpush1.msra.mxu0 0.0
    %2904 = vmatprep.subr.mxu0 0.0
    %2905 = vmatpush1.msra.mxu0 0.0
    %2906 = vmatprep.subr.mxu0 0.0
    %2907 = vmatpush1.msra.mxu0 0.0
    %2908 = vmatprep.subr.mxu0 0.0
    %2909 = vmatpush1.msra.mxu0 0.0
    %2910 = vmatprep.subr.mxu0 0.0
    %2911 = vmatpush1.msra.mxu0 0.0
    %2912 = vmatprep.subr.mxu0 0.0
    %2913 = vmatpush1.msra.mxu0 0.0
    %2914 = vmatprep.subr.mxu0 0.0
    %2915 = vmatpush1.msra.mxu0 0.0
    %2916 = vmatprep.subr.mxu0 0.0
    %2917 = vmatpush1.msra.mxu0 0.0
    %2918 = vmatprep.subr.mxu0 0.0
    %2919 = vmatpush1.msra.mxu0 0.0
    %2920 = vmatprep.subr.mxu0 0.0
    %2921 = vmatpush1.msra.mxu0 0.0
    %2922 = vmatprep.mubr.f32.mxu0 0.0
    %2923 = vmatmul.mubr.f32.gmra.mrb[0].mxu0 %v2856
    %v2924 = vpop.f32.mrb[0].mxu0
    %v2925 = vadd.f32 0.0, %v2924
    %v2926 = vpop.f32.mrb[0].mxu0
    %2927 = vdwg.mxu0
    %2928 = vrot.lane.b32.xlu0 %v2495, 64
    %v2929 = vpop.permute.xlu0 %2928
    %v2932 = vsel %vm361, %v2849, 0
    %2934 = vmatprep.subr.mxu0 0.0
    %2935 = vmatpush1.msra.mxu0 %v2929
    %2936 = vmatprep.subr.mxu0 0.0
    %2937 = vmatpush1.msra.mxu0 0.0
    %2938 = vmatprep.subr.mxu0 0.0
    %2939 = vmatpush1.msra.mxu0 0.0
    %2940 = vmatprep.subr.mxu0 0.0
    %2941 = vmatpush1.msra.mxu0 0.0
    %2942 = vmatprep.subr.mxu0 0.0
    %2943 = vmatpush1.msra.mxu0 0.0
    %2944 = vmatprep.subr.mxu0 0.0
    %2945 = vmatpush1.msra.mxu0 0.0
    %2946 = vmatprep.subr.mxu0 0.0
    %2947 = vmatpush1.msra.mxu0 0.0
    %2948 = vmatprep.subr.mxu0 0.0
    %2949 = vmatpush1.msra.mxu0 0.0
    %2950 = vmatprep.subr.mxu0 0.0
    %2951 = vmatpush1.msra.mxu0 0.0
    %2952 = vmatprep.subr.mxu0 0.0
    %2953 = vmatpush1.msra.mxu0 0.0
    %2954 = vmatprep.subr.mxu0 0.0
    %2955 = vmatpush1.msra.mxu0 0.0
    %2956 = vmatprep.subr.mxu0 0.0
    %2957 = vmatpush1.msra.mxu0 0.0
    %2958 = vmatprep.subr.mxu0 0.0
    %2959 = vmatpush1.msra.mxu0 0.0
    %2960 = vmatprep.subr.mxu0 0.0
    %2961 = vmatpush1.msra.mxu0 0.0
    %2962 = vmatprep.subr.mxu0 0.0
    %2963 = vmatpush1.msra.mxu0 0.0
    %2964 = vmatprep.subr.mxu0 0.0
    %2965 = vmatpush1.msra.mxu0 0.0
    %2966 = vmatprep.subr.mxu0 0.0
    %2967 = vmatpush1.msra.mxu0 0.0
    %2968 = vmatprep.subr.mxu0 0.0
    %2969 = vmatpush1.msra.mxu0 0.0
    %2970 = vmatprep.subr.mxu0 0.0
    %2971 = vmatpush1.msra.mxu0 0.0
    %2972 = vmatprep.subr.mxu0 0.0
    %2973 = vmatpush1.msra.mxu0 0.0
    %2974 = vmatprep.subr.mxu0 0.0
    %2975 = vmatpush1.msra.mxu0 0.0
    %2976 = vmatprep.subr.mxu0 0.0
    %2977 = vmatpush1.msra.mxu0 0.0
    %2978 = vmatprep.subr.mxu0 0.0
    %2979 = vmatpush1.msra.mxu0 0.0
    %2980 = vmatprep.subr.mxu0 0.0
    %2981 = vmatpush1.msra.mxu0 0.0
    %2982 = vmatprep.subr.mxu0 0.0
    %2983 = vmatpush1.msra.mxu0 0.0
    %2984 = vmatprep.subr.mxu0 0.0
    %2985 = vmatpush1.msra.mxu0 0.0
    %2986 = vmatprep.subr.mxu0 0.0
    %2987 = vmatpush1.msra.mxu0 0.0
    %2988 = vmatprep.subr.mxu0 0.0
    %2989 = vmatpush1.msra.mxu0 0.0
    %2990 = vmatprep.subr.mxu0 0.0
    %2991 = vmatpush1.msra.mxu0 0.0
    %2992 = vmatprep.subr.mxu0 0.0
    %2993 = vmatpush1.msra.mxu0 0.0
    %2994 = vmatprep.subr.mxu0 0.0
    %2995 = vmatpush1.msra.mxu0 0.0
    %2996 = vmatprep.subr.mxu0 0.0
    %2997 = vmatpush1.msra.mxu0 0.0
    %2998 = vmatprep.mubr.f32.mxu0 0.0
    %2999 = vmatmul.mubr.f32.gmra.mrb[0].mxu0 %v2932
    %v3000 = vpop.f32.mrb[0].mxu0
    %v3001 = vadd.f32 0.0, %v3000
    %v3002 = vpop.f32.mrb[0].mxu0
    %3003 = vdwg.mxu0
    %3004 = vrot.lane.b32.xlu0 %v2497, 64
    %v3005 = vpop.permute.xlu0 %3004
    %v3008 = vsel %vm361, %v2850, 0
    %3010 = vmatprep.subr.mxu0 0.0
    %3011 = vmatpush1.msra.mxu0 %v3005
    %3012 = vmatprep.subr.mxu0 0.0
    %3013 = vmatpush1.msra.mxu0 0.0
    %3014 = vmatprep.subr.mxu0 0.0
    %3015 = vmatpush1.msra.mxu0 0.0
    %3016 = vmatprep.subr.mxu0 0.0
    %3017 = vmatpush1.msra.mxu0 0.0
    %3018 = vmatprep.subr.mxu0 0.0
    %3019 = vmatpush1.msra.mxu0 0.0
    %3020 = vmatprep.subr.mxu0 0.0
    %3021 = vmatpush1.msra.mxu0 0.0
    %3022 = vmatprep.subr.mxu0 0.0
    %3023 = vmatpush1.msra.mxu0 0.0
    %3024 = vmatprep.subr.mxu0 0.0
    %3025 = vmatpush1.msra.mxu0 0.0
    %3026 = vmatprep.subr.mxu0 0.0
    %3027 = vmatpush1.msra.mxu0 0.0
    %3028 = vmatprep.subr.mxu0 0.0
    %3029 = vmatpush1.msra.mxu0 0.0
    %3030 = vmatprep.subr.mxu0 0.0
    %3031 = vmatpush1.msra.mxu0 0.0
    %3032 = vmatprep.subr.mxu0 0.0
    %3033 = vmatpush1.msra.mxu0 0.0
    %3034 = vmatprep.subr.mxu0 0.0
    %3035 = vmatpush1.msra.mxu0 0.0
    %3036 = vmatprep.subr.mxu0 0.0
    %3037 = vmatpush1.msra.mxu0 0.0
    %3038 = vmatprep.subr.mxu0 0.0
    %3039 = vmatpush1.msra.mxu0 0.0
    %3040 = vmatprep.subr.mxu0 0.0
    %3041 = vmatpush1.msra.mxu0 0.0
    %3042 = vmatprep.subr.mxu0 0.0
    %3043 = vmatpush1.msra.mxu0 0.0
    %3044 = vmatprep.subr.mxu0 0.0
    %3045 = vmatpush1.msra.mxu0 0.0
    %3046 = vmatprep.subr.mxu0 0.0
    %3047 = vmatpush1.msra.mxu0 0.0
    %3048 = vmatprep.subr.mxu0 0.0
    %3049 = vmatpush1.msra.mxu0 0.0
    %3050 = vmatprep.subr.mxu0 0.0
    %3051 = vmatpush1.msra.mxu0 0.0
    %3052 = vmatprep.subr.mxu0 0.0
    %3053 = vmatpush1.msra.mxu0 0.0
    %3054 = vmatprep.subr.mxu0 0.0
    %3055 = vmatpush1.msra.mxu0 0.0
    %3056 = vmatprep.subr.mxu0 0.0
    %3057 = vmatpush1.msra.mxu0 0.0
    %3058 = vmatprep.subr.mxu0 0.0
    %3059 = vmatpush1.msra.mxu0 0.0
    %3060 = vmatprep.subr.mxu0 0.0
    %3061 = vmatpush1.msra.mxu0 0.0
    %3062 = vmatprep.subr.mxu0 0.0
    %3063 = vmatpush1.msra.mxu0 0.0
    %3064 = vmatprep.subr.mxu0 0.0
    %3065 = vmatpush1.msra.mxu0 0.0
    %3066 = vmatprep.subr.mxu0 0.0
    %3067 = vmatpush1.msra.mxu0 0.0
    %3068 = vmatprep.subr.mxu0 0.0
    %3069 = vmatpush1.msra.mxu0 0.0
    %3070 = vmatprep.subr.mxu0 0.0
    %3071 = vmatpush1.msra.mxu0 0.0
    %3072 = vmatprep.subr.mxu0 0.0
    %3073 = vmatpush1.msra.mxu0 0.0
    %3074 = vmatprep.mubr.f32.mxu0 0.0
    %3075 = vmatmul.mubr.f32.gmra.mrb[0].mxu0 %v3008
    %v3076 = vpop.f32.mrb[0].mxu0
    %v3077 = vadd.f32 0.0, %v3076
    %v3078 = vpop.f32.mrb[0].mxu0
    %3079 = vdwg.mxu0
    %3080 = vrot.lane.b32.xlu0 %v2499, 64
    %v3081 = vpop.permute.xlu0 %3080
    %v3084 = vsel %vm361, %v2851, 0
    %3086 = vmatprep.subr.mxu0 0.0
    %3087 = vmatpush1.msra.mxu0 %v3081
    %3088 = vmatprep.subr.mxu0 0.0
    %3089 = vmatpush1.msra.mxu0 0.0
    %3090 = vmatprep.subr.mxu0 0.0
    %3091 = vmatpush1.msra.mxu0 0.0
    %3092 = vmatprep.subr.mxu0 0.0
    %3093 = vmatpush1.msra.mxu0 0.0
    %3094 = vmatprep.subr.mxu0 0.0
    %3095 = vmatpush1.msra.mxu0 0.0
    %3096 = vmatprep.subr.mxu0 0.0
    %3097 = vmatpush1.msra.mxu0 0.0
    %3098 = vmatprep.subr.mxu0 0.0
    %3099 = vmatpush1.msra.mxu0 0.0
    %3100 = vmatprep.subr.mxu0 0.0
    %3101 = vmatpush1.msra.mxu0 0.0
    %3102 = vmatprep.subr.mxu0 0.0
    %3103 = vmatpush1.msra.mxu0 0.0
    %3104 = vmatprep.subr.mxu0 0.0
    %3105 = vmatpush1.msra.mxu0 0.0
    %3106 = vmatprep.subr.mxu0 0.0
    %3107 = vmatpush1.msra.mxu0 0.0
    %3108 = vmatprep.subr.mxu0 0.0
    %3109 = vmatpush1.msra.mxu0 0.0
    %3110 = vmatprep.subr.mxu0 0.0
    %3111 = vmatpush1.msra.mxu0 0.0
    %3112 = vmatprep.subr.mxu0 0.0
    %3113 = vmatpush1.msra.mxu0 0.0
    %3114 = vmatprep.subr.mxu0 0.0
    %3115 = vmatpush1.msra.mxu0 0.0
    %3116 = vmatprep.subr.mxu0 0.0
    %3117 = vmatpush1.msra.mxu0 0.0
    %3118 = vmatprep.subr.mxu0 0.0
    %3119 = vmatpush1.msra.mxu0 0.0
    %3120 = vmatprep.subr.mxu0 0.0
    %3121 = vmatpush1.msra.mxu0 0.0
    %3122 = vmatprep.subr.mxu0 0.0
    %3123 = vmatpush1.msra.mxu0 0.0
    %3124 = vmatprep.subr.mxu0 0.0
    %3125 = vmatpush1.msra.mxu0 0.0
    %3126 = vmatprep.subr.mxu0 0.0
    %3127 = vmatpush1.msra.mxu0 0.0
    %3128 = vmatprep.subr.mxu0 0.0
    %3129 = vmatpush1.msra.mxu0 0.0
    %3130 = vmatprep.subr.mxu0 0.0
    %3131 = vmatpush1.msra.mxu0 0.0
    %3132 = vmatprep.subr.mxu0 0.0
    %3133 = vmatpush1.msra.mxu0 0.0
    %3134 = vmatprep.subr.mxu0 0.0
    %3135 = vmatpush1.msra.mxu0 0.0
    %3136 = vmatprep.subr.mxu0 0.0
    %3137 = vmatpush1.msra.mxu0 0.0
    %3138 = vmatprep.subr.mxu0 0.0
    %3139 = vmatpush1.msra.mxu0 0.0
    %3140 = vmatprep.subr.mxu0 0.0
    %3141 = vmatpush1.msra.mxu0 0.0
    %3142 = vmatprep.subr.mxu0 0.0
    %3143 = vmatpush1.msra.mxu0 0.0
    %3144 = vmatprep.subr.mxu0 0.0
    %3145 = vmatpush1.msra.mxu0 0.0
    %3146 = vmatprep.subr.mxu0 0.0
    %3147 = vmatpush1.msra.mxu0 0.0
    %3148 = vmatprep.subr.mxu0 0.0
    %3149 = vmatpush1.msra.mxu0 0.0
    %3150 = vmatprep.mubr.f32.mxu0 0.0
    %3151 = vmatmul.mubr.f32.gmra.mrb[0].mxu0 %v3084
    %v3152 = vpop.f32.mrb[0].mxu0
    %v3153 = vadd.f32 0.0, %v3152
    %v3154 = vpop.f32.mrb[0].mxu0
    %3155 = vdwg.mxu0
    %3157 = vrot.lane.b32.xlu0 %v3001, 8
    %v3158 = vpop.permute.xlu0 %3157
    %3161 = vrot.lane.b32.xlu0 %v3077, 16
    %v3162 = vpop.permute.xlu0 %3161
    %3165 = vrot.lane.b32.xlu0 %v3153, 24
    %v3166 = vpop.permute.xlu0 %3165
    %v3168 = vsel %vm361, %v2925, %v3158
    %v3169 = vsel %vm1029, %v3168, %v3162
    %v3170 = vsel %vm1031, %v3169, %v3166
    %s3171 = scalar_lea.vmem %s8, 64
    %v3172 = vld [vmem:[%s3171] sm:$0xff]
    %v3173 = vld [vmem:[%s3171 + $0x8] sm:$0xff]
    %v3174 = vld [vmem:[%s3171 + $0x10] sm:$0xff]
    %v3175 = vld [vmem:[%s3171 + $0x18] sm:$0xff]
    %s3176 = scalar_lea.vmem %s9, 2
    %v3177 = vld [vmem:[%s3176] sm:$0x1]
    %v3179 = vlaneseq
    %v3180 = vshrl.u32 %v3179, 7
    %v3181 = vsub.s32 0, %v3180
    %v3182 = vrot.slane %v3177, %v3181
    %v3185 = vsel %vm278, %v3170, 0
    %3187 = vmatprep.subr.mxu0 0.0
    %3188 = vmatpush1.msra.mxu0 %v3172
    %3189 = vmatprep.subr.mxu0 0.0
    %3190 = vmatpush1.msra.mxu0 %v3173
    %3191 = vmatprep.subr.mxu0 0.0
    %3192 = vmatpush1.msra.mxu0 %v3174
    %3193 = vmatprep.subr.mxu0 0.0
    %3194 = vmatpush1.msra.mxu0 %v3175
    %3195 = vmatprep.subr.mxu0 0.0
    %3196 = vmatpush1.msra.mxu0 0.0
    %3197 = vmatprep.subr.mxu0 0.0
    %3198 = vmatpush1.msra.mxu0 0.0
    %3199 = vmatprep.subr.mxu0 0.0
    %3200 = vmatpush1.msra.mxu0 0.0
    %3201 = vmatprep.subr.mxu0 0.0
    %3202 = vmatpush1.msra.mxu0 0.0
    %3203 = vmatprep.subr.mxu0 0.0
    %3204 = vmatpush1.msra.mxu0 0.0
    %3205 = vmatprep.subr.mxu0 0.0
    %3206 = vmatpush1.msra.mxu0 0.0
    %3207 = vmatprep.subr.mxu0 0.0
    %3208 = vmatpush1.msra.mxu0 0.0
    %3209 = vmatprep.subr.mxu0 0.0
    %3210 = vmatpush1.msra.mxu0 0.0
    %3211 = vmatprep.subr.mxu0 0.0
    %3212 = vmatpush1.msra.mxu0 0.0
    %3213 = vmatprep.subr.mxu0 0.0
    %3214 = vmatpush1.msra.mxu0 0.0
    %3215 = vmatprep.subr.mxu0 0.0
    %3216 = vmatpush1.msra.mxu0 0.0
    %3217 = vmatprep.subr.mxu0 0.0
    %3218 = vmatpush1.msra.mxu0 0.0
    %3219 = vmatprep.subr.mxu0 0.0
    %3220 = vmatpush1.msra.mxu0 0.0
    %3221 = vmatprep.subr.mxu0 0.0
    %3222 = vmatpush1.msra.mxu0 0.0
    %3223 = vmatprep.subr.mxu0 0.0
    %3224 = vmatpush1.msra.mxu0 0.0
    %3225 = vmatprep.subr.mxu0 0.0
    %3226 = vmatpush1.msra.mxu0 0.0
    %3227 = vmatprep.subr.mxu0 0.0
    %3228 = vmatpush1.msra.mxu0 0.0
    %3229 = vmatprep.subr.mxu0 0.0
    %3230 = vmatpush1.msra.mxu0 0.0
    %3231 = vmatprep.subr.mxu0 0.0
    %3232 = vmatpush1.msra.mxu0 0.0
    %3233 = vmatprep.subr.mxu0 0.0
    %3234 = vmatpush1.msra.mxu0 0.0
    %3235 = vmatprep.subr.mxu0 0.0
    %3236 = vmatpush1.msra.mxu0 0.0
    %3237 = vmatprep.subr.mxu0 0.0
    %3238 = vmatpush1.msra.mxu0 0.0
    %3239 = vmatprep.subr.mxu0 0.0
    %3240 = vmatpush1.msra.mxu0 0.0
    %3241 = vmatprep.subr.mxu0 0.0
    %3242 = vmatpush1.msra.mxu0 0.0
    %3243 = vmatprep.subr.mxu0 0.0
    %3244 = vmatpush1.msra.mxu0 0.0
    %3245 = vmatprep.subr.mxu0 0.0
    %3246 = vmatpush1.msra.mxu0 0.0
    %3247 = vmatprep.subr.mxu0 0.0
    %3248 = vmatpush1.msra.mxu0 0.0
    %3249 = vmatprep.subr.mxu0 0.0
    %3250 = vmatpush1.msra.mxu0 0.0
    %3251 = vmatprep.mubr.f32.mxu0 0.0
    %3252 = vmatmul.mubr.f32.gmra.mrb[0].mxu0 %v3185
    %v3253 = vpop.f32.mrb[0].mxu0
    %v3254 = vadd.f32 %v3182, %v3253
    %v3255 = vpop.f32.mrb[0].mxu0
    %3256 = vdwg.mxu0
    %s3257 = scalar_lea.vmem %s6, 96
    %v3258 = vld [vmem:[%s3257] sm:$0xff]
    %v3259 = vld [vmem:[%s3257 + $0x8] sm:$0xff]
    %v3260 = vld [vmem:[%s3257 + $0x10] sm:$0xff]
    %v3261 = vld [vmem:[%s3257 + $0x18] sm:$0xff]
    %s3262 = scalar_lea.vmem %s7, 3
    %v3263 = vld [vmem:[%s3262] sm:$0x1]
    %v3265 = vlaneseq
    %v3266 = vshrl.u32 %v3265, 7
    %v3267 = vsub.s32 0, %v3266
    %v3268 = vrot.slane %v3263, %v3267
    %3270 = vmatprep.subr.mxu0 0.0
    %3271 = vmatpush1.msra.mxu0 %v3258
    %3272 = vmatprep.subr.mxu0 0.0
    %3273 = vmatpush1.msra.mxu0 %v3259
    %3274 = vmatprep.subr.mxu0 0.0
    %3275 = vmatpush1.msra.mxu0 %v3260
    %3276 = vmatprep.subr.mxu0 0.0
    %3277 = vmatpush1.msra.mxu0 %v3261
    %3278 = vmatprep.subr.mxu0 0.0
    %3279 = vmatpush1.msra.mxu0 0.0
    %3280 = vmatprep.subr.mxu0 0.0
    %3281 = vmatpush1.msra.mxu0 0.0
    %3282 = vmatprep.subr.mxu0 0.0
    %3283 = vmatpush1.msra.mxu0 0.0
    %3284 = vmatprep.subr.mxu0 0.0
    %3285 = vmatpush1.msra.mxu0 0.0
    %3286 = vmatprep.subr.mxu0 0.0
    %3287 = vmatpush1.msra.mxu0 0.0
    %3288 = vmatprep.subr.mxu0 0.0
    %3289 = vmatpush1.msra.mxu0 0.0
    %3290 = vmatprep.subr.mxu0 0.0
    %3291 = vmatpush1.msra.mxu0 0.0
    %3292 = vmatprep.subr.mxu0 0.0
    %3293 = vmatpush1.msra.mxu0 0.0
    %3294 = vmatprep.subr.mxu0 0.0
    %3295 = vmatpush1.msra.mxu0 0.0
    %3296 = vmatprep.subr.mxu0 0.0
    %3297 = vmatpush1.msra.mxu0 0.0
    %3298 = vmatprep.subr.mxu0 0.0
    %3299 = vmatpush1.msra.mxu0 0.0
    %3300 = vmatprep.subr.mxu0 0.0
    %3301 = vmatpush1.msra.mxu0 0.0
    %3302 = vmatprep.subr.mxu0 0.0
    %3303 = vmatpush1.msra.mxu0 0.0
    %3304 = vmatprep.subr.mxu0 0.0
    %3305 = vmatpush1.msra.mxu0 0.0
    %3306 = vmatprep.subr.mxu0 0.0
    %3307 = vmatpush1.msra.mxu0 0.0
    %3308 = vmatprep.subr.mxu0 0.0
    %3309 = vmatpush1.msra.mxu0 0.0
    %3310 = vmatprep.subr.mxu0 0.0
    %3311 = vmatpush1.msra.mxu0 0.0
    %3312 = vmatprep.subr.mxu0 0.0
    %3313 = vmatpush1.msra.mxu0 0.0
    %3314 = vmatprep.subr.mxu0 0.0
    %3315 = vmatpush1.msra.mxu0 0.0
    %3316 = vmatprep.subr.mxu0 0.0
    %3317 = vmatpush1.msra.mxu0 0.0
    %3318 = vmatprep.subr.mxu0 0.0
    %3319 = vmatpush1.msra.mxu0 0.0
    %3320 = vmatprep.subr.mxu0 0.0
    %3321 = vmatpush1.msra.mxu0 0.0
    %3322 = vmatprep.subr.mxu0 0.0
    %3323 = vmatpush1.msra.mxu0 0.0
    %3324 = vmatprep.subr.mxu0 0.0
    %3325 = vmatpush1.msra.mxu0 0.0
    %3326 = vmatprep.subr.mxu0 0.0
    %3327 = vmatpush1.msra.mxu0 0.0
    %3328 = vmatprep.subr.mxu0 0.0
    %3329 = vmatpush1.msra.mxu0 0.0
    %3330 = vmatprep.subr.mxu0 0.0
    %3331 = vmatpush1.msra.mxu0 0.0
    %3332 = vmatprep.subr.mxu0 0.0
    %3333 = vmatpush1.msra.mxu0 0.0
    %3334 = vmatprep.mubr.f32.mxu0 0.0
    %3335 = vmatmul.mubr.f32.gmra.mrb[0].mxu0 %v2409
    %v3336 = vpop.f32.mrb[0].mxu0
    %v3337 = vadd.f32 %v3268, %v3336
    %v3338 = vpop.f32.mrb[0].mxu0
    %3339 = vmatprep.mubr.f32.mxu0 0.0
    %3340 = vmatmul.mubr.f32.gmra.mrb[0].mxu0 %v2406
    %v3341 = vpop.f32.mrb[0].mxu0
    %v3342 = vadd.f32 %v3268, %v3341
    %v3343 = vpop.f32.mrb[0].mxu0
    %3344 = vdwg.mxu0
    %3346 = vrot.lane.b32.xlu0 %v3337, 120
    %v3347 = vpop.permute.xlu0 %3346
    %3348 = vrot.lane.b32.xlu0 %v3337, 112
    %v3349 = vpop.permute.xlu0 %3348
    %3350 = vrot.lane.b32.xlu0 %v3337, 104
    %v3351 = vpop.permute.xlu0 %3350
    %3353 = vrot.lane.b32.xlu0 %v3342, 120
    %v3354 = vpop.permute.xlu0 %3353
    %3355 = vrot.lane.b32.xlu0 %v3342, 112
    %v3356 = vpop.permute.xlu0 %3355
    %3357 = vrot.lane.b32.xlu0 %v3342, 104
    %v3358 = vpop.permute.xlu0 %3357
    %3359 = vrot.lane.b32.xlu0 %v3342, 96
    %v3360 = vpop.permute.xlu0 %3359
    %v3361 = vsel %vm361, %v3337, 0
    %v3363 = vsel %vm361, %v3360, 0
    %3365 = vmatprep.subr.mxu0 0.0
    %3366 = vmatpush1.xpose.msra.mxu0 %v3363
    %3367 = vmatprep.subr.mxu0 0.0
    %3368 = vmatpush1.xpose.msra.mxu0 0.0
    %3369 = vmatprep.subr.mxu0 0.0
    %3370 = vmatpush1.xpose.msra.mxu0 0.0
    %3371 = vmatprep.subr.mxu0 0.0
    %3372 = vmatpush1.xpose.msra.mxu0 0.0
    %3373 = vmatprep.subr.mxu0 0.0
    %3374 = vmatpush1.xpose.msra.mxu0 0.0
    %3375 = vmatprep.subr.mxu0 0.0
    %3376 = vmatpush1.xpose.msra.mxu0 0.0
    %3377 = vmatprep.subr.mxu0 0.0
    %3378 = vmatpush1.xpose.msra.mxu0 0.0
    %3379 = vmatprep.subr.mxu0 0.0
    %3380 = vmatpush1.xpose.msra.mxu0 0.0
    %3381 = vmatprep.subr.mxu0 0.0
    %3382 = vmatpush1.xpose.msra.mxu0 0.0
    %3383 = vmatprep.subr.mxu0 0.0
    %3384 = vmatpush1.xpose.msra.mxu0 0.0
    %3385 = vmatprep.subr.mxu0 0.0
    %3386 = vmatpush1.xpose.msra.mxu0 0.0
    %3387 = vmatprep.subr.mxu0 0.0
    %3388 = vmatpush1.xpose.msra.mxu0 0.0
    %3389 = vmatprep.subr.mxu0 0.0
    %3390 = vmatpush1.xpose.msra.mxu0 0.0
    %3391 = vmatprep.subr.mxu0 0.0
    %3392 = vmatpush1.xpose.msra.mxu0 0.0
    %3393 = vmatprep.subr.mxu0 0.0
    %3394 = vmatpush1.xpose.msra.mxu0 0.0
    %3395 = vmatprep.subr.mxu0 0.0
    %3396 = vmatpush1.xpose.msra.mxu0 0.0
    %3397 = vmatprep.subr.mxu0 0.0
    %3398 = vmatpush1.xpose.msra.mxu0 0.0
    %3399 = vmatprep.subr.mxu0 0.0
    %3400 = vmatpush1.xpose.msra.mxu0 0.0
    %3401 = vmatprep.subr.mxu0 0.0
    %3402 = vmatpush1.xpose.msra.mxu0 0.0
    %3403 = vmatprep.subr.mxu0 0.0
    %3404 = vmatpush1.xpose.msra.mxu0 0.0
    %3405 = vmatprep.subr.mxu0 0.0
    %3406 = vmatpush1.xpose.msra.mxu0 0.0
    %3407 = vmatprep.subr.mxu0 0.0
    %3408 = vmatpush1.xpose.msra.mxu0 0.0
    %3409 = vmatprep.subr.mxu0 0.0
    %3410 = vmatpush1.xpose.msra.mxu0 0.0
    %3411 = vmatprep.subr.mxu0 0.0
    %3412 = vmatpush1.xpose.msra.mxu0 0.0
    %3413 = vmatprep.subr.mxu0 0.0
    %3414 = vmatpush1.xpose.msra.mxu0 0.0
    %3415 = vmatprep.subr.mxu0 0.0
    %3416 = vmatpush1.xpose.msra.mxu0 0.0
    %3417 = vmatprep.subr.mxu0 0.0
    %3418 = vmatpush1.xpose.msra.mxu0 0.0
    %3419 = vmatprep.subr.mxu0 0.0
    %3420 = vmatpush1.xpose.msra.mxu0 0.0
    %3421 = vmatprep.subr.mxu0 0.0
    %3422 = vmatpush1.xpose.msra.mxu0 0.0
    %3423 = vmatprep.subr.mxu0 0.0
    %3424 = vmatpush1.xpose.msra.mxu0 0.0
    %3425 = vmatprep.subr.mxu0 0.0
    %3426 = vmatpush1.xpose.msra.mxu0 0.0
    %3427 = vmatprep.subr.mxu0 0.0
    %3428 = vmatpush1.xpose.msra.mxu0 0.0
    %3429 = vmatprep.mubr.f32.mxu0 0.0
    %3430 = vmatmul.mubr.f32.gmra.mrb[0].mxu0 %v3361
    %v3431 = vpop.f32.mrb[0].mxu0
    %v3432 = vadd.f32 0.0, %v3431
    %v3433 = vpop.f32.mrb[0].mxu0
    %3434 = vdwg.mxu0
    %3435 = vrot.lane.b32.xlu0 %v3354, 96
    %v3436 = vpop.permute.xlu0 %3435
    %v3437 = vsel %vm361, %v3347, 0
    %v3439 = vsel %vm361, %v3436, 0
    %3441 = vmatprep.subr.mxu0 0.0
    %3442 = vmatpush1.xpose.msra.mxu0 %v3439
    %3443 = vmatprep.subr.mxu0 0.0
    %3444 = vmatpush1.xpose.msra.mxu0 0.0
    %3445 = vmatprep.subr.mxu0 0.0
    %3446 = vmatpush1.xpose.msra.mxu0 0.0
    %3447 = vmatprep.subr.mxu0 0.0
    %3448 = vmatpush1.xpose.msra.mxu0 0.0
    %3449 = vmatprep.subr.mxu0 0.0
    %3450 = vmatpush1.xpose.msra.mxu0 0.0
    %3451 = vmatprep.subr.mxu0 0.0
    %3452 = vmatpush1.xpose.msra.mxu0 0.0
    %3453 = vmatprep.subr.mxu0 0.0
    %3454 = vmatpush1.xpose.msra.mxu0 0.0
    %3455 = vmatprep.subr.mxu0 0.0
    %3456 = vmatpush1.xpose.msra.mxu0 0.0
    %3457 = vmatprep.subr.mxu0 0.0
    %3458 = vmatpush1.xpose.msra.mxu0 0.0
    %3459 = vmatprep.subr.mxu0 0.0
    %3460 = vmatpush1.xpose.msra.mxu0 0.0
    %3461 = vmatprep.subr.mxu0 0.0
    %3462 = vmatpush1.xpose.msra.mxu0 0.0
    %3463 = vmatprep.subr.mxu0 0.0
    %3464 = vmatpush1.xpose.msra.mxu0 0.0
    %3465 = vmatprep.subr.mxu0 0.0
    %3466 = vmatpush1.xpose.msra.mxu0 0.0
    %3467 = vmatprep.subr.mxu0 0.0
    %3468 = vmatpush1.xpose.msra.mxu0 0.0
    %3469 = vmatprep.subr.mxu0 0.0
    %3470 = vmatpush1.xpose.msra.mxu0 0.0
    %3471 = vmatprep.subr.mxu0 0.0
    %3472 = vmatpush1.xpose.msra.mxu0 0.0
    %3473 = vmatprep.subr.mxu0 0.0
    %3474 = vmatpush1.xpose.msra.mxu0 0.0
    %3475 = vmatprep.subr.mxu0 0.0
    %3476 = vmatpush1.xpose.msra.mxu0 0.0
    %3477 = vmatprep.subr.mxu0 0.0
    %3478 = vmatpush1.xpose.msra.mxu0 0.0
    %3479 = vmatprep.subr.mxu0 0.0
    %3480 = vmatpush1.xpose.msra.mxu0 0.0
    %3481 = vmatprep.subr.mxu0 0.0
    %3482 = vmatpush1.xpose.msra.mxu0 0.0
    %3483 = vmatprep.subr.mxu0 0.0
    %3484 = vmatpush1.xpose.msra.mxu0 0.0
    %3485 = vmatprep.subr.mxu0 0.0
    %3486 = vmatpush1.xpose.msra.mxu0 0.0
    %3487 = vmatprep.subr.mxu0 0.0
    %3488 = vmatpush1.xpose.msra.mxu0 0.0
    %3489 = vmatprep.subr.mxu0 0.0
    %3490 = vmatpush1.xpose.msra.mxu0 0.0
    %3491 = vmatprep.subr.mxu0 0.0
    %3492 = vmatpush1.xpose.msra.mxu0 0.0
    %3493 = vmatprep.subr.mxu0 0.0
    %3494 = vmatpush1.xpose.msra.mxu0 0.0
    %3495 = vmatprep.subr.mxu0 0.0
    %3496 = vmatpush1.xpose.msra.mxu0 0.0
    %3497 = vmatprep.subr.mxu0 0.0
    %3498 = vmatpush1.xpose.msra.mxu0 0.0
    %3499 = vmatprep.subr.mxu0 0.0
    %3500 = vmatpush1.xpose.msra.mxu0 0.0
    %3501 = vmatprep.subr.mxu0 0.0
    %3502 = vmatpush1.xpose.msra.mxu0 0.0
    %3503 = vmatprep.subr.mxu0 0.0
    %3504 = vmatpush1.xpose.msra.mxu0 0.0
    %3505 = vmatprep.mubr.f32.mxu0 0.0
    %3506 = vmatmul.mubr.f32.gmra.mrb[0].mxu0 %v3437
    %v3507 = vpop.f32.mrb[0].mxu0
    %v3508 = vadd.f32 0.0, %v3507
    %v3509 = vpop.f32.mrb[0].mxu0
    %3510 = vdwg.mxu0
    %3511 = vrot.lane.b32.xlu0 %v3356, 96
    %v3512 = vpop.permute.xlu0 %3511
    %v3513 = vsel %vm361, %v3349, 0
    %v3515 = vsel %vm361, %v3512, 0
    %3517 = vmatprep.subr.mxu0 0.0
    %3518 = vmatpush1.xpose.msra.mxu0 %v3515
    %3519 = vmatprep.subr.mxu0 0.0
    %3520 = vmatpush1.xpose.msra.mxu0 0.0
    %3521 = vmatprep.subr.mxu0 0.0
    %3522 = vmatpush1.xpose.msra.mxu0 0.0
    %3523 = vmatprep.subr.mxu0 0.0
    %3524 = vmatpush1.xpose.msra.mxu0 0.0
    %3525 = vmatprep.subr.mxu0 0.0
    %3526 = vmatpush1.xpose.msra.mxu0 0.0
    %3527 = vmatprep.subr.mxu0 0.0
    %3528 = vmatpush1.xpose.msra.mxu0 0.0
    %3529 = vmatprep.subr.mxu0 0.0
    %3530 = vmatpush1.xpose.msra.mxu0 0.0
    %3531 = vmatprep.subr.mxu0 0.0
    %3532 = vmatpush1.xpose.msra.mxu0 0.0
    %3533 = vmatprep.subr.mxu0 0.0
    %3534 = vmatpush1.xpose.msra.mxu0 0.0
    %3535 = vmatprep.subr.mxu0 0.0
    %3536 = vmatpush1.xpose.msra.mxu0 0.0
    %3537 = vmatprep.subr.mxu0 0.0
    %3538 = vmatpush1.xpose.msra.mxu0 0.0
    %3539 = vmatprep.subr.mxu0 0.0
    %3540 = vmatpush1.xpose.msra.mxu0 0.0
    %3541 = vmatprep.subr.mxu0 0.0
    %3542 = vmatpush1.xpose.msra.mxu0 0.0
    %3543 = vmatprep.subr.mxu0 0.0
    %3544 = vmatpush1.xpose.msra.mxu0 0.0
    %3545 = vmatprep.subr.mxu0 0.0
    %3546 = vmatpush1.xpose.msra.mxu0 0.0
    %3547 = vmatprep.subr.mxu0 0.0
    %3548 = vmatpush1.xpose.msra.mxu0 0.0
    %3549 = vmatprep.subr.mxu0 0.0
    %3550 = vmatpush1.xpose.msra.mxu0 0.0
    %3551 = vmatprep.subr.mxu0 0.0
    %3552 = vmatpush1.xpose.msra.mxu0 0.0
    %3553 = vmatprep.subr.mxu0 0.0
    %3554 = vmatpush1.xpose.msra.mxu0 0.0
    %3555 = vmatprep.subr.mxu0 0.0
    %3556 = vmatpush1.xpose.msra.mxu0 0.0
    %3557 = vmatprep.subr.mxu0 0.0
    %3558 = vmatpush1.xpose.msra.mxu0 0.0
    %3559 = vmatprep.subr.mxu0 0.0
    %3560 = vmatpush1.xpose.msra.mxu0 0.0
    %3561 = vmatprep.subr.mxu0 0.0
    %3562 = vmatpush1.xpose.msra.mxu0 0.0
    %3563 = vmatprep.subr.mxu0 0.0
    %3564 = vmatpush1.xpose.msra.mxu0 0.0
    %3565 = vmatprep.subr.mxu0 0.0
    %3566 = vmatpush1.xpose.msra.mxu0 0.0
    %3567 = vmatprep.subr.mxu0 0.0
    %3568 = vmatpush1.xpose.msra.mxu0 0.0
    %3569 = vmatprep.subr.mxu0 0.0
    %3570 = vmatpush1.xpose.msra.mxu0 0.0
    %3571 = vmatprep.subr.mxu0 0.0
    %3572 = vmatpush1.xpose.msra.mxu0 0.0
    %3573 = vmatprep.subr.mxu0 0.0
    %3574 = vmatpush1.xpose.msra.mxu0 0.0
    %3575 = vmatprep.subr.mxu0 0.0
    %3576 = vmatpush1.xpose.msra.mxu0 0.0
    %3577 = vmatprep.subr.mxu0 0.0
    %3578 = vmatpush1.xpose.msra.mxu0 0.0
    %3579 = vmatprep.subr.mxu0 0.0
    %3580 = vmatpush1.xpose.msra.mxu0 0.0
    %3581 = vmatprep.mubr.f32.mxu0 0.0
    %3582 = vmatmul.mubr.f32.gmra.mrb[0].mxu0 %v3513
    %v3583 = vpop.f32.mrb[0].mxu0
    %v3584 = vadd.f32 0.0, %v3583
    %v3585 = vpop.f32.mrb[0].mxu0
    %3586 = vdwg.mxu0
    %3587 = vrot.lane.b32.xlu0 %v3358, 96
    %v3588 = vpop.permute.xlu0 %3587
    %v3589 = vsel %vm361, %v3351, 0
    %v3591 = vsel %vm361, %v3588, 0
    %3593 = vmatprep.subr.mxu0 0.0
    %3594 = vmatpush1.xpose.msra.mxu0 %v3591
    %3595 = vmatprep.subr.mxu0 0.0
    %3596 = vmatpush1.xpose.msra.mxu0 0.0
    %3597 = vmatprep.subr.mxu0 0.0
    %3598 = vmatpush1.xpose.msra.mxu0 0.0
    %3599 = vmatprep.subr.mxu0 0.0
    %3600 = vmatpush1.xpose.msra.mxu0 0.0
    %3601 = vmatprep.subr.mxu0 0.0
    %3602 = vmatpush1.xpose.msra.mxu0 0.0
    %3603 = vmatprep.subr.mxu0 0.0
    %3604 = vmatpush1.xpose.msra.mxu0 0.0
    %3605 = vmatprep.subr.mxu0 0.0
    %3606 = vmatpush1.xpose.msra.mxu0 0.0
    %3607 = vmatprep.subr.mxu0 0.0
    %3608 = vmatpush1.xpose.msra.mxu0 0.0
    %3609 = vmatprep.subr.mxu0 0.0
    %3610 = vmatpush1.xpose.msra.mxu0 0.0
    %3611 = vmatprep.subr.mxu0 0.0
    %3612 = vmatpush1.xpose.msra.mxu0 0.0
    %3613 = vmatprep.subr.mxu0 0.0
    %3614 = vmatpush1.xpose.msra.mxu0 0.0
    %3615 = vmatprep.subr.mxu0 0.0
    %3616 = vmatpush1.xpose.msra.mxu0 0.0
    %3617 = vmatprep.subr.mxu0 0.0
    %3618 = vmatpush1.xpose.msra.mxu0 0.0
    %3619 = vmatprep.subr.mxu0 0.0
    %3620 = vmatpush1.xpose.msra.mxu0 0.0
    %3621 = vmatprep.subr.mxu0 0.0
    %3622 = vmatpush1.xpose.msra.mxu0 0.0
    %3623 = vmatprep.subr.mxu0 0.0
    %3624 = vmatpush1.xpose.msra.mxu0 0.0
    %3625 = vmatprep.subr.mxu0 0.0
    %3626 = vmatpush1.xpose.msra.mxu0 0.0
    %3627 = vmatprep.subr.mxu0 0.0
    %3628 = vmatpush1.xpose.msra.mxu0 0.0
    %3629 = vmatprep.subr.mxu0 0.0
    %3630 = vmatpush1.xpose.msra.mxu0 0.0
    %3631 = vmatprep.subr.mxu0 0.0
    %3632 = vmatpush1.xpose.msra.mxu0 0.0
    %3633 = vmatprep.subr.mxu0 0.0
    %3634 = vmatpush1.xpose.msra.mxu0 0.0
    %3635 = vmatprep.subr.mxu0 0.0
    %3636 = vmatpush1.xpose.msra.mxu0 0.0
    %3637 = vmatprep.subr.mxu0 0.0
    %3638 = vmatpush1.xpose.msra.mxu0 0.0
    %3639 = vmatprep.subr.mxu0 0.0
    %3640 = vmatpush1.xpose.msra.mxu0 0.0
    %3641 = vmatprep.subr.mxu0 0.0
    %3642 = vmatpush1.xpose.msra.mxu0 0.0
    %3643 = vmatprep.subr.mxu0 0.0
    %3644 = vmatpush1.xpose.msra.mxu0 0.0
    %3645 = vmatprep.subr.mxu0 0.0
    %3646 = vmatpush1.xpose.msra.mxu0 0.0
    %3647 = vmatprep.subr.mxu0 0.0
    %3648 = vmatpush1.xpose.msra.mxu0 0.0
    %3649 = vmatprep.subr.mxu0 0.0
    %3650 = vmatpush1.xpose.msra.mxu0 0.0
    %3651 = vmatprep.subr.mxu0 0.0
    %3652 = vmatpush1.xpose.msra.mxu0 0.0
    %3653 = vmatprep.subr.mxu0 0.0
    %3654 = vmatpush1.xpose.msra.mxu0 0.0
    %3655 = vmatprep.subr.mxu0 0.0
    %3656 = vmatpush1.xpose.msra.mxu0 0.0
    %3657 = vmatprep.mubr.f32.mxu0 0.0
    %3658 = vmatmul.mubr.f32.gmra.mrb[0].mxu0 %v3589
    %v3659 = vpop.f32.mrb[0].mxu0
    %v3660 = vadd.f32 0.0, %v3659
    %v3661 = vpop.f32.mrb[0].mxu0
    %3662 = vdwg.mxu0
    %v3663 = vmul.f32 %v3432, 0.35355338
    %v3664 = vmul.f32 %v3508, 0.35355338
    %v3665 = vmul.f32 %v3584, 0.35355338
    %v3666 = vmul.f32 %v3660, 0.35355338
    %v3667 = vsel %vm361, %v3663, -inf
    %3668 = vmax.xlane.f32.xlu0 %v3667
    %v3669 = vpop.xlane.xlu0 %3668
    %v3670 = vsel %vm361, %v3664, -inf
    %3671 = vmax.xlane.f32.xlu0 %v3670
    %v3672 = vpop.xlane.xlu0 %3671
    %v3673 = vsel %vm361, %v3665, -inf
    %3674 = vmax.xlane.f32.xlu0 %v3673
    %v3675 = vpop.xlane.xlu0 %3674
    %v3676 = vsel %vm361, %v3666, -inf
    %3677 = vmax.xlane.f32.xlu0 %v3676
    %v3678 = vpop.xlane.xlu0 %3677
    %v3679 = vsub.f32 %v3663, %v3669
    %v3680 = vsub.f32 %v3664, %v3672
    %v3681 = vsub.f32 %v3665, %v3675
    %v3682 = vsub.f32 %v3666, %v3678
    %v3683 = vmul.f32 %v3679, 1.442695
    %v3684 = vpow.pop %v3683
    %v3685 = vmul.f32 %v3680, 1.442695
    %v3686 = vpow.pop %v3685
    %v3687 = vmul.f32 %v3681, 1.442695
    %v3688 = vpow.pop %v3687
    %v3689 = vmul.f32 %v3682, 1.442695
    %v3690 = vpow.pop %v3689
    %v3691 = vsel %vm361, %v3684, 0.0
    %3692 = vadd.xlane.f32.xlu0 %v3691
    %v3693 = vpop.xlane.xlu0 %3692
    %v3694 = vsel %vm361, %v3686, 0.0
    %3695 = vadd.xlane.f32.xlu0 %v3694
    %v3696 = vpop.xlane.xlu0 %3695
    %v3697 = vsel %vm361, %v3688, 0.0
    %3698 = vadd.xlane.f32.xlu0 %v3697
    %v3699 = vpop.xlane.xlu0 %3698
    %v3700 = vsel %vm361, %v3690, 0.0
    %3701 = vadd.xlane.f32.xlu0 %v3700
    %v3702 = vpop.xlane.xlu0 %3701
    %v3703 = vrcp.pop %v3693
    %v3704 = vrcp.pop %v3696
    %v3705 = vrcp.pop %v3699
    %v3706 = vrcp.pop %v3702
    %v3707 = vmul.f32 %v3684, %v3703
    %v3708 = vmul.f32 %v3686, %v3704
    %v3709 = vmul.f32 %v3688, %v3705
    %v3710 = vmul.f32 %v3690, %v3706
    %3711 = vrot.lane.b32.xlu0 %v3342, 64
    %v3712 = vpop.permute.xlu0 %3711
    %v3715 = vsel %vm361, %v3707, 0
    %3717 = vmatprep.subr.mxu0 0.0
    %3718 = vmatpush1.msra.mxu0 %v3712
    %3719 = vmatprep.subr.mxu0 0.0
    %3720 = vmatpush1.msra.mxu0 0.0
    %3721 = vmatprep.subr.mxu0 0.0
    %3722 = vmatpush1.msra.mxu0 0.0
    %3723 = vmatprep.subr.mxu0 0.0
    %3724 = vmatpush1.msra.mxu0 0.0
    %3725 = vmatprep.subr.mxu0 0.0
    %3726 = vmatpush1.msra.mxu0 0.0
    %3727 = vmatprep.subr.mxu0 0.0
    %3728 = vmatpush1.msra.mxu0 0.0
    %3729 = vmatprep.subr.mxu0 0.0
    %3730 = vmatpush1.msra.mxu0 0.0
    %3731 = vmatprep.subr.mxu0 0.0
    %3732 = vmatpush1.msra.mxu0 0.0
    %3733 = vmatprep.subr.mxu0 0.0
    %3734 = vmatpush1.msra.mxu0 0.0
    %3735 = vmatprep.subr.mxu0 0.0
    %3736 = vmatpush1.msra.mxu0 0.0
    %3737 = vmatprep.subr.mxu0 0.0
    %3738 = vmatpush1.msra.mxu0 0.0
    %3739 = vmatprep.subr.mxu0 0.0
    %3740 = vmatpush1.msra.mxu0 0.0
    %3741 = vmatprep.subr.mxu0 0.0
    %3742 = vmatpush1.msra.mxu0 0.0
    %3743 = vmatprep.subr.mxu0 0.0
    %3744 = vmatpush1.msra.mxu0 0.0
    %3745 = vmatprep.subr.mxu0 0.0
    %3746 = vmatpush1.msra.mxu0 0.0
    %3747 = vmatprep.subr.mxu0 0.0
    %3748 = vmatpush1.msra.mxu0 0.0
    %3749 = vmatprep.subr.mxu0 0.0
    %3750 = vmatpush1.msra.mxu0 0.0
    %3751 = vmatprep.subr.mxu0 0.0
    %3752 = vmatpush1.msra.mxu0 0.0
    %3753 = vmatprep.subr.mxu0 0.0
    %3754 = vmatpush1.msra.mxu0 0.0
    %3755 = vmatprep.subr.mxu0 0.0
    %3756 = vmatpush1.msra.mxu0 0.0
    %3757 = vmatprep.subr.mxu0 0.0
    %3758 = vmatpush1.msra.mxu0 0.0
    %3759 = vmatprep.subr.mxu0 0.0
    %3760 = vmatpush1.msra.mxu0 0.0
    %3761 = vmatprep.subr.mxu0 0.0
    %3762 = vmatpush1.msra.mxu0 0.0
    %3763 = vmatprep.subr.mxu0 0.0
    %3764 = vmatpush1.msra.mxu0 0.0
    %3765 = vmatprep.subr.mxu0 0.0
    %3766 = vmatpush1.msra.mxu0 0.0
    %3767 = vmatprep.subr.mxu0 0.0
    %3768 = vmatpush1.msra.mxu0 0.0
    %3769 = vmatprep.subr.mxu0 0.0
    %3770 = vmatpush1.msra.mxu0 0.0
    %3771 = vmatprep.subr.mxu0 0.0
    %3772 = vmatpush1.msra.mxu0 0.0
    %3773 = vmatprep.subr.mxu0 0.0
    %3774 = vmatpush1.msra.mxu0 0.0
    %3775 = vmatprep.subr.mxu0 0.0
    %3776 = vmatpush1.msra.mxu0 0.0
    %3777 = vmatprep.subr.mxu0 0.0
    %3778 = vmatpush1.msra.mxu0 0.0
    %3779 = vmatprep.subr.mxu0 0.0
    %3780 = vmatpush1.msra.mxu0 0.0
    %3781 = vmatprep.mubr.f32.mxu0 0.0
    %3782 = vmatmul.mubr.f32.gmra.mrb[0].mxu0 %v3715
    %v3783 = vpop.f32.mrb[0].mxu0
    %v3784 = vadd.f32 0.0, %v3783
    %v3785 = vpop.f32.mrb[0].mxu0
    %3786 = vdwg.mxu0
    %3787 = vrot.lane.b32.xlu0 %v3354, 64
    %v3788 = vpop.permute.xlu0 %3787
    %v3791 = vsel %vm361, %v3708, 0
    %3793 = vmatprep.subr.mxu0 0.0
    %3794 = vmatpush1.msra.mxu0 %v3788
    %3795 = vmatprep.subr.mxu0 0.0
    %3796 = vmatpush1.msra.mxu0 0.0
    %3797 = vmatprep.subr.mxu0 0.0
    %3798 = vmatpush1.msra.mxu0 0.0
    %3799 = vmatprep.subr.mxu0 0.0
    %3800 = vmatpush1.msra.mxu0 0.0
    %3801 = vmatprep.subr.mxu0 0.0
    %3802 = vmatpush1.msra.mxu0 0.0
    %3803 = vmatprep.subr.mxu0 0.0
    %3804 = vmatpush1.msra.mxu0 0.0
    %3805 = vmatprep.subr.mxu0 0.0
    %3806 = vmatpush1.msra.mxu0 0.0
    %3807 = vmatprep.subr.mxu0 0.0
    %3808 = vmatpush1.msra.mxu0 0.0
    %3809 = vmatprep.subr.mxu0 0.0
    %3810 = vmatpush1.msra.mxu0 0.0
    %3811 = vmatprep.subr.mxu0 0.0
    %3812 = vmatpush1.msra.mxu0 0.0
    %3813 = vmatprep.subr.mxu0 0.0
    %3814 = vmatpush1.msra.mxu0 0.0
    %3815 = vmatprep.subr.mxu0 0.0
    %3816 = vmatpush1.msra.mxu0 0.0
    %3817 = vmatprep.subr.mxu0 0.0
    %3818 = vmatpush1.msra.mxu0 0.0
    %3819 = vmatprep.subr.mxu0 0.0
    %3820 = vmatpush1.msra.mxu0 0.0
    %3821 = vmatprep.subr.mxu0 0.0
    %3822 = vmatpush1.msra.mxu0 0.0
    %3823 = vmatprep.subr.mxu0 0.0
    %3824 = vmatpush1.msra.mxu0 0.0
    %3825 = vmatprep.subr.mxu0 0.0
    %3826 = vmatpush1.msra.mxu0 0.0
    %3827 = vmatprep.subr.mxu0 0.0
    %3828 = vmatpush1.msra.mxu0 0.0
    %3829 = vmatprep.subr.mxu0 0.0
    %3830 = vmatpush1.msra.mxu0 0.0
    %3831 = vmatprep.subr.mxu0 0.0
    %3832 = vmatpush1.msra.mxu0 0.0
    %3833 = vmatprep.subr.mxu0 0.0
    %3834 = vmatpush1.msra.mxu0 0.0
    %3835 = vmatprep.subr.mxu0 0.0
    %3836 = vmatpush1.msra.mxu0 0.0
    %3837 = vmatprep.subr.mxu0 0.0
    %3838 = vmatpush1.msra.mxu0 0.0
    %3839 = vmatprep.subr.mxu0 0.0
    %3840 = vmatpush1.msra.mxu0 0.0
    %3841 = vmatprep.subr.mxu0 0.0
    %3842 = vmatpush1.msra.mxu0 0.0
    %3843 = vmatprep.subr.mxu0 0.0
    %3844 = vmatpush1.msra.mxu0 0.0
    %3845 = vmatprep.subr.mxu0 0.0
    %3846 = vmatpush1.msra.mxu0 0.0
    %3847 = vmatprep.subr.mxu0 0.0
    %3848 = vmatpush1.msra.mxu0 0.0
    %3849 = vmatprep.subr.mxu0 0.0
    %3850 = vmatpush1.msra.mxu0 0.0
    %3851 = vmatprep.subr.mxu0 0.0
    %3852 = vmatpush1.msra.mxu0 0.0
    %3853 = vmatprep.subr.mxu0 0.0
    %3854 = vmatpush1.msra.mxu0 0.0
    %3855 = vmatprep.subr.mxu0 0.0
    %3856 = vmatpush1.msra.mxu0 0.0
    %3857 = vmatprep.mubr.f32.mxu0 0.0
    %3858 = vmatmul.mubr.f32.gmra.mrb[0].mxu0 %v3791
    %v3859 = vpop.f32.mrb[0].mxu0
    %v3860 = vadd.f32 0.0, %v3859
    %v3861 = vpop.f32.mrb[0].mxu0
    %3862 = vdwg.mxu0
    %3863 = vrot.lane.b32.xlu0 %v3356, 64
    %v3864 = vpop.permute.xlu0 %3863
    %v3867 = vsel %vm361, %v3709, 0
    %3869 = vmatprep.subr.mxu0 0.0
    %3870 = vmatpush1.msra.mxu0 %v3864
    %3871 = vmatprep.subr.mxu0 0.0
    %3872 = vmatpush1.msra.mxu0 0.0
    %3873 = vmatprep.subr.mxu0 0.0
    %3874 = vmatpush1.msra.mxu0 0.0
    %3875 = vmatprep.subr.mxu0 0.0
    %3876 = vmatpush1.msra.mxu0 0.0
    %3877 = vmatprep.subr.mxu0 0.0
    %3878 = vmatpush1.msra.mxu0 0.0
    %3879 = vmatprep.subr.mxu0 0.0
    %3880 = vmatpush1.msra.mxu0 0.0
    %3881 = vmatprep.subr.mxu0 0.0
    %3882 = vmatpush1.msra.mxu0 0.0
    %3883 = vmatprep.subr.mxu0 0.0
    %3884 = vmatpush1.msra.mxu0 0.0
    %3885 = vmatprep.subr.mxu0 0.0
    %3886 = vmatpush1.msra.mxu0 0.0
    %3887 = vmatprep.subr.mxu0 0.0
    %3888 = vmatpush1.msra.mxu0 0.0
    %3889 = vmatprep.subr.mxu0 0.0
    %3890 = vmatpush1.msra.mxu0 0.0
    %3891 = vmatprep.subr.mxu0 0.0
    %3892 = vmatpush1.msra.mxu0 0.0
    %3893 = vmatprep.subr.mxu0 0.0
    %3894 = vmatpush1.msra.mxu0 0.0
    %3895 = vmatprep.subr.mxu0 0.0
    %3896 = vmatpush1.msra.mxu0 0.0
    %3897 = vmatprep.subr.mxu0 0.0
    %3898 = vmatpush1.msra.mxu0 0.0
    %3899 = vmatprep.subr.mxu0 0.0
    %3900 = vmatpush1.msra.mxu0 0.0
    %3901 = vmatprep.subr.mxu0 0.0
    %3902 = vmatpush1.msra.mxu0 0.0
    %3903 = vmatprep.subr.mxu0 0.0
    %3904 = vmatpush1.msra.mxu0 0.0
    %3905 = vmatprep.subr.mxu0 0.0
    %3906 = vmatpush1.msra.mxu0 0.0
    %3907 = vmatprep.subr.mxu0 0.0
    %3908 = vmatpush1.msra.mxu0 0.0
    %3909 = vmatprep.subr.mxu0 0.0
    %3910 = vmatpush1.msra.mxu0 0.0
    %3911 = vmatprep.subr.mxu0 0.0
    %3912 = vmatpush1.msra.mxu0 0.0
    %3913 = vmatprep.subr.mxu0 0.0
    %3914 = vmatpush1.msra.mxu0 0.0
    %3915 = vmatprep.subr.mxu0 0.0
    %3916 = vmatpush1.msra.mxu0 0.0
    %3917 = vmatprep.subr.mxu0 0.0
    %3918 = vmatpush1.msra.mxu0 0.0
    %3919 = vmatprep.subr.mxu0 0.0
    %3920 = vmatpush1.msra.mxu0 0.0
    %3921 = vmatprep.subr.mxu0 0.0
    %3922 = vmatpush1.msra.mxu0 0.0
    %3923 = vmatprep.subr.mxu0 0.0
    %3924 = vmatpush1.msra.mxu0 0.0
    %3925 = vmatprep.subr.mxu0 0.0
    %3926 = vmatpush1.msra.mxu0 0.0
    %3927 = vmatprep.subr.mxu0 0.0
    %3928 = vmatpush1.msra.mxu0 0.0
    %3929 = vmatprep.subr.mxu0 0.0
    %3930 = vmatpush1.msra.mxu0 0.0
    %3931 = vmatprep.subr.mxu0 0.0
    %3932 = vmatpush1.msra.mxu0 0.0
    %3933 = vmatprep.mubr.f32.mxu0 0.0
    %3934 = vmatmul.mubr.f32.gmra.mrb[0].mxu0 %v3867
    %v3935 = vpop.f32.mrb[0].mxu0
    %v3936 = vadd.f32 0.0, %v3935
    %v3937 = vpop.f32.mrb[0].mxu0
    %3938 = vdwg.mxu0
    %3939 = vrot.lane.b32.xlu0 %v3358, 64
    %v3940 = vpop.permute.xlu0 %3939
    %v3943 = vsel %vm361, %v3710, 0
    %3945 = vmatprep.subr.mxu0 0.0
    %3946 = vmatpush1.msra.mxu0 %v3940
    %3947 = vmatprep.subr.mxu0 0.0
    %3948 = vmatpush1.msra.mxu0 0.0
    %3949 = vmatprep.subr.mxu0 0.0
    %3950 = vmatpush1.msra.mxu0 0.0
    %3951 = vmatprep.subr.mxu0 0.0
    %3952 = vmatpush1.msra.mxu0 0.0
    %3953 = vmatprep.subr.mxu0 0.0
    %3954 = vmatpush1.msra.mxu0 0.0
    %3955 = vmatprep.subr.mxu0 0.0
    %3956 = vmatpush1.msra.mxu0 0.0
    %3957 = vmatprep.subr.mxu0 0.0
    %3958 = vmatpush1.msra.mxu0 0.0
    %3959 = vmatprep.subr.mxu0 0.0
    %3960 = vmatpush1.msra.mxu0 0.0
    %3961 = vmatprep.subr.mxu0 0.0
    %3962 = vmatpush1.msra.mxu0 0.0
    %3963 = vmatprep.subr.mxu0 0.0
    %3964 = vmatpush1.msra.mxu0 0.0
    %3965 = vmatprep.subr.mxu0 0.0
    %3966 = vmatpush1.msra.mxu0 0.0
    %3967 = vmatprep.subr.mxu0 0.0
    %3968 = vmatpush1.msra.mxu0 0.0
    %3969 = vmatprep.subr.mxu0 0.0
    %3970 = vmatpush1.msra.mxu0 0.0
    %3971 = vmatprep.subr.mxu0 0.0
    %3972 = vmatpush1.msra.mxu0 0.0
    %3973 = vmatprep.subr.mxu0 0.0
    %3974 = vmatpush1.msra.mxu0 0.0
    %3975 = vmatprep.subr.mxu0 0.0
    %3976 = vmatpush1.msra.mxu0 0.0
    %3977 = vmatprep.subr.mxu0 0.0
    %3978 = vmatpush1.msra.mxu0 0.0
    %3979 = vmatprep.subr.mxu0 0.0
    %3980 = vmatpush1.msra.mxu0 0.0
    %3981 = vmatprep.subr.mxu0 0.0
    %3982 = vmatpush1.msra.mxu0 0.0
    %3983 = vmatprep.subr.mxu0 0.0
    %3984 = vmatpush1.msra.mxu0 0.0
    %3985 = vmatprep.subr.mxu0 0.0
    %3986 = vmatpush1.msra.mxu0 0.0
    %3987 = vmatprep.subr.mxu0 0.0
    %3988 = vmatpush1.msra.mxu0 0.0
    %3989 = vmatprep.subr.mxu0 0.0
    %3990 = vmatpush1.msra.mxu0 0.0
    %3991 = vmatprep.subr.mxu0 0.0
    %3992 = vmatpush1.msra.mxu0 0.0
    %3993 = vmatprep.subr.mxu0 0.0
    %3994 = vmatpush1.msra.mxu0 0.0
    %3995 = vmatprep.subr.mxu0 0.0
    %3996 = vmatpush1.msra.mxu0 0.0
    %3997 = vmatprep.subr.mxu0 0.0
    %3998 = vmatpush1.msra.mxu0 0.0
    %3999 = vmatprep.subr.mxu0 0.0
    %4000 = vmatpush1.msra.mxu0 0.0
    %4001 = vmatprep.subr.mxu0 0.0
    %4002 = vmatpush1.msra.mxu0 0.0
    %4003 = vmatprep.subr.mxu0 0.0
    %4004 = vmatpush1.msra.mxu0 0.0
    %4005 = vmatprep.subr.mxu0 0.0
    %4006 = vmatpush1.msra.mxu0 0.0
    %4007 = vmatprep.subr.mxu0 0.0
    %4008 = vmatpush1.msra.mxu0 0.0
    %4009 = vmatprep.mubr.f32.mxu0 0.0
    %4010 = vmatmul.mubr.f32.gmra.mrb[0].mxu0 %v3943
    %v4011 = vpop.f32.mrb[0].mxu0
    %v4012 = vadd.f32 0.0, %v4011
    %v4013 = vpop.f32.mrb[0].mxu0
    %4014 = vdwg.mxu0
    %4016 = vrot.lane.b32.xlu0 %v3860, 8
    %v4017 = vpop.permute.xlu0 %4016
    %4020 = vrot.lane.b32.xlu0 %v3936, 16
    %v4021 = vpop.permute.xlu0 %4020
    %4024 = vrot.lane.b32.xlu0 %v4012, 24
    %v4025 = vpop.permute.xlu0 %4024
    %v4027 = vsel %vm361, %v3784, %v4017
    %v4028 = vsel %vm1029, %v4027, %v4021
    %v4029 = vsel %vm1031, %v4028, %v4025
    %s4030 = scalar_lea.vmem %s8, 96
    %v4031 = vld [vmem:[%s4030] sm:$0xff]
    %v4032 = vld [vmem:[%s4030 + $0x8] sm:$0xff]
    %v4033 = vld [vmem:[%s4030 + $0x10] sm:$0xff]
    %v4034 = vld [vmem:[%s4030 + $0x18] sm:$0xff]
    %s4035 = scalar_lea.vmem %s9, 3
    %v4036 = vld [vmem:[%s4035] sm:$0x1]
    %v4038 = vlaneseq
    %v4039 = vshrl.u32 %v4038, 7
    %v4040 = vsub.s32 0, %v4039
    %v4041 = vrot.slane %v4036, %v4040
    %v4044 = vsel %vm278, %v4029, 0
    %4046 = vmatprep.subr.mxu0 0.0
    %4047 = vmatpush1.msra.mxu0 %v4031
    %4048 = vmatprep.subr.mxu0 0.0
    %4049 = vmatpush1.msra.mxu0 %v4032
    %4050 = vmatprep.subr.mxu0 0.0
    %4051 = vmatpush1.msra.mxu0 %v4033
    %4052 = vmatprep.subr.mxu0 0.0
    %4053 = vmatpush1.msra.mxu0 %v4034
    %4054 = vmatprep.subr.mxu0 0.0
    %4055 = vmatpush1.msra.mxu0 0.0
    %4056 = vmatprep.subr.mxu0 0.0
    %4057 = vmatpush1.msra.mxu0 0.0
    %4058 = vmatprep.subr.mxu0 0.0
    %4059 = vmatpush1.msra.mxu0 0.0
    %4060 = vmatprep.subr.mxu0 0.0
    %4061 = vmatpush1.msra.mxu0 0.0
    %4062 = vmatprep.subr.mxu0 0.0
    %4063 = vmatpush1.msra.mxu0 0.0
    %4064 = vmatprep.subr.mxu0 0.0
    %4065 = vmatpush1.msra.mxu0 0.0
    %4066 = vmatprep.subr.mxu0 0.0
    %4067 = vmatpush1.msra.mxu0 0.0
    %4068 = vmatprep.subr.mxu0 0.0
    %4069 = vmatpush1.msra.mxu0 0.0
    %4070 = vmatprep.subr.mxu0 0.0
    %4071 = vmatpush1.msra.mxu0 0.0
    %4072 = vmatprep.subr.mxu0 0.0
    %4073 = vmatpush1.msra.mxu0 0.0
    %4074 = vmatprep.subr.mxu0 0.0
    %4075 = vmatpush1.msra.mxu0 0.0
    %4076 = vmatprep.subr.mxu0 0.0
    %4077 = vmatpush1.msra.mxu0 0.0
    %4078 = vmatprep.subr.mxu0 0.0
    %4079 = vmatpush1.msra.mxu0 0.0
    %4080 = vmatprep.subr.mxu0 0.0
    %4081 = vmatpush1.msra.mxu0 0.0
    %4082 = vmatprep.subr.mxu0 0.0
    %4083 = vmatpush1.msra.mxu0 0.0
    %4084 = vmatprep.subr.mxu0 0.0
    %4085 = vmatpush1.msra.mxu0 0.0
    %4086 = vmatprep.subr.mxu0 0.0
    %4087 = vmatpush1.msra.mxu0 0.0
    %4088 = vmatprep.subr.mxu0 0.0
    %4089 = vmatpush1.msra.mxu0 0.0
    %4090 = vmatprep.subr.mxu0 0.0
    %4091 = vmatpush1.msra.mxu0 0.0
    %4092 = vmatprep.subr.mxu0 0.0
    %4093 = vmatpush1.msra.mxu0 0.0
    %4094 = vmatprep.subr.mxu0 0.0
    %4095 = vmatpush1.msra.mxu0 0.0
    %4096 = vmatprep.subr.mxu0 0.0
    %4097 = vmatpush1.msra.mxu0 0.0
    %4098 = vmatprep.subr.mxu0 0.0
    %4099 = vmatpush1.msra.mxu0 0.0
    %4100 = vmatprep.subr.mxu0 0.0
    %4101 = vmatpush1.msra.mxu0 0.0
    %4102 = vmatprep.subr.mxu0 0.0
    %4103 = vmatpush1.msra.mxu0 0.0
    %4104 = vmatprep.subr.mxu0 0.0
    %4105 = vmatpush1.msra.mxu0 0.0
    %4106 = vmatprep.subr.mxu0 0.0
    %4107 = vmatpush1.msra.mxu0 0.0
    %4108 = vmatprep.subr.mxu0 0.0
    %4109 = vmatpush1.msra.mxu0 0.0
    %4110 = vmatprep.mubr.f32.mxu0 0.0
    %4111 = vmatmul.mubr.f32.gmra.mrb[0].mxu0 %v4044
    %v4112 = vpop.f32.mrb[0].mxu0
    %v4113 = vadd.f32 %v4041, %v4112
    %v4114 = vpop.f32.mrb[0].mxu0
    %4115 = vdwg.mxu0
    %v4116 = vadd.f32 %v2390, %v3254
    %v4117 = vadd.f32 %v2391, %v4113
    %s4118 = scalar_lea.vmem %s14, 32
    %v4119 = vld [vmem:[%s4118] sm:$0xff]
    %v4120 = vld [vmem:[%s4118 + $0x8] sm:$0xff]
    %s4121 = scalar_lea.vmem %s15, 32
    %v4122 = vld [vmem:[%s4121] sm:$0xff]
    %v4123 = vld [vmem:[%s4121 + $0x8] sm:$0xff]
    %v4124 = vsel %vm278, %v4116, 0.0
    %4125 = vadd.xlane.f32.xlu0 %v4124
    %v4126 = vpop.xlane.xlu0 %4125
    %v4127 = vsel %vm278, %v4117, 0.0
    %4128 = vadd.xlane.f32.xlu0 %v4127
    %v4129 = vpop.xlane.xlu0 %4128
    %v4130 = vmul.f32 %v4126, %v1979
    %v4131 = vmul.f32 %v4129, %v1979
    %v4132 = vsub.f32 %v4116, %v4130
    %v4133 = vsub.f32 %v4117, %v4131
    %v4134 = vmul.f32 %v4132, %v4132
    %v4135 = vmul.f32 %v4133, %v4133
    %v4136 = vsel %vm278, %v4134, 0.0
    %4137 = vadd.xlane.f32.xlu0 %v4136
    %v4138 = vpop.xlane.xlu0 %4137
    %v4139 = vsel %vm278, %v4135, 0.0
    %4140 = vadd.xlane.f32.xlu0 %v4139
    %v4141 = vpop.xlane.xlu0 %4140
    %v4142 = vmul.f32 %v4138, %v1979
    %v4143 = vmul.f32 %v4141, %v1979
    %v4144 = vadd.f32 %v4142, 1e-05
    %v4145 = vadd.f32 %v4143, 1e-05
    %v4146 = vrsqrt.pop %v4144
    %v4147 = vrsqrt.pop %v4145
    %v4148 = vmul.f32 %v4132, %v4146
    %v4149 = vmul.f32 %v4133, %v4147
    %v4150 = vmul.f32 %v4148, %v4119
    %v4151 = vmul.f32 %v4149, %v4120
    %v4152 = vadd.f32 %v4150, %v4122
    %v4153 = vadd.f32 %v4151, %v4123
    %s4154 = scalar_lea.vmem %s10, 64
    %v4155 = vld [vmem:[%s4154] sm:$0xff]
    %v4156 = vld [vmem:[%s4154 + $0x8] sm:$0xff]
    %v4157 = vld [vmem:[%s4154 + $0x10] sm:$0xff]
    %v4158 = vld [vmem:[%s4154 + $0x18] sm:$0xff]
    %s4159 = scalar_lea.vmem %s11, 2
    %v4160 = vld [vmem:[%s4159] sm:$0x1]
    %v4162 = vlaneseq
    %v4163 = vshrl.u32 %v4162, 7
    %v4164 = vsub.s32 0, %v4163
    %v4165 = vrot.slane %v4160, %v4164
    %v4168 = vsel %vm278, %v4152, 0
    %4170 = vmatprep.subr.mxu0 0.0
    %4171 = vmatpush1.msra.mxu0 %v4155
    %4172 = vmatprep.subr.mxu0 0.0
    %4173 = vmatpush1.msra.mxu0 %v4156
    %4174 = vmatprep.subr.mxu0 0.0
    %4175 = vmatpush1.msra.mxu0 %v4157
    %4176 = vmatprep.subr.mxu0 0.0
    %4177 = vmatpush1.msra.mxu0 %v4158
    %4178 = vmatprep.subr.mxu0 0.0
    %4179 = vmatpush1.msra.mxu0 0.0
    %4180 = vmatprep.subr.mxu0 0.0
    %4181 = vmatpush1.msra.mxu0 0.0
    %4182 = vmatprep.subr.mxu0 0.0
    %4183 = vmatpush1.msra.mxu0 0.0
    %4184 = vmatprep.subr.mxu0 0.0
    %4185 = vmatpush1.msra.mxu0 0.0
    %4186 = vmatprep.subr.mxu0 0.0
    %4187 = vmatpush1.msra.mxu0 0.0
    %4188 = vmatprep.subr.mxu0 0.0
    %4189 = vmatpush1.msra.mxu0 0.0
    %4190 = vmatprep.subr.mxu0 0.0
    %4191 = vmatpush1.msra.mxu0 0.0
    %4192 = vmatprep.subr.mxu0 0.0
    %4193 = vmatpush1.msra.mxu0 0.0
    %4194 = vmatprep.subr.mxu0 0.0
    %4195 = vmatpush1.msra.mxu0 0.0
    %4196 = vmatprep.subr.mxu0 0.0
    %4197 = vmatpush1.msra.mxu0 0.0
    %4198 = vmatprep.subr.mxu0 0.0
    %4199 = vmatpush1.msra.mxu0 0.0
    %4200 = vmatprep.subr.mxu0 0.0
    %4201 = vmatpush1.msra.mxu0 0.0
    %4202 = vmatprep.subr.mxu0 0.0
    %4203 = vmatpush1.msra.mxu0 0.0
    %4204 = vmatprep.subr.mxu0 0.0
    %4205 = vmatpush1.msra.mxu0 0.0
    %4206 = vmatprep.subr.mxu0 0.0
    %4207 = vmatpush1.msra.mxu0 0.0
    %4208 = vmatprep.subr.mxu0 0.0
    %4209 = vmatpush1.msra.mxu0 0.0
    %4210 = vmatprep.subr.mxu0 0.0
    %4211 = vmatpush1.msra.mxu0 0.0
    %4212 = vmatprep.subr.mxu0 0.0
    %4213 = vmatpush1.msra.mxu0 0.0
    %4214 = vmatprep.subr.mxu0 0.0
    %4215 = vmatpush1.msra.mxu0 0.0
    %4216 = vmatprep.subr.mxu0 0.0
    %4217 = vmatpush1.msra.mxu0 0.0
    %4218 = vmatprep.subr.mxu0 0.0
    %4219 = vmatpush1.msra.mxu0 0.0
    %4220 = vmatprep.subr.mxu0 0.0
    %4221 = vmatpush1.msra.mxu0 0.0
    %4222 = vmatprep.subr.mxu0 0.0
    %4223 = vmatpush1.msra.mxu0 0.0
    %4224 = vmatprep.subr.mxu0 0.0
    %4225 = vmatpush1.msra.mxu0 0.0
    %4226 = vmatprep.subr.mxu0 0.0
    %4227 = vmatpush1.msra.mxu0 0.0
    %4228 = vmatprep.subr.mxu0 0.0
    %4229 = vmatpush1.msra.mxu0 0.0
    %4230 = vmatprep.subr.mxu0 0.0
    %4231 = vmatpush1.msra.mxu0 0.0
    %4232 = vmatprep.subr.mxu0 0.0
    %4233 = vmatpush1.msra.mxu0 0.0
    %4234 = vmatprep.mubr.f32.mxu0 0.0
    %4235 = vmatmul.mubr.f32.gmra.mrb[0].mxu0 %v4168
    %v4236 = vpop.f32.mrb[0].mxu0
    %v4237 = vadd.f32 %v4165, %v4236
    %v4238 = vpop.f32.mrb[0].mxu0
    %4239 = vdwg.mxu0
    %v4240 = vmax.f32 %v4237, 0.0
    %s4241 = scalar_lea.vmem %s12, 128
    %v4242 = vld [vmem:[%s4241] sm:$0xff]
    %v4243 = vld [vmem:[%s4241 + $0x8] sm:$0xff]
    %v4244 = vld [vmem:[%s4241 + $0x10] sm:$0xff]
    %v4245 = vld [vmem:[%s4241 + $0x18] sm:$0xff]
    %v4246 = vld [vmem:[%s4241 + $0x20] sm:$0xff]
    %v4247 = vld [vmem:[%s4241 + $0x28] sm:$0xff]
    %v4248 = vld [vmem:[%s4241 + $0x30] sm:$0xff]
    %v4249 = vld [vmem:[%s4241 + $0x38] sm:$0xff]
    %s4250 = scalar_lea.vmem %s13, 2
    %v4251 = vld [vmem:[%s4250] sm:$0x1]
    %v4253 = vlaneseq
    %v4254 = vshrl.u32 %v4253, 7
    %v4255 = vsub.s32 0, %v4254
    %v4256 = vrot.slane %v4251, %v4255
    %v4259 = vsel %vm82, %v4240, 0
    %4261 = vmatprep.subr.mxu0 0.0
    %4262 = vmatpush1.msra.mxu0 %v4242
    %4263 = vmatprep.subr.mxu0 0.0
    %4264 = vmatpush1.msra.mxu0 %v4243
    %4265 = vmatprep.subr.mxu0 0.0
    %4266 = vmatpush1.msra.mxu0 %v4244
    %4267 = vmatprep.subr.mxu0 0.0
    %4268 = vmatpush1.msra.mxu0 %v4245
    %4269 = vmatprep.subr.mxu0 0.0
    %4270 = vmatpush1.msra.mxu0 %v4246
    %4271 = vmatprep.subr.mxu0 0.0
    %4272 = vmatpush1.msra.mxu0 %v4247
    %4273 = vmatprep.subr.mxu0 0.0
    %4274 = vmatpush1.msra.mxu0 %v4248
    %4275 = vmatprep.subr.mxu0 0.0
    %4276 = vmatpush1.msra.mxu0 %v4249
    %4277 = vmatprep.subr.mxu0 0.0
    %4278 = vmatpush1.msra.mxu0 0.0
    %4279 = vmatprep.subr.mxu0 0.0
    %4280 = vmatpush1.msra.mxu0 0.0
    %4281 = vmatprep.subr.mxu0 0.0
    %4282 = vmatpush1.msra.mxu0 0.0
    %4283 = vmatprep.subr.mxu0 0.0
    %4284 = vmatpush1.msra.mxu0 0.0
    %4285 = vmatprep.subr.mxu0 0.0
    %4286 = vmatpush1.msra.mxu0 0.0
    %4287 = vmatprep.subr.mxu0 0.0
    %4288 = vmatpush1.msra.mxu0 0.0
    %4289 = vmatprep.subr.mxu0 0.0
    %4290 = vmatpush1.msra.mxu0 0.0
    %4291 = vmatprep.subr.mxu0 0.0
    %4292 = vmatpush1.msra.mxu0 0.0
    %4293 = vmatprep.subr.mxu0 0.0
    %4294 = vmatpush1.msra.mxu0 0.0
    %4295 = vmatprep.subr.mxu0 0.0
    %4296 = vmatpush1.msra.mxu0 0.0
    %4297 = vmatprep.subr.mxu0 0.0
    %4298 = vmatpush1.msra.mxu0 0.0
    %4299 = vmatprep.subr.mxu0 0.0
    %4300 = vmatpush1.msra.mxu0 0.0
    %4301 = vmatprep.subr.mxu0 0.0
    %4302 = vmatpush1.msra.mxu0 0.0
    %4303 = vmatprep.subr.mxu0 0.0
    %4304 = vmatpush1.msra.mxu0 0.0
    %4305 = vmatprep.subr.mxu0 0.0
    %4306 = vmatpush1.msra.mxu0 0.0
    %4307 = vmatprep.subr.mxu0 0.0
    %4308 = vmatpush1.msra.mxu0 0.0
    %4309 = vmatprep.subr.mxu0 0.0
    %4310 = vmatpush1.msra.mxu0 0.0
    %4311 = vmatprep.subr.mxu0 0.0
    %4312 = vmatpush1.msra.mxu0 0.0
    %4313 = vmatprep.subr.mxu0 0.0
    %4314 = vmatpush1.msra.mxu0 0.0
    %4315 = vmatprep.subr.mxu0 0.0
    %4316 = vmatpush1.msra.mxu0 0.0
    %4317 = vmatprep.subr.mxu0 0.0
    %4318 = vmatpush1.msra.mxu0 0.0
    %4319 = vmatprep.subr.mxu0 0.0
    %4320 = vmatpush1.msra.mxu0 0.0
    %4321 = vmatprep.subr.mxu0 0.0
    %4322 = vmatpush1.msra.mxu0 0.0
    %4323 = vmatprep.subr.mxu0 0.0
    %4324 = vmatpush1.msra.mxu0 0.0
    %4325 = vmatprep.mubr.f32.mxu0 0.0
    %4326 = vmatmul.mubr.f32.gmra.mrb[0].mxu0 %v4259
    %v4327 = vpop.f32.mrb[0].mxu0
    %v4328 = vadd.f32 %v4256, %v4327
    %v4329 = vpop.f32.mrb[0].mxu0
    %4330 = vdwg.mxu0
    %s4331 = scalar_lea.vmem %s10, 96
    %v4332 = vld [vmem:[%s4331] sm:$0xff]
    %v4333 = vld [vmem:[%s4331 + $0x8] sm:$0xff]
    %v4334 = vld [vmem:[%s4331 + $0x10] sm:$0xff]
    %v4335 = vld [vmem:[%s4331 + $0x18] sm:$0xff]
    %s4336 = scalar_lea.vmem %s11, 3
    %v4337 = vld [vmem:[%s4336] sm:$0x1]
    %v4339 = vlaneseq
    %v4340 = vshrl.u32 %v4339, 7
    %v4341 = vsub.s32 0, %v4340
    %v4342 = vrot.slane %v4337, %v4341
    %v4345 = vsel %vm278, %v4153, 0
    %4347 = vmatprep.subr.mxu0 0.0
    %4348 = vmatpush1.msra.mxu0 %v4332
    %4349 = vmatprep.subr.mxu0 0.0
    %4350 = vmatpush1.msra.mxu0 %v4333
    %4351 = vmatprep.subr.mxu0 0.0
    %4352 = vmatpush1.msra.mxu0 %v4334
    %4353 = vmatprep.subr.mxu0 0.0
    %4354 = vmatpush1.msra.mxu0 %v4335
    %4355 = vmatprep.subr.mxu0 0.0
    %4356 = vmatpush1.msra.mxu0 0.0
    %4357 = vmatprep.subr.mxu0 0.0
    %4358 = vmatpush1.msra.mxu0 0.0
    %4359 = vmatprep.subr.mxu0 0.0
    %4360 = vmatpush1.msra.mxu0 0.0
    %4361 = vmatprep.subr.mxu0 0.0
    %4362 = vmatpush1.msra.mxu0 0.0
    %4363 = vmatprep.subr.mxu0 0.0
    %4364 = vmatpush1.msra.mxu0 0.0
    %4365 = vmatprep.subr.mxu0 0.0
    %4366 = vmatpush1.msra.mxu0 0.0
    %4367 = vmatprep.subr.mxu0 0.0
    %4368 = vmatpush1.msra.mxu0 0.0
    %4369 = vmatprep.subr.mxu0 0.0
    %4370 = vmatpush1.msra.mxu0 0.0
    %4371 = vmatprep.subr.mxu0 0.0
    %4372 = vmatpush1.msra.mxu0 0.0
    %4373 = vmatprep.subr.mxu0 0.0
    %4374 = vmatpush1.msra.mxu0 0.0
    %4375 = vmatprep.subr.mxu0 0.0
    %4376 = vmatpush1.msra.mxu0 0.0
    %4377 = vmatprep.subr.mxu0 0.0
    %4378 = vmatpush1.msra.mxu0 0.0
    %4379 = vmatprep.subr.mxu0 0.0
    %4380 = vmatpush1.msra.mxu0 0.0
    %4381 = vmatprep.subr.mxu0 0.0
    %4382 = vmatpush1.msra.mxu0 0.0
    %4383 = vmatprep.subr.mxu0 0.0
    %4384 = vmatpush1.msra.mxu0 0.0
    %4385 = vmatprep.subr.mxu0 0.0
    %4386 = vmatpush1.msra.mxu0 0.0
    %4387 = vmatprep.subr.mxu0 0.0
    %4388 = vmatpush1.msra.mxu0 0.0
    %4389 = vmatprep.subr.mxu0 0.0
    %4390 = vmatpush1.msra.mxu0 0.0
    %4391 = vmatprep.subr.mxu0 0.0
    %4392 = vmatpush1.msra.mxu0 0.0
    %4393 = vmatprep.subr.mxu0 0.0
    %4394 = vmatpush1.msra.mxu0 0.0
    %4395 = vmatprep.subr.mxu0 0.0
    %4396 = vmatpush1.msra.mxu0 0.0
    %4397 = vmatprep.subr.mxu0 0.0
    %4398 = vmatpush1.msra.mxu0 0.0
    %4399 = vmatprep.subr.mxu0 0.0
    %4400 = vmatpush1.msra.mxu0 0.0
    %4401 = vmatprep.subr.mxu0 0.0
    %4402 = vmatpush1.msra.mxu0 0.0
    %4403 = vmatprep.subr.mxu0 0.0
    %4404 = vmatpush1.msra.mxu0 0.0
    %4405 = vmatprep.subr.mxu0 0.0
    %4406 = vmatpush1.msra.mxu0 0.0
    %4407 = vmatprep.subr.mxu0 0.0
    %4408 = vmatpush1.msra.mxu0 0.0
    %4409 = vmatprep.subr.mxu0 0.0
    %4410 = vmatpush1.msra.mxu0 0.0
    %4411 = vmatprep.mubr.f32.mxu0 0.0
    %4412 = vmatmul.mubr.f32.gmra.mrb[0].mxu0 %v4345
    %v4413 = vpop.f32.mrb[0].mxu0
    %v4414 = vadd.f32 %v4342, %v4413
    %v4415 = vpop.f32.mrb[0].mxu0
    %4416 = vdwg.mxu0
    %v4417 = vmax.f32 %v4414, 0.0
    %s4418 = scalar_lea.vmem %s12, 192
    %v4419 = vld [vmem:[%s4418] sm:$0xff]
    %v4420 = vld [vmem:[%s4418 + $0x8] sm:$0xff]
    %v4421 = vld [vmem:[%s4418 + $0x10] sm:$0xff]
    %v4422 = vld [vmem:[%s4418 + $0x18] sm:$0xff]
    %v4423 = vld [vmem:[%s4418 + $0x20] sm:$0xff]
    %v4424 = vld [vmem:[%s4418 + $0x28] sm:$0xff]
    %v4425 = vld [vmem:[%s4418 + $0x30] sm:$0xff]
    %v4426 = vld [vmem:[%s4418 + $0x38] sm:$0xff]
    %s4427 = scalar_lea.vmem %s13, 3
    %v4428 = vld [vmem:[%s4427] sm:$0x1]
    %v4430 = vlaneseq
    %v4431 = vshrl.u32 %v4430, 7
    %v4432 = vsub.s32 0, %v4431
    %v4433 = vrot.slane %v4428, %v4432
    %v4436 = vsel %vm82, %v4417, 0
    %4438 = vmatprep.subr.mxu0 0.0
    %4439 = vmatpush1.msra.mxu0 %v4419
    %4440 = vmatprep.subr.mxu0 0.0
    %4441 = vmatpush1.msra.mxu0 %v4420
    %4442 = vmatprep.subr.mxu0 0.0
    %4443 = vmatpush1.msra.mxu0 %v4421
    %4444 = vmatprep.subr.mxu0 0.0
    %4445 = vmatpush1.msra.mxu0 %v4422
    %4446 = vmatprep.subr.mxu0 0.0
    %4447 = vmatpush1.msra.mxu0 %v4423
    %4448 = vmatprep.subr.mxu0 0.0
    %4449 = vmatpush1.msra.mxu0 %v4424
    %4450 = vmatprep.subr.mxu0 0.0
    %4451 = vmatpush1.msra.mxu0 %v4425
    %4452 = vmatprep.subr.mxu0 0.0
    %4453 = vmatpush1.msra.mxu0 %v4426
    %4454 = vmatprep.subr.mxu0 0.0
    %4455 = vmatpush1.msra.mxu0 0.0
    %4456 = vmatprep.subr.mxu0 0.0
    %4457 = vmatpush1.msra.mxu0 0.0
    %4458 = vmatprep.subr.mxu0 0.0
    %4459 = vmatpush1.msra.mxu0 0.0
    %4460 = vmatprep.subr.mxu0 0.0
    %4461 = vmatpush1.msra.mxu0 0.0
    %4462 = vmatprep.subr.mxu0 0.0
    %4463 = vmatpush1.msra.mxu0 0.0
    %4464 = vmatprep.subr.mxu0 0.0
    %4465 = vmatpush1.msra.mxu0 0.0
    %4466 = vmatprep.subr.mxu0 0.0
    %4467 = vmatpush1.msra.mxu0 0.0
    %4468 = vmatprep.subr.mxu0 0.0
    %4469 = vmatpush1.msra.mxu0 0.0
    %4470 = vmatprep.subr.mxu0 0.0
    %4471 = vmatpush1.msra.mxu0 0.0
    %4472 = vmatprep.subr.mxu0 0.0
    %4473 = vmatpush1.msra.mxu0 0.0
    %4474 = vmatprep.subr.mxu0 0.0
    %4475 = vmatpush1.msra.mxu0 0.0
    %4476 = vmatprep.subr.mxu0 0.0
    %4477 = vmatpush1.msra.mxu0 0.0
    %4478 = vmatprep.subr.mxu0 0.0
    %4479 = vmatpush1.msra.mxu0 0.0
    %4480 = vmatprep.subr.mxu0 0.0
    %4481 = vmatpush1.msra.mxu0 0.0
    %4482 = vmatprep.subr.mxu0 0.0
    %4483 = vmatpush1.msra.mxu0 0.0
    %4484 = vmatprep.subr.mxu0 0.0
    %4485 = vmatpush1.msra.mxu0 0.0
    %4486 = vmatprep.subr.mxu0 0.0
    %4487 = vmatpush1.msra.mxu0 0.0
    %4488 = vmatprep.subr.mxu0 0.0
    %4489 = vmatpush1.msra.mxu0 0.0
    %4490 = vmatprep.subr.mxu0 0.0
    %4491 = vmatpush1.msra.mxu0 0.0
    %4492 = vmatprep.subr.mxu0 0.0
    %4493 = vmatpush1.msra.mxu0 0.0
    %4494 = vmatprep.subr.mxu0 0.0
    %4495 = vmatpush1.msra.mxu0 0.0
    %4496 = vmatprep.subr.mxu0 0.0
    %4497 = vmatpush1.msra.mxu0 0.0
    %4498 = vmatprep.subr.mxu0 0.0
    %4499 = vmatpush1.msra.mxu0 0.0
    %4500 = vmatprep.subr.mxu0 0.0
    %4501 = vmatpush1.msra.mxu0 0.0
    %4502 = vmatprep.mubr.f32.mxu0 0.0
    %4503 = vmatmul.mubr.f32.gmra.mrb[0].mxu0 %v4436
    %v4504 = vpop.f32.mrb[0].mxu0
    %v4505 = vadd.f32 %v4433, %v4504
    %v4506 = vpop.f32.mrb[0].mxu0
    %4507 = vdwg.mxu0
    %v4508 = vadd.f32 %v4152, %v4328
    %v4509 = vadd.f32 %v4153, %v4505
    %s4510 = scalar_lea.vmem %s14, 48
    %v4511 = vld [vmem:[%s4510] sm:$0xff]
    %v4512 = vld [vmem:[%s4510 + $0x8] sm:$0xff]
    %s4513 = scalar_lea.vmem %s15, 48
    %v4514 = vld [vmem:[%s4513] sm:$0xff]
    %v4515 = vld [vmem:[%s4513 + $0x8] sm:$0xff]
    %v4516 = vsel %vm278, %v4508, 0.0
    %4517 = vadd.xlane.f32.xlu0 %v4516
    %v4518 = vpop.xlane.xlu0 %4517
    %v4519 = vsel %vm278, %v4509, 0.0
    %4520 = vadd.xlane.f32.xlu0 %v4519
    %v4521 = vpop.xlane.xlu0 %4520
    %v4522 = vmul.f32 %v4518, %v1979
    %v4523 = vmul.f32 %v4521, %v1979
    %v4524 = vsub.f32 %v4508, %v4522
    %v4525 = vsub.f32 %v4509, %v4523
    %v4526 = vmul.f32 %v4524, %v4524
    %v4527 = vmul.f32 %v4525, %v4525
    %v4528 = vsel %vm278, %v4526, 0.0
    %4529 = vadd.xlane.f32.xlu0 %v4528
    %v4530 = vpop.xlane.xlu0 %4529
    %v4531 = vsel %vm278, %v4527, 0.0
    %4532 = vadd.xlane.f32.xlu0 %v4531
    %v4533 = vpop.xlane.xlu0 %4532
    %v4534 = vmul.f32 %v4530, %v1979
    %v4535 = vmul.f32 %v4533, %v1979
    %v4536 = vadd.f32 %v4534, 1e-05
    %v4537 = vadd.f32 %v4535, 1e-05
    %v4538 = vrsqrt.pop %v4536
    %v4539 = vrsqrt.pop %v4537
    %v4540 = vmul.f32 %v4524, %v4538
    %v4541 = vmul.f32 %v4525, %v4539
    %v4542 = vmul.f32 %v4540, %v4511
    %v4543 = vmul.f32 %v4541, %v4512
    %v4544 = vadd.f32 %v4542, %v4514
    %v4545 = vadd.f32 %v4543, %v4515
    %s4546 = scalar_lea.vmem %s6, 128
    %v4547 = vld [vmem:[%s4546] sm:$0xff]
    %v4548 = vld [vmem:[%s4546 + $0x8] sm:$0xff]
    %v4549 = vld [vmem:[%s4546 + $0x10] sm:$0xff]
    %v4550 = vld [vmem:[%s4546 + $0x18] sm:$0xff]
    %s4551 = scalar_lea.vmem %s7, 4
    %v4552 = vld [vmem:[%s4551] sm:$0x1]
    %v4554 = vlaneseq
    %v4555 = vshrl.u32 %v4554, 7
    %v4556 = vsub.s32 0, %v4555
    %v4557 = vrot.slane %v4552, %v4556
    %v4560 = vsel %vm278, %v4544, 0
    %v4563 = vsel %vm278, %v4545, 0
    %4565 = vmatprep.subr.mxu0 0.0
    %4566 = vmatpush1.msra.mxu0 %v4547
    %4567 = vmatprep.subr.mxu0 0.0
    %4568 = vmatpush1.msra.mxu0 %v4548
    %4569 = vmatprep.subr.mxu0 0.0
    %4570 = vmatpush1.msra.mxu0 %v4549
    %4571 = vmatprep.subr.mxu0 0.0
    %4572 = vmatpush1.msra.mxu0 %v4550
    %4573 = vmatprep.subr.mxu0 0.0
    %4574 = vmatpush1.msra.mxu0 0.0
    %4575 = vmatprep.subr.mxu0 0.0
    %4576 = vmatpush1.msra.mxu0 0.0
    %4577 = vmatprep.subr.mxu0 0.0
    %4578 = vmatpush1.msra.mxu0 0.0
    %4579 = vmatprep.subr.mxu0 0.0
    %4580 = vmatpush1.msra.mxu0 0.0
    %4581 = vmatprep.subr.mxu0 0.0
    %4582 = vmatpush1.msra.mxu0 0.0
    %4583 = vmatprep.subr.mxu0 0.0
    %4584 = vmatpush1.msra.mxu0 0.0
    %4585 = vmatprep.subr.mxu0 0.0
    %4586 = vmatpush1.msra.mxu0 0.0
    %4587 = vmatprep.subr.mxu0 0.0
    %4588 = vmatpush1.msra.mxu0 0.0
    %4589 = vmatprep.subr.mxu0 0.0
    %4590 = vmatpush1.msra.mxu0 0.0
    %4591 = vmatprep.subr.mxu0 0.0
    %4592 = vmatpush1.msra.mxu0 0.0
    %4593 = vmatprep.subr.mxu0 0.0
    %4594 = vmatpush1.msra.mxu0 0.0
    %4595 = vmatprep.subr.mxu0 0.0
    %4596 = vmatpush1.msra.mxu0 0.0
    %4597 = vmatprep.subr.mxu0 0.0
    %4598 = vmatpush1.msra.mxu0 0.0
    %4599 = vmatprep.subr.mxu0 0.0
    %4600 = vmatpush1.msra.mxu0 0.0
    %4601 = vmatprep.subr.mxu0 0.0
    %4602 = vmatpush1.msra.mxu0 0.0
    %4603 = vmatprep.subr.mxu0 0.0
    %4604 = vmatpush1.msra.mxu0 0.0
    %4605 = vmatprep.subr.mxu0 0.0
    %4606 = vmatpush1.msra.mxu0 0.0
    %4607 = vmatprep.subr.mxu0 0.0
    %4608 = vmatpush1.msra.mxu0 0.0
    %4609 = vmatprep.subr.mxu0 0.0
    %4610 = vmatpush1.msra.mxu0 0.0
    %4611 = vmatprep.subr.mxu0 0.0
    %4612 = vmatpush1.msra.mxu0 0.0
    %4613 = vmatprep.subr.mxu0 0.0
    %4614 = vmatpush1.msra.mxu0 0.0
    %4615 = vmatprep.subr.mxu0 0.0
    %4616 = vmatpush1.msra.mxu0 0.0
    %4617 = vmatprep.subr.mxu0 0.0
    %4618 = vmatpush1.msra.mxu0 0.0
    %4619 = vmatprep.subr.mxu0 0.0
    %4620 = vmatpush1.msra.mxu0 0.0
    %4621 = vmatprep.subr.mxu0 0.0
    %4622 = vmatpush1.msra.mxu0 0.0
    %4623 = vmatprep.subr.mxu0 0.0
    %4624 = vmatpush1.msra.mxu0 0.0
    %4625 = vmatprep.subr.mxu0 0.0
    %4626 = vmatpush1.msra.mxu0 0.0
    %4627 = vmatprep.subr.mxu0 0.0
    %4628 = vmatpush1.msra.mxu0 0.0
    %4629 = vmatprep.mubr.f32.mxu0 0.0
    %4630 = vmatmul.mubr.f32.gmra.mrb[0].mxu0 %v4560
    %v4631 = vpop.f32.mrb[0].mxu0
    %v4632 = vadd.f32 %v4557, %v4631
    %v4633 = vpop.f32.mrb[0].mxu0
    %4634 = vmatprep.mubr.f32.mxu0 0.0
    %4635 = vmatmul.mubr.f32.gmra.mrb[0].mxu0 %v4563
    %v4636 = vpop.f32.mrb[0].mxu0
    %v4637 = vadd.f32 %v4557, %v4636
    %v4638 = vpop.f32.mrb[0].mxu0
    %4639 = vdwg.mxu0
    %4641 = vrot.lane.b32.xlu0 %v4632, 120
    %v4642 = vpop.permute.xlu0 %4641
    %4643 = vrot.lane.b32.xlu0 %v4632, 112
    %v4644 = vpop.permute.xlu0 %4643
    %4645 = vrot.lane.b32.xlu0 %v4632, 104
    %v4646 = vpop.permute.xlu0 %4645
    %4648 = vrot.lane.b32.xlu0 %v4637, 120
    %v4649 = vpop.permute.xlu0 %4648
    %4650 = vrot.lane.b32.xlu0 %v4637, 112
    %v4651 = vpop.permute.xlu0 %4650
    %4652 = vrot.lane.b32.xlu0 %v4637, 104
    %v4653 = vpop.permute.xlu0 %4652
    %4654 = vrot.lane.b32.xlu0 %v4637, 96
    %v4655 = vpop.permute.xlu0 %4654
    %v4656 = vsel %vm361, %v4632, 0
    %v4658 = vsel %vm361, %v4655, 0
    %4660 = vmatprep.subr.mxu0 0.0
    %4661 = vmatpush1.xpose.msra.mxu0 %v4658
    %4662 = vmatprep.subr.mxu0 0.0
    %4663 = vmatpush1.xpose.msra.mxu0 0.0
    %4664 = vmatprep.subr.mxu0 0.0
    %4665 = vmatpush1.xpose.msra.mxu0 0.0
    %4666 = vmatprep.subr.mxu0 0.0
    %4667 = vmatpush1.xpose.msra.mxu0 0.0
    %4668 = vmatprep.subr.mxu0 0.0
    %4669 = vmatpush1.xpose.msra.mxu0 0.0
    %4670 = vmatprep.subr.mxu0 0.0
    %4671 = vmatpush1.xpose.msra.mxu0 0.0
    %4672 = vmatprep.subr.mxu0 0.0
    %4673 = vmatpush1.xpose.msra.mxu0 0.0
    %4674 = vmatprep.subr.mxu0 0.0
    %4675 = vmatpush1.xpose.msra.mxu0 0.0
    %4676 = vmatprep.subr.mxu0 0.0
    %4677 = vmatpush1.xpose.msra.mxu0 0.0
    %4678 = vmatprep.subr.mxu0 0.0
    %4679 = vmatpush1.xpose.msra.mxu0 0.0
    %4680 = vmatprep.subr.mxu0 0.0
    %4681 = vmatpush1.xpose.msra.mxu0 0.0
    %4682 = vmatprep.subr.mxu0 0.0
    %4683 = vmatpush1.xpose.msra.mxu0 0.0
    %4684 = vmatprep.subr.mxu0 0.0
    %4685 = vmatpush1.xpose.msra.mxu0 0.0
    %4686 = vmatprep.subr.mxu0 0.0
    %4687 = vmatpush1.xpose.msra.mxu0 0.0
    %4688 = vmatprep.subr.mxu0 0.0
    %4689 = vmatpush1.xpose.msra.mxu0 0.0
    %4690 = vmatprep.subr.mxu0 0.0
    %4691 = vmatpush1.xpose.msra.mxu0 0.0
    %4692 = vmatprep.subr.mxu0 0.0
    %4693 = vmatpush1.xpose.msra.mxu0 0.0
    %4694 = vmatprep.subr.mxu0 0.0
    %4695 = vmatpush1.xpose.msra.mxu0 0.0
    %4696 = vmatprep.subr.mxu0 0.0
    %4697 = vmatpush1.xpose.msra.mxu0 0.0
    %4698 = vmatprep.subr.mxu0 0.0
    %4699 = vmatpush1.xpose.msra.mxu0 0.0
    %4700 = vmatprep.subr.mxu0 0.0
    %4701 = vmatpush1.xpose.msra.mxu0 0.0
    %4702 = vmatprep.subr.mxu0 0.0
    %4703 = vmatpush1.xpose.msra.mxu0 0.0
    %4704 = vmatprep.subr.mxu0 0.0
    %4705 = vmatpush1.xpose.msra.mxu0 0.0
    %4706 = vmatprep.subr.mxu0 0.0
    %4707 = vmatpush1.xpose.msra.mxu0 0.0
    %4708 = vmatprep.subr.mxu0 0.0
    %4709 = vmatpush1.xpose.msra.mxu0 0.0
    %4710 = vmatprep.subr.mxu0 0.0
    %4711 = vmatpush1.xpose.msra.mxu0 0.0
    %4712 = vmatprep.subr.mxu0 0.0
    %4713 = vmatpush1.xpose.msra.mxu0 0.0
    %4714 = vmatprep.subr.mxu0 0.0
    %4715 = vmatpush1.xpose.msra.mxu0 0.0
    %4716 = vmatprep.subr.mxu0 0.0
    %4717 = vmatpush1.xpose.msra.mxu0 0.0
    %4718 = vmatprep.subr.mxu0 0.0
    %4719 = vmatpush1.xpose.msra.mxu0 0.0
    %4720 = vmatprep.subr.mxu0 0.0
    %4721 = vmatpush1.xpose.msra.mxu0 0.0
    %4722 = vmatprep.subr.mxu0 0.0
    %4723 = vmatpush1.xpose.msra.mxu0 0.0
    %4724 = vmatprep.mubr.f32.mxu0 0.0
    %4725 = vmatmul.mubr.f32.gmra.mrb[0].mxu0 %v4656
    %v4726 = vpop.f32.mrb[0].mxu0
    %v4727 = vadd.f32 0.0, %v4726
    %v4728 = vpop.f32.mrb[0].mxu0
    %4729 = vdwg.mxu0
    %4730 = vrot.lane.b32.xlu0 %v4649, 96
    %v4731 = vpop.permute.xlu0 %4730
    %v4732 = vsel %vm361, %v4642, 0
    %v4734 = vsel %vm361, %v4731, 0
    %4736 = vmatprep.subr.mxu0 0.0
    %4737 = vmatpush1.xpose.msra.mxu0 %v4734
    %4738 = vmatprep.subr.mxu0 0.0
    %4739 = vmatpush1.xpose.msra.mxu0 0.0
    %4740 = vmatprep.subr.mxu0 0.0
    %4741 = vmatpush1.xpose.msra.mxu0 0.0
    %4742 = vmatprep.subr.mxu0 0.0
    %4743 = vmatpush1.xpose.msra.mxu0 0.0
    %4744 = vmatprep.subr.mxu0 0.0
    %4745 = vmatpush1.xpose.msra.mxu0 0.0
    %4746 = vmatprep.subr.mxu0 0.0
    %4747 = vmatpush1.xpose.msra.mxu0 0.0
    %4748 = vmatprep.subr.mxu0 0.0
    %4749 = vmatpush1.xpose.msra.mxu0 0.0
    %4750 = vmatprep.subr.mxu0 0.0
    %4751 = vmatpush1.xpose.msra.mxu0 0.0
    %4752 = vmatprep.subr.mxu0 0.0
    %4753 = vmatpush1.xpose.msra.mxu0 0.0
    %4754 = vmatprep.subr.mxu0 0.0
    %4755 = vmatpush1.xpose.msra.mxu0 0.0
    %4756 = vmatprep.subr.mxu0 0.0
    %4757 = vmatpush1.xpose.msra.mxu0 0.0
    %4758 = vmatprep.subr.mxu0 0.0
    %4759 = vmatpush1.xpose.msra.mxu0 0.0
    %4760 = vmatprep.subr.mxu0 0.0
    %4761 = vmatpush1.xpose.msra.mxu0 0.0
    %4762 = vmatprep.subr.mxu0 0.0
    %4763 = vmatpush1.xpose.msra.mxu0 0.0
    %4764 = vmatprep.subr.mxu0 0.0
    %4765 = vmatpush1.xpose.msra.mxu0 0.0
    %4766 = vmatprep.subr.mxu0 0.0
    %4767 = vmatpush1.xpose.msra.mxu0 0.0
    %4768 = vmatprep.subr.mxu0 0.0
    %4769 = vmatpush1.xpose.msra.mxu0 0.0
    %4770 = vmatprep.subr.mxu0 0.0
    %4771 = vmatpush1.xpose.msra.mxu0 0.0
    %4772 = vmatprep.subr.mxu0 0.0
    %4773 = vmatpush1.xpose.msra.mxu0 0.0
    %4774 = vmatprep.subr.mxu0 0.0
    %4775 = vmatpush1.xpose.msra.mxu0 0.0
    %4776 = vmatprep.subr.mxu0 0.0
    %4777 = vmatpush1.xpose.msra.mxu0 0.0
    %4778 = vmatprep.subr.mxu0 0.0
    %4779 = vmatpush1.xpose.msra.mxu0 0.0
    %4780 = vmatprep.subr.mxu0 0.0
    %4781 = vmatpush1.xpose.msra.mxu0 0.0
    %4782 = vmatprep.subr.mxu0 0.0
    %4783 = vmatpush1.xpose.msra.mxu0 0.0
    %4784 = vmatprep.subr.mxu0 0.0
    %4785 = vmatpush1.xpose.msra.mxu0 0.0
    %4786 = vmatprep.subr.mxu0 0.0
    %4787 = vmatpush1.xpose.msra.mxu0 0.0
    %4788 = vmatprep.subr.mxu0 0.0
    %4789 = vmatpush1.xpose.msra.mxu0 0.0
    %4790 = vmatprep.subr.mxu0 0.0
    %4791 = vmatpush1.xpose.msra.mxu0 0.0
    %4792 = vmatprep.subr.mxu0 0.0
    %4793 = vmatpush1.xpose.msra.mxu0 0.0
    %4794 = vmatprep.subr.mxu0 0.0
    %4795 = vmatpush1.xpose.msra.mxu0 0.0
    %4796 = vmatprep.subr.mxu0 0.0
    %4797 = vmatpush1.xpose.msra.mxu0 0.0
    %4798 = vmatprep.subr.mxu0 0.0
    %4799 = vmatpush1.xpose.msra.mxu0 0.0
    %4800 = vmatprep.mubr.f32.mxu0 0.0
    %4801 = vmatmul.mubr.f32.gmra.mrb[0].mxu0 %v4732
    %v4802 = vpop.f32.mrb[0].mxu0
    %v4803 = vadd.f32 0.0, %v4802
    %v4804 = vpop.f32.mrb[0].mxu0
    %4805 = vdwg.mxu0
    %4806 = vrot.lane.b32.xlu0 %v4651, 96
    %v4807 = vpop.permute.xlu0 %4806
    %v4808 = vsel %vm361, %v4644, 0
    %v4810 = vsel %vm361, %v4807, 0
    %4812 = vmatprep.subr.mxu0 0.0
    %4813 = vmatpush1.xpose.msra.mxu0 %v4810
    %4814 = vmatprep.subr.mxu0 0.0
    %4815 = vmatpush1.xpose.msra.mxu0 0.0
    %4816 = vmatprep.subr.mxu0 0.0
    %4817 = vmatpush1.xpose.msra.mxu0 0.0
    %4818 = vmatprep.subr.mxu0 0.0
    %4819 = vmatpush1.xpose.msra.mxu0 0.0
    %4820 = vmatprep.subr.mxu0 0.0
    %4821 = vmatpush1.xpose.msra.mxu0 0.0
    %4822 = vmatprep.subr.mxu0 0.0
    %4823 = vmatpush1.xpose.msra.mxu0 0.0
    %4824 = vmatprep.subr.mxu0 0.0
    %4825 = vmatpush1.xpose.msra.mxu0 0.0
    %4826 = vmatprep.subr.mxu0 0.0
    %4827 = vmatpush1.xpose.msra.mxu0 0.0
    %4828 = vmatprep.subr.mxu0 0.0
    %4829 = vmatpush1.xpose.msra.mxu0 0.0
    %4830 = vmatprep.subr.mxu0 0.0
    %4831 = vmatpush1.xpose.msra.mxu0 0.0
    %4832 = vmatprep.subr.mxu0 0.0
    %4833 = vmatpush1.xpose.msra.mxu0 0.0
    %4834 = vmatprep.subr.mxu0 0.0
    %4835 = vmatpush1.xpose.msra.mxu0 0.0
    %4836 = vmatprep.subr.mxu0 0.0
    %4837 = vmatpush1.xpose.msra.mxu0 0.0
    %4838 = vmatprep.subr.mxu0 0.0
    %4839 = vmatpush1.xpose.msra.mxu0 0.0
    %4840 = vmatprep.subr.mxu0 0.0
    %4841 = vmatpush1.xpose.msra.mxu0 0.0
    %4842 = vmatprep.subr.mxu0 0.0
    %4843 = vmatpush1.xpose.msra.mxu0 0.0
    %4844 = vmatprep.subr.mxu0 0.0
    %4845 = vmatpush1.xpose.msra.mxu0 0.0
    %4846 = vmatprep.subr.mxu0 0.0
    %4847 = vmatpush1.xpose.msra.mxu0 0.0
    %4848 = vmatprep.subr.mxu0 0.0
    %4849 = vmatpush1.xpose.msra.mxu0 0.0
    %4850 = vmatprep.subr.mxu0 0.0
    %4851 = vmatpush1.xpose.msra.mxu0 0.0
    %4852 = vmatprep.subr.mxu0 0.0
    %4853 = vmatpush1.xpose.msra.mxu0 0.0
    %4854 = vmatprep.subr.mxu0 0.0
    %4855 = vmatpush1.xpose.msra.mxu0 0.0
    %4856 = vmatprep.subr.mxu0 0.0
    %4857 = vmatpush1.xpose.msra.mxu0 0.0
    %4858 = vmatprep.subr.mxu0 0.0
    %4859 = vmatpush1.xpose.msra.mxu0 0.0
    %4860 = vmatprep.subr.mxu0 0.0
    %4861 = vmatpush1.xpose.msra.mxu0 0.0
    %4862 = vmatprep.subr.mxu0 0.0
    %4863 = vmatpush1.xpose.msra.mxu0 0.0
    %4864 = vmatprep.subr.mxu0 0.0
    %4865 = vmatpush1.xpose.msra.mxu0 0.0
    %4866 = vmatprep.subr.mxu0 0.0
    %4867 = vmatpush1.xpose.msra.mxu0 0.0
    %4868 = vmatprep.subr.mxu0 0.0
    %4869 = vmatpush1.xpose.msra.mxu0 0.0
    %4870 = vmatprep.subr.mxu0 0.0
    %4871 = vmatpush1.xpose.msra.mxu0 0.0
    %4872 = vmatprep.subr.mxu0 0.0
    %4873 = vmatpush1.xpose.msra.mxu0 0.0
    %4874 = vmatprep.subr.mxu0 0.0
    %4875 = vmatpush1.xpose.msra.mxu0 0.0
    %4876 = vmatprep.mubr.f32.mxu0 0.0
    %4877 = vmatmul.mubr.f32.gmra.mrb[0].mxu0 %v4808
    %v4878 = vpop.f32.mrb[0].mxu0
    %v4879 = vadd.f32 0.0, %v4878
    %v4880 = vpop.f32.mrb[0].mxu0
    %4881 = vdwg.mxu0
    %4882 = vrot.lane.b32.xlu0 %v4653, 96
    %v4883 = vpop.permute.xlu0 %4882
    %v4884 = vsel %vm361, %v4646, 0
    %v4886 = vsel %vm361, %v4883, 0
    %4888 = vmatprep.subr.mxu0 0.0
    %4889 = vmatpush1.xpose.msra.mxu0 %v4886
    %4890 = vmatprep.subr.mxu0 0.0
    %4891 = vmatpush1.xpose.msra.mxu0 0.0
    %4892 = vmatprep.subr.mxu0 0.0
    %4893 = vmatpush1.xpose.msra.mxu0 0.0
    %4894 = vmatprep.subr.mxu0 0.0
    %4895 = vmatpush1.xpose.msra.mxu0 0.0
    %4896 = vmatprep.subr.mxu0 0.0
    %4897 = vmatpush1.xpose.msra.mxu0 0.0
    %4898 = vmatprep.subr.mxu0 0.0
    %4899 = vmatpush1.xpose.msra.mxu0 0.0
    %4900 = vmatprep.subr.mxu0 0.0
    %4901 = vmatpush1.xpose.msra.mxu0 0.0
    %4902 = vmatprep.subr.mxu0 0.0
    %4903 = vmatpush1.xpose.msra.mxu0 0.0
    %4904 = vmatprep.subr.mxu0 0.0
    %4905 = vmatpush1.xpose.msra.mxu0 0.0
    %4906 = vmatprep.subr.mxu0 0.0
    %4907 = vmatpush1.xpose.msra.mxu0 0.0
    %4908 = vmatprep.subr.mxu0 0.0
    %4909 = vmatpush1.xpose.msra.mxu0 0.0
    %4910 = vmatprep.subr.mxu0 0.0
    %4911 = vmatpush1.xpose.msra.mxu0 0.0
    %4912 = vmatprep.subr.mxu0 0.0
    %4913 = vmatpush1.xpose.msra.mxu0 0.0
    %4914 = vmatprep.subr.mxu0 0.0
    %4915 = vmatpush1.xpose.msra.mxu0 0.0
    %4916 = vmatprep.subr.mxu0 0.0
    %4917 = vmatpush1.xpose.msra.mxu0 0.0
    %4918 = vmatprep.subr.mxu0 0.0
    %4919 = vmatpush1.xpose.msra.mxu0 0.0
    %4920 = vmatprep.subr.mxu0 0.0
    %4921 = vmatpush1.xpose.msra.mxu0 0.0
    %4922 = vmatprep.subr.mxu0 0.0
    %4923 = vmatpush1.xpose.msra.mxu0 0.0
    %4924 = vmatprep.subr.mxu0 0.0
    %4925 = vmatpush1.xpose.msra.mxu0 0.0
    %4926 = vmatprep.subr.mxu0 0.0
    %4927 = vmatpush1.xpose.msra.mxu0 0.0
    %4928 = vmatprep.subr.mxu0 0.0
    %4929 = vmatpush1.xpose.msra.mxu0 0.0
    %4930 = vmatprep.subr.mxu0 0.0
    %4931 = vmatpush1.xpose.msra.mxu0 0.0
    %4932 = vmatprep.subr.mxu0 0.0
    %4933 = vmatpush1.xpose.msra.mxu0 0.0
    %4934 = vmatprep.subr.mxu0 0.0
    %4935 = vmatpush1.xpose.msra.mxu0 0.0
    %4936 = vmatprep.subr.mxu0 0.0
    %4937 = vmatpush1.xpose.msra.mxu0 0.0
    %4938 = vmatprep.subr.mxu0 0.0
    %4939 = vmatpush1.xpose.msra.mxu0 0.0
    %4940 = vmatprep.subr.mxu0 0.0
    %4941 = vmatpush1.xpose.msra.mxu0 0.0
    %4942 = vmatprep.subr.mxu0 0.0
    %4943 = vmatpush1.xpose.msra.mxu0 0.0
    %4944 = vmatprep.subr.mxu0 0.0
    %4945 = vmatpush1.xpose.msra.mxu0 0.0
    %4946 = vmatprep.subr.mxu0 0.0
    %4947 = vmatpush1.xpose.msra.mxu0 0.0
    %4948 = vmatprep.subr.mxu0 0.0
    %4949 = vmatpush1.xpose.msra.mxu0 0.0
    %4950 = vmatprep.subr.mxu0 0.0
    %4951 = vmatpush1.xpose.msra.mxu0 0.0
    %4952 = vmatprep.mubr.f32.mxu0 0.0
    %4953 = vmatmul.mubr.f32.gmra.mrb[0].mxu0 %v4884
    %v4954 = vpop.f32.mrb[0].mxu0
    %v4955 = vadd.f32 0.0, %v4954
    %v4956 = vpop.f32.mrb[0].mxu0
    %4957 = vdwg.mxu0
    %v4958 = vmul.f32 %v4727, 0.35355338
    %v4959 = vmul.f32 %v4803, 0.35355338
    %v4960 = vmul.f32 %v4879, 0.35355338
    %v4961 = vmul.f32 %v4955, 0.35355338
    %v4962 = vsel %vm361, %v4958, -inf
    %4963 = vmax.xlane.f32.xlu0 %v4962
    %v4964 = vpop.xlane.xlu0 %4963
    %v4965 = vsel %vm361, %v4959, -inf
    %4966 = vmax.xlane.f32.xlu0 %v4965
    %v4967 = vpop.xlane.xlu0 %4966
    %v4968 = vsel %vm361, %v4960, -inf
    %4969 = vmax.xlane.f32.xlu0 %v4968
    %v4970 = vpop.xlane.xlu0 %4969
    %v4971 = vsel %vm361, %v4961, -inf
    %4972 = vmax.xlane.f32.xlu0 %v4971
    %v4973 = vpop.xlane.xlu0 %4972
    %v4974 = vsub.f32 %v4958, %v4964
    %v4975 = vsub.f32 %v4959, %v4967
    %v4976 = vsub.f32 %v4960, %v4970
    %v4977 = vsub.f32 %v4961, %v4973
    %v4978 = vmul.f32 %v4974, 1.442695
    %v4979 = vpow.pop %v4978
    %v4980 = vmul.f32 %v4975, 1.442695
    %v4981 = vpow.pop %v4980
    %v4982 = vmul.f32 %v4976, 1.442695
    %v4983 = vpow.pop %v4982
    %v4984 = vmul.f32 %v4977, 1.442695
    %v4985 = vpow.pop %v4984
    %v4986 = vsel %vm361, %v4979, 0.0
    %4987 = vadd.xlane.f32.xlu0 %v4986
    %v4988 = vpop.xlane.xlu0 %4987
    %v4989 = vsel %vm361, %v4981, 0.0
    %4990 = vadd.xlane.f32.xlu0 %v4989
    %v4991 = vpop.xlane.xlu0 %4990
    %v4992 = vsel %vm361, %v4983, 0.0
    %4993 = vadd.xlane.f32.xlu0 %v4992
    %v4994 = vpop.xlane.xlu0 %4993
    %v4995 = vsel %vm361, %v4985, 0.0
    %4996 = vadd.xlane.f32.xlu0 %v4995
    %v4997 = vpop.xlane.xlu0 %4996
    %v4998 = vrcp.pop %v4988
    %v4999 = vrcp.pop %v4991
    %v5000 = vrcp.pop %v4994
    %v5001 = vrcp.pop %v4997
    %v5002 = vmul.f32 %v4979, %v4998
    %v5003 = vmul.f32 %v4981, %v4999
    %v5004 = vmul.f32 %v4983, %v5000
    %v5005 = vmul.f32 %v4985, %v5001
    %5006 = vrot.lane.b32.xlu0 %v4637, 64
    %v5007 = vpop.permute.xlu0 %5006
    %v5010 = vsel %vm361, %v5002, 0
    %5012 = vmatprep.subr.mxu0 0.0
    %5013 = vmatpush1.msra.mxu0 %v5007
    %5014 = vmatprep.subr.mxu0 0.0
    %5015 = vmatpush1.msra.mxu0 0.0
    %5016 = vmatprep.subr.mxu0 0.0
    %5017 = vmatpush1.msra.mxu0 0.0
    %5018 = vmatprep.subr.mxu0 0.0
    %5019 = vmatpush1.msra.mxu0 0.0
    %5020 = vmatprep.subr.mxu0 0.0
    %5021 = vmatpush1.msra.mxu0 0.0
    %5022 = vmatprep.subr.mxu0 0.0
    %5023 = vmatpush1.msra.mxu0 0.0
    %5024 = vmatprep.subr.mxu0 0.0
    %5025 = vmatpush1.msra.mxu0 0.0
    %5026 = vmatprep.subr.mxu0 0.0
    %5027 = vmatpush1.msra.mxu0 0.0
    %5028 = vmatprep.subr.mxu0 0.0
    %5029 = vmatpush1.msra.mxu0 0.0
    %5030 = vmatprep.subr.mxu0 0.0
    %5031 = vmatpush1.msra.mxu0 0.0
    %5032 = vmatprep.subr.mxu0 0.0
    %5033 = vmatpush1.msra.mxu0 0.0
    %5034 = vmatprep.subr.mxu0 0.0
    %5035 = vmatpush1.msra.mxu0 0.0
    %5036 = vmatprep.subr.mxu0 0.0
    %5037 = vmatpush1.msra.mxu0 0.0
    %5038 = vmatprep.subr.mxu0 0.0
    %5039 = vmatpush1.msra.mxu0 0.0
    %5040 = vmatprep.subr.mxu0 0.0
    %5041 = vmatpush1.msra.mxu0 0.0
    %5042 = vmatprep.subr.mxu0 0.0
    %5043 = vmatpush1.msra.mxu0 0.0
    %5044 = vmatprep.subr.mxu0 0.0
    %5045 = vmatpush1.msra.mxu0 0.0
    %5046 = vmatprep.subr.mxu0 0.0
    %5047 = vmatpush1.msra.mxu0 0.0
    %5048 = vmatprep.subr.mxu0 0.0
    %5049 = vmatpush1.msra.mxu0 0.0
    %5050 = vmatprep.subr.mxu0 0.0
    %5051 = vmatpush1.msra.mxu0 0.0
    %5052 = vmatprep.subr.mxu0 0.0
    %5053 = vmatpush1.msra.mxu0 0.0
    %5054 = vmatprep.subr.mxu0 0.0
    %5055 = vmatpush1.msra.mxu0 0.0
    %5056 = vmatprep.subr.mxu0 0.0
    %5057 = vmatpush1.msra.mxu0 0.0
    %5058 = vmatprep.subr.mxu0 0.0
    %5059 = vmatpush1.msra.mxu0 0.0
    %5060 = vmatprep.subr.mxu0 0.0
    %5061 = vmatpush1.msra.mxu0 0.0
    %5062 = vmatprep.subr.mxu0 0.0
    %5063 = vmatpush1.msra.mxu0 0.0
    %5064 = vmatprep.subr.mxu0 0.0
    %5065 = vmatpush1.msra.mxu0 0.0
    %5066 = vmatprep.subr.mxu0 0.0
    %5067 = vmatpush1.msra.mxu0 0.0
    %5068 = vmatprep.subr.mxu0 0.0
    %5069 = vmatpush1.msra.mxu0 0.0
    %5070 = vmatprep.subr.mxu0 0.0
    %5071 = vmatpush1.msra.mxu0 0.0
    %5072 = vmatprep.subr.mxu0 0.0
    %5073 = vmatpush1.msra.mxu0 0.0
    %5074 = vmatprep.subr.mxu0 0.0
    %5075 = vmatpush1.msra.mxu0 0.0
    %5076 = vmatprep.mubr.f32.mxu0 0.0
    %5077 = vmatmul.mubr.f32.gmra.mrb[0].mxu0 %v5010
    %v5078 = vpop.f32.mrb[0].mxu0
    %v5079 = vadd.f32 0.0, %v5078
    %v5080 = vpop.f32.mrb[0].mxu0
    %5081 = vdwg.mxu0
    %5082 = vrot.lane.b32.xlu0 %v4649, 64
    %v5083 = vpop.permute.xlu0 %5082
    %v5086 = vsel %vm361, %v5003, 0
    %5088 = vmatprep.subr.mxu0 0.0
    %5089 = vmatpush1.msra.mxu0 %v5083
    %5090 = vmatprep.subr.mxu0 0.0
    %5091 = vmatpush1.msra.mxu0 0.0
    %5092 = vmatprep.subr.mxu0 0.0
    %5093 = vmatpush1.msra.mxu0 0.0
    %5094 = vmatprep.subr.mxu0 0.0
    %5095 = vmatpush1.msra.mxu0 0.0
    %5096 = vmatprep.subr.mxu0 0.0
    %5097 = vmatpush1.msra.mxu0 0.0
    %5098 = vmatprep.subr.mxu0 0.0
    %5099 = vmatpush1.msra.mxu0 0.0
    %5100 = vmatprep.subr.mxu0 0.0
    %5101 = vmatpush1.msra.mxu0 0.0
    %5102 = vmatprep.subr.mxu0 0.0
    %5103 = vmatpush1.msra.mxu0 0.0
    %5104 = vmatprep.subr.mxu0 0.0
    %5105 = vmatpush1.msra.mxu0 0.0
    %5106 = vmatprep.subr.mxu0 0.0
    %5107 = vmatpush1.msra.mxu0 0.0
    %5108 = vmatprep.subr.mxu0 0.0
    %5109 = vmatpush1.msra.mxu0 0.0
    %5110 = vmatprep.subr.mxu0 0.0
    %5111 = vmatpush1.msra.mxu0 0.0
    %5112 = vmatprep.subr.mxu0 0.0
    %5113 = vmatpush1.msra.mxu0 0.0
    %5114 = vmatprep.subr.mxu0 0.0
    %5115 = vmatpush1.msra.mxu0 0.0
    %5116 = vmatprep.subr.mxu0 0.0
    %5117 = vmatpush1.msra.mxu0 0.0
    %5118 = vmatprep.subr.mxu0 0.0
    %5119 = vmatpush1.msra.mxu0 0.0
    %5120 = vmatprep.subr.mxu0 0.0
    %5121 = vmatpush1.msra.mxu0 0.0
    %5122 = vmatprep.subr.mxu0 0.0
    %5123 = vmatpush1.msra.mxu0 0.0
    %5124 = vmatprep.subr.mxu0 0.0
    %5125 = vmatpush1.msra.mxu0 0.0
    %5126 = vmatprep.subr.mxu0 0.0
    %5127 = vmatpush1.msra.mxu0 0.0
    %5128 = vmatprep.subr.mxu0 0.0
    %5129 = vmatpush1.msra.mxu0 0.0
    %5130 = vmatprep.subr.mxu0 0.0
    %5131 = vmatpush1.msra.mxu0 0.0
    %5132 = vmatprep.subr.mxu0 0.0
    %5133 = vmatpush1.msra.mxu0 0.0
    %5134 = vmatprep.subr.mxu0 0.0
    %5135 = vmatpush1.msra.mxu0 0.0
    %5136 = vmatprep.subr.mxu0 0.0
    %5137 = vmatpush1.msra.mxu0 0.0
    %5138 = vmatprep.subr.mxu0 0.0
    %5139 = vmatpush1.msra.mxu0 0.0
    %5140 = vmatprep.subr.mxu0 0.0
    %5141 = vmatpush1.msra.mxu0 0.0
    %5142 = vmatprep.subr.mxu0 0.0
    %5143 = vmatpush1.msra.mxu0 0.0
    %5144 = vmatprep.subr.mxu0 0.0
    %5145 = vmatpush1.msra.mxu0 0.0
    %5146 = vmatprep.subr.mxu0 0.0
    %5147 = vmatpush1.msra.mxu0 0.0
    %5148 = vmatprep.subr.mxu0 0.0
    %5149 = vmatpush1.msra.mxu0 0.0
    %5150 = vmatprep.subr.mxu0 0.0
    %5151 = vmatpush1.msra.mxu0 0.0
    %5152 = vmatprep.mubr.f32.mxu0 0.0
    %5153 = vmatmul.mubr.f32.gmra.mrb[0].mxu0 %v5086
    %v5154 = vpop.f32.mrb[0].mxu0
    %v5155 = vadd.f32 0.0, %v5154
    %v5156 = vpop.f32.mrb[0].mxu0
    %5157 = vdwg.mxu0
    %5158 = vrot.lane.b32.xlu0 %v4651, 64
    %v5159 = vpop.permute.xlu0 %5158
    %v5162 = vsel %vm361, %v5004, 0
    %5164 = vmatprep.subr.mxu0 0.0
    %5165 = vmatpush1.msra.mxu0 %v5159
    %5166 = vmatprep.subr.mxu0 0.0
    %5167 = vmatpush1.msra.mxu0 0.0
    %5168 = vmatprep.subr.mxu0 0.0
    %5169 = vmatpush1.msra.mxu0 0.0
    %5170 = vmatprep.subr.mxu0 0.0
    %5171 = vmatpush1.msra.mxu0 0.0
    %5172 = vmatprep.subr.mxu0 0.0
    %5173 = vmatpush1.msra.mxu0 0.0
    %5174 = vmatprep.subr.mxu0 0.0
    %5175 = vmatpush1.msra.mxu0 0.0
    %5176 = vmatprep.subr.mxu0 0.0
    %5177 = vmatpush1.msra.mxu0 0.0
    %5178 = vmatprep.subr.mxu0 0.0
    %5179 = vmatpush1.msra.mxu0 0.0
    %5180 = vmatprep.subr.mxu0 0.0
    %5181 = vmatpush1.msra.mxu0 0.0
    %5182 = vmatprep.subr.mxu0 0.0
    %5183 = vmatpush1.msra.mxu0 0.0
    %5184 = vmatprep.subr.mxu0 0.0
    %5185 = vmatpush1.msra.mxu0 0.0
    %5186 = vmatprep.subr.mxu0 0.0
    %5187 = vmatpush1.msra.mxu0 0.0
    %5188 = vmatprep.subr.mxu0 0.0
    %5189 = vmatpush1.msra.mxu0 0.0
    %5190 = vmatprep.subr.mxu0 0.0
    %5191 = vmatpush1.msra.mxu0 0.0
    %5192 = vmatprep.subr.mxu0 0.0
    %5193 = vmatpush1.msra.mxu0 0.0
    %5194 = vmatprep.subr.mxu0 0.0
    %5195 = vmatpush1.msra.mxu0 0.0
    %5196 = vmatprep.subr.mxu0 0.0
    %5197 = vmatpush1.msra.mxu0 0.0
    %5198 = vmatprep.subr.mxu0 0.0
    %5199 = vmatpush1.msra.mxu0 0.0
    %5200 = vmatprep.subr.mxu0 0.0
    %5201 = vmatpush1.msra.mxu0 0.0
    %5202 = vmatprep.subr.mxu0 0.0
    %5203 = vmatpush1.msra.mxu0 0.0
    %5204 = vmatprep.subr.mxu0 0.0
    %5205 = vmatpush1.msra.mxu0 0.0
    %5206 = vmatprep.subr.mxu0 0.0
    %5207 = vmatpush1.msra.mxu0 0.0
    %5208 = vmatprep.subr.mxu0 0.0
    %5209 = vmatpush1.msra.mxu0 0.0
    %5210 = vmatprep.subr.mxu0 0.0
    %5211 = vmatpush1.msra.mxu0 0.0
    %5212 = vmatprep.subr.mxu0 0.0
    %5213 = vmatpush1.msra.mxu0 0.0
    %5214 = vmatprep.subr.mxu0 0.0
    %5215 = vmatpush1.msra.mxu0 0.0
    %5216 = vmatprep.subr.mxu0 0.0
    %5217 = vmatpush1.msra.mxu0 0.0
    %5218 = vmatprep.subr.mxu0 0.0
    %5219 = vmatpush1.msra.mxu0 0.0
    %5220 = vmatprep.subr.mxu0 0.0
    %5221 = vmatpush1.msra.mxu0 0.0
    %5222 = vmatprep.subr.mxu0 0.0
    %5223 = vmatpush1.msra.mxu0 0.0
    %5224 = vmatprep.subr.mxu0 0.0
    %5225 = vmatpush1.msra.mxu0 0.0
    %5226 = vmatprep.subr.mxu0 0.0
    %5227 = vmatpush1.msra.mxu0 0.0
    %5228 = vmatprep.mubr.f32.mxu0 0.0
    %5229 = vmatmul.mubr.f32.gmra.mrb[0].mxu0 %v5162
    %v5230 = vpop.f32.mrb[0].mxu0
    %v5231 = vadd.f32 0.0, %v5230
    %v5232 = vpop.f32.mrb[0].mxu0
    %5233 = vdwg.mxu0
    %5234 = vrot.lane.b32.xlu0 %v4653, 64
    %v5235 = vpop.permute.xlu0 %5234
    %v5238 = vsel %vm361, %v5005, 0
    %5240 = vmatprep.subr.mxu0 0.0
    %5241 = vmatpush1.msra.mxu0 %v5235
    %5242 = vmatprep.subr.mxu0 0.0
    %5243 = vmatpush1.msra.mxu0 0.0
    %5244 = vmatprep.subr.mxu0 0.0
    %5245 = vmatpush1.msra.mxu0 0.0
    %5246 = vmatprep.subr.mxu0 0.0
    %5247 = vmatpush1.msra.mxu0 0.0
    %5248 = vmatprep.subr.mxu0 0.0
    %5249 = vmatpush1.msra.mxu0 0.0
    %5250 = vmatprep.subr.mxu0 0.0
    %5251 = vmatpush1.msra.mxu0 0.0
    %5252 = vmatprep.subr.mxu0 0.0
    %5253 = vmatpush1.msra.mxu0 0.0
    %5254 = vmatprep.subr.mxu0 0.0
    %5255 = vmatpush1.msra.mxu0 0.0
    %5256 = vmatprep.subr.mxu0 0.0
    %5257 = vmatpush1.msra.mxu0 0.0
    %5258 = vmatprep.subr.mxu0 0.0
    %5259 = vmatpush1.msra.mxu0 0.0
    %5260 = vmatprep.subr.mxu0 0.0
    %5261 = vmatpush1.msra.mxu0 0.0
    %5262 = vmatprep.subr.mxu0 0.0
    %5263 = vmatpush1.msra.mxu0 0.0
    %5264 = vmatprep.subr.mxu0 0.0
    %5265 = vmatpush1.msra.mxu0 0.0
    %5266 = vmatprep.subr.mxu0 0.0
    %5267 = vmatpush1.msra.mxu0 0.0
    %5268 = vmatprep.subr.mxu0 0.0
    %5269 = vmatpush1.msra.mxu0 0.0
    %5270 = vmatprep.subr.mxu0 0.0
    %5271 = vmatpush1.msra.mxu0 0.0
    %5272 = vmatprep.subr.mxu0 0.0
    %5273 = vmatpush1.msra.mxu0 0.0
    %5274 = vmatprep.subr.mxu0 0.0
    %5275 = vmatpush1.msra.mxu0 0.0
    %5276 = vmatprep.subr.mxu0 0.0
    %5277 = vmatpush1.msra.mxu0 0.0
    %5278 = vmatprep.subr.mxu0 0.0
    %5279 = vmatpush1.msra.mxu0 0.0
    %5280 = vmatprep.subr.mxu0 0.0
    %5281 = vmatpush1.msra.mxu0 0.0
    %5282 = vmatprep.subr.mxu0 0.0
    %5283 = vmatpush1.msra.mxu0 0.0
    %5284 = vmatprep.subr.mxu0 0.0
    %5285 = vmatpush1.msra.mxu0 0.0
    %5286 = vmatprep.subr.mxu0 0.0
    %5287 = vmatpush1.msra.mxu0 0.0
    %5288 = vmatprep.subr.mxu0 0.0
    %5289 = vmatpush1.msra.mxu0 0.0
    %5290 = vmatprep.subr.mxu0 0.0
    %5291 = vmatpush1.msra.mxu0 0.0
    %5292 = vmatprep.subr.mxu0 0.0
    %5293 = vmatpush1.msra.mxu0 0.0
    %5294 = vmatprep.subr.mxu0 0.0
    %5295 = vmatpush1.msra.mxu0 0.0
    %5296 = vmatprep.subr.mxu0 0.0
    %5297 = vmatpush1.msra.mxu0 0.0
    %5298 = vmatprep.subr.mxu0 0.0
    %5299 = vmatpush1.msra.mxu0 0.0
    %5300 = vmatprep.subr.mxu0 0.0
    %5301 = vmatpush1.msra.mxu0 0.0
    %5302 = vmatprep.subr.mxu0 0.0
    %5303 = vmatpush1.msra.mxu0 0.0
    %5304 = vmatprep.mubr.f32.mxu0 0.0
    %5305 = vmatmul.mubr.f32.gmra.mrb[0].mxu0 %v5238
    %v5306 = vpop.f32.mrb[0].mxu0
    %v5307 = vadd.f32 0.0, %v5306
    %v5308 = vpop.f32.mrb[0].mxu0
    %5309 = vdwg.mxu0
    %5311 = vrot.lane.b32.xlu0 %v5155, 8
    %v5312 = vpop.permute.xlu0 %5311
    %5315 = vrot.lane.b32.xlu0 %v5231, 16
    %v5316 = vpop.permute.xlu0 %5315
    %5319 = vrot.lane.b32.xlu0 %v5307, 24
    %v5320 = vpop.permute.xlu0 %5319
    %v5322 = vsel %vm361, %v5079, %v5312
    %v5323 = vsel %vm1029, %v5322, %v5316
    %v5324 = vsel %vm1031, %v5323, %v5320
    %s5325 = scalar_lea.vmem %s8, 128
    %v5326 = vld [vmem:[%s5325] sm:$0xff]
    %v5327 = vld [vmem:[%s5325 + $0x8] sm:$0xff]
    %v5328 = vld [vmem:[%s5325 + $0x10] sm:$0xff]
    %v5329 = vld [vmem:[%s5325 + $0x18] sm:$0xff]
    %s5330 = scalar_lea.vmem %s9, 4
    %v5331 = vld [vmem:[%s5330] sm:$0x1]
    %v5333 = vlaneseq
    %v5334 = vshrl.u32 %v5333, 7
    %v5335 = vsub.s32 0, %v5334
    %v5336 = vrot.slane %v5331, %v5335
    %v5339 = vsel %vm278, %v5324, 0
    %5341 = vmatprep.subr.mxu0 0.0
    %5342 = vmatpush1.msra.mxu0 %v5326
    %5343 = vmatprep.subr.mxu0 0.0
    %5344 = vmatpush1.msra.mxu0 %v5327
    %5345 = vmatprep.subr.mxu0 0.0
    %5346 = vmatpush1.msra.mxu0 %v5328
    %5347 = vmatprep.subr.mxu0 0.0
    %5348 = vmatpush1.msra.mxu0 %v5329
    %5349 = vmatprep.subr.mxu0 0.0
    %5350 = vmatpush1.msra.mxu0 0.0
    %5351 = vmatprep.subr.mxu0 0.0
    %5352 = vmatpush1.msra.mxu0 0.0
    %5353 = vmatprep.subr.mxu0 0.0
    %5354 = vmatpush1.msra.mxu0 0.0
    %5355 = vmatprep.subr.mxu0 0.0
    %5356 = vmatpush1.msra.mxu0 0.0
    %5357 = vmatprep.subr.mxu0 0.0
    %5358 = vmatpush1.msra.mxu0 0.0
    %5359 = vmatprep.subr.mxu0 0.0
    %5360 = vmatpush1.msra.mxu0 0.0
    %5361 = vmatprep.subr.mxu0 0.0
    %5362 = vmatpush1.msra.mxu0 0.0
    %5363 = vmatprep.subr.mxu0 0.0
    %5364 = vmatpush1.msra.mxu0 0.0
    %5365 = vmatprep.subr.mxu0 0.0
    %5366 = vmatpush1.msra.mxu0 0.0
    %5367 = vmatprep.subr.mxu0 0.0
    %5368 = vmatpush1.msra.mxu0 0.0
    %5369 = vmatprep.subr.mxu0 0.0
    %5370 = vmatpush1.msra.mxu0 0.0
    %5371 = vmatprep.subr.mxu0 0.0
    %5372 = vmatpush1.msra.mxu0 0.0
    %5373 = vmatprep.subr.mxu0 0.0
    %5374 = vmatpush1.msra.mxu0 0.0
    %5375 = vmatprep.subr.mxu0 0.0
    %5376 = vmatpush1.msra.mxu0 0.0
    %5377 = vmatprep.subr.mxu0 0.0
    %5378 = vmatpush1.msra.mxu0 0.0
    %5379 = vmatprep.subr.mxu0 0.0
    %5380 = vmatpush1.msra.mxu0 0.0
    %5381 = vmatprep.subr.mxu0 0.0
    %5382 = vmatpush1.msra.mxu0 0.0
    %5383 = vmatprep.subr.mxu0 0.0
    %5384 = vmatpush1.msra.mxu0 0.0
    %5385 = vmatprep.subr.mxu0 0.0
    %5386 = vmatpush1.msra.mxu0 0.0
    %5387 = vmatprep.subr.mxu0 0.0
    %5388 = vmatpush1.msra.mxu0 0.0
    %5389 = vmatprep.subr.mxu0 0.0
    %5390 = vmatpush1.msra.mxu0 0.0
    %5391 = vmatprep.subr.mxu0 0.0
    %5392 = vmatpush1.msra.mxu0 0.0
    %5393 = vmatprep.subr.mxu0 0.0
    %5394 = vmatpush1.msra.mxu0 0.0
    %5395 = vmatprep.subr.mxu0 0.0
    %5396 = vmatpush1.msra.mxu0 0.0
    %5397 = vmatprep.subr.mxu0 0.0
    %5398 = vmatpush1.msra.mxu0 0.0
    %5399 = vmatprep.subr.mxu0 0.0
    %5400 = vmatpush1.msra.mxu0 0.0
    %5401 = vmatprep.subr.mxu0 0.0
    %5402 = vmatpush1.msra.mxu0 0.0
    %5403 = vmatprep.subr.mxu0 0.0
    %5404 = vmatpush1.msra.mxu0 0.0
    %5405 = vmatprep.mubr.f32.mxu0 0.0
    %5406 = vmatmul.mubr.f32.gmra.mrb[0].mxu0 %v5339
    %v5407 = vpop.f32.mrb[0].mxu0
    %v5408 = vadd.f32 %v5336, %v5407
    %v5409 = vpop.f32.mrb[0].mxu0
    %5410 = vdwg.mxu0
    %s5411 = scalar_lea.vmem %s6, 160
    %v5412 = vld [vmem:[%s5411] sm:$0xff]
    %v5413 = vld [vmem:[%s5411 + $0x8] sm:$0xff]
    %v5414 = vld [vmem:[%s5411 + $0x10] sm:$0xff]
    %v5415 = vld [vmem:[%s5411 + $0x18] sm:$0xff]
    %s5416 = scalar_lea.vmem %s7, 5
    %v5417 = vld [vmem:[%s5416] sm:$0x1]
    %v5419 = vlaneseq
    %v5420 = vshrl.u32 %v5419, 7
    %v5421 = vsub.s32 0, %v5420
    %v5422 = vrot.slane %v5417, %v5421
    %5424 = vmatprep.subr.mxu0 0.0
    %5425 = vmatpush1.msra.mxu0 %v5412
    %5426 = vmatprep.subr.mxu0 0.0
    %5427 = vmatpush1.msra.mxu0 %v5413
    %5428 = vmatprep.subr.mxu0 0.0
    %5429 = vmatpush1.msra.mxu0 %v5414
    %5430 = vmatprep.subr.mxu0 0.0
    %5431 = vmatpush1.msra.mxu0 %v5415
    %5432 = vmatprep.subr.mxu0 0.0
    %5433 = vmatpush1.msra.mxu0 0.0
    %5434 = vmatprep.subr.mxu0 0.0
    %5435 = vmatpush1.msra.mxu0 0.0
    %5436 = vmatprep.subr.mxu0 0.0
    %5437 = vmatpush1.msra.mxu0 0.0
    %5438 = vmatprep.subr.mxu0 0.0
    %5439 = vmatpush1.msra.mxu0 0.0
    %5440 = vmatprep.subr.mxu0 0.0
    %5441 = vmatpush1.msra.mxu0 0.0
    %5442 = vmatprep.subr.mxu0 0.0
    %5443 = vmatpush1.msra.mxu0 0.0
    %5444 = vmatprep.subr.mxu0 0.0
    %5445 = vmatpush1.msra.mxu0 0.0
    %5446 = vmatprep.subr.mxu0 0.0
    %5447 = vmatpush1.msra.mxu0 0.0
    %5448 = vmatprep.subr.mxu0 0.0
    %5449 = vmatpush1.msra.mxu0 0.0
    %5450 = vmatprep.subr.mxu0 0.0
    %5451 = vmatpush1.msra.mxu0 0.0
    %5452 = vmatprep.subr.mxu0 0.0
    %5453 = vmatpush1.msra.mxu0 0.0
    %5454 = vmatprep.subr.mxu0 0.0
    %5455 = vmatpush1.msra.mxu0 0.0
    %5456 = vmatprep.subr.mxu0 0.0
    %5457 = vmatpush1.msra.mxu0 0.0
    %5458 = vmatprep.subr.mxu0 0.0
    %5459 = vmatpush1.msra.mxu0 0.0
    %5460 = vmatprep.subr.mxu0 0.0
    %5461 = vmatpush1.msra.mxu0 0.0
    %5462 = vmatprep.subr.mxu0 0.0
    %5463 = vmatpush1.msra.mxu0 0.0
    %5464 = vmatprep.subr.mxu0 0.0
    %5465 = vmatpush1.msra.mxu0 0.0
    %5466 = vmatprep.subr.mxu0 0.0
    %5467 = vmatpush1.msra.mxu0 0.0
    %5468 = vmatprep.subr.mxu0 0.0
    %5469 = vmatpush1.msra.mxu0 0.0
    %5470 = vmatprep.subr.mxu0 0.0
    %5471 = vmatpush1.msra.mxu0 0.0
    %5472 = vmatprep.subr.mxu0 0.0
    %5473 = vmatpush1.msra.mxu0 0.0
    %5474 = vmatprep.subr.mxu0 0.0
    %5475 = vmatpush1.msra.mxu0 0.0
    %5476 = vmatprep.subr.mxu0 0.0
    %5477 = vmatpush1.msra.mxu0 0.0
    %5478 = vmatprep.subr.mxu0 0.0
    %5479 = vmatpush1.msra.mxu0 0.0
    %5480 = vmatprep.subr.mxu0 0.0
    %5481 = vmatpush1.msra.mxu0 0.0
    %5482 = vmatprep.subr.mxu0 0.0
    %5483 = vmatpush1.msra.mxu0 0.0
    %5484 = vmatprep.subr.mxu0 0.0
    %5485 = vmatpush1.msra.mxu0 0.0
    %5486 = vmatprep.subr.mxu0 0.0
    %5487 = vmatpush1.msra.mxu0 0.0
    %5488 = vmatprep.mubr.f32.mxu0 0.0
    %5489 = vmatmul.mubr.f32.gmra.mrb[0].mxu0 %v4563
    %v5490 = vpop.f32.mrb[0].mxu0
    %v5491 = vadd.f32 %v5422, %v5490
    %v5492 = vpop.f32.mrb[0].mxu0
    %5493 = vmatprep.mubr.f32.mxu0 0.0
    %5494 = vmatmul.mubr.f32.gmra.mrb[0].mxu0 %v4560
    %v5495 = vpop.f32.mrb[0].mxu0
    %v5496 = vadd.f32 %v5422, %v5495
    %v5497 = vpop.f32.mrb[0].mxu0
    %5498 = vdwg.mxu0
    %5500 = vrot.lane.b32.xlu0 %v5491, 120
    %v5501 = vpop.permute.xlu0 %5500
    %5502 = vrot.lane.b32.xlu0 %v5491, 112
    %v5503 = vpop.permute.xlu0 %5502
    %5504 = vrot.lane.b32.xlu0 %v5491, 104
    %v5505 = vpop.permute.xlu0 %5504
    %5507 = vrot.lane.b32.xlu0 %v5496, 120
    %v5508 = vpop.permute.xlu0 %5507
    %5509 = vrot.lane.b32.xlu0 %v5496, 112
    %v5510 = vpop.permute.xlu0 %5509
    %5511 = vrot.lane.b32.xlu0 %v5496, 104
    %v5512 = vpop.permute.xlu0 %5511
    %5513 = vrot.lane.b32.xlu0 %v5496, 96
    %v5514 = vpop.permute.xlu0 %5513
    %v5515 = vsel %vm361, %v5491, 0
    %v5517 = vsel %vm361, %v5514, 0
    %5519 = vmatprep.subr.mxu0 0.0
    %5520 = vmatpush1.xpose.msra.mxu0 %v5517
    %5521 = vmatprep.subr.mxu0 0.0
    %5522 = vmatpush1.xpose.msra.mxu0 0.0
    %5523 = vmatprep.subr.mxu0 0.0
    %5524 = vmatpush1.xpose.msra.mxu0 0.0
    %5525 = vmatprep.subr.mxu0 0.0
    %5526 = vmatpush1.xpose.msra.mxu0 0.0
    %5527 = vmatprep.subr.mxu0 0.0
    %5528 = vmatpush1.xpose.msra.mxu0 0.0
    %5529 = vmatprep.subr.mxu0 0.0
    %5530 = vmatpush1.xpose.msra.mxu0 0.0
    %5531 = vmatprep.subr.mxu0 0.0
    %5532 = vmatpush1.xpose.msra.mxu0 0.0
    %5533 = vmatprep.subr.mxu0 0.0
    %5534 = vmatpush1.xpose.msra.mxu0 0.0
    %5535 = vmatprep.subr.mxu0 0.0
    %5536 = vmatpush1.xpose.msra.mxu0 0.0
    %5537 = vmatprep.subr.mxu0 0.0
    %5538 = vmatpush1.xpose.msra.mxu0 0.0
    %5539 = vmatprep.subr.mxu0 0.0
    %5540 = vmatpush1.xpose.msra.mxu0 0.0
    %5541 = vmatprep.subr.mxu0 0.0
    %5542 = vmatpush1.xpose.msra.mxu0 0.0
    %5543 = vmatprep.subr.mxu0 0.0
    %5544 = vmatpush1.xpose.msra.mxu0 0.0
    %5545 = vmatprep.subr.mxu0 0.0
    %5546 = vmatpush1.xpose.msra.mxu0 0.0
    %5547 = vmatprep.subr.mxu0 0.0
    %5548 = vmatpush1.xpose.msra.mxu0 0.0
    %5549 = vmatprep.subr.mxu0 0.0
    %5550 = vmatpush1.xpose.msra.mxu0 0.0
    %5551 = vmatprep.subr.mxu0 0.0
    %5552 = vmatpush1.xpose.msra.mxu0 0.0
    %5553 = vmatprep.subr.mxu0 0.0
    %5554 = vmatpush1.xpose.msra.mxu0 0.0
    %5555 = vmatprep.subr.mxu0 0.0
    %5556 = vmatpush1.xpose.msra.mxu0 0.0
    %5557 = vmatprep.subr.mxu0 0.0
    %5558 = vmatpush1.xpose.msra.mxu0 0.0
    %5559 = vmatprep.subr.mxu0 0.0
    %5560 = vmatpush1.xpose.msra.mxu0 0.0
    %5561 = vmatprep.subr.mxu0 0.0
    %5562 = vmatpush1.xpose.msra.mxu0 0.0
    %5563 = vmatprep.subr.mxu0 0.0
    %5564 = vmatpush1.xpose.msra.mxu0 0.0
    %5565 = vmatprep.subr.mxu0 0.0
    %5566 = vmatpush1.xpose.msra.mxu0 0.0
    %5567 = vmatprep.subr.mxu0 0.0
    %5568 = vmatpush1.xpose.msra.mxu0 0.0
    %5569 = vmatprep.subr.mxu0 0.0
    %5570 = vmatpush1.xpose.msra.mxu0 0.0
    %5571 = vmatprep.subr.mxu0 0.0
    %5572 = vmatpush1.xpose.msra.mxu0 0.0
    %5573 = vmatprep.subr.mxu0 0.0
    %5574 = vmatpush1.xpose.msra.mxu0 0.0
    %5575 = vmatprep.subr.mxu0 0.0
    %5576 = vmatpush1.xpose.msra.mxu0 0.0
    %5577 = vmatprep.subr.mxu0 0.0
    %5578 = vmatpush1.xpose.msra.mxu0 0.0
    %5579 = vmatprep.subr.mxu0 0.0
    %5580 = vmatpush1.xpose.msra.mxu0 0.0
    %5581 = vmatprep.subr.mxu0 0.0
    %5582 = vmatpush1.xpose.msra.mxu0 0.0
    %5583 = vmatprep.mubr.f32.mxu0 0.0
    %5584 = vmatmul.mubr.f32.gmra.mrb[0].mxu0 %v5515
    %v5585 = vpop.f32.mrb[0].mxu0
    %v5586 = vadd.f32 0.0, %v5585
    %v5587 = vpop.f32.mrb[0].mxu0
    %5588 = vdwg.mxu0
    %5589 = vrot.lane.b32.xlu0 %v5508, 96
    %v5590 = vpop.permute.xlu0 %5589
    %v5591 = vsel %vm361, %v5501, 0
    %v5593 = vsel %vm361, %v5590, 0
    %5595 = vmatprep.subr.mxu0 0.0
    %5596 = vmatpush1.xpose.msra.mxu0 %v5593
    %5597 = vmatprep.subr.mxu0 0.0
    %5598 = vmatpush1.xpose.msra.mxu0 0.0
    %5599 = vmatprep.subr.mxu0 0.0
    %5600 = vmatpush1.xpose.msra.mxu0 0.0
    %5601 = vmatprep.subr.mxu0 0.0
    %5602 = vmatpush1.xpose.msra.mxu0 0.0
    %5603 = vmatprep.subr.mxu0 0.0
    %5604 = vmatpush1.xpose.msra.mxu0 0.0
    %5605 = vmatprep.subr.mxu0 0.0
    %5606 = vmatpush1.xpose.msra.mxu0 0.0
    %5607 = vmatprep.subr.mxu0 0.0
    %5608 = vmatpush1.xpose.msra.mxu0 0.0
    %5609 = vmatprep.subr.mxu0 0.0
    %5610 = vmatpush1.xpose.msra.mxu0 0.0
    %5611 = vmatprep.subr.mxu0 0.0
    %5612 = vmatpush1.xpose.msra.mxu0 0.0
    %5613 = vmatprep.subr.mxu0 0.0
    %5614 = vmatpush1.xpose.msra.mxu0 0.0
    %5615 = vmatprep.subr.mxu0 0.0
    %5616 = vmatpush1.xpose.msra.mxu0 0.0
    %5617 = vmatprep.subr.mxu0 0.0
    %5618 = vmatpush1.xpose.msra.mxu0 0.0
    %5619 = vmatprep.subr.mxu0 0.0
    %5620 = vmatpush1.xpose.msra.mxu0 0.0
    %5621 = vmatprep.subr.mxu0 0.0
    %5622 = vmatpush1.xpose.msra.mxu0 0.0
    %5623 = vmatprep.subr.mxu0 0.0
    %5624 = vmatpush1.xpose.msra.mxu0 0.0
    %5625 = vmatprep.subr.mxu0 0.0
    %5626 = vmatpush1.xpose.msra.mxu0 0.0
    %5627 = vmatprep.subr.mxu0 0.0
    %5628 = vmatpush1.xpose.msra.mxu0 0.0
    %5629 = vmatprep.subr.mxu0 0.0
    %5630 = vmatpush1.xpose.msra.mxu0 0.0
    %5631 = vmatprep.subr.mxu0 0.0
    %5632 = vmatpush1.xpose.msra.mxu0 0.0
    %5633 = vmatprep.subr.mxu0 0.0
    %5634 = vmatpush1.xpose.msra.mxu0 0.0
    %5635 = vmatprep.subr.mxu0 0.0
    %5636 = vmatpush1.xpose.msra.mxu0 0.0
    %5637 = vmatprep.subr.mxu0 0.0
    %5638 = vmatpush1.xpose.msra.mxu0 0.0
    %5639 = vmatprep.subr.mxu0 0.0
    %5640 = vmatpush1.xpose.msra.mxu0 0.0
    %5641 = vmatprep.subr.mxu0 0.0
    %5642 = vmatpush1.xpose.msra.mxu0 0.0
    %5643 = vmatprep.subr.mxu0 0.0
    %5644 = vmatpush1.xpose.msra.mxu0 0.0
    %5645 = vmatprep.subr.mxu0 0.0
    %5646 = vmatpush1.xpose.msra.mxu0 0.0
    %5647 = vmatprep.subr.mxu0 0.0
    %5648 = vmatpush1.xpose.msra.mxu0 0.0
    %5649 = vmatprep.subr.mxu0 0.0
    %5650 = vmatpush1.xpose.msra.mxu0 0.0
    %5651 = vmatprep.subr.mxu0 0.0
    %5652 = vmatpush1.xpose.msra.mxu0 0.0
    %5653 = vmatprep.subr.mxu0 0.0
    %5654 = vmatpush1.xpose.msra.mxu0 0.0
    %5655 = vmatprep.subr.mxu0 0.0
    %5656 = vmatpush1.xpose.msra.mxu0 0.0
    %5657 = vmatprep.subr.mxu0 0.0
    %5658 = vmatpush1.xpose.msra.mxu0 0.0
    %5659 = vmatprep.mubr.f32.mxu0 0.0
    %5660 = vmatmul.mubr.f32.gmra.mrb[0].mxu0 %v5591
    %v5661 = vpop.f32.mrb[0].mxu0
    %v5662 = vadd.f32 0.0, %v5661
    %v5663 = vpop.f32.mrb[0].mxu0
    %5664 = vdwg.mxu0
    %5665 = vrot.lane.b32.xlu0 %v5510, 96
    %v5666 = vpop.permute.xlu0 %5665
    %v5667 = vsel %vm361, %v5503, 0
    %v5669 = vsel %vm361, %v5666, 0
    %5671 = vmatprep.subr.mxu0 0.0
    %5672 = vmatpush1.xpose.msra.mxu0 %v5669
    %5673 = vmatprep.subr.mxu0 0.0
    %5674 = vmatpush1.xpose.msra.mxu0 0.0
    %5675 = vmatprep.subr.mxu0 0.0
    %5676 = vmatpush1.xpose.msra.mxu0 0.0
    %5677 = vmatprep.subr.mxu0 0.0
    %5678 = vmatpush1.xpose.msra.mxu0 0.0
    %5679 = vmatprep.subr.mxu0 0.0
    %5680 = vmatpush1.xpose.msra.mxu0 0.0
    %5681 = vmatprep.subr.mxu0 0.0
    %5682 = vmatpush1.xpose.msra.mxu0 0.0
    %5683 = vmatprep.subr.mxu0 0.0
    %5684 = vmatpush1.xpose.msra.mxu0 0.0
    %5685 = vmatprep.subr.mxu0 0.0
    %5686 = vmatpush1.xpose.msra.mxu0 0.0
    %5687 = vmatprep.subr.mxu0 0.0
    %5688 = vmatpush1.xpose.msra.mxu0 0.0
    %5689 = vmatprep.subr.mxu0 0.0
    %5690 = vmatpush1.xpose.msra.mxu0 0.0
    %5691 = vmatprep.subr.mxu0 0.0
    %5692 = vmatpush1.xpose.msra.mxu0 0.0
    %5693 = vmatprep.subr.mxu0 0.0
    %5694 = vmatpush1.xpose.msra.mxu0 0.0
    %5695 = vmatprep.subr.mxu0 0.0
    %5696 = vmatpush1.xpose.msra.mxu0 0.0
    %5697 = vmatprep.subr.mxu0 0.0
    %5698 = vmatpush1.xpose.msra.mxu0 0.0
    %5699 = vmatprep.subr.mxu0 0.0
    %5700 = vmatpush1.xpose.msra.mxu0 0.0
    %5701 = vmatprep.subr.mxu0 0.0
    %5702 = vmatpush1.xpose.msra.mxu0 0.0
    %5703 = vmatprep.subr.mxu0 0.0
    %5704 = vmatpush1.xpose.msra.mxu0 0.0
    %5705 = vmatprep.subr.mxu0 0.0
    %5706 = vmatpush1.xpose.msra.mxu0 0.0
    %5707 = vmatprep.subr.mxu0 0.0
    %5708 = vmatpush1.xpose.msra.mxu0 0.0
    %5709 = vmatprep.subr.mxu0 0.0
    %5710 = vmatpush1.xpose.msra.mxu0 0.0
    %5711 = vmatprep.subr.mxu0 0.0
    %5712 = vmatpush1.xpose.msra.mxu0 0.0
    %5713 = vmatprep.subr.mxu0 0.0
    %5714 = vmatpush1.xpose.msra.mxu0 0.0
    %5715 = vmatprep.subr.mxu0 0.0
    %5716 = vmatpush1.xpose.msra.mxu0 0.0
    %5717 = vmatprep.subr.mxu0 0.0
    %5718 = vmatpush1.xpose.msra.mxu0 0.0
    %5719 = vmatprep.subr.mxu0 0.0
    %5720 = vmatpush1.xpose.msra.mxu0 0.0
    %5721 = vmatprep.subr.mxu0 0.0
    %5722 = vmatpush1.xpose.msra.mxu0 0.0
    %5723 = vmatprep.subr.mxu0 0.0
    %5724 = vmatpush1.xpose.msra.mxu0 0.0
    %5725 = vmatprep.subr.mxu0 0.0
    %5726 = vmatpush1.xpose.msra.mxu0 0.0
    %5727 = vmatprep.subr.mxu0 0.0
    %5728 = vmatpush1.xpose.msra.mxu0 0.0
    %5729 = vmatprep.subr.mxu0 0.0
    %5730 = vmatpush1.xpose.msra.mxu0 0.0
    %5731 = vmatprep.subr.mxu0 0.0
    %5732 = vmatpush1.xpose.msra.mxu0 0.0
    %5733 = vmatprep.subr.mxu0 0.0
    %5734 = vmatpush1.xpose.msra.mxu0 0.0
    %5735 = vmatprep.mubr.f32.mxu0 0.0
    %5736 = vmatmul.mubr.f32.gmra.mrb[0].mxu0 %v5667
    %v5737 = vpop.f32.mrb[0].mxu0
    %v5738 = vadd.f32 0.0, %v5737
    %v5739 = vpop.f32.mrb[0].mxu0
    %5740 = vdwg.mxu0
    %5741 = vrot.lane.b32.xlu0 %v5512, 96
    %v5742 = vpop.permute.xlu0 %5741
    %v5743 = vsel %vm361, %v5505, 0
    %v5745 = vsel %vm361, %v5742, 0
    %5747 = vmatprep.subr.mxu0 0.0
    %5748 = vmatpush1.xpose.msra.mxu0 %v5745
    %5749 = vmatprep.subr.mxu0 0.0
    %5750 = vmatpush1.xpose.msra.mxu0 0.0
    %5751 = vmatprep.subr.mxu0 0.0
    %5752 = vmatpush1.xpose.msra.mxu0 0.0
    %5753 = vmatprep.subr.mxu0 0.0
    %5754 = vmatpush1.xpose.msra.mxu0 0.0
    %5755 = vmatprep.subr.mxu0 0.0
    %5756 = vmatpush1.xpose.msra.mxu0 0.0
    %5757 = vmatprep.subr.mxu0 0.0
    %5758 = vmatpush1.xpose.msra.mxu0 0.0
    %5759 = vmatprep.subr.mxu0 0.0
    %5760 = vmatpush1.xpose.msra.mxu0 0.0
    %5761 = vmatprep.subr.mxu0 0.0
    %5762 = vmatpush1.xpose.msra.mxu0 0.0
    %5763 = vmatprep.subr.mxu0 0.0
    %5764 = vmatpush1.xpose.msra.mxu0 0.0
    %5765 = vmatprep.subr.mxu0 0.0
    %5766 = vmatpush1.xpose.msra.mxu0 0.0
    %5767 = vmatprep.subr.mxu0 0.0
    %5768 = vmatpush1.xpose.msra.mxu0 0.0
    %5769 = vmatprep.subr.mxu0 0.0
    %5770 = vmatpush1.xpose.msra.mxu0 0.0
    %5771 = vmatprep.subr.mxu0 0.0
    %5772 = vmatpush1.xpose.msra.mxu0 0.0
    %5773 = vmatprep.subr.mxu0 0.0
    %5774 = vmatpush1.xpose.msra.mxu0 0.0
    %5775 = vmatprep.subr.mxu0 0.0
    %5776 = vmatpush1.xpose.msra.mxu0 0.0
    %5777 = vmatprep.subr.mxu0 0.0
    %5778 = vmatpush1.xpose.msra.mxu0 0.0
    %5779 = vmatprep.subr.mxu0 0.0
    %5780 = vmatpush1.xpose.msra.mxu0 0.0
    %5781 = vmatprep.subr.mxu0 0.0
    %5782 = vmatpush1.xpose.msra.mxu0 0.0
    %5783 = vmatprep.subr.mxu0 0.0
    %5784 = vmatpush1.xpose.msra.mxu0 0.0
    %5785 = vmatprep.subr.mxu0 0.0
    %5786 = vmatpush1.xpose.msra.mxu0 0.0
    %5787 = vmatprep.subr.mxu0 0.0
    %5788 = vmatpush1.xpose.msra.mxu0 0.0
    %5789 = vmatprep.subr.mxu0 0.0
    %5790 = vmatpush1.xpose.msra.mxu0 0.0
    %5791 = vmatprep.subr.mxu0 0.0
    %5792 = vmatpush1.xpose.msra.mxu0 0.0
    %5793 = vmatprep.subr.mxu0 0.0
    %5794 = vmatpush1.xpose.msra.mxu0 0.0
    %5795 = vmatprep.subr.mxu0 0.0
    %5796 = vmatpush1.xpose.msra.mxu0 0.0
    %5797 = vmatprep.subr.mxu0 0.0
    %5798 = vmatpush1.xpose.msra.mxu0 0.0
    %5799 = vmatprep.subr.mxu0 0.0
    %5800 = vmatpush1.xpose.msra.mxu0 0.0
    %5801 = vmatprep.subr.mxu0 0.0
    %5802 = vmatpush1.xpose.msra.mxu0 0.0
    %5803 = vmatprep.subr.mxu0 0.0
    %5804 = vmatpush1.xpose.msra.mxu0 0.0
    %5805 = vmatprep.subr.mxu0 0.0
    %5806 = vmatpush1.xpose.msra.mxu0 0.0
    %5807 = vmatprep.subr.mxu0 0.0
    %5808 = vmatpush1.xpose.msra.mxu0 0.0
    %5809 = vmatprep.subr.mxu0 0.0
    %5810 = vmatpush1.xpose.msra.mxu0 0.0
    %5811 = vmatprep.mubr.f32.mxu0 0.0
    %5812 = vmatmul.mubr.f32.gmra.mrb[0].mxu0 %v5743
    %v5813 = vpop.f32.mrb[0].mxu0
    %v5814 = vadd.f32 0.0, %v5813
    %v5815 = vpop.f32.mrb[0].mxu0
    %5816 = vdwg.mxu0
    %v5817 = vmul.f32 %v5586, 0.35355338
    %v5818 = vmul.f32 %v5662, 0.35355338
    %v5819 = vmul.f32 %v5738, 0.35355338
    %v5820 = vmul.f32 %v5814, 0.35355338
    %v5821 = vsel %vm361, %v5817, -inf
    %5822 = vmax.xlane.f32.xlu0 %v5821
    %v5823 = vpop.xlane.xlu0 %5822
    %v5824 = vsel %vm361, %v5818, -inf
    %5825 = vmax.xlane.f32.xlu0 %v5824
    %v5826 = vpop.xlane.xlu0 %5825
    %v5827 = vsel %vm361, %v5819, -inf
    %5828 = vmax.xlane.f32.xlu0 %v5827
    %v5829 = vpop.xlane.xlu0 %5828
    %v5830 = vsel %vm361, %v5820, -inf
    %5831 = vmax.xlane.f32.xlu0 %v5830
    %v5832 = vpop.xlane.xlu0 %5831
    %v5833 = vsub.f32 %v5817, %v5823
    %v5834 = vsub.f32 %v5818, %v5826
    %v5835 = vsub.f32 %v5819, %v5829
    %v5836 = vsub.f32 %v5820, %v5832
    %v5837 = vmul.f32 %v5833, 1.442695
    %v5838 = vpow.pop %v5837
    %v5839 = vmul.f32 %v5834, 1.442695
    %v5840 = vpow.pop %v5839
    %v5841 = vmul.f32 %v5835, 1.442695
    %v5842 = vpow.pop %v5841
    %v5843 = vmul.f32 %v5836, 1.442695
    %v5844 = vpow.pop %v5843
    %v5845 = vsel %vm361, %v5838, 0.0
    %5846 = vadd.xlane.f32.xlu0 %v5845
    %v5847 = vpop.xlane.xlu0 %5846
    %v5848 = vsel %vm361, %v5840, 0.0
    %5849 = vadd.xlane.f32.xlu0 %v5848
    %v5850 = vpop.xlane.xlu0 %5849
    %v5851 = vsel %vm361, %v5842, 0.0
    %5852 = vadd.xlane.f32.xlu0 %v5851
    %v5853 = vpop.xlane.xlu0 %5852
    %v5854 = vsel %vm361, %v5844, 0.0
    %5855 = vadd.xlane.f32.xlu0 %v5854
    %v5856 = vpop.xlane.xlu0 %5855
    %v5857 = vrcp.pop %v5847
    %v5858 = vrcp.pop %v5850
    %v5859 = vrcp.pop %v5853
    %v5860 = vrcp.pop %v5856
    %v5861 = vmul.f32 %v5838, %v5857
    %v5862 = vmul.f32 %v5840, %v5858
    %v5863 = vmul.f32 %v5842, %v5859
    %v5864 = vmul.f32 %v5844, %v5860
    %5865 = vrot.lane.b32.xlu0 %v5496, 64
    %v5866 = vpop.permute.xlu0 %5865
    %v5869 = vsel %vm361, %v5861, 0
    %5871 = vmatprep.subr.mxu0 0.0
    %5872 = vmatpush1.msra.mxu0 %v5866
    %5873 = vmatprep.subr.mxu0 0.0
    %5874 = vmatpush1.msra.mxu0 0.0
    %5875 = vmatprep.subr.mxu0 0.0
    %5876 = vmatpush1.msra.mxu0 0.0
    %5877 = vmatprep.subr.mxu0 0.0
    %5878 = vmatpush1.msra.mxu0 0.0
    %5879 = vmatprep.subr.mxu0 0.0
    %5880 = vmatpush1.msra.mxu0 0.0
    %5881 = vmatprep.subr.mxu0 0.0
    %5882 = vmatpush1.msra.mxu0 0.0
    %5883 = vmatprep.subr.mxu0 0.0
    %5884 = vmatpush1.msra.mxu0 0.0
    %5885 = vmatprep.subr.mxu0 0.0
    %5886 = vmatpush1.msra.mxu0 0.0
    %5887 = vmatprep.subr.mxu0 0.0
    %5888 = vmatpush1.msra.mxu0 0.0
    %5889 = vmatprep.subr.mxu0 0.0
    %5890 = vmatpush1.msra.mxu0 0.0
    %5891 = vmatprep.subr.mxu0 0.0
    %5892 = vmatpush1.msra.mxu0 0.0
    %5893 = vmatprep.subr.mxu0 0.0
    %5894 = vmatpush1.msra.mxu0 0.0
    %5895 = vmatprep.subr.mxu0 0.0
    %5896 = vmatpush1.msra.mxu0 0.0
    %5897 = vmatprep.subr.mxu0 0.0
    %5898 = vmatpush1.msra.mxu0 0.0
    %5899 = vmatprep.subr.mxu0 0.0
    %5900 = vmatpush1.msra.mxu0 0.0
    %5901 = vmatprep.subr.mxu0 0.0
    %5902 = vmatpush1.msra.mxu0 0.0
    %5903 = vmatprep.subr.mxu0 0.0
    %5904 = vmatpush1.msra.mxu0 0.0
    %5905 = vmatprep.subr.mxu0 0.0
    %5906 = vmatpush1.msra.mxu0 0.0
    %5907 = vmatprep.subr.mxu0 0.0
    %5908 = vmatpush1.msra.mxu0 0.0
    %5909 = vmatprep.subr.mxu0 0.0
    %5910 = vmatpush1.msra.mxu0 0.0
    %5911 = vmatprep.subr.mxu0 0.0
    %5912 = vmatpush1.msra.mxu0 0.0
    %5913 = vmatprep.subr.mxu0 0.0
    %5914 = vmatpush1.msra.mxu0 0.0
    %5915 = vmatprep.subr.mxu0 0.0
    %5916 = vmatpush1.msra.mxu0 0.0
    %5917 = vmatprep.subr.mxu0 0.0
    %5918 = vmatpush1.msra.mxu0 0.0
    %5919 = vmatprep.subr.mxu0 0.0
    %5920 = vmatpush1.msra.mxu0 0.0
    %5921 = vmatprep.subr.mxu0 0.0
    %5922 = vmatpush1.msra.mxu0 0.0
    %5923 = vmatprep.subr.mxu0 0.0
    %5924 = vmatpush1.msra.mxu0 0.0
    %5925 = vmatprep.subr.mxu0 0.0
    %5926 = vmatpush1.msra.mxu0 0.0
    %5927 = vmatprep.subr.mxu0 0.0
    %5928 = vmatpush1.msra.mxu0 0.0
    %5929 = vmatprep.subr.mxu0 0.0
    %5930 = vmatpush1.msra.mxu0 0.0
    %5931 = vmatprep.subr.mxu0 0.0
    %5932 = vmatpush1.msra.mxu0 0.0
    %5933 = vmatprep.subr.mxu0 0.0
    %5934 = vmatpush1.msra.mxu0 0.0
    %5935 = vmatprep.mubr.f32.mxu0 0.0
    %5936 = vmatmul.mubr.f32.gmra.mrb[0].mxu0 %v5869
    %v5937 = vpop.f32.mrb[0].mxu0
    %v5938 = vadd.f32 0.0, %v5937
    %v5939 = vpop.f32.mrb[0].mxu0
    %5940 = vdwg.mxu0
    %5941 = vrot.lane.b32.xlu0 %v5508, 64
    %v5942 = vpop.permute.xlu0 %5941
    %v5945 = vsel %vm361, %v5862, 0
    %5947 = vmatprep.subr.mxu0 0.0
    %5948 = vmatpush1.msra.mxu0 %v5942
    %5949 = vmatprep.subr.mxu0 0.0
    %5950 = vmatpush1.msra.mxu0 0.0
    %5951 = vmatprep.subr.mxu0 0.0
    %5952 = vmatpush1.msra.mxu0 0.0
    %5953 = vmatprep.subr.mxu0 0.0
    %5954 = vmatpush1.msra.mxu0 0.0
    %5955 = vmatprep.subr.mxu0 0.0
    %5956 = vmatpush1.msra.mxu0 0.0
    %5957 = vmatprep.subr.mxu0 0.0
    %5958 = vmatpush1.msra.mxu0 0.0
    %5959 = vmatprep.subr.mxu0 0.0
    %5960 = vmatpush1.msra.mxu0 0.0
    %5961 = vmatprep.subr.mxu0 0.0
    %5962 = vmatpush1.msra.mxu0 0.0
    %5963 = vmatprep.subr.mxu0 0.0
    %5964 = vmatpush1.msra.mxu0 0.0
    %5965 = vmatprep.subr.mxu0 0.0
    %5966 = vmatpush1.msra.mxu0 0.0
    %5967 = vmatprep.subr.mxu0 0.0
    %5968 = vmatpush1.msra.mxu0 0.0
    %5969 = vmatprep.subr.mxu0 0.0
    %5970 = vmatpush1.msra.mxu0 0.0
    %5971 = vmatprep.subr.mxu0 0.0
    %5972 = vmatpush1.msra.mxu0 0.0
    %5973 = vmatprep.subr.mxu0 0.0
    %5974 = vmatpush1.msra.mxu0 0.0
    %5975 = vmatprep.subr.mxu0 0.0
    %5976 = vmatpush1.msra.mxu0 0.0
    %5977 = vmatprep.subr.mxu0 0.0
    %5978 = vmatpush1.msra.mxu0 0.0
    %5979 = vmatprep.subr.mxu0 0.0
    %5980 = vmatpush1.msra.mxu0 0.0
    %5981 = vmatprep.subr.mxu0 0.0
    %5982 = vmatpush1.msra.mxu0 0.0
    %5983 = vmatprep.subr.mxu0 0.0
    %5984 = vmatpush1.msra.mxu0 0.0
    %5985 = vmatprep.subr.mxu0 0.0
    %5986 = vmatpush1.msra.mxu0 0.0
    %5987 = vmatprep.subr.mxu0 0.0
    %5988 = vmatpush1.msra.mxu0 0.0
    %5989 = vmatprep.subr.mxu0 0.0
    %5990 = vmatpush1.msra.mxu0 0.0
    %5991 = vmatprep.subr.mxu0 0.0
    %5992 = vmatpush1.msra.mxu0 0.0
    %5993 = vmatprep.subr.mxu0 0.0
    %5994 = vmatpush1.msra.mxu0 0.0
    %5995 = vmatprep.subr.mxu0 0.0
    %5996 = vmatpush1.msra.mxu0 0.0
    %5997 = vmatprep.subr.mxu0 0.0
    %5998 = vmatpush1.msra.mxu0 0.0
    %5999 = vmatprep.subr.mxu0 0.0
    %6000 = vmatpush1.msra.mxu0 0.0
    %6001 = vmatprep.subr.mxu0 0.0
    %6002 = vmatpush1.msra.mxu0 0.0
    %6003 = vmatprep.subr.mxu0 0.0
    %6004 = vmatpush1.msra.mxu0 0.0
    %6005 = vmatprep.subr.mxu0 0.0
    %6006 = vmatpush1.msra.mxu0 0.0
    %6007 = vmatprep.subr.mxu0 0.0
    %6008 = vmatpush1.msra.mxu0 0.0
    %6009 = vmatprep.subr.mxu0 0.0
    %6010 = vmatpush1.msra.mxu0 0.0
    %6011 = vmatprep.mubr.f32.mxu0 0.0
    %6012 = vmatmul.mubr.f32.gmra.mrb[0].mxu0 %v5945
    %v6013 = vpop.f32.mrb[0].mxu0
    %v6014 = vadd.f32 0.0, %v6013
    %v6015 = vpop.f32.mrb[0].mxu0
    %6016 = vdwg.mxu0
    %6017 = vrot.lane.b32.xlu0 %v5510, 64
    %v6018 = vpop.permute.xlu0 %6017
    %v6021 = vsel %vm361, %v5863, 0
    %6023 = vmatprep.subr.mxu0 0.0
    %6024 = vmatpush1.msra.mxu0 %v6018
    %6025 = vmatprep.subr.mxu0 0.0
    %6026 = vmatpush1.msra.mxu0 0.0
    %6027 = vmatprep.subr.mxu0 0.0
    %6028 = vmatpush1.msra.mxu0 0.0
    %6029 = vmatprep.subr.mxu0 0.0
    %6030 = vmatpush1.msra.mxu0 0.0
    %6031 = vmatprep.subr.mxu0 0.0
    %6032 = vmatpush1.msra.mxu0 0.0
    %6033 = vmatprep.subr.mxu0 0.0
    %6034 = vmatpush1.msra.mxu0 0.0
    %6035 = vmatprep.subr.mxu0 0.0
    %6036 = vmatpush1.msra.mxu0 0.0
    %6037 = vmatprep.subr.mxu0 0.0
    %6038 = vmatpush1.msra.mxu0 0.0
    %6039 = vmatprep.subr.mxu0 0.0
    %6040 = vmatpush1.msra.mxu0 0.0
    %6041 = vmatprep.subr.mxu0 0.0
    %6042 = vmatpush1.msra.mxu0 0.0
    %6043 = vmatprep.subr.mxu0 0.0
    %6044 = vmatpush1.msra.mxu0 0.0
    %6045 = vmatprep.subr.mxu0 0.0
    %6046 = vmatpush1.msra.mxu0 0.0
    %6047 = vmatprep.subr.mxu0 0.0
    %6048 = vmatpush1.msra.mxu0 0.0
    %6049 = vmatprep.subr.mxu0 0.0
    %6050 = vmatpush1.msra.mxu0 0.0
    %6051 = vmatprep.subr.mxu0 0.0
    %6052 = vmatpush1.msra.mxu0 0.0
    %6053 = vmatprep.subr.mxu0 0.0
    %6054 = vmatpush1.msra.mxu0 0.0
    %6055 = vmatprep.subr.mxu0 0.0
    %6056 = vmatpush1.msra.mxu0 0.0
    %6057 = vmatprep.subr.mxu0 0.0
    %6058 = vmatpush1.msra.mxu0 0.0
    %6059 = vmatprep.subr.mxu0 0.0
    %6060 = vmatpush1.msra.mxu0 0.0
    %6061 = vmatprep.subr.mxu0 0.0
    %6062 = vmatpush1.msra.mxu0 0.0
    %6063 = vmatprep.subr.mxu0 0.0
    %6064 = vmatpush1.msra.mxu0 0.0
    %6065 = vmatprep.subr.mxu0 0.0
    %6066 = vmatpush1.msra.mxu0 0.0
    %6067 = vmatprep.subr.mxu0 0.0
    %6068 = vmatpush1.msra.mxu0 0.0
    %6069 = vmatprep.subr.mxu0 0.0
    %6070 = vmatpush1.msra.mxu0 0.0
    %6071 = vmatprep.subr.mxu0 0.0
    %6072 = vmatpush1.msra.mxu0 0.0
    %6073 = vmatprep.subr.mxu0 0.0
    %6074 = vmatpush1.msra.mxu0 0.0
    %6075 = vmatprep.subr.mxu0 0.0
    %6076 = vmatpush1.msra.mxu0 0.0
    %6077 = vmatprep.subr.mxu0 0.0
    %6078 = vmatpush1.msra.mxu0 0.0
    %6079 = vmatprep.subr.mxu0 0.0
    %6080 = vmatpush1.msra.mxu0 0.0
    %6081 = vmatprep.subr.mxu0 0.0
    %6082 = vmatpush1.msra.mxu0 0.0
    %6083 = vmatprep.subr.mxu0 0.0
    %6084 = vmatpush1.msra.mxu0 0.0
    %6085 = vmatprep.subr.mxu0 0.0
    %6086 = vmatpush1.msra.mxu0 0.0
    %6087 = vmatprep.mubr.f32.mxu0 0.0
    %6088 = vmatmul.mubr.f32.gmra.mrb[0].mxu0 %v6021
    %v6089 = vpop.f32.mrb[0].mxu0
    %v6090 = vadd.f32 0.0, %v6089
    %v6091 = vpop.f32.mrb[0].mxu0
    %6092 = vdwg.mxu0
    %6093 = vrot.lane.b32.xlu0 %v5512, 64
    %v6094 = vpop.permute.xlu0 %6093
    %v6097 = vsel %vm361, %v5864, 0
    %6099 = vmatprep.subr.mxu0 0.0
    %6100 = vmatpush1.msra.mxu0 %v6094
    %6101 = vmatprep.subr.mxu0 0.0
    %6102 = vmatpush1.msra.mxu0 0.0
    %6103 = vmatprep.subr.mxu0 0.0
    %6104 = vmatpush1.msra.mxu0 0.0
    %6105 = vmatprep.subr.mxu0 0.0
    %6106 = vmatpush1.msra.mxu0 0.0
    %6107 = vmatprep.subr.mxu0 0.0
    %6108 = vmatpush1.msra.mxu0 0.0
    %6109 = vmatprep.subr.mxu0 0.0
    %6110 = vmatpush1.msra.mxu0 0.0
    %6111 = vmatprep.subr.mxu0 0.0
    %6112 = vmatpush1.msra.mxu0 0.0
    %6113 = vmatprep.subr.mxu0 0.0
    %6114 = vmatpush1.msra.mxu0 0.0
    %6115 = vmatprep.subr.mxu0 0.0
    %6116 = vmatpush1.msra.mxu0 0.0
    %6117 = vmatprep.subr.mxu0 0.0
    %6118 = vmatpush1.msra.mxu0 0.0
    %6119 = vmatprep.subr.mxu0 0.0
    %6120 = vmatpush1.msra.mxu0 0.0
    %6121 = vmatprep.subr.mxu0 0.0
    %6122 = vmatpush1.msra.mxu0 0.0
    %6123 = vmatprep.subr.mxu0 0.0
    %6124 = vmatpush1.msra.mxu0 0.0
    %6125 = vmatprep.subr.mxu0 0.0
    %6126 = vmatpush1.msra.mxu0 0.0
    %6127 = vmatprep.subr.mxu0 0.0
    %6128 = vmatpush1.msra.mxu0 0.0
    %6129 = vmatprep.subr.mxu0 0.0
    %6130 = vmatpush1.msra.mxu0 0.0
    %6131 = vmatprep.subr.mxu0 0.0
    %6132 = vmatpush1.msra.mxu0 0.0
    %6133 = vmatprep.subr.mxu0 0.0
    %6134 = vmatpush1.msra.mxu0 0.0
    %6135 = vmatprep.subr.mxu0 0.0
    %6136 = vmatpush1.msra.mxu0 0.0
    %6137 = vmatprep.subr.mxu0 0.0
    %6138 = vmatpush1.msra.mxu0 0.0
    %6139 = vmatprep.subr.mxu0 0.0
    %6140 = vmatpush1.msra.mxu0 0.0
    %6141 = vmatprep.subr.mxu0 0.0
    %6142 = vmatpush1.msra.mxu0 0.0
    %6143 = vmatprep.subr.mxu0 0.0
    %6144 = vmatpush1.msra.mxu0 0.0
    %6145 = vmatprep.subr.mxu0 0.0
    %6146 = vmatpush1.msra.mxu0 0.0
    %6147 = vmatprep.subr.mxu0 0.0
    %6148 = vmatpush1.msra.mxu0 0.0
    %6149 = vmatprep.subr.mxu0 0.0
    %6150 = vmatpush1.msra.mxu0 0.0
    %6151 = vmatprep.subr.mxu0 0.0
    %6152 = vmatpush1.msra.mxu0 0.0
    %6153 = vmatprep.subr.mxu0 0.0
    %6154 = vmatpush1.msra.mxu0 0.0
    %6155 = vmatprep.subr.mxu0 0.0
    %6156 = vmatpush1.msra.mxu0 0.0
    %6157 = vmatprep.subr.mxu0 0.0
    %6158 = vmatpush1.msra.mxu0 0.0
    %6159 = vmatprep.subr.mxu0 0.0
    %6160 = vmatpush1.msra.mxu0 0.0
    %6161 = vmatprep.subr.mxu0 0.0
    %6162 = vmatpush1.msra.mxu0 0.0
    %6163 = vmatprep.mubr.f32.mxu0 0.0
    %6164 = vmatmul.mubr.f32.gmra.mrb[0].mxu0 %v6097
    %v6165 = vpop.f32.mrb[0].mxu0
    %v6166 = vadd.f32 0.0, %v6165
    %v6167 = vpop.f32.mrb[0].mxu0
    %6168 = vdwg.mxu0
    %6170 = vrot.lane.b32.xlu0 %v6014, 8
    %v6171 = vpop.permute.xlu0 %6170
    %6174 = vrot.lane.b32.xlu0 %v6090, 16
    %v6175 = vpop.permute.xlu0 %6174
    %6178 = vrot.lane.b32.xlu0 %v6166, 24
    %v6179 = vpop.permute.xlu0 %6178
    %v6181 = vsel %vm361, %v5938, %v6171
    %v6182 = vsel %vm1029, %v6181, %v6175
    %v6183 = vsel %vm1031, %v6182, %v6179
    %s6184 = scalar_lea.vmem %s8, 160
    %v6185 = vld [vmem:[%s6184] sm:$0xff]
    %v6186 = vld [vmem:[%s6184 + $0x8] sm:$0xff]
    %v6187 = vld [vmem:[%s6184 + $0x10] sm:$0xff]
    %v6188 = vld [vmem:[%s6184 + $0x18] sm:$0xff]
    %s6189 = scalar_lea.vmem %s9, 5
    %v6190 = vld [vmem:[%s6189] sm:$0x1]
    %v6192 = vlaneseq
    %v6193 = vshrl.u32 %v6192, 7
    %v6194 = vsub.s32 0, %v6193
    %v6195 = vrot.slane %v6190, %v6194
    %v6198 = vsel %vm278, %v6183, 0
    %6200 = vmatprep.subr.mxu0 0.0
    %6201 = vmatpush1.msra.mxu0 %v6185
    %6202 = vmatprep.subr.mxu0 0.0
    %6203 = vmatpush1.msra.mxu0 %v6186
    %6204 = vmatprep.subr.mxu0 0.0
    %6205 = vmatpush1.msra.mxu0 %v6187
    %6206 = vmatprep.subr.mxu0 0.0
    %6207 = vmatpush1.msra.mxu0 %v6188
    %6208 = vmatprep.subr.mxu0 0.0
    %6209 = vmatpush1.msra.mxu0 0.0
    %6210 = vmatprep.subr.mxu0 0.0
    %6211 = vmatpush1.msra.mxu0 0.0
    %6212 = vmatprep.subr.mxu0 0.0
    %6213 = vmatpush1.msra.mxu0 0.0
    %6214 = vmatprep.subr.mxu0 0.0
    %6215 = vmatpush1.msra.mxu0 0.0
    %6216 = vmatprep.subr.mxu0 0.0
    %6217 = vmatpush1.msra.mxu0 0.0
    %6218 = vmatprep.subr.mxu0 0.0
    %6219 = vmatpush1.msra.mxu0 0.0
    %6220 = vmatprep.subr.mxu0 0.0
    %6221 = vmatpush1.msra.mxu0 0.0
    %6222 = vmatprep.subr.mxu0 0.0
    %6223 = vmatpush1.msra.mxu0 0.0
    %6224 = vmatprep.subr.mxu0 0.0
    %6225 = vmatpush1.msra.mxu0 0.0
    %6226 = vmatprep.subr.mxu0 0.0
    %6227 = vmatpush1.msra.mxu0 0.0
    %6228 = vmatprep.subr.mxu0 0.0
    %6229 = vmatpush1.msra.mxu0 0.0
    %6230 = vmatprep.subr.mxu0 0.0
    %6231 = vmatpush1.msra.mxu0 0.0
    %6232 = vmatprep.subr.mxu0 0.0
    %6233 = vmatpush1.msra.mxu0 0.0
    %6234 = vmatprep.subr.mxu0 0.0
    %6235 = vmatpush1.msra.mxu0 0.0
    %6236 = vmatprep.subr.mxu0 0.0
    %6237 = vmatpush1.msra.mxu0 0.0
    %6238 = vmatprep.subr.mxu0 0.0
    %6239 = vmatpush1.msra.mxu0 0.0
    %6240 = vmatprep.subr.mxu0 0.0
    %6241 = vmatpush1.msra.mxu0 0.0
    %6242 = vmatprep.subr.mxu0 0.0
    %6243 = vmatpush1.msra.mxu0 0.0
    %6244 = vmatprep.subr.mxu0 0.0
    %6245 = vmatpush1.msra.mxu0 0.0
    %6246 = vmatprep.subr.mxu0 0.0
    %6247 = vmatpush1.msra.mxu0 0.0
    %6248 = vmatprep.subr.mxu0 0.0
    %6249 = vmatpush1.msra.mxu0 0.0
    %6250 = vmatprep.subr.mxu0 0.0
    %6251 = vmatpush1.msra.mxu0 0.0
    %6252 = vmatprep.subr.mxu0 0.0
    %6253 = vmatpush1.msra.mxu0 0.0
    %6254 = vmatprep.subr.mxu0 0.0
    %6255 = vmatpush1.msra.mxu0 0.0
    %6256 = vmatprep.subr.mxu0 0.0
    %6257 = vmatpush1.msra.mxu0 0.0
    %6258 = vmatprep.subr.mxu0 0.0
    %6259 = vmatpush1.msra.mxu0 0.0
    %6260 = vmatprep.subr.mxu0 0.0
    %6261 = vmatpush1.msra.mxu0 0.0
    %6262 = vmatprep.subr.mxu0 0.0
    %6263 = vmatpush1.msra.mxu0 0.0
    %6264 = vmatprep.mubr.f32.mxu0 0.0
    %6265 = vmatmul.mubr.f32.gmra.mrb[0].mxu0 %v6198
    %v6266 = vpop.f32.mrb[0].mxu0
    %v6267 = vadd.f32 %v6195, %v6266
    %v6268 = vpop.f32.mrb[0].mxu0
    %6269 = vdwg.mxu0
    %v6270 = vadd.f32 %v4544, %v5408
    %v6271 = vadd.f32 %v4545, %v6267
    %s6272 = scalar_lea.vmem %s14, 64
    %v6273 = vld [vmem:[%s6272] sm:$0xff]
    %v6274 = vld [vmem:[%s6272 + $0x8] sm:$0xff]
    %s6275 = scalar_lea.vmem %s15, 64
    %v6276 = vld [vmem:[%s6275] sm:$0xff]
    %v6277 = vld [vmem:[%s6275 + $0x8] sm:$0xff]
    %v6278 = vsel %vm278, %v6270, 0.0
    %6279 = vadd.xlane.f32.xlu0 %v6278
    %v6280 = vpop.xlane.xlu0 %6279
    %v6281 = vsel %vm278, %v6271, 0.0
    %6282 = vadd.xlane.f32.xlu0 %v6281
    %v6283 = vpop.xlane.xlu0 %6282
    %v6284 = vmul.f32 %v6280, %v1979
    %v6285 = vmul.f32 %v6283, %v1979
    %v6286 = vsub.f32 %v6270, %v6284
    %v6287 = vsub.f32 %v6271, %v6285
    %v6288 = vmul.f32 %v6286, %v6286
    %v6289 = vmul.f32 %v6287, %v6287
    %v6290 = vsel %vm278, %v6288, 0.0
    %6291 = vadd.xlane.f32.xlu0 %v6290
    %v6292 = vpop.xlane.xlu0 %6291
    %v6293 = vsel %vm278, %v6289, 0.0
    %6294 = vadd.xlane.f32.xlu0 %v6293
    %v6295 = vpop.xlane.xlu0 %6294
    %v6296 = vmul.f32 %v6292, %v1979
    %v6297 = vmul.f32 %v6295, %v1979
    %v6298 = vadd.f32 %v6296, 1e-05
    %v6299 = vadd.f32 %v6297, 1e-05
    %v6300 = vrsqrt.pop %v6298
    %v6301 = vrsqrt.pop %v6299
    %v6302 = vmul.f32 %v6286, %v6300
    %v6303 = vmul.f32 %v6287, %v6301
    %v6304 = vmul.f32 %v6302, %v6273
    %v6305 = vmul.f32 %v6303, %v6274
    %v6306 = vadd.f32 %v6304, %v6276
    %v6307 = vadd.f32 %v6305, %v6277
    %s6308 = scalar_lea.vmem %s10, 128
    %v6309 = vld [vmem:[%s6308] sm:$0xff]
    %v6310 = vld [vmem:[%s6308 + $0x8] sm:$0xff]
    %v6311 = vld [vmem:[%s6308 + $0x10] sm:$0xff]
    %v6312 = vld [vmem:[%s6308 + $0x18] sm:$0xff]
    %s6313 = scalar_lea.vmem %s11, 4
    %v6314 = vld [vmem:[%s6313] sm:$0x1]
    %v6316 = vlaneseq
    %v6317 = vshrl.u32 %v6316, 7
    %v6318 = vsub.s32 0, %v6317
    %v6319 = vrot.slane %v6314, %v6318
    %v6322 = vsel %vm278, %v6306, 0
    %6324 = vmatprep.subr.mxu0 0.0
    %6325 = vmatpush1.msra.mxu0 %v6309
    %6326 = vmatprep.subr.mxu0 0.0
    %6327 = vmatpush1.msra.mxu0 %v6310
    %6328 = vmatprep.subr.mxu0 0.0
    %6329 = vmatpush1.msra.mxu0 %v6311
    %6330 = vmatprep.subr.mxu0 0.0
    %6331 = vmatpush1.msra.mxu0 %v6312
    %6332 = vmatprep.subr.mxu0 0.0
    %6333 = vmatpush1.msra.mxu0 0.0
    %6334 = vmatprep.subr.mxu0 0.0
    %6335 = vmatpush1.msra.mxu0 0.0
    %6336 = vmatprep.subr.mxu0 0.0
    %6337 = vmatpush1.msra.mxu0 0.0
    %6338 = vmatprep.subr.mxu0 0.0
    %6339 = vmatpush1.msra.mxu0 0.0
    %6340 = vmatprep.subr.mxu0 0.0
    %6341 = vmatpush1.msra.mxu0 0.0
    %6342 = vmatprep.subr.mxu0 0.0
    %6343 = vmatpush1.msra.mxu0 0.0
    %6344 = vmatprep.subr.mxu0 0.0
    %6345 = vmatpush1.msra.mxu0 0.0
    %6346 = vmatprep.subr.mxu0 0.0
    %6347 = vmatpush1.msra.mxu0 0.0
    %6348 = vmatprep.subr.mxu0 0.0
    %6349 = vmatpush1.msra.mxu0 0.0
    %6350 = vmatprep.subr.mxu0 0.0
    %6351 = vmatpush1.msra.mxu0 0.0
    %6352 = vmatprep.subr.mxu0 0.0
    %6353 = vmatpush1.msra.mxu0 0.0
    %6354 = vmatprep.subr.mxu0 0.0
    %6355 = vmatpush1.msra.mxu0 0.0
    %6356 = vmatprep.subr.mxu0 0.0
    %6357 = vmatpush1.msra.mxu0 0.0
    %6358 = vmatprep.subr.mxu0 0.0
    %6359 = vmatpush1.msra.mxu0 0.0
    %6360 = vmatprep.subr.mxu0 0.0
    %6361 = vmatpush1.msra.mxu0 0.0
    %6362 = vmatprep.subr.mxu0 0.0
    %6363 = vmatpush1.msra.mxu0 0.0
    %6364 = vmatprep.subr.mxu0 0.0
    %6365 = vmatpush1.msra.mxu0 0.0
    %6366 = vmatprep.subr.mxu0 0.0
    %6367 = vmatpush1.msra.mxu0 0.0
    %6368 = vmatprep.subr.mxu0 0.0
    %6369 = vmatpush1.msra.mxu0 0.0
    %6370 = vmatprep.subr.mxu0 0.0
    %6371 = vmatpush1.msra.mxu0 0.0
    %6372 = vmatprep.subr.mxu0 0.0
    %6373 = vmatpush1.msra.mxu0 0.0
    %6374 = vmatprep.subr.mxu0 0.0
    %6375 = vmatpush1.msra.mxu0 0.0
    %6376 = vmatprep.subr.mxu0 0.0
    %6377 = vmatpush1.msra.mxu0 0.0
    %6378 = vmatprep.subr.mxu0 0.0
    %6379 = vmatpush1.msra.mxu0 0.0
    %6380 = vmatprep.subr.mxu0 0.0
    %6381 = vmatpush1.msra.mxu0 0.0
    %6382 = vmatprep.subr.mxu0 0.0
    %6383 = vmatpush1.msra.mxu0 0.0
    %6384 = vmatprep.subr.mxu0 0.0
    %6385 = vmatpush1.msra.mxu0 0.0
    %6386 = vmatprep.subr.mxu0 0.0
    %6387 = vmatpush1.msra.mxu0 0.0
    %6388 = vmatprep.mubr.f32.mxu0 0.0
    %6389 = vmatmul.mubr.f32.gmra.mrb[0].mxu0 %v6322
    %v6390 = vpop.f32.mrb[0].mxu0
    %v6391 = vadd.f32 %v6319, %v6390
    %v6392 = vpop.f32.mrb[0].mxu0
    %6393 = vdwg.mxu0
    %v6394 = vmax.f32 %v6391, 0.0
    %s6395 = scalar_lea.vmem %s12, 256
    %v6396 = vld [vmem:[%s6395] sm:$0xff]
    %v6397 = vld [vmem:[%s6395 + $0x8] sm:$0xff]
    %v6398 = vld [vmem:[%s6395 + $0x10] sm:$0xff]
    %v6399 = vld [vmem:[%s6395 + $0x18] sm:$0xff]
    %v6400 = vld [vmem:[%s6395 + $0x20] sm:$0xff]
    %v6401 = vld [vmem:[%s6395 + $0x28] sm:$0xff]
    %v6402 = vld [vmem:[%s6395 + $0x30] sm:$0xff]
    %v6403 = vld [vmem:[%s6395 + $0x38] sm:$0xff]
    %s6404 = scalar_lea.vmem %s13, 4
    %v6405 = vld [vmem:[%s6404] sm:$0x1]
    %v6407 = vlaneseq
    %v6408 = vshrl.u32 %v6407, 7
    %v6409 = vsub.s32 0, %v6408
    %v6410 = vrot.slane %v6405, %v6409
    %v6413 = vsel %vm82, %v6394, 0
    %6415 = vmatprep.subr.mxu0 0.0
    %6416 = vmatpush1.msra.mxu0 %v6396
    %6417 = vmatprep.subr.mxu0 0.0
    %6418 = vmatpush1.msra.mxu0 %v6397
    %6419 = vmatprep.subr.mxu0 0.0
    %6420 = vmatpush1.msra.mxu0 %v6398
    %6421 = vmatprep.subr.mxu0 0.0
    %6422 = vmatpush1.msra.mxu0 %v6399
    %6423 = vmatprep.subr.mxu0 0.0
    %6424 = vmatpush1.msra.mxu0 %v6400
    %6425 = vmatprep.subr.mxu0 0.0
    %6426 = vmatpush1.msra.mxu0 %v6401
    %6427 = vmatprep.subr.mxu0 0.0
    %6428 = vmatpush1.msra.mxu0 %v6402
    %6429 = vmatprep.subr.mxu0 0.0
    %6430 = vmatpush1.msra.mxu0 %v6403
    %6431 = vmatprep.subr.mxu0 0.0
    %6432 = vmatpush1.msra.mxu0 0.0
    %6433 = vmatprep.subr.mxu0 0.0
    %6434 = vmatpush1.msra.mxu0 0.0
    %6435 = vmatprep.subr.mxu0 0.0
    %6436 = vmatpush1.msra.mxu0 0.0
    %6437 = vmatprep.subr.mxu0 0.0
    %6438 = vmatpush1.msra.mxu0 0.0
    %6439 = vmatprep.subr.mxu0 0.0
    %6440 = vmatpush1.msra.mxu0 0.0
    %6441 = vmatprep.subr.mxu0 0.0
    %6442 = vmatpush1.msra.mxu0 0.0
    %6443 = vmatprep.subr.mxu0 0.0
    %6444 = vmatpush1.msra.mxu0 0.0
    %6445 = vmatprep.subr.mxu0 0.0
    %6446 = vmatpush1.msra.mxu0 0.0
    %6447 = vmatprep.subr.mxu0 0.0
    %6448 = vmatpush1.msra.mxu0 0.0
    %6449 = vmatprep.subr.mxu0 0.0
    %6450 = vmatpush1.msra.mxu0 0.0
    %6451 = vmatprep.subr.mxu0 0.0
    %6452 = vmatpush1.msra.mxu0 0.0
    %6453 = vmatprep.subr.mxu0 0.0
    %6454 = vmatpush1.msra.mxu0 0.0
    %6455 = vmatprep.subr.mxu0 0.0
    %6456 = vmatpush1.msra.mxu0 0.0
    %6457 = vmatprep.subr.mxu0 0.0
    %6458 = vmatpush1.msra.mxu0 0.0
    %6459 = vmatprep.subr.mxu0 0.0
    %6460 = vmatpush1.msra.mxu0 0.0
    %6461 = vmatprep.subr.mxu0 0.0
    %6462 = vmatpush1.msra.mxu0 0.0
    %6463 = vmatprep.subr.mxu0 0.0
    %6464 = vmatpush1.msra.mxu0 0.0
    %6465 = vmatprep.subr.mxu0 0.0
    %6466 = vmatpush1.msra.mxu0 0.0
    %6467 = vmatprep.subr.mxu0 0.0
    %6468 = vmatpush1.msra.mxu0 0.0
    %6469 = vmatprep.subr.mxu0 0.0
    %6470 = vmatpush1.msra.mxu0 0.0
    %6471 = vmatprep.subr.mxu0 0.0
    %6472 = vmatpush1.msra.mxu0 0.0
    %6473 = vmatprep.subr.mxu0 0.0
    %6474 = vmatpush1.msra.mxu0 0.0
    %6475 = vmatprep.subr.mxu0 0.0
    %6476 = vmatpush1.msra.mxu0 0.0
    %6477 = vmatprep.subr.mxu0 0.0
    %6478 = vmatpush1.msra.mxu0 0.0
    %6479 = vmatprep.mubr.f32.mxu0 0.0
    %6480 = vmatmul.mubr.f32.gmra.mrb[0].mxu0 %v6413
    %v6481 = vpop.f32.mrb[0].mxu0
    %v6482 = vadd.f32 %v6410, %v6481
    %v6483 = vpop.f32.mrb[0].mxu0
    %6484 = vdwg.mxu0
    %s6485 = scalar_lea.vmem %s10, 160
    %v6486 = vld [vmem:[%s6485] sm:$0xff]
    %v6487 = vld [vmem:[%s6485 + $0x8] sm:$0xff]
    %v6488 = vld [vmem:[%s6485 + $0x10] sm:$0xff]
    %v6489 = vld [vmem:[%s6485 + $0x18] sm:$0xff]
    %s6490 = scalar_lea.vmem %s11, 5
    %v6491 = vld [vmem:[%s6490] sm:$0x1]
    %v6493 = vlaneseq
    %v6494 = vshrl.u32 %v6493, 7
    %v6495 = vsub.s32 0, %v6494
    %v6496 = vrot.slane %v6491, %v6495
    %v6499 = vsel %vm278, %v6307, 0
    %6501 = vmatprep.subr.mxu0 0.0
    %6502 = vmatpush1.msra.mxu0 %v6486
    %6503 = vmatprep.subr.mxu0 0.0
    %6504 = vmatpush1.msra.mxu0 %v6487
    %6505 = vmatprep.subr.mxu0 0.0
    %6506 = vmatpush1.msra.mxu0 %v6488
    %6507 = vmatprep.subr.mxu0 0.0
    %6508 = vmatpush1.msra.mxu0 %v6489
    %6509 = vmatprep.subr.mxu0 0.0
    %6510 = vmatpush1.msra.mxu0 0.0
    %6511 = vmatprep.subr.mxu0 0.0
    %6512 = vmatpush1.msra.mxu0 0.0
    %6513 = vmatprep.subr.mxu0 0.0
    %6514 = vmatpush1.msra.mxu0 0.0
    %6515 = vmatprep.subr.mxu0 0.0
    %6516 = vmatpush1.msra.mxu0 0.0
    %6517 = vmatprep.subr.mxu0 0.0
    %6518 = vmatpush1.msra.mxu0 0.0
    %6519 = vmatprep.subr.mxu0 0.0
    %6520 = vmatpush1.msra.mxu0 0.0
    %6521 = vmatprep.subr.mxu0 0.0
    %6522 = vmatpush1.msra.mxu0 0.0
    %6523 = vmatprep.subr.mxu0 0.0
    %6524 = vmatpush1.msra.mxu0 0.0
    %6525 = vmatprep.subr.mxu0 0.0
    %6526 = vmatpush1.msra.mxu0 0.0
    %6527 = vmatprep.subr.mxu0 0.0
    %6528 = vmatpush1.msra.mxu0 0.0
    %6529 = vmatprep.subr.mxu0 0.0
    %6530 = vmatpush1.msra.mxu0 0.0
    %6531 = vmatprep.subr.mxu0 0.0
    %6532 = vmatpush1.msra.mxu0 0.0
    %6533 = vmatprep.subr.mxu0 0.0
    %6534 = vmatpush1.msra.mxu0 0.0
    %6535 = vmatprep.subr.mxu0 0.0
    %6536 = vmatpush1.msra.mxu0 0.0
    %6537 = vmatprep.subr.mxu0 0.0
    %6538 = vmatpush1.msra.mxu0 0.0
    %6539 = vmatprep.subr.mxu0 0.0
    %6540 = vmatpush1.msra.mxu0 0.0
    %6541 = vmatprep.subr.mxu0 0.0
    %6542 = vmatpush1.msra.mxu0 0.0
    %6543 = vmatprep.subr.mxu0 0.0
    %6544 = vmatpush1.msra.mxu0 0.0
    %6545 = vmatprep.subr.mxu0 0.0
    %6546 = vmatpush1.msra.mxu0 0.0
    %6547 = vmatprep.subr.mxu0 0.0
    %6548 = vmatpush1.msra.mxu0 0.0
    %6549 = vmatprep.subr.mxu0 0.0
    %6550 = vmatpush1.msra.mxu0 0.0
    %6551 = vmatprep.subr.mxu0 0.0
    %6552 = vmatpush1.msra.mxu0 0.0
    %6553 = vmatprep.subr.mxu0 0.0
    %6554 = vmatpush1.msra.mxu0 0.0
    %6555 = vmatprep.subr.mxu0 0.0
    %6556 = vmatpush1.msra.mxu0 0.0
    %6557 = vmatprep.subr.mxu0 0.0
    %6558 = vmatpush1.msra.mxu0 0.0
    %6559 = vmatprep.subr.mxu0 0.0
    %6560 = vmatpush1.msra.mxu0 0.0
    %6561 = vmatprep.subr.mxu0 0.0
    %6562 = vmatpush1.msra.mxu0 0.0
    %6563 = vmatprep.subr.mxu0 0.0
    %6564 = vmatpush1.msra.mxu0 0.0
    %6565 = vmatprep.mubr.f32.mxu0 0.0
    %6566 = vmatmul.mubr.f32.gmra.mrb[0].mxu0 %v6499
    %v6567 = vpop.f32.mrb[0].mxu0
    %v6568 = vadd.f32 %v6496, %v6567
    %v6569 = vpop.f32.mrb[0].mxu0
    %6570 = vdwg.mxu0
    %v6571 = vmax.f32 %v6568, 0.0
    %s6572 = scalar_lea.vmem %s12, 320
    %v6573 = vld [vmem:[%s6572] sm:$0xff]
    %v6574 = vld [vmem:[%s6572 + $0x8] sm:$0xff]
    %v6575 = vld [vmem:[%s6572 + $0x10] sm:$0xff]
    %v6576 = vld [vmem:[%s6572 + $0x18] sm:$0xff]
    %v6577 = vld [vmem:[%s6572 + $0x20] sm:$0xff]
    %v6578 = vld [vmem:[%s6572 + $0x28] sm:$0xff]
    %v6579 = vld [vmem:[%s6572 + $0x30] sm:$0xff]
    %v6580 = vld [vmem:[%s6572 + $0x38] sm:$0xff]
    %s6581 = scalar_lea.vmem %s13, 5
    %v6582 = vld [vmem:[%s6581] sm:$0x1]
    %v6584 = vlaneseq
    %v6585 = vshrl.u32 %v6584, 7
    %v6586 = vsub.s32 0, %v6585
    %v6587 = vrot.slane %v6582, %v6586
    %v6590 = vsel %vm82, %v6571, 0
    %6592 = vmatprep.subr.mxu0 0.0
    %6593 = vmatpush1.msra.mxu0 %v6573
    %6594 = vmatprep.subr.mxu0 0.0
    %6595 = vmatpush1.msra.mxu0 %v6574
    %6596 = vmatprep.subr.mxu0 0.0
    %6597 = vmatpush1.msra.mxu0 %v6575
    %6598 = vmatprep.subr.mxu0 0.0
    %6599 = vmatpush1.msra.mxu0 %v6576
    %6600 = vmatprep.subr.mxu0 0.0
    %6601 = vmatpush1.msra.mxu0 %v6577
    %6602 = vmatprep.subr.mxu0 0.0
    %6603 = vmatpush1.msra.mxu0 %v6578
    %6604 = vmatprep.subr.mxu0 0.0
    %6605 = vmatpush1.msra.mxu0 %v6579
    %6606 = vmatprep.subr.mxu0 0.0
    %6607 = vmatpush1.msra.mxu0 %v6580
    %6608 = vmatprep.subr.mxu0 0.0
    %6609 = vmatpush1.msra.mxu0 0.0
    %6610 = vmatprep.subr.mxu0 0.0
    %6611 = vmatpush1.msra.mxu0 0.0
    %6612 = vmatprep.subr.mxu0 0.0
    %6613 = vmatpush1.msra.mxu0 0.0
    %6614 = vmatprep.subr.mxu0 0.0
    %6615 = vmatpush1.msra.mxu0 0.0
    %6616 = vmatprep.subr.mxu0 0.0
    %6617 = vmatpush1.msra.mxu0 0.0
    %6618 = vmatprep.subr.mxu0 0.0
    %6619 = vmatpush1.msra.mxu0 0.0
    %6620 = vmatprep.subr.mxu0 0.0
    %6621 = vmatpush1.msra.mxu0 0.0
    %6622 = vmatprep.subr.mxu0 0.0
    %6623 = vmatpush1.msra.mxu0 0.0
    %6624 = vmatprep.subr.mxu0 0.0
    %6625 = vmatpush1.msra.mxu0 0.0
    %6626 = vmatprep.subr.mxu0 0.0
    %6627 = vmatpush1.msra.mxu0 0.0
    %6628 = vmatprep.subr.mxu0 0.0
    %6629 = vmatpush1.msra.mxu0 0.0
    %6630 = vmatprep.subr.mxu0 0.0
    %6631 = vmatpush1.msra.mxu0 0.0
    %6632 = vmatprep.subr.mxu0 0.0
    %6633 = vmatpush1.msra.mxu0 0.0
    %6634 = vmatprep.subr.mxu0 0.0
    %6635 = vmatpush1.msra.mxu0 0.0
    %6636 = vmatprep.subr.mxu0 0.0
    %6637 = vmatpush1.msra.mxu0 0.0
    %6638 = vmatprep.subr.mxu0 0.0
    %6639 = vmatpush1.msra.mxu0 0.0
    %6640 = vmatprep.subr.mxu0 0.0
    %6641 = vmatpush1.msra.mxu0 0.0
    %6642 = vmatprep.subr.mxu0 0.0
    %6643 = vmatpush1.msra.mxu0 0.0
    %6644 = vmatprep.subr.mxu0 0.0
    %6645 = vmatpush1.msra.mxu0 0.0
    %6646 = vmatprep.subr.mxu0 0.0
    %6647 = vmatpush1.msra.mxu0 0.0
    %6648 = vmatprep.subr.mxu0 0.0
    %6649 = vmatpush1.msra.mxu0 0.0
    %6650 = vmatprep.subr.mxu0 0.0
    %6651 = vmatpush1.msra.mxu0 0.0
    %6652 = vmatprep.subr.mxu0 0.0
    %6653 = vmatpush1.msra.mxu0 0.0
    %6654 = vmatprep.subr.mxu0 0.0
    %6655 = vmatpush1.msra.mxu0 0.0
    %6656 = vmatprep.mubr.f32.mxu0 0.0
    %6657 = vmatmul.mubr.f32.gmra.mrb[0].mxu0 %v6590
    %v6658 = vpop.f32.mrb[0].mxu0
    %v6659 = vadd.f32 %v6587, %v6658
    %v6660 = vpop.f32.mrb[0].mxu0
    %6661 = vdwg.mxu0
    %v6662 = vadd.f32 %v6306, %v6482
    %v6663 = vadd.f32 %v6307, %v6659
    %s6664 = scalar_lea.vmem %s14, 80
    %v6665 = vld [vmem:[%s6664] sm:$0xff]
    %v6666 = vld [vmem:[%s6664 + $0x8] sm:$0xff]
    %s6667 = scalar_lea.vmem %s15, 80
    %v6668 = vld [vmem:[%s6667] sm:$0xff]
    %v6669 = vld [vmem:[%s6667 + $0x8] sm:$0xff]
    %v6670 = vsel %vm278, %v6662, 0.0
    %6671 = vadd.xlane.f32.xlu0 %v6670
    %v6672 = vpop.xlane.xlu0 %6671
    %v6673 = vsel %vm278, %v6663, 0.0
    %6674 = vadd.xlane.f32.xlu0 %v6673
    %v6675 = vpop.xlane.xlu0 %6674
    %v6676 = vmul.f32 %v6672, %v1979
    %v6677 = vmul.f32 %v6675, %v1979
    %v6678 = vsub.f32 %v6662, %v6676
    %v6679 = vsub.f32 %v6663, %v6677
    %v6680 = vmul.f32 %v6678, %v6678
    %v6681 = vmul.f32 %v6679, %v6679
    %v6682 = vsel %vm278, %v6680, 0.0
    %6683 = vadd.xlane.f32.xlu0 %v6682
    %v6684 = vpop.xlane.xlu0 %6683
    %v6685 = vsel %vm278, %v6681, 0.0
    %6686 = vadd.xlane.f32.xlu0 %v6685
    %v6687 = vpop.xlane.xlu0 %6686
    %v6688 = vmul.f32 %v6684, %v1979
    %v6689 = vmul.f32 %v6687, %v1979
    %v6690 = vadd.f32 %v6688, 1e-05
    %v6691 = vadd.f32 %v6689, 1e-05
    %v6692 = vrsqrt.pop %v6690
    %v6693 = vrsqrt.pop %v6691
    %v6694 = vmul.f32 %v6678, %v6692
    %v6695 = vmul.f32 %v6679, %v6693
    %v6696 = vmul.f32 %v6694, %v6665
    %v6697 = vmul.f32 %v6695, %v6666
    %v6698 = vadd.f32 %v6696, %v6668
    %v6699 = vadd.f32 %v6697, %v6669
    %v6700 = vsel %vm278, %v6698, 0.0
    %v6701 = vrot.slane %v6700, 4
    %v6702 = vadd.f32 %v6700, %v6701
    %v6703 = vrot.slane %v6702, 2
    %v6704 = vadd.f32 %v6702, %v6703
    %v6705 = vrot.slane %v6704, 1
    %v6706 = vadd.f32 %v6704, %v6705
    %v6707 = vrcp.pop 8.0
    %v6708 = vmul.f32 %v6706, %v6707
    %v6709 = vsel %vm278, %v6699, 0.0
    %v6710 = vrot.slane %v6709, 4
    %v6711 = vadd.f32 %v6709, %v6710
    %v6712 = vrot.slane %v6711, 2
    %v6713 = vadd.f32 %v6711, %v6712
    %v6714 = vrot.slane %v6713, 1
    %v6715 = vadd.f32 %v6713, %v6714
    %v6716 = vmul.f32 %v6715, %v6707
    %6718 = vrot.lane.b32.xlu0 %v6716, 32
    %v6719 = vpop.permute.xlu0 %6718
    %v6721 = vsel %vm278, %v6708, %v6719
    %v6722 = vld [vmem:[%s16] sm:$0x1]
    %v6723 = vld [vmem:[%s17] sm:$0x1]
    %vm6724 = vcmask 516096
    %v6725 = vsel %vm6724, %v6721, 0.0
    %6726 = vadd.xlane.f32.xlu0 %v6725
    %v6727 = vpop.xlane.xlu0 %6726
    %v6728 = vrcp.pop 64.0
    %v6729 = vmul.f32 %v6727, %v6728
    %v6730 = vsub.f32 %v6721, %v6729
    %v6731 = vmul.f32 %v6730, %v6730
    %v6732 = vsel %vm6724, %v6731, 0.0
    %6733 = vadd.xlane.f32.xlu0 %v6732
    %v6734 = vpop.xlane.xlu0 %6733
    %v6735 = vmul.f32 %v6734, %v6728
    %v6736 = vadd.f32 %v6735, 1e-05
    %v6737 = vrsqrt.pop %v6736
    %v6738 = vmul.f32 %v6730, %v6737
    %v6739 = vmul.f32 %v6738, %v6722
    %v6740 = vadd.f32 %v6739, %v6723
    %v6741 = vld [vmem:[%s18] sm:$0xff]
    %v6742 = vld [vmem:[%s18 + $0x8] sm:$0xff]
    %v6743 = vld [vmem:[%s18 + $0x10] sm:$0xff]
    %v6744 = vld [vmem:[%s18 + $0x18] sm:$0xff]
    %v6745 = vld [vmem:[%s18 + $0x20] sm:$0xff]
    %v6746 = vld [vmem:[%s18 + $0x28] sm:$0xff]
    %v6747 = vld [vmem:[%s18 + $0x30] sm:$0xff]
    %v6748 = vld [vmem:[%s18 + $0x38] sm:$0xff]
    %v6749 = vld [vmem:[%s19] sm:$0x1]
    %v6751 = vsel %vm82, %v6740, 0
    %6753 = vmatprep.subr.mxu0 0.0
    %6754 = vmatpush1.msra.mxu0 %v6741
    %6755 = vmatprep.subr.mxu0 0.0
    %6756 = vmatpush1.msra.mxu0 %v6742
    %6757 = vmatprep.subr.mxu0 0.0
    %6758 = vmatpush1.msra.mxu0 %v6743
    %6759 = vmatprep.subr.mxu0 0.0
    %6760 = vmatpush1.msra.mxu0 %v6744
    %6761 = vmatprep.subr.mxu0 0.0
    %6762 = vmatpush1.msra.mxu0 %v6745
    %6763 = vmatprep.subr.mxu0 0.0
    %6764 = vmatpush1.msra.mxu0 %v6746
    %6765 = vmatprep.subr.mxu0 0.0
    %6766 = vmatpush1.msra.mxu0 %v6747
    %6767 = vmatprep.subr.mxu0 0.0
    %6768 = vmatpush1.msra.mxu0 %v6748
    %6769 = vmatprep.subr.mxu0 0.0
    %6770 = vmatpush1.msra.mxu0 0.0
    %6771 = vmatprep.subr.mxu0 0.0
    %6772 = vmatpush1.msra.mxu0 0.0
    %6773 = vmatprep.subr.mxu0 0.0
    %6774 = vmatpush1.msra.mxu0 0.0
    %6775 = vmatprep.subr.mxu0 0.0
    %6776 = vmatpush1.msra.mxu0 0.0
    %6777 = vmatprep.subr.mxu0 0.0
    %6778 = vmatpush1.msra.mxu0 0.0
    %6779 = vmatprep.subr.mxu0 0.0
    %6780 = vmatpush1.msra.mxu0 0.0
    %6781 = vmatprep.subr.mxu0 0.0
    %6782 = vmatpush1.msra.mxu0 0.0
    %6783 = vmatprep.subr.mxu0 0.0
    %6784 = vmatpush1.msra.mxu0 0.0
    %6785 = vmatprep.subr.mxu0 0.0
    %6786 = vmatpush1.msra.mxu0 0.0
    %6787 = vmatprep.subr.mxu0 0.0
    %6788 = vmatpush1.msra.mxu0 0.0
    %6789 = vmatprep.subr.mxu0 0.0
    %6790 = vmatpush1.msra.mxu0 0.0
    %6791 = vmatprep.subr.mxu0 0.0
    %6792 = vmatpush1.msra.mxu0 0.0
    %6793 = vmatprep.subr.mxu0 0.0
    %6794 = vmatpush1.msra.mxu0 0.0
    %6795 = vmatprep.subr.mxu0 0.0
    %6796 = vmatpush1.msra.mxu0 0.0
    %6797 = vmatprep.subr.mxu0 0.0
    %6798 = vmatpush1.msra.mxu0 0.0
    %6799 = vmatprep.subr.mxu0 0.0
    %6800 = vmatpush1.msra.mxu0 0.0
    %6801 = vmatprep.subr.mxu0 0.0
    %6802 = vmatpush1.msra.mxu0 0.0
    %6803 = vmatprep.subr.mxu0 0.0
    %6804 = vmatpush1.msra.mxu0 0.0
    %6805 = vmatprep.subr.mxu0 0.0
    %6806 = vmatpush1.msra.mxu0 0.0
    %6807 = vmatprep.subr.mxu0 0.0
    %6808 = vmatpush1.msra.mxu0 0.0
    %6809 = vmatprep.subr.mxu0 0.0
    %6810 = vmatpush1.msra.mxu0 0.0
    %6811 = vmatprep.subr.mxu0 0.0
    %6812 = vmatpush1.msra.mxu0 0.0
    %6813 = vmatprep.subr.mxu0 0.0
    %6814 = vmatpush1.msra.mxu0 0.0
    %6815 = vmatprep.subr.mxu0 0.0
    %6816 = vmatpush1.msra.mxu0 0.0
    %6817 = vmatprep.mubr.f32.mxu0 0.0
    %6818 = vmatmul.mubr.f32.gmra.mrb[0].mxu0 %v6751
    %v6819 = vpop.f32.mrb[0].mxu0
    %v6820 = vadd.f32 %v6749, %v6819
    %v6821 = vpop.f32.mrb[0].mxu0
    %6822 = vdwg.mxu0
    %6823 = vst [vmem:[#allocation2] sm:$0x1] %v6820
    // Predicated region
    $region82: #{forward.1} parent=1 // pred_check
      _
    $region83: #{forward.1} parent=1 // pred_check_branch
      %6825 = sbr.rel (0) target = $region85
    $region84: #{forward.1} parent=1 // pred_region
      %s6827 = ssub.s32 16, 16
      %6828 = vsyncadd [#allocation3], %s6827
      %s6830 = sshll.u32 [#allocation2], 4
      %s6831 = int_to_ptr.vmem [resolvable:$true] %s6830
      %6833 = dma.vmem_to_hbm [thread:$0]  %s6831, 16, %s20, [#allocation3]
    $region85: #{forward.1} parent=1 // pred_fallthru
      _
    // Predicated region
    $region86: #{forward.1} parent=1 // pred_check
      _
    $region87: #{forward.1} parent=1 // pred_check_branch
      %6835 = sbr.rel (0) target = $region89
    $region88: #{forward.1} parent=1 // pred_region
      %6836 = dma.done [#allocation3], 16
    $region89: #{forward.1} parent=1 // pred_fallthru
      _
    %6837 = vsyncpa [#allocation3], 1

</llo_original>
